<compile_context>
chip_gen: v6e
topology: v6e:2x2x1
jax: 0.10.0
libtpu: 0.0.40
codegen_flags: <defaults>
</compile_context>

<pallas_src>
import functools
import math

import jax
import jax.numpy as jnp
from jax.experimental import pallas as pl
from jax.experimental.pallas import tpu as pltpu

M_DIM = 32      # m_dim (D)
N_HEAD = 8      # number of attention heads
C_DIM = 8       # per-head channel dim
HC = N_HEAD * C_DIM
SQ_C = 1.0 / math.sqrt(C_DIM)
LN_EPS = 1e-5


def _msarow_kernel(m_ref, gamma_ref, beta_ref, wqkvg_ref, bg_ref, wo_ref, bo_ref,
                   out_ref, o_scr, *, tb, seq):
    """One grid step = `tb` MSA rows of length `seq`; block view is (tb*seq, D)."""
    x = m_ref[...]                                        # (tb*seq, D) f32

    # ---- LayerNorm over D (f32) ----
    mu = jnp.mean(x, axis=-1, keepdims=True)
    var = jnp.mean((x - mu) ** 2, axis=-1, keepdims=True)
    xn = (x - mu) * jax.lax.rsqrt(var + LN_EPS)
    xn = xn * gamma_ref[...] + beta_ref[...]              # (tb*seq, D)

    # ---- fused q/k/v/g projection: one MXU matmul, bf16 operands, f32 acc ----
    qkvg = jnp.dot(xn.astype(jnp.bfloat16), wqkvg_ref[...],
                   preferred_element_type=jnp.float32)    # (tb*seq, 4*HC)

    q = qkvg[:, 0 * HC:1 * HC].reshape(tb, seq, HC)
    k = qkvg[:, 1 * HC:2 * HC].reshape(tb, seq, HC)
    v = qkvg[:, 2 * HC:3 * HC].reshape(tb, seq, HC)
    g = jax.nn.sigmoid(qkvg[:, 3 * HC:4 * HC] + bg_ref[...])   # (tb*seq, HC) f32

    # ---- per-head attention, batched over the tb rows of this block ----
    # Single-batch-dim einsums contract the trailing channel dims directly, so
    # no explicit transpose of kh is materialized.
    for h in range(N_HEAD):
        lo = h * C_DIM
        qh = q[:, :, lo:lo + C_DIM].astype(jnp.bfloat16)  # (tb, seq, c)
        kh = k[:, :, lo:lo + C_DIM].astype(jnp.bfloat16)  # (tb, seq, c)
        vh = v[:, :, lo:lo + C_DIM]                       # (tb, seq, c) f32

        att = jnp.einsum('blc,bmc->blm', qh, kh,
                         preferred_element_type=jnp.float32) * SQ_C   # (tb, seq, seq)

        # signed sqrt: one EUP sqrt + select (== sqrt(relu(x)) - sqrt(relu(-x)))
        s = jnp.sqrt(jnp.abs(att))
        att = jnp.where(att >= 0, s, -s)

        # softmax over the key axis (last dim)
        att = att - jnp.max(att, axis=-1, keepdims=True)
        e = jnp.exp(att)
        p = e * pl.reciprocal(jnp.sum(e, axis=-1, keepdims=True), approx=True)

        oh = jnp.einsum('blm,bmc->blc', p, vh,
                        preferred_element_type=jnp.float32)           # (tb, seq, c)
        o_scr[:, lo:lo + C_DIM] = oh.reshape(tb * seq, C_DIM)

    # ---- gating + output projection ----
    o = o_scr[...] * g                                     # (tb*seq, HC) f32
    out = jnp.dot(o.astype(jnp.bfloat16), wo_ref[...],
                  preferred_element_type=jnp.float32) + bo_ref[...]
    out_ref[...] = out.astype(out_ref.dtype)


def _pick_row_tile(n, max_tb=8):
    """Largest divisor of n that is <= max_tb while keeping >= 2 grid steps
    whenever n >= 2 (so both v7x TensorCores get work)."""
    best = 1
    for tb in range(1, min(n, max_tb) + 1):
        if n % tb != 0:
            continue
        if n // tb >= 2 or n == 1:
            best = tb
    return best


def msarow_pallas(m, params, max_rows_per_step=8):
    N, L, D = m.shape
    gamma, beta, wq, wk, wv, wg, bg, wo, bo = params

    # Fuse the four projection weights into one (D, 4*HC) bf16 matrix; output
    # projection weight also goes to bf16 (MXU operands; accumulation is f32).
    w_qkvg = jnp.concatenate([wq, wk, wv, wg], axis=1).astype(jnp.bfloat16)
    wo_bf16 = wo.astype(jnp.bfloat16)

    TB = _pick_row_tile(N, max_rows_per_step)
    G = N // TB
    m_flat = m.reshape(N * L, D)

    kernel = functools.partial(_msarow_kernel, tb=TB, seq=L)
    full = lambda shape: pl.BlockSpec(shape, lambda i: (0,) * len(shape))

    out_flat = pl.pallas_call(
        kernel,
        out_shape=jax.ShapeDtypeStruct((N * L, D), m.dtype),
        grid=(G,),
        in_specs=[
            pl.BlockSpec((TB * L, D), lambda i: (i, 0)),   # m (row tile)
            full((1, D)),                                  # gamma
            full((1, D)),                                  # beta
            full((D, 4 * HC)),                             # fused W_qkvg (bf16)
            full((1, HC)),                                 # bg
            full((HC, D)),                                 # wo (bf16)
            full((1, D)),                                  # bo
        ],
        out_specs=pl.BlockSpec((TB * L, D), lambda i: (i, 0)),
        scratch_shapes=[pltpu.VMEM((TB * L, HC), jnp.float32)],
        compiler_params=pltpu.CompilerParams(
            dimension_semantics=("parallel",)),
    )(m_flat, gamma, beta, w_qkvg, bg, wo_bf16, bo)

    return out_flat.reshape(N, L, D)


def msarow_reference(m, params):
    """Pure-JAX f32 reference mirroring the PyTorch forward (eval mode)."""
    gamma, beta, wq, wk, wv, wg, bg, wo, bo = params
    N, L, D = m.shape
    mu = jnp.mean(m, axis=-1, keepdims=True)
    var = jnp.mean((m - mu) ** 2, axis=-1, keepdims=True)
    xn = (m - mu) / jnp.sqrt(var + LN_EPS) * gamma[0] + beta[0]
    q = (xn @ wq).reshape(N, L, N_HEAD, C_DIM)
    k = (xn @ wk).reshape(N, L, N_HEAD, C_DIM)
    v = (xn @ wv).reshape(N, L, N_HEAD, C_DIM)
    g = jax.nn.sigmoid(xn @ wg + bg[0]).reshape(N, L, N_HEAD, C_DIM)
    att = jnp.einsum('bqhc,bvhc->bqvh', q, k) * SQ_C
    att = jnp.sqrt(jnp.maximum(att, 0.0)) - jnp.sqrt(jnp.maximum(-att, 0.0))
    att = jax.nn.softmax(att, axis=2)
    o = jnp.einsum('bqvh,bvhc->bqhc', att, v) * g
    return o.reshape(N, L, HC) @ wo + bo[0]


def init_params(key, d=M_DIM):
    hc = HC
    ks = jax.random.split(key, 8)
    scale = 0.1
    gamma = jnp.ones((1, d), jnp.float32)
    beta = jnp.zeros((1, d), jnp.float32)
    wq = scale * jax.random.normal(ks[0], (d, hc), jnp.float32)
    wk = scale * jax.random.normal(ks[1], (d, hc), jnp.float32)
    wv = scale * jax.random.normal(ks[2], (d, hc), jnp.float32)
    wg = scale * jax.random.normal(ks[3], (d, hc), jnp.float32)
    bg = scale * jax.random.normal(ks[4], (1, hc), jnp.float32)
    wo = scale * jax.random.normal(ks[5], (hc, d), jnp.float32)
    bo = scale * jax.random.normal(ks[6], (1, d), jnp.float32)
    return (gamma, beta, wq, wk, wv, wg, bg, wo, bo)


if __name__ == "__main__":
    key = jax.random.PRNGKey(0)
    k_m, k_p = jax.random.split(key)

    # Small but representative: 8 MSA rows -> row-tile TB=4, grid=(2,).
    N, L, D = 8, 16, M_DIM
    m = jax.random.normal(k_m, (N, L, D), jnp.float32)
    params = init_params(k_p)

    # TODO(synk): attdrop (config-gated basic.DropAtt) is training-only; eval path implemented.
    out = jax.block_until_ready(msarow_pallas(m, params))

    ref = msarow_reference(m, params)
    assert out.shape == (N, L, D)
    # Tolerance loosened vs f32-only version: bf16 MXU operands (f32 accumulation)
    # and the approx softmax reciprocal perturb results at roughly the 1e-3 level.
    assert jnp.allclose(out, ref, atol=1e-2, rtol=1e-2), "mismatch vs reference"

    print("KERNEL_OK")
</pallas_src>

<mosaic_0001>
module attributes {stable_mosaic.version = 11 : i64} {
  func.func @_msarow_kernel(%arg0: i32, %arg1: memref<64x32xf32, #tpu.memory_space<vmem>>, %arg2: memref<1x32xf32, #tpu.memory_space<vmem>>, %arg3: memref<1x32xf32, #tpu.memory_space<vmem>>, %arg4: memref<32x256xbf16, #tpu.memory_space<vmem>>, %arg5: memref<1x64xf32, #tpu.memory_space<vmem>>, %arg6: memref<64x32xbf16, #tpu.memory_space<vmem>>, %arg7: memref<1x32xf32, #tpu.memory_space<vmem>>, %arg8: memref<64x32xf32, #tpu.memory_space<vmem>>, %arg9: memref<64x64xf32, #tpu.memory_space<vmem>>) attributes {dimension_semantics = [#tpu.dimension_semantics<parallel>], iteration_bounds = array<i64: 2>, scalar_prefetch = 0 : i64, scratch_operands = 1 : i64, tpu.core_type = #tpu.core_type<tc>, window_params = [{transform_indices = @transform_0, window_bounds = array<i64: 64, 32>}, {pipeline_mode = #tpu.pipeline_mode<synchronous>, transform_indices = @transform_1, window_bounds = array<i64: 1, 32>}, {pipeline_mode = #tpu.pipeline_mode<synchronous>, transform_indices = @transform_2, window_bounds = array<i64: 1, 32>}, {pipeline_mode = #tpu.pipeline_mode<synchronous>, transform_indices = @transform_3, window_bounds = array<i64: 32, 256>}, {pipeline_mode = #tpu.pipeline_mode<synchronous>, transform_indices = @transform_4, window_bounds = array<i64: 1, 64>}, {pipeline_mode = #tpu.pipeline_mode<synchronous>, transform_indices = @transform_5, window_bounds = array<i64: 64, 32>}, {pipeline_mode = #tpu.pipeline_mode<synchronous>, transform_indices = @transform_6, window_bounds = array<i64: 1, 32>}, {transform_indices = @transform_7, window_bounds = array<i64: 64, 32>}]} {
    %c0 = arith.constant 0 : index
    %c0_0 = arith.constant 0 : index
    %0 = vector.load %arg1[%c0, %c0_0] : memref<64x32xf32, #tpu.memory_space<vmem>>, vector<64x32xf32>
    %cst = arith.constant dense<0.000000e+00> : vector<64xf32>
    %1 = vector.multi_reduction <add>, %0, %cst [1] : vector<64x32xf32> to vector<64xf32>
    %2 = vector.shape_cast %1 : vector<64xf32> to vector<64x1xf32>
    %cst_1 = arith.constant 3.200000e+01 : f32
    %3 = vector.broadcast %cst_1 : f32 to vector<64x1xf32>
    %4 = arith.divf %2, %3 : vector<64x1xf32>
    %5 = vector.broadcast %4 : vector<64x1xf32> to vector<64x32xf32>
    %6 = arith.subf %0, %5 : vector<64x32xf32>
    %7 = arith.mulf %6, %6 : vector<64x32xf32>
    %cst_2 = arith.constant dense<0.000000e+00> : vector<64xf32>
    %8 = vector.multi_reduction <add>, %7, %cst_2 [1] : vector<64x32xf32> to vector<64xf32>
    %9 = vector.shape_cast %8 : vector<64xf32> to vector<64x1xf32>
    %cst_3 = arith.constant 3.200000e+01 : f32
    %10 = vector.broadcast %cst_3 : f32 to vector<64x1xf32>
    %11 = arith.divf %9, %10 : vector<64x1xf32>
    %12 = vector.broadcast %4 : vector<64x1xf32> to vector<64x32xf32>
    %13 = arith.subf %0, %12 : vector<64x32xf32>
    %cst_4 = arith.constant 9.99999974E-6 : f32
    %14 = vector.broadcast %cst_4 : f32 to vector<64x1xf32>
    %15 = arith.addf %11, %14 : vector<64x1xf32>
    %16 = math.rsqrt %15 : vector<64x1xf32>
    %17 = vector.broadcast %16 : vector<64x1xf32> to vector<64x32xf32>
    %18 = arith.mulf %13, %17 : vector<64x32xf32>
    %c0_5 = arith.constant 0 : index
    %c0_6 = arith.constant 0 : index
    %19 = vector.load %arg2[%c0_5, %c0_6] : memref<1x32xf32, #tpu.memory_space<vmem>>, vector<1x32xf32>
    %20 = vector.broadcast %19 : vector<1x32xf32> to vector<64x32xf32>
    %21 = arith.mulf %18, %20 : vector<64x32xf32>
    %c0_7 = arith.constant 0 : index
    %c0_8 = arith.constant 0 : index
    %22 = vector.load %arg3[%c0_7, %c0_8] : memref<1x32xf32, #tpu.memory_space<vmem>>, vector<1x32xf32>
    %23 = vector.broadcast %22 : vector<1x32xf32> to vector<64x32xf32>
    %24 = arith.addf %21, %23 : vector<64x32xf32>
    %25 = arith.truncf %24 : vector<64x32xf32> to vector<64x32xbf16>
    %c0_9 = arith.constant 0 : index
    %c0_10 = arith.constant 0 : index
    %26 = vector.load %arg4[%c0_9, %c0_10] : memref<32x256xbf16, #tpu.memory_space<vmem>>, vector<32x256xbf16>
    %cst_11 = arith.constant dense<0.000000e+00> : vector<64x256xf32>
    %27 = tpu.matmul %25, %26, %cst_11 {dimension_numbers = #tpu.dot_dimension_numbers<[1], [0], [0], [1], [0, 0, 1, 1], [], []>} : vector<64x32xbf16>, vector<32x256xbf16>, vector<64x256xf32> -> vector<64x256xf32>
    %28 = vector.extract_strided_slice %27 {offsets = [0, 0], sizes = [64, 64], strides = [1, 1]} : vector<64x256xf32> to vector<64x64xf32>
    %29 = vector.shape_cast %28 : vector<64x64xf32> to vector<4x16x64xf32>
    %30 = vector.extract_strided_slice %27 {offsets = [0, 64], sizes = [64, 64], strides = [1, 1]} : vector<64x256xf32> to vector<64x64xf32>
    %31 = vector.shape_cast %30 : vector<64x64xf32> to vector<4x16x64xf32>
    %32 = vector.extract_strided_slice %27 {offsets = [0, 128], sizes = [64, 64], strides = [1, 1]} : vector<64x256xf32> to vector<64x64xf32>
    %33 = vector.shape_cast %32 : vector<64x64xf32> to vector<4x16x64xf32>
    %34 = vector.extract_strided_slice %27 {offsets = [0, 192], sizes = [64, 64], strides = [1, 1]} : vector<64x256xf32> to vector<64x64xf32>
    %c0_12 = arith.constant 0 : index
    %c0_13 = arith.constant 0 : index
    %35 = vector.load %arg5[%c0_12, %c0_13] : memref<1x64xf32, #tpu.memory_space<vmem>>, vector<1x64xf32>
    %36 = vector.broadcast %35 : vector<1x64xf32> to vector<64x64xf32>
    %37 = arith.addf %34, %36 : vector<64x64xf32>
    %38 = arith.negf %37 : vector<64x64xf32>
    %39 = math.exp %38 : vector<64x64xf32>
    %cst_14 = arith.constant 1.000000e+00 : f32
    %40 = vector.broadcast %cst_14 : f32 to vector<64x64xf32>
    %41 = arith.addf %40, %39 : vector<64x64xf32>
    %42 = arith.divf %40, %41 : vector<64x64xf32>
    %43 = vector.extract_strided_slice %29 {offsets = [0, 0, 0], sizes = [4, 16, 8], strides = [1, 1, 1]} : vector<4x16x64xf32> to vector<4x16x8xf32>
    %44 = arith.truncf %43 : vector<4x16x8xf32> to vector<4x16x8xbf16>
    %45 = vector.extract_strided_slice %31 {offsets = [0, 0, 0], sizes = [4, 16, 8], strides = [1, 1, 1]} : vector<4x16x64xf32> to vector<4x16x8xf32>
    %46 = arith.truncf %45 : vector<4x16x8xf32> to vector<4x16x8xbf16>
    %47 = vector.extract_strided_slice %33 {offsets = [0, 0, 0], sizes = [4, 16, 8], strides = [1, 1, 1]} : vector<4x16x64xf32> to vector<4x16x8xf32>
    "tpu.trace_start"() <{level = 10 : i32, message = "blc,bmc->blm"}> : () -> ()
    %cst_15 = arith.constant dense<0.000000e+00> : vector<4x16x16xf32>
    %48 = tpu.matmul %44, %46, %cst_15 {dimension_numbers = #tpu.dot_dimension_numbers<[2], [2], [1], [1], [0, 0, 0, 1, 1, 1], [0], [0]>} : vector<4x16x8xbf16>, vector<4x16x8xbf16>, vector<4x16x16xf32> -> vector<4x16x16xf32>
    "tpu.trace_stop"() : () -> ()
    %cst_16 = arith.constant 0.353553385 : f32
    %49 = vector.broadcast %cst_16 : f32 to vector<4x16x16xf32>
    %50 = arith.mulf %48, %49 : vector<4x16x16xf32>
    %51 = math.absf %50 : vector<4x16x16xf32>
    %52 = math.sqrt %51 : vector<4x16x16xf32>
    %cst_17 = arith.constant 0.000000e+00 : f32
    %53 = vector.broadcast %cst_17 : f32 to vector<4x16x16xf32>
    %54 = arith.cmpf oge, %50, %53 : vector<4x16x16xf32>
    %cst_18 = arith.constant 0.000000e+00 : f32
    %55 = vector.broadcast %cst_18 : f32 to vector<4x16x16xf32>
    %56 = arith.subf %55, %52 : vector<4x16x16xf32>
    %57 = arith.select %54, %52, %56 : vector<4x16x16xi1>, vector<4x16x16xf32>
    %cst_19 = arith.constant dense<0xFF800000> : vector<4x16xf32>
    %58 = vector.multi_reduction <maximumf>, %57, %cst_19 [2] : vector<4x16x16xf32> to vector<4x16xf32>
    %59 = vector.shape_cast %58 : vector<4x16xf32> to vector<4x16x1xf32>
    %60 = vector.broadcast %59 : vector<4x16x1xf32> to vector<4x16x16xf32>
    %61 = arith.subf %57, %60 : vector<4x16x16xf32>
    %62 = math.exp %61 : vector<4x16x16xf32>
    %cst_20 = arith.constant dense<0.000000e+00> : vector<4x16xf32>
    %63 = vector.multi_reduction <add>, %62, %cst_20 [2] : vector<4x16x16xf32> to vector<4x16xf32>
    %64 = vector.shape_cast %63 : vector<4x16xf32> to vector<4x16x1xf32>
    %65 = tpu.reciprocal %64 {approx = true} : vector<4x16x1xf32> -> vector<4x16x1xf32>
    %66 = vector.broadcast %65 : vector<4x16x1xf32> to vector<4x16x16xf32>
    %67 = arith.mulf %62, %66 : vector<4x16x16xf32>
    "tpu.trace_start"() <{level = 10 : i32, message = "blm,bmc->blc"}> : () -> ()
    %cst_21 = arith.constant dense<0.000000e+00> : vector<4x16x8xf32>
    %68 = tpu.matmul %67, %47, %cst_21 {dimension_numbers = #tpu.dot_dimension_numbers<[2], [1], [1], [2], [0, 0, 0, 1, 1, 2], [0], [0]>} : vector<4x16x16xf32>, vector<4x16x8xf32>, vector<4x16x8xf32> -> vector<4x16x8xf32>
    "tpu.trace_stop"() : () -> ()
    %69 = vector.shape_cast %68 : vector<4x16x8xf32> to vector<64x8xf32>
    %c0_22 = arith.constant 0 : index
    %c0_23 = arith.constant 0 : index
    %70 = vector.load %arg9[%c0_22, %c0_23] : memref<64x64xf32, #tpu.memory_space<vmem>>, vector<64x8xf32>
    tpu.vector_store %arg9[%c0_22, %c0_23], %69 {strides = array<i32>} : memref<64x64xf32, #tpu.memory_space<vmem>>, vector<64x8xf32>,
    %71 = vector.extract_strided_slice %29 {offsets = [0, 0, 8], sizes = [4, 16, 8], strides = [1, 1, 1]} : vector<4x16x64xf32> to vector<4x16x8xf32>
    %72 = arith.truncf %71 : vector<4x16x8xf32> to vector<4x16x8xbf16>
    %73 = vector.extract_strided_slice %31 {offsets = [0, 0, 8], sizes = [4, 16, 8], strides = [1, 1, 1]} : vector<4x16x64xf32> to vector<4x16x8xf32>
    %74 = arith.truncf %73 : vector<4x16x8xf32> to vector<4x16x8xbf16>
    %75 = vector.extract_strided_slice %33 {offsets = [0, 0, 8], sizes = [4, 16, 8], strides = [1, 1, 1]} : vector<4x16x64xf32> to vector<4x16x8xf32>
    "tpu.trace_start"() <{level = 10 : i32, message = "blc,bmc->blm"}> : () -> ()
    %cst_24 = arith.constant dense<0.000000e+00> : vector<4x16x16xf32>
    %76 = tpu.matmul %72, %74, %cst_24 {dimension_numbers = #tpu.dot_dimension_numbers<[2], [2], [1], [1], [0, 0, 0, 1, 1, 1], [0], [0]>} : vector<4x16x8xbf16>, vector<4x16x8xbf16>, vector<4x16x16xf32> -> vector<4x16x16xf32>
    "tpu.trace_stop"() : () -> ()
    %cst_25 = arith.constant 0.353553385 : f32
    %77 = vector.broadcast %cst_25 : f32 to vector<4x16x16xf32>
    %78 = arith.mulf %76, %77 : vector<4x16x16xf32>
    %79 = math.absf %78 : vector<4x16x16xf32>
    %80 = math.sqrt %79 : vector<4x16x16xf32>
    %cst_26 = arith.constant 0.000000e+00 : f32
    %81 = vector.broadcast %cst_26 : f32 to vector<4x16x16xf32>
    %82 = arith.cmpf oge, %78, %81 : vector<4x16x16xf32>
    %cst_27 = arith.constant 0.000000e+00 : f32
    %83 = vector.broadcast %cst_27 : f32 to vector<4x16x16xf32>
    %84 = arith.subf %83, %80 : vector<4x16x16xf32>
    %85 = arith.select %82, %80, %84 : vector<4x16x16xi1>, vector<4x16x16xf32>
    %cst_28 = arith.constant dense<0xFF800000> : vector<4x16xf32>
    %86 = vector.multi_reduction <maximumf>, %85, %cst_28 [2] : vector<4x16x16xf32> to vector<4x16xf32>
    %87 = vector.shape_cast %86 : vector<4x16xf32> to vector<4x16x1xf32>
    %88 = vector.broadcast %87 : vector<4x16x1xf32> to vector<4x16x16xf32>
    %89 = arith.subf %85, %88 : vector<4x16x16xf32>
    %90 = math.exp %89 : vector<4x16x16xf32>
    %cst_29 = arith.constant dense<0.000000e+00> : vector<4x16xf32>
    %91 = vector.multi_reduction <add>, %90, %cst_29 [2] : vector<4x16x16xf32> to vector<4x16xf32>
    %92 = vector.shape_cast %91 : vector<4x16xf32> to vector<4x16x1xf32>
    %93 = tpu.reciprocal %92 {approx = true} : vector<4x16x1xf32> -> vector<4x16x1xf32>
    %94 = vector.broadcast %93 : vector<4x16x1xf32> to vector<4x16x16xf32>
    %95 = arith.mulf %90, %94 : vector<4x16x16xf32>
    "tpu.trace_start"() <{level = 10 : i32, message = "blm,bmc->blc"}> : () -> ()
    %cst_30 = arith.constant dense<0.000000e+00> : vector<4x16x8xf32>
    %96 = tpu.matmul %95, %75, %cst_30 {dimension_numbers = #tpu.dot_dimension_numbers<[2], [1], [1], [2], [0, 0, 0, 1, 1, 2], [0], [0]>} : vector<4x16x16xf32>, vector<4x16x8xf32>, vector<4x16x8xf32> -> vector<4x16x8xf32>
    "tpu.trace_stop"() : () -> ()
    %97 = vector.shape_cast %96 : vector<4x16x8xf32> to vector<64x8xf32>
    %c0_31 = arith.constant 0 : index
    %c8 = arith.constant 8 : index
    %98 = vector.load %arg9[%c0_31, %c8] : memref<64x64xf32, #tpu.memory_space<vmem>>, vector<64x8xf32>
    tpu.vector_store %arg9[%c0_31, %c8], %97 {strides = array<i32>} : memref<64x64xf32, #tpu.memory_space<vmem>>, vector<64x8xf32>,
    %99 = vector.extract_strided_slice %29 {offsets = [0, 0, 16], sizes = [4, 16, 8], strides = [1, 1, 1]} : vector<4x16x64xf32> to vector<4x16x8xf32>
    %100 = arith.truncf %99 : vector<4x16x8xf32> to vector<4x16x8xbf16>
    %101 = vector.extract_strided_slice %31 {offsets = [0, 0, 16], sizes = [4, 16, 8], strides = [1, 1, 1]} : vector<4x16x64xf32> to vector<4x16x8xf32>
    %102 = arith.truncf %101 : vector<4x16x8xf32> to vector<4x16x8xbf16>
    %103 = vector.extract_strided_slice %33 {offsets = [0, 0, 16], sizes = [4, 16, 8], strides = [1, 1, 1]} : vector<4x16x64xf32> to vector<4x16x8xf32>
    "tpu.trace_start"() <{level = 10 : i32, message = "blc,bmc->blm"}> : () -> ()
    %cst_32 = arith.constant dense<0.000000e+00> : vector<4x16x16xf32>
    %104 = tpu.matmul %100, %102, %cst_32 {dimension_numbers = #tpu.dot_dimension_numbers<[2], [2], [1], [1], [0, 0, 0, 1, 1, 1], [0], [0]>} : vector<4x16x8xbf16>, vector<4x16x8xbf16>, vector<4x16x16xf32> -> vector<4x16x16xf32>
    "tpu.trace_stop"() : () -> ()
    %cst_33 = arith.constant 0.353553385 : f32
    %105 = vector.broadcast %cst_33 : f32 to vector<4x16x16xf32>
    %106 = arith.mulf %104, %105 : vector<4x16x16xf32>
    %107 = math.absf %106 : vector<4x16x16xf32>
    %108 = math.sqrt %107 : vector<4x16x16xf32>
    %cst_34 = arith.constant 0.000000e+00 : f32
    %109 = vector.broadcast %cst_34 : f32 to vector<4x16x16xf32>
    %110 = arith.cmpf oge, %106, %109 : vector<4x16x16xf32>
    %cst_35 = arith.constant 0.000000e+00 : f32
    %111 = vector.broadcast %cst_35 : f32 to vector<4x16x16xf32>
    %112 = arith.subf %111, %108 : vector<4x16x16xf32>
    %113 = arith.select %110, %108, %112 : vector<4x16x16xi1>, vector<4x16x16xf32>
    %cst_36 = arith.constant dense<0xFF800000> : vector<4x16xf32>
    %114 = vector.multi_reduction <maximumf>, %113, %cst_36 [2] : vector<4x16x16xf32> to vector<4x16xf32>
    %115 = vector.shape_cast %114 : vector<4x16xf32> to vector<4x16x1xf32>
    %116 = vector.broadcast %115 : vector<4x16x1xf32> to vector<4x16x16xf32>
    %117 = arith.subf %113, %116 : vector<4x16x16xf32>
    %118 = math.exp %117 : vector<4x16x16xf32>
    %cst_37 = arith.constant dense<0.000000e+00> : vector<4x16xf32>
    %119 = vector.multi_reduction <add>, %118, %cst_37 [2] : vector<4x16x16xf32> to vector<4x16xf32>
    %120 = vector.shape_cast %119 : vector<4x16xf32> to vector<4x16x1xf32>
    %121 = tpu.reciprocal %120 {approx = true} : vector<4x16x1xf32> -> vector<4x16x1xf32>
    %122 = vector.broadcast %121 : vector<4x16x1xf32> to vector<4x16x16xf32>
    %123 = arith.mulf %118, %122 : vector<4x16x16xf32>
    "tpu.trace_start"() <{level = 10 : i32, message = "blm,bmc->blc"}> : () -> ()
    %cst_38 = arith.constant dense<0.000000e+00> : vector<4x16x8xf32>
    %124 = tpu.matmul %123, %103, %cst_38 {dimension_numbers = #tpu.dot_dimension_numbers<[2], [1], [1], [2], [0, 0, 0, 1, 1, 2], [0], [0]>} : vector<4x16x16xf32>, vector<4x16x8xf32>, vector<4x16x8xf32> -> vector<4x16x8xf32>
    "tpu.trace_stop"() : () -> ()
    %125 = vector.shape_cast %124 : vector<4x16x8xf32> to vector<64x8xf32>
    %c0_39 = arith.constant 0 : index
    %c16 = arith.constant 16 : index
    %126 = vector.load %arg9[%c0_39, %c16] : memref<64x64xf32, #tpu.memory_space<vmem>>, vector<64x8xf32>
    tpu.vector_store %arg9[%c0_39, %c16], %125 {strides = array<i32>} : memref<64x64xf32, #tpu.memory_space<vmem>>, vector<64x8xf32>,
    %127 = vector.extract_strided_slice %29 {offsets = [0, 0, 24], sizes = [4, 16, 8], strides = [1, 1, 1]} : vector<4x16x64xf32> to vector<4x16x8xf32>
    %128 = arith.truncf %127 : vector<4x16x8xf32> to vector<4x16x8xbf16>
    %129 = vector.extract_strided_slice %31 {offsets = [0, 0, 24], sizes = [4, 16, 8], strides = [1, 1, 1]} : vector<4x16x64xf32> to vector<4x16x8xf32>
    %130 = arith.truncf %129 : vector<4x16x8xf32> to vector<4x16x8xbf16>
    %131 = vector.extract_strided_slice %33 {offsets = [0, 0, 24], sizes = [4, 16, 8], strides = [1, 1, 1]} : vector<4x16x64xf32> to vector<4x16x8xf32>
    "tpu.trace_start"() <{level = 10 : i32, message = "blc,bmc->blm"}> : () -> ()
    %cst_40 = arith.constant dense<0.000000e+00> : vector<4x16x16xf32>
    %132 = tpu.matmul %128, %130, %cst_40 {dimension_numbers = #tpu.dot_dimension_numbers<[2], [2], [1], [1], [0, 0, 0, 1, 1, 1], [0], [0]>} : vector<4x16x8xbf16>, vector<4x16x8xbf16>, vector<4x16x16xf32> -> vector<4x16x16xf32>
    "tpu.trace_stop"() : () -> ()
    %cst_41 = arith.constant 0.353553385 : f32
    %133 = vector.broadcast %cst_41 : f32 to vector<4x16x16xf32>
    %134 = arith.mulf %132, %133 : vector<4x16x16xf32>
    %135 = math.absf %134 : vector<4x16x16xf32>
    %136 = math.sqrt %135 : vector<4x16x16xf32>
    %cst_42 = arith.constant 0.000000e+00 : f32
    %137 = vector.broadcast %cst_42 : f32 to vector<4x16x16xf32>
    %138 = arith.cmpf oge, %134, %137 : vector<4x16x16xf32>
    %cst_43 = arith.constant 0.000000e+00 : f32
    %139 = vector.broadcast %cst_43 : f32 to vector<4x16x16xf32>
    %140 = arith.subf %139, %136 : vector<4x16x16xf32>
    %141 = arith.select %138, %136, %140 : vector<4x16x16xi1>, vector<4x16x16xf32>
    %cst_44 = arith.constant dense<0xFF800000> : vector<4x16xf32>
    %142 = vector.multi_reduction <maximumf>, %141, %cst_44 [2] : vector<4x16x16xf32> to vector<4x16xf32>
    %143 = vector.shape_cast %142 : vector<4x16xf32> to vector<4x16x1xf32>
    %144 = vector.broadcast %143 : vector<4x16x1xf32> to vector<4x16x16xf32>
    %145 = arith.subf %141, %144 : vector<4x16x16xf32>
    %146 = math.exp %145 : vector<4x16x16xf32>
    %cst_45 = arith.constant dense<0.000000e+00> : vector<4x16xf32>
    %147 = vector.multi_reduction <add>, %146, %cst_45 [2] : vector<4x16x16xf32> to vector<4x16xf32>
    %148 = vector.shape_cast %147 : vector<4x16xf32> to vector<4x16x1xf32>
    %149 = tpu.reciprocal %148 {approx = true} : vector<4x16x1xf32> -> vector<4x16x1xf32>
    %150 = vector.broadcast %149 : vector<4x16x1xf32> to vector<4x16x16xf32>
    %151 = arith.mulf %146, %150 : vector<4x16x16xf32>
    "tpu.trace_start"() <{level = 10 : i32, message = "blm,bmc->blc"}> : () -> ()
    %cst_46 = arith.constant dense<0.000000e+00> : vector<4x16x8xf32>
    %152 = tpu.matmul %151, %131, %cst_46 {dimension_numbers = #tpu.dot_dimension_numbers<[2], [1], [1], [2], [0, 0, 0, 1, 1, 2], [0], [0]>} : vector<4x16x16xf32>, vector<4x16x8xf32>, vector<4x16x8xf32> -> vector<4x16x8xf32>
    "tpu.trace_stop"() : () -> ()
    %153 = vector.shape_cast %152 : vector<4x16x8xf32> to vector<64x8xf32>
    %c0_47 = arith.constant 0 : index
    %c24 = arith.constant 24 : index
    %154 = vector.load %arg9[%c0_47, %c24] : memref<64x64xf32, #tpu.memory_space<vmem>>, vector<64x8xf32>
    tpu.vector_store %arg9[%c0_47, %c24], %153 {strides = array<i32>} : memref<64x64xf32, #tpu.memory_space<vmem>>, vector<64x8xf32>,
    %155 = vector.extract_strided_slice %29 {offsets = [0, 0, 32], sizes = [4, 16, 8], strides = [1, 1, 1]} : vector<4x16x64xf32> to vector<4x16x8xf32>
    %156 = arith.truncf %155 : vector<4x16x8xf32> to vector<4x16x8xbf16>
    %157 = vector.extract_strided_slice %31 {offsets = [0, 0, 32], sizes = [4, 16, 8], strides = [1, 1, 1]} : vector<4x16x64xf32> to vector<4x16x8xf32>
    %158 = arith.truncf %157 : vector<4x16x8xf32> to vector<4x16x8xbf16>
    %159 = vector.extract_strided_slice %33 {offsets = [0, 0, 32], sizes = [4, 16, 8], strides = [1, 1, 1]} : vector<4x16x64xf32> to vector<4x16x8xf32>
    "tpu.trace_start"() <{level = 10 : i32, message = "blc,bmc->blm"}> : () -> ()
    %cst_48 = arith.constant dense<0.000000e+00> : vector<4x16x16xf32>
    %160 = tpu.matmul %156, %158, %cst_48 {dimension_numbers = #tpu.dot_dimension_numbers<[2], [2], [1], [1], [0, 0, 0, 1, 1, 1], [0], [0]>} : vector<4x16x8xbf16>, vector<4x16x8xbf16>, vector<4x16x16xf32> -> vector<4x16x16xf32>
    "tpu.trace_stop"() : () -> ()
    %cst_49 = arith.constant 0.353553385 : f32
    %161 = vector.broadcast %cst_49 : f32 to vector<4x16x16xf32>
    %162 = arith.mulf %160, %161 : vector<4x16x16xf32>
    %163 = math.absf %162 : vector<4x16x16xf32>
    %164 = math.sqrt %163 : vector<4x16x16xf32>
    %cst_50 = arith.constant 0.000000e+00 : f32
    %165 = vector.broadcast %cst_50 : f32 to vector<4x16x16xf32>
    %166 = arith.cmpf oge, %162, %165 : vector<4x16x16xf32>
    %cst_51 = arith.constant 0.000000e+00 : f32
    %167 = vector.broadcast %cst_51 : f32 to vector<4x16x16xf32>
    %168 = arith.subf %167, %164 : vector<4x16x16xf32>
    %169 = arith.select %166, %164, %168 : vector<4x16x16xi1>, vector<4x16x16xf32>
    %cst_52 = arith.constant dense<0xFF800000> : vector<4x16xf32>
    %170 = vector.multi_reduction <maximumf>, %169, %cst_52 [2] : vector<4x16x16xf32> to vector<4x16xf32>
    %171 = vector.shape_cast %170 : vector<4x16xf32> to vector<4x16x1xf32>
    %172 = vector.broadcast %171 : vector<4x16x1xf32> to vector<4x16x16xf32>
    %173 = arith.subf %169, %172 : vector<4x16x16xf32>
    %174 = math.exp %173 : vector<4x16x16xf32>
    %cst_53 = arith.constant dense<0.000000e+00> : vector<4x16xf32>
    %175 = vector.multi_reduction <add>, %174, %cst_53 [2] : vector<4x16x16xf32> to vector<4x16xf32>
    %176 = vector.shape_cast %175 : vector<4x16xf32> to vector<4x16x1xf32>
    %177 = tpu.reciprocal %176 {approx = true} : vector<4x16x1xf32> -> vector<4x16x1xf32>
    %178 = vector.broadcast %177 : vector<4x16x1xf32> to vector<4x16x16xf32>
    %179 = arith.mulf %174, %178 : vector<4x16x16xf32>
    "tpu.trace_start"() <{level = 10 : i32, message = "blm,bmc->blc"}> : () -> ()
    %cst_54 = arith.constant dense<0.000000e+00> : vector<4x16x8xf32>
    %180 = tpu.matmul %179, %159, %cst_54 {dimension_numbers = #tpu.dot_dimension_numbers<[2], [1], [1], [2], [0, 0, 0, 1, 1, 2], [0], [0]>} : vector<4x16x16xf32>, vector<4x16x8xf32>, vector<4x16x8xf32> -> vector<4x16x8xf32>
    "tpu.trace_stop"() : () -> ()
    %181 = vector.shape_cast %180 : vector<4x16x8xf32> to vector<64x8xf32>
    %c0_55 = arith.constant 0 : index
    %c32 = arith.constant 32 : index
    %182 = vector.load %arg9[%c0_55, %c32] : memref<64x64xf32, #tpu.memory_space<vmem>>, vector<64x8xf32>
    tpu.vector_store %arg9[%c0_55, %c32], %181 {strides = array<i32>} : memref<64x64xf32, #tpu.memory_space<vmem>>, vector<64x8xf32>,
    %183 = vector.extract_strided_slice %29 {offsets = [0, 0, 40], sizes = [4, 16, 8], strides = [1, 1, 1]} : vector<4x16x64xf32> to vector<4x16x8xf32>
    %184 = arith.truncf %183 : vector<4x16x8xf32> to vector<4x16x8xbf16>
    %185 = vector.extract_strided_slice %31 {offsets = [0, 0, 40], sizes = [4, 16, 8], strides = [1, 1, 1]} : vector<4x16x64xf32> to vector<4x16x8xf32>
    %186 = arith.truncf %185 : vector<4x16x8xf32> to vector<4x16x8xbf16>
    %187 = vector.extract_strided_slice %33 {offsets = [0, 0, 40], sizes = [4, 16, 8], strides = [1, 1, 1]} : vector<4x16x64xf32> to vector<4x16x8xf32>
    "tpu.trace_start"() <{level = 10 : i32, message = "blc,bmc->blm"}> : () -> ()
    %cst_56 = arith.constant dense<0.000000e+00> : vector<4x16x16xf32>
    %188 = tpu.matmul %184, %186, %cst_56 {dimension_numbers = #tpu.dot_dimension_numbers<[2], [2], [1], [1], [0, 0, 0, 1, 1, 1], [0], [0]>} : vector<4x16x8xbf16>, vector<4x16x8xbf16>, vector<4x16x16xf32> -> vector<4x16x16xf32>
    "tpu.trace_stop"() : () -> ()
    %cst_57 = arith.constant 0.353553385 : f32
    %189 = vector.broadcast %cst_57 : f32 to vector<4x16x16xf32>
    %190 = arith.mulf %188, %189 : vector<4x16x16xf32>
    %191 = math.absf %190 : vector<4x16x16xf32>
    %192 = math.sqrt %191 : vector<4x16x16xf32>
    %cst_58 = arith.constant 0.000000e+00 : f32
    %193 = vector.broadcast %cst_58 : f32 to vector<4x16x16xf32>
    %194 = arith.cmpf oge, %190, %193 : vector<4x16x16xf32>
    %cst_59 = arith.constant 0.000000e+00 : f32
    %195 = vector.broadcast %cst_59 : f32 to vector<4x16x16xf32>
    %196 = arith.subf %195, %192 : vector<4x16x16xf32>
    %197 = arith.select %194, %192, %196 : vector<4x16x16xi1>, vector<4x16x16xf32>
    %cst_60 = arith.constant dense<0xFF800000> : vector<4x16xf32>
    %198 = vector.multi_reduction <maximumf>, %197, %cst_60 [2] : vector<4x16x16xf32> to vector<4x16xf32>
    %199 = vector.shape_cast %198 : vector<4x16xf32> to vector<4x16x1xf32>
    %200 = vector.broadcast %199 : vector<4x16x1xf32> to vector<4x16x16xf32>
    %201 = arith.subf %197, %200 : vector<4x16x16xf32>
    %202 = math.exp %201 : vector<4x16x16xf32>
    %cst_61 = arith.constant dense<0.000000e+00> : vector<4x16xf32>
    %203 = vector.multi_reduction <add>, %202, %cst_61 [2] : vector<4x16x16xf32> to vector<4x16xf32>
    %204 = vector.shape_cast %203 : vector<4x16xf32> to vector<4x16x1xf32>
    %205 = tpu.reciprocal %204 {approx = true} : vector<4x16x1xf32> -> vector<4x16x1xf32>
    %206 = vector.broadcast %205 : vector<4x16x1xf32> to vector<4x16x16xf32>
    %207 = arith.mulf %202, %206 : vector<4x16x16xf32>
    "tpu.trace_start"() <{level = 10 : i32, message = "blm,bmc->blc"}> : () -> ()
    %cst_62 = arith.constant dense<0.000000e+00> : vector<4x16x8xf32>
    %208 = tpu.matmul %207, %187, %cst_62 {dimension_numbers = #tpu.dot_dimension_numbers<[2], [1], [1], [2], [0, 0, 0, 1, 1, 2], [0], [0]>} : vector<4x16x16xf32>, vector<4x16x8xf32>, vector<4x16x8xf32> -> vector<4x16x8xf32>
    "tpu.trace_stop"() : () -> ()
    %209 = vector.shape_cast %208 : vector<4x16x8xf32> to vector<64x8xf32>
    %c0_63 = arith.constant 0 : index
    %c40 = arith.constant 40 : index
    %210 = vector.load %arg9[%c0_63, %c40] : memref<64x64xf32, #tpu.memory_space<vmem>>, vector<64x8xf32>
    tpu.vector_store %arg9[%c0_63, %c40], %209 {strides = array<i32>} : memref<64x64xf32, #tpu.memory_space<vmem>>, vector<64x8xf32>,
    %211 = vector.extract_strided_slice %29 {offsets = [0, 0, 48], sizes = [4, 16, 8], strides = [1, 1, 1]} : vector<4x16x64xf32> to vector<4x16x8xf32>
    %212 = arith.truncf %211 : vector<4x16x8xf32> to vector<4x16x8xbf16>
    %213 = vector.extract_strided_slice %31 {offsets = [0, 0, 48], sizes = [4, 16, 8], strides = [1, 1, 1]} : vector<4x16x64xf32> to vector<4x16x8xf32>
    %214 = arith.truncf %213 : vector<4x16x8xf32> to vector<4x16x8xbf16>
    %215 = vector.extract_strided_slice %33 {offsets = [0, 0, 48], sizes = [4, 16, 8], strides = [1, 1, 1]} : vector<4x16x64xf32> to vector<4x16x8xf32>
    "tpu.trace_start"() <{level = 10 : i32, message = "blc,bmc->blm"}> : () -> ()
    %cst_64 = arith.constant dense<0.000000e+00> : vector<4x16x16xf32>
    %216 = tpu.matmul %212, %214, %cst_64 {dimension_numbers = #tpu.dot_dimension_numbers<[2], [2], [1], [1], [0, 0, 0, 1, 1, 1], [0], [0]>} : vector<4x16x8xbf16>, vector<4x16x8xbf16>, vector<4x16x16xf32> -> vector<4x16x16xf32>
    "tpu.trace_stop"() : () -> ()
    %cst_65 = arith.constant 0.353553385 : f32
    %217 = vector.broadcast %cst_65 : f32 to vector<4x16x16xf32>
    %218 = arith.mulf %216, %217 : vector<4x16x16xf32>
    %219 = math.absf %218 : vector<4x16x16xf32>
    %220 = math.sqrt %219 : vector<4x16x16xf32>
    %cst_66 = arith.constant 0.000000e+00 : f32
    %221 = vector.broadcast %cst_66 : f32 to vector<4x16x16xf32>
    %222 = arith.cmpf oge, %218, %221 : vector<4x16x16xf32>
    %cst_67 = arith.constant 0.000000e+00 : f32
    %223 = vector.broadcast %cst_67 : f32 to vector<4x16x16xf32>
    %224 = arith.subf %223, %220 : vector<4x16x16xf32>
    %225 = arith.select %222, %220, %224 : vector<4x16x16xi1>, vector<4x16x16xf32>
    %cst_68 = arith.constant dense<0xFF800000> : vector<4x16xf32>
    %226 = vector.multi_reduction <maximumf>, %225, %cst_68 [2] : vector<4x16x16xf32> to vector<4x16xf32>
    %227 = vector.shape_cast %226 : vector<4x16xf32> to vector<4x16x1xf32>
    %228 = vector.broadcast %227 : vector<4x16x1xf32> to vector<4x16x16xf32>
    %229 = arith.subf %225, %228 : vector<4x16x16xf32>
    %230 = math.exp %229 : vector<4x16x16xf32>
    %cst_69 = arith.constant dense<0.000000e+00> : vector<4x16xf32>
    %231 = vector.multi_reduction <add>, %230, %cst_69 [2] : vector<4x16x16xf32> to vector<4x16xf32>
    %232 = vector.shape_cast %231 : vector<4x16xf32> to vector<4x16x1xf32>
    %233 = tpu.reciprocal %232 {approx = true} : vector<4x16x1xf32> -> vector<4x16x1xf32>
    %234 = vector.broadcast %233 : vector<4x16x1xf32> to vector<4x16x16xf32>
    %235 = arith.mulf %230, %234 : vector<4x16x16xf32>
    "tpu.trace_start"() <{level = 10 : i32, message = "blm,bmc->blc"}> : () -> ()
    %cst_70 = arith.constant dense<0.000000e+00> : vector<4x16x8xf32>
    %236 = tpu.matmul %235, %215, %cst_70 {dimension_numbers = #tpu.dot_dimension_numbers<[2], [1], [1], [2], [0, 0, 0, 1, 1, 2], [0], [0]>} : vector<4x16x16xf32>, vector<4x16x8xf32>, vector<4x16x8xf32> -> vector<4x16x8xf32>
    "tpu.trace_stop"() : () -> ()
    %237 = vector.shape_cast %236 : vector<4x16x8xf32> to vector<64x8xf32>
    %c0_71 = arith.constant 0 : index
    %c48 = arith.constant 48 : index
    %238 = vector.load %arg9[%c0_71, %c48] : memref<64x64xf32, #tpu.memory_space<vmem>>, vector<64x8xf32>
    tpu.vector_store %arg9[%c0_71, %c48], %237 {strides = array<i32>} : memref<64x64xf32, #tpu.memory_space<vmem>>, vector<64x8xf32>,
    %239 = vector.extract_strided_slice %29 {offsets = [0, 0, 56], sizes = [4, 16, 8], strides = [1, 1, 1]} : vector<4x16x64xf32> to vector<4x16x8xf32>
    %240 = arith.truncf %239 : vector<4x16x8xf32> to vector<4x16x8xbf16>
    %241 = vector.extract_strided_slice %31 {offsets = [0, 0, 56], sizes = [4, 16, 8], strides = [1, 1, 1]} : vector<4x16x64xf32> to vector<4x16x8xf32>
    %242 = arith.truncf %241 : vector<4x16x8xf32> to vector<4x16x8xbf16>
    %243 = vector.extract_strided_slice %33 {offsets = [0, 0, 56], sizes = [4, 16, 8], strides = [1, 1, 1]} : vector<4x16x64xf32> to vector<4x16x8xf32>
    "tpu.trace_start"() <{level = 10 : i32, message = "blc,bmc->blm"}> : () -> ()
    %cst_72 = arith.constant dense<0.000000e+00> : vector<4x16x16xf32>
    %244 = tpu.matmul %240, %242, %cst_72 {dimension_numbers = #tpu.dot_dimension_numbers<[2], [2], [1], [1], [0, 0, 0, 1, 1, 1], [0], [0]>} : vector<4x16x8xbf16>, vector<4x16x8xbf16>, vector<4x16x16xf32> -> vector<4x16x16xf32>
    "tpu.trace_stop"() : () -> ()
    %cst_73 = arith.constant 0.353553385 : f32
    %245 = vector.broadcast %cst_73 : f32 to vector<4x16x16xf32>
    %246 = arith.mulf %244, %245 : vector<4x16x16xf32>
    %247 = math.absf %246 : vector<4x16x16xf32>
    %248 = math.sqrt %247 : vector<4x16x16xf32>
    %cst_74 = arith.constant 0.000000e+00 : f32
    %249 = vector.broadcast %cst_74 : f32 to vector<4x16x16xf32>
    %250 = arith.cmpf oge, %246, %249 : vector<4x16x16xf32>
    %cst_75 = arith.constant 0.000000e+00 : f32
    %251 = vector.broadcast %cst_75 : f32 to vector<4x16x16xf32>
    %252 = arith.subf %251, %248 : vector<4x16x16xf32>
    %253 = arith.select %250, %248, %252 : vector<4x16x16xi1>, vector<4x16x16xf32>
    %cst_76 = arith.constant dense<0xFF800000> : vector<4x16xf32>
    %254 = vector.multi_reduction <maximumf>, %253, %cst_76 [2] : vector<4x16x16xf32> to vector<4x16xf32>
    %255 = vector.shape_cast %254 : vector<4x16xf32> to vector<4x16x1xf32>
    %256 = vector.broadcast %255 : vector<4x16x1xf32> to vector<4x16x16xf32>
    %257 = arith.subf %253, %256 : vector<4x16x16xf32>
    %258 = math.exp %257 : vector<4x16x16xf32>
    %cst_77 = arith.constant dense<0.000000e+00> : vector<4x16xf32>
    %259 = vector.multi_reduction <add>, %258, %cst_77 [2] : vector<4x16x16xf32> to vector<4x16xf32>
    %260 = vector.shape_cast %259 : vector<4x16xf32> to vector<4x16x1xf32>
    %261 = tpu.reciprocal %260 {approx = true} : vector<4x16x1xf32> -> vector<4x16x1xf32>
    %262 = vector.broadcast %261 : vector<4x16x1xf32> to vector<4x16x16xf32>
    %263 = arith.mulf %258, %262 : vector<4x16x16xf32>
    "tpu.trace_start"() <{level = 10 : i32, message = "blm,bmc->blc"}> : () -> ()
    %cst_78 = arith.constant dense<0.000000e+00> : vector<4x16x8xf32>
    %264 = tpu.matmul %263, %243, %cst_78 {dimension_numbers = #tpu.dot_dimension_numbers<[2], [1], [1], [2], [0, 0, 0, 1, 1, 2], [0], [0]>} : vector<4x16x16xf32>, vector<4x16x8xf32>, vector<4x16x8xf32> -> vector<4x16x8xf32>
    "tpu.trace_stop"() : () -> ()
    %265 = vector.shape_cast %264 : vector<4x16x8xf32> to vector<64x8xf32>
    %c0_79 = arith.constant 0 : index
    %c56 = arith.constant 56 : index
    %266 = vector.load %arg9[%c0_79, %c56] : memref<64x64xf32, #tpu.memory_space<vmem>>, vector<64x8xf32>
    tpu.vector_store %arg9[%c0_79, %c56], %265 {strides = array<i32>} : memref<64x64xf32, #tpu.memory_space<vmem>>, vector<64x8xf32>,
    %c0_80 = arith.constant 0 : index
    %c0_81 = arith.constant 0 : index
    %267 = vector.load %arg9[%c0_80, %c0_81] : memref<64x64xf32, #tpu.memory_space<vmem>>, vector<64x64xf32>
    %268 = arith.mulf %267, %42 : vector<64x64xf32>
    %269 = arith.truncf %268 : vector<64x64xf32> to vector<64x64xbf16>
    %c0_82 = arith.constant 0 : index
    %c0_83 = arith.constant 0 : index
    %270 = vector.load %arg6[%c0_82, %c0_83] : memref<64x32xbf16, #tpu.memory_space<vmem>>, vector<64x32xbf16>
    %cst_84 = arith.constant dense<0.000000e+00> : vector<64x32xf32>
    %271 = tpu.matmul %269, %270, %cst_84 {dimension_numbers = #tpu.dot_dimension_numbers<[1], [0], [0], [1], [0, 0, 1, 1], [], []>} : vector<64x64xbf16>, vector<64x32xbf16>, vector<64x32xf32> -> vector<64x32xf32>
    %c0_85 = arith.constant 0 : index
    %c0_86 = arith.constant 0 : index
    %272 = vector.load %arg7[%c0_85, %c0_86] : memref<1x32xf32, #tpu.memory_space<vmem>>, vector<1x32xf32>
    %273 = vector.broadcast %272 : vector<1x32xf32> to vector<64x32xf32>
    %274 = arith.addf %271, %273 : vector<64x32xf32>
    %c0_87 = arith.constant 0 : index
    %c0_88 = arith.constant 0 : index
    %275 = vector.load %arg8[%c0_87, %c0_88] : memref<64x32xf32, #tpu.memory_space<vmem>>, vector<64x32xf32>
    tpu.vector_store %arg8[%c0_87, %c0_88], %274 {strides = array<i32>} : memref<64x32xf32, #tpu.memory_space<vmem>>, vector<64x32xf32>,
    return
  }
  func.func @transform_0(%arg0: i32) -> (i32, i32) {
    %c0_i32 = arith.constant 0 : i32
    %c0_i32_0 = arith.constant 0 : i32
    return %arg0, %c0_i32 : i32, i32
  }
  func.func @transform_1(%arg0: i32) -> (i32, i32) {
    %c0_i32 = arith.constant 0 : i32
    %c0_i32_0 = arith.constant 0 : i32
    %c0_i32_1 = arith.constant 0 : i32
    return %c0_i32, %c0_i32_0 : i32, i32
  }
  func.func @transform_2(%arg0: i32) -> (i32, i32) {
    %c0_i32 = arith.constant 0 : i32
    %c0_i32_0 = arith.constant 0 : i32
    %c0_i32_1 = arith.constant 0 : i32
    return %c0_i32, %c0_i32_0 : i32, i32
  }
  func.func @transform_3(%arg0: i32) -> (i32, i32) {
    %c0_i32 = arith.constant 0 : i32
    %c0_i32_0 = arith.constant 0 : i32
    %c0_i32_1 = arith.constant 0 : i32
    return %c0_i32, %c0_i32_0 : i32, i32
  }
  func.func @transform_4(%arg0: i32) -> (i32, i32) {
    %c0_i32 = arith.constant 0 : i32
    %c0_i32_0 = arith.constant 0 : i32
    %c0_i32_1 = arith.constant 0 : i32
    return %c0_i32, %c0_i32_0 : i32, i32
  }
  func.func @transform_5(%arg0: i32) -> (i32, i32) {
    %c0_i32 = arith.constant 0 : i32
    %c0_i32_0 = arith.constant 0 : i32
    %c0_i32_1 = arith.constant 0 : i32
    return %c0_i32, %c0_i32_0 : i32, i32
  }
  func.func @transform_6(%arg0: i32) -> (i32, i32) {
    %c0_i32 = arith.constant 0 : i32
    %c0_i32_0 = arith.constant 0 : i32
    %c0_i32_1 = arith.constant 0 : i32
    return %c0_i32, %c0_i32_0 : i32, i32
  }
  func.func @transform_7(%arg0: i32) -> (i32, i32) {
    %c0_i32 = arith.constant 0 : i32
    %c0_i32_0 = arith.constant 0 : i32
    return %arg0, %c0_i32 : i32, i32
  }
}

</mosaic_0001>

<llo_original>
// kernel: tpu_custom_call.1
$region0: #{tpu_custom_call.1}
  #allocation0 [shape = 'u32[]', space=smem, size = 0x4, offset = 0x4, fixed_abs, tag = 'smem constant byte address 0x4 - core index']
  #allocation1 [shape = 'u32[144,128]{1,0:T(1,128)}', space=vmem, size = 0x12000, scoped, tag = 'internal scratch']
  #allocation2 [shape = 'f32[64,64]{1,0:T(8,128)}', space=vmem, size = 0x8000, scoped, tag = 'scratch operand']
  %s0 = inlined_call_operand.vmem [shape: f32[128,32], index: 0, kind: input, shape index: {}]
  %s1 = inlined_call_operand.vmem [shape: f32[1,32], index: 1, kind: input, shape index: {}]
  %s2 = inlined_call_operand.vmem [shape: f32[1,32], index: 2, kind: input, shape index: {}]
  %s3 = inlined_call_operand.vmem [shape: bf16[32,256], index: 3, kind: input, shape index: {}]
  %s4 = inlined_call_operand.vmem [shape: f32[1,64], index: 4, kind: input, shape index: {}]
  %s5 = inlined_call_operand.vmem [shape: bf16[64,32], index: 5, kind: input, shape index: {}]
  %s6 = inlined_call_operand.vmem [shape: f32[1,32], index: 6, kind: input, shape index: {}]
  %s7 = inlined_call_operand.vmem [shape: f32[128,32], index: 7, kind: output, shape index: {}]
  %s8 = sld [smem:[#allocation0]]
  $region61: #{tpu_custom_call.1} parent=0
    _
  %s10 = ssub.s32 1, %s8
  %s11 = scalar_select 0, %s10, %s8
  loop: start=0, step=1, limit=4
  $region2: #{tpu_custom_call.1} parent=0 // loop_pre_header
    _
  $region3: #{tpu_custom_call.1} parent=0 // loop_header
    %s13 = sphi 0, %s17
    %p14 = scmp.ge.s32.totalorder %s13, 4
    %s23 = sphi 0, %s25
    %s26 = sphi 0, %s23
    %s27 = sphi 0, %s26
    %s43 = sphi 0, %s27
    %s47 = sphi 0, %s47
    %s49 = sphi 0, %s47
    %s50 = sphi 0, %s49
    %s64 = sphi 0, %s50
    %s68 = sphi 0, %s68
    %s70 = sphi 0, %s68
    %s71 = sphi 0, %s70
    %s85 = sphi 0, %s71
    %s89 = sphi 0, %s89
    %s91 = sphi 0, %s89
    %s92 = sphi 0, %s91
    %s106 = sphi 0, %s92
    %s110 = sphi 0, %s110
    %s112 = sphi 0, %s110
    %s113 = sphi 0, %s112
    %s127 = sphi 0, %s113
    %s131 = sphi 0, %s131
    %s133 = sphi 0, %s131
    %s134 = sphi 0, %s133
    %s148 = sphi 0, %s134
    %s152 = sphi 0, %s152
    %s154 = sphi 0, %s152
    %s155 = sphi 0, %s154
    %s169 = sphi 0, %s155
    %s175 = sphi 0, %s177
    %s178 = sphi 0, %s175
    %s179 = sphi 0, %s178
    %s195 = sphi 0, %s179
  $region4: #{tpu_custom_call.1} parent=0 // loop_header_branch
    %16 = sbr.rel (%p14) target = $region8
  $region5: #{tpu_custom_call.1} parent=0 // loop_body
    %s18 = ssub.s32 %s13, 1
    %s19 = ssub.s32 %s13, 2
    %s20 = sadd.s32 %s13, 1
    %s21 = ssub.s32 %s13, %s20
    %p22 = scmp.eq.s32.totalorder %s21, 0
    %s24 = sadd.s32 %s23, 1
    %s25 = scalar_select %p22, %s23, %s24
    %p28 = pneg %p22
    %p29 = scmp.eq.s32.totalorder %s13, 1
    %p30 = por %p28, %p29
    %p31 = scmp.ne.s32.totalorder %s23, %s26
    %p32 = scmp.eq.s32.totalorder %s13, 0
    %p33 = por %p31, %p32
    %p34 = scmp.ne.s32.totalorder %s23, %s26
    %p35 = scmp.eq.s32.totalorder %s18, 1
    %p36 = por %p34, %p35
    %p37 = scmp.ne.s32.totalorder %s26, %s27
    %p38 = scmp.eq.s32.totalorder %s18, 0
    %p39 = por %p37, %p38
    %p40 = scmp.ne.s32.totalorder %s26, %s27
    %p41 = scmp.eq.s32.totalorder %s19, 1
    %p42 = por %p40, %p41
    %p44 = scmp.ne.s32.totalorder %s27, %s43
    %p45 = scmp.eq.s32.totalorder %s19, 0
    %p46 = por %p44, %p45
    %s48 = sadd.s32 %s47, 1
    %p51 = scmp.eq.s32.totalorder %s13, 1
    %p52 = scmp.ne.s32.totalorder %s47, %s49
    %p53 = scmp.eq.s32.totalorder %s13, 0
    %p54 = por %p52, %p53
    %p55 = scmp.ne.s32.totalorder %s47, %s49
    %p56 = scmp.eq.s32.totalorder %s18, 1
    %p57 = por %p55, %p56
    %p58 = scmp.ne.s32.totalorder %s49, %s50
    %p59 = scmp.eq.s32.totalorder %s18, 0
    %p60 = por %p58, %p59
    %p61 = scmp.ne.s32.totalorder %s49, %s50
    %p62 = scmp.eq.s32.totalorder %s19, 1
    %p63 = por %p61, %p62
    %p65 = scmp.ne.s32.totalorder %s50, %s64
    %p66 = scmp.eq.s32.totalorder %s19, 0
    %p67 = por %p65, %p66
    %s69 = sadd.s32 %s68, 1
    %p72 = scmp.eq.s32.totalorder %s13, 1
    %p73 = scmp.ne.s32.totalorder %s68, %s70
    %p74 = scmp.eq.s32.totalorder %s13, 0
    %p75 = por %p73, %p74
    %p76 = scmp.ne.s32.totalorder %s68, %s70
    %p77 = scmp.eq.s32.totalorder %s18, 1
    %p78 = por %p76, %p77
    %p79 = scmp.ne.s32.totalorder %s70, %s71
    %p80 = scmp.eq.s32.totalorder %s18, 0
    %p81 = por %p79, %p80
    %p82 = scmp.ne.s32.totalorder %s70, %s71
    %p83 = scmp.eq.s32.totalorder %s19, 1
    %p84 = por %p82, %p83
    %p86 = scmp.ne.s32.totalorder %s71, %s85
    %p87 = scmp.eq.s32.totalorder %s19, 0
    %p88 = por %p86, %p87
    %s90 = sadd.s32 %s89, 1
    %p93 = scmp.eq.s32.totalorder %s13, 1
    %p94 = scmp.ne.s32.totalorder %s89, %s91
    %p95 = scmp.eq.s32.totalorder %s13, 0
    %p96 = por %p94, %p95
    %p97 = scmp.ne.s32.totalorder %s89, %s91
    %p98 = scmp.eq.s32.totalorder %s18, 1
    %p99 = por %p97, %p98
    %p100 = scmp.ne.s32.totalorder %s91, %s92
    %p101 = scmp.eq.s32.totalorder %s18, 0
    %p102 = por %p100, %p101
    %p103 = scmp.ne.s32.totalorder %s91, %s92
    %p104 = scmp.eq.s32.totalorder %s19, 1
    %p105 = por %p103, %p104
    %p107 = scmp.ne.s32.totalorder %s92, %s106
    %p108 = scmp.eq.s32.totalorder %s19, 0
    %p109 = por %p107, %p108
    %s111 = sadd.s32 %s110, 1
    %p114 = scmp.eq.s32.totalorder %s13, 1
    %p115 = scmp.ne.s32.totalorder %s110, %s112
    %p116 = scmp.eq.s32.totalorder %s13, 0
    %p117 = por %p115, %p116
    %p118 = scmp.ne.s32.totalorder %s110, %s112
    %p119 = scmp.eq.s32.totalorder %s18, 1
    %p120 = por %p118, %p119
    %p121 = scmp.ne.s32.totalorder %s112, %s113
    %p122 = scmp.eq.s32.totalorder %s18, 0
    %p123 = por %p121, %p122
    %p124 = scmp.ne.s32.totalorder %s112, %s113
    %p125 = scmp.eq.s32.totalorder %s19, 1
    %p126 = por %p124, %p125
    %p128 = scmp.ne.s32.totalorder %s113, %s127
    %p129 = scmp.eq.s32.totalorder %s19, 0
    %p130 = por %p128, %p129
    %s132 = sadd.s32 %s131, 1
    %p135 = scmp.eq.s32.totalorder %s13, 1
    %p136 = scmp.ne.s32.totalorder %s131, %s133
    %p137 = scmp.eq.s32.totalorder %s13, 0
    %p138 = por %p136, %p137
    %p139 = scmp.ne.s32.totalorder %s131, %s133
    %p140 = scmp.eq.s32.totalorder %s18, 1
    %p141 = por %p139, %p140
    %p142 = scmp.ne.s32.totalorder %s133, %s134
    %p143 = scmp.eq.s32.totalorder %s18, 0
    %p144 = por %p142, %p143
    %p145 = scmp.ne.s32.totalorder %s133, %s134
    %p146 = scmp.eq.s32.totalorder %s19, 1
    %p147 = por %p145, %p146
    %p149 = scmp.ne.s32.totalorder %s134, %s148
    %p150 = scmp.eq.s32.totalorder %s19, 0
    %p151 = por %p149, %p150
    %s153 = sadd.s32 %s152, 1
    %p156 = scmp.eq.s32.totalorder %s13, 1
    %p157 = scmp.ne.s32.totalorder %s152, %s154
    %p158 = scmp.eq.s32.totalorder %s13, 0
    %p159 = por %p157, %p158
    %p160 = scmp.ne.s32.totalorder %s152, %s154
    %p161 = scmp.eq.s32.totalorder %s18, 1
    %p162 = por %p160, %p161
    %p163 = scmp.ne.s32.totalorder %s154, %s155
    %p164 = scmp.eq.s32.totalorder %s18, 0
    %p165 = por %p163, %p164
    %p166 = scmp.ne.s32.totalorder %s154, %s155
    %p167 = scmp.eq.s32.totalorder %s19, 1
    %p168 = por %p166, %p167
    %p170 = scmp.ne.s32.totalorder %s155, %s169
    %p171 = scmp.eq.s32.totalorder %s19, 0
    %p172 = por %p170, %p171
    %s173 = ssub.s32 %s13, %s20
    %p174 = scmp.eq.s32.totalorder %s173, 0
    %s176 = sadd.s32 %s175, 1
    %s177 = scalar_select %p174, %s175, %s176
    %p180 = pneg %p174
    %p181 = scmp.eq.s32.totalorder %s13, 1
    %p182 = por %p180, %p181
    %p183 = scmp.ne.s32.totalorder %s175, %s178
    %p184 = scmp.eq.s32.totalorder %s13, 0
    %p185 = por %p183, %p184
    %p186 = scmp.ne.s32.totalorder %s175, %s178
    %p187 = scmp.eq.s32.totalorder %s18, 1
    %p188 = por %p186, %p187
    %p189 = scmp.ne.s32.totalorder %s178, %s179
    %p190 = scmp.eq.s32.totalorder %s18, 0
    %p191 = por %p189, %p190
    %p192 = scmp.ne.s32.totalorder %s178, %s179
    %p193 = scmp.eq.s32.totalorder %s19, 1
    %p194 = por %p192, %p193
    %p196 = scmp.ne.s32.totalorder %s179, %s195
    %p197 = scmp.eq.s32.totalorder %s19, 0
    %p198 = por %p196, %p197
    %p199 = scmp.le.s32.totalorder 1, %s13
    %p200 = scmp.lt.s32.totalorder %s13, 3
    %p201 = pnand %p199, %p200
    %p202 = pneg %p201
    // Predicated region
    $region9: #{tpu_custom_call.1} parent=5 // pred_check
      _
    $region10: #{tpu_custom_call.1} parent=5 // pred_check_branch
      %204 = sbr.rel (%p201) target = $region12
    $region11: #{tpu_custom_call.1} parent=5 // pred_region
      %s205 = ssub.s32 %s13, 1
      // Predicated region
      $region13: #{tpu_custom_call.1} parent=11 // pred_check
        %p206 = pneg %p60
      $region14: #{tpu_custom_call.1} parent=11 // pred_check_branch
        %208 = sbr.rel (%p206) target = $region16
      $region15: #{tpu_custom_call.1} parent=11 // pred_region
        _
      $region16: #{tpu_custom_call.1} parent=11 // pred_fallthru
        _
      // Predicated region
      $region17: #{tpu_custom_call.1} parent=11 // pred_check
        %p209 = pneg %p81
      $region18: #{tpu_custom_call.1} parent=11 // pred_check_branch
        %211 = sbr.rel (%p209) target = $region20
      $region19: #{tpu_custom_call.1} parent=11 // pred_region
        _
      $region20: #{tpu_custom_call.1} parent=11 // pred_fallthru
        _
      // Predicated region
      $region21: #{tpu_custom_call.1} parent=11 // pred_check
        %p212 = pneg %p102
      $region22: #{tpu_custom_call.1} parent=11 // pred_check_branch
        %214 = sbr.rel (%p212) target = $region24
      $region23: #{tpu_custom_call.1} parent=11 // pred_region
        _
      $region24: #{tpu_custom_call.1} parent=11 // pred_fallthru
        _
      // Predicated region
      $region25: #{tpu_custom_call.1} parent=11 // pred_check
        %p215 = pneg %p123
      $region26: #{tpu_custom_call.1} parent=11 // pred_check_branch
        %217 = sbr.rel (%p215) target = $region28
      $region27: #{tpu_custom_call.1} parent=11 // pred_region
        _
      $region28: #{tpu_custom_call.1} parent=11 // pred_fallthru
        _
      // Predicated region
      $region29: #{tpu_custom_call.1} parent=11 // pred_check
        %p218 = pneg %p144
      $region30: #{tpu_custom_call.1} parent=11 // pred_check_branch
        %220 = sbr.rel (%p218) target = $region32
      $region31: #{tpu_custom_call.1} parent=11 // pred_region
        _
      $region32: #{tpu_custom_call.1} parent=11 // pred_fallthru
        _
      // Predicated region
      $region33: #{tpu_custom_call.1} parent=11 // pred_check
        %p221 = pneg %p165
      $region34: #{tpu_custom_call.1} parent=11 // pred_check_branch
        %223 = sbr.rel (%p221) target = $region36
      $region35: #{tpu_custom_call.1} parent=11 // pred_region
        _
      $region36: #{tpu_custom_call.1} parent=11 // pred_fallthru
        _
    $region12: #{tpu_custom_call.1} parent=5 // pred_fallthru
      _
    %p224 = scmp.lt.s32.totalorder %s13, 2
    // Predicated region
    $region37: #{tpu_custom_call.1} parent=5 // pred_check
      %p225 = pneg %p224
    $region38: #{tpu_custom_call.1} parent=5 // pred_check_branch
      %227 = sbr.rel (%p225) target = $region40
    $region39: #{tpu_custom_call.1} parent=5 // pred_region
      // Predicated region
      $region41: #{tpu_custom_call.1} parent=39 // pred_check
        %p228 = pneg %p33
      $region42: #{tpu_custom_call.1} parent=39 // pred_check_branch
        %230 = sbr.rel (%p228) target = $region44
      $region43: #{tpu_custom_call.1} parent=39 // pred_region
        %s231 = smul.u32 8, %s13
        %p232 = scmp.lt.s32.totalorder %s231, 15
        %s233 = scalar_select %p232, %s231, 15
        %s234 = smul.addr %s233, 8
        %s235 = scalar_lea.vmem %s0, %s234
        %s236 = smul.u32 8, %s13
      $region44: #{tpu_custom_call.1} parent=39 // pred_fallthru
        _
    $region40: #{tpu_custom_call.1} parent=5 // pred_fallthru
      _
    %p237 = scmp.le.s32.totalorder 1, %s13
    %p238 = scmp.lt.s32.totalorder %s13, 3
    %p239 = pnand %p237, %p238
    %p240 = pneg %p239
    // Predicated region
    $region45: #{tpu_custom_call.1} parent=5 // pred_check
      _
    $region46: #{tpu_custom_call.1} parent=5 // pred_check_branch
      %242 = sbr.rel (%p239) target = $region48
    $region47: #{tpu_custom_call.1} parent=5 // pred_region
      %s243 = ssub.s32 %s13, 1
      %s244 = smul.u32 8, %s18
      %p245 = scmp.lt.s32.totalorder %s244, 15
      %s246 = scalar_select %p245, %s244, 15
      %s247 = smul.addr %s246, 8
      %s248 = scalar_lea.vmem %s0, %s247
      %p249 = pneg %p39
      %p250 = pneg %p36
      %p251 = pneg %p60
      %p252 = pneg %p57
      %p253 = pneg %p81
      %p254 = pneg %p78
      %p255 = pneg %p102
      %p256 = pneg %p99
      %p257 = pneg %p123
      %p258 = pneg %p120
      %p259 = pneg %p144
      %p260 = pneg %p141
      %p261 = pneg %p165
      %p262 = pneg %p162
      %p263 = pneg %p191
      %p264 = pneg %p188
      %s265 = smul.u32 8, %s18
      %p266 = scmp.lt.s32.totalorder %s265, 15
      %s267 = scalar_select %p266, %s265, 15
      %s268 = smul.addr %s267, 8
      %s269 = scalar_lea.vmem %s7, %s268
      %s270 = smul.u32 8, %s18
      %p271 = scmp.lt.s32.totalorder %s270, 15
      %s272 = scalar_select %p271, %s270, 15
      %s273 = smul.addr %s272, 8
      %s274 = scalar_lea.vmem %s0, %s273
      %s275 = smul.u32 8, %s18
      %s276 = smul.u32 8, %s18
      %p277 = scmp.lt.s32.totalorder %s276, 15
      %s278 = scalar_select %p277, %s276, 15
      %s279 = smul.addr %s278, 8
      %s280 = scalar_lea.vmem %s7, %s279
      %s281 = smul.u32 8, %s18
      %v283 = vld [vmem:[%s274] sm:$0xff]
      %v284 = vld [vmem:[%s274 + $0x8] sm:$0xff]
      %v285 = vld [vmem:[%s274 + $0x10] sm:$0xff]
      %v286 = vld [vmem:[%s274 + $0x18] sm:$0xff]
      %v287 = vld [vmem:[%s274 + $0x20] sm:$0xff]
      %v288 = vld [vmem:[%s274 + $0x28] sm:$0xff]
      %v289 = vld [vmem:[%s274 + $0x30] sm:$0xff]
      %v290 = vld [vmem:[%s274 + $0x38] sm:$0xff]
      %vm291 = vcmask 261120
      %v292 = vsel %vm291, %v283, 0.0
      %293 = vadd.xlane.f32.xlu0 %v292
      %v294 = vpop.xlane.xlu0 %293
      %v295 = vsel %vm291, %v284, 0.0
      %296 = vadd.xlane.f32.xlu0 %v295
      %v297 = vpop.xlane.xlu0 %296
      %v298 = vsel %vm291, %v285, 0.0
      %299 = vadd.xlane.f32.xlu0 %v298
      %v300 = vpop.xlane.xlu0 %299
      %v301 = vsel %vm291, %v286, 0.0
      %302 = vadd.xlane.f32.xlu0 %v301
      %v303 = vpop.xlane.xlu0 %302
      %v304 = vsel %vm291, %v287, 0.0
      %305 = vadd.xlane.f32.xlu0 %v304
      %v306 = vpop.xlane.xlu0 %305
      %v307 = vsel %vm291, %v288, 0.0
      %308 = vadd.xlane.f32.xlu0 %v307
      %v309 = vpop.xlane.xlu0 %308
      %v310 = vsel %vm291, %v289, 0.0
      %311 = vadd.xlane.f32.xlu0 %v310
      %v312 = vpop.xlane.xlu0 %311
      %v313 = vsel %vm291, %v290, 0.0
      %314 = vadd.xlane.f32.xlu0 %v313
      %v315 = vpop.xlane.xlu0 %314
      %v316 = vrcp.pop 32.0
      %v317 = vmul.f32 %v294, %v316
      %v318 = vmul.f32 %v297, %v316
      %v319 = vmul.f32 %v300, %v316
      %v320 = vmul.f32 %v303, %v316
      %v321 = vmul.f32 %v306, %v316
      %v322 = vmul.f32 %v309, %v316
      %v323 = vmul.f32 %v312, %v316
      %v324 = vmul.f32 %v315, %v316
      %v325 = vsub.f32 %v283, %v317
      %v326 = vsub.f32 %v284, %v318
      %v327 = vsub.f32 %v285, %v319
      %v328 = vsub.f32 %v286, %v320
      %v329 = vsub.f32 %v287, %v321
      %v330 = vsub.f32 %v288, %v322
      %v331 = vsub.f32 %v289, %v323
      %v332 = vsub.f32 %v290, %v324
      %v333 = vmul.f32 %v325, %v325
      %v334 = vmul.f32 %v326, %v326
      %v335 = vmul.f32 %v327, %v327
      %v336 = vmul.f32 %v328, %v328
      %v337 = vmul.f32 %v329, %v329
      %v338 = vmul.f32 %v330, %v330
      %v339 = vmul.f32 %v331, %v331
      %v340 = vmul.f32 %v332, %v332
      %v341 = vsel %vm291, %v333, 0.0
      %342 = vadd.xlane.f32.xlu0 %v341
      %v343 = vpop.xlane.xlu0 %342
      %v344 = vsel %vm291, %v334, 0.0
      %345 = vadd.xlane.f32.xlu0 %v344
      %v346 = vpop.xlane.xlu0 %345
      %v347 = vsel %vm291, %v335, 0.0
      %348 = vadd.xlane.f32.xlu0 %v347
      %v349 = vpop.xlane.xlu0 %348
      %v350 = vsel %vm291, %v336, 0.0
      %351 = vadd.xlane.f32.xlu0 %v350
      %v352 = vpop.xlane.xlu0 %351
      %v353 = vsel %vm291, %v337, 0.0
      %354 = vadd.xlane.f32.xlu0 %v353
      %v355 = vpop.xlane.xlu0 %354
      %v356 = vsel %vm291, %v338, 0.0
      %357 = vadd.xlane.f32.xlu0 %v356
      %v358 = vpop.xlane.xlu0 %357
      %v359 = vsel %vm291, %v339, 0.0
      %360 = vadd.xlane.f32.xlu0 %v359
      %v361 = vpop.xlane.xlu0 %360
      %v362 = vsel %vm291, %v340, 0.0
      %363 = vadd.xlane.f32.xlu0 %v362
      %v364 = vpop.xlane.xlu0 %363
      %v365 = vmul.f32 %v343, %v316
      %v366 = vmul.f32 %v346, %v316
      %v367 = vmul.f32 %v349, %v316
      %v368 = vmul.f32 %v352, %v316
      %v369 = vmul.f32 %v355, %v316
      %v370 = vmul.f32 %v358, %v316
      %v371 = vmul.f32 %v361, %v316
      %v372 = vmul.f32 %v364, %v316
      %v373 = vadd.f32 %v365, 1e-05
      %v374 = vadd.f32 %v366, 1e-05
      %v375 = vadd.f32 %v367, 1e-05
      %v376 = vadd.f32 %v368, 1e-05
      %v377 = vadd.f32 %v369, 1e-05
      %v378 = vadd.f32 %v370, 1e-05
      %v379 = vadd.f32 %v371, 1e-05
      %v380 = vadd.f32 %v372, 1e-05
      %v381 = vrsqrt.pop %v373
      %v382 = vrsqrt.pop %v374
      %v383 = vrsqrt.pop %v375
      %v384 = vrsqrt.pop %v376
      %v385 = vrsqrt.pop %v377
      %v386 = vrsqrt.pop %v378
      %v387 = vrsqrt.pop %v379
      %v388 = vrsqrt.pop %v380
      %v389 = vmul.f32 %v325, %v381
      %v390 = vmul.f32 %v326, %v382
      %v391 = vmul.f32 %v327, %v383
      %v392 = vmul.f32 %v328, %v384
      %v393 = vmul.f32 %v329, %v385
      %v394 = vmul.f32 %v330, %v386
      %v395 = vmul.f32 %v331, %v387
      %v396 = vmul.f32 %v332, %v388
      %v397 = vld [vmem:[%s1] sm:$0x1]
      %v399 = vlaneseq
      %v400 = vshrl.u32 %v399, 7
      %v401 = vsub.s32 0, %v400
      %v402 = vrot.slane %v397, %v401
      %v404 = vmul.f32 %v389, %v402
      %v405 = vmul.f32 %v390, %v402
      %v406 = vmul.f32 %v391, %v402
      %v407 = vmul.f32 %v392, %v402
      %v408 = vmul.f32 %v393, %v402
      %v409 = vmul.f32 %v394, %v402
      %v410 = vmul.f32 %v395, %v402
      %v411 = vmul.f32 %v396, %v402
      %v412 = vld [vmem:[%s2] sm:$0x1]
      %v414 = vlaneseq
      %v415 = vshrl.u32 %v414, 7
      %v416 = vsub.s32 0, %v415
      %v417 = vrot.slane %v412, %v416
      %v419 = vadd.f32 %v404, %v417
      %v420 = vadd.f32 %v405, %v417
      %v421 = vadd.f32 %v406, %v417
      %v422 = vadd.f32 %v407, %v417
      %v423 = vadd.f32 %v408, %v417
      %v424 = vadd.f32 %v409, %v417
      %v425 = vadd.f32 %v410, %v417
      %v426 = vadd.f32 %v411, %v417
      %v427 = vpack.c.bf16 %v420, %v419
      %v428 = vpack.c.bf16 %v422, %v421
      %v429 = vpack.c.bf16 %v424, %v423
      %v430 = vpack.c.bf16 %v426, %v425
      %v431 = vld [vmem:[%s3] sm:$0xff]
      %v432 = vld [vmem:[%s3 + $0x8] sm:$0xff]
      %v433 = vld [vmem:[%s3 + $0x10] sm:$0xff]
      %v434 = vld [vmem:[%s3 + $0x18] sm:$0xff]
      %v439 = vunpack.c.l.b16 %v431
      %v440 = vunpack.c.h.b16 %v431
      %v441 = vunpack.c.l.b16 %v432
      %v442 = vunpack.c.h.b16 %v432
      %v443 = vunpack.c.l.b16 %v433
      %v444 = vunpack.c.h.b16 %v433
      %v445 = vunpack.c.l.b16 %v434
      %v446 = vunpack.c.h.b16 %v434
      %v447 = vpack.c.b16 %v441, %v439
      %v448 = vpack.c.b16 %v442, %v440
      %v449 = vpack.c.b16 %v445, %v443
      %v450 = vpack.c.b16 %v446, %v444
      %v456 = vsel %vm291, %v427, 0
      %v459 = vsel %vm291, %v428, 0
      %v462 = vsel %vm291, %v429, 0
      %v465 = vsel %vm291, %v430, 0
      %467 = vmatprep.subr.bf16.mxu0 0
      %468 = vmatpush1.bf16.msra.mxu0 0
      %469 = vmatprep.subr.bf16.mxu0 0
      %470 = vmatpush1.bf16.msra.mxu0 0
      %471 = vmatprep.subr.bf16.mxu0 0
      %472 = vmatpush1.bf16.msra.mxu0 0
      %473 = vmatprep.subr.bf16.mxu0 0
      %474 = vmatpush1.bf16.msra.mxu0 0
      %475 = vmatprep.subr.bf16.mxu0 0
      %476 = vmatpush1.bf16.msra.mxu0 0
      %477 = vmatprep.subr.bf16.mxu0 0
      %478 = vmatpush1.bf16.msra.mxu0 0
      %479 = vmatprep.subr.bf16.mxu0 %v450
      %480 = vmatpush1.bf16.msra.mxu0 %v449
      %481 = vmatprep.subr.bf16.mxu0 %v448
      %482 = vmatpush1.bf16.msra.mxu0 %v447
      %483 = vmatprep.subr.bf16.mxu0 0
      %484 = vmatpush2.bf16.msra.mxu0 0
      %485 = vmatprep.subr.bf16.mxu0 0
      %486 = vmatpush2.bf16.msra.mxu0 0
      %487 = vmatprep.subr.bf16.mxu0 0
      %488 = vmatpush2.bf16.msra.mxu0 0
      %489 = vmatprep.subr.bf16.mxu0 0
      %490 = vmatpush2.bf16.msra.mxu0 0
      %491 = vmatprep.subr.bf16.mxu0 0
      %492 = vmatpush2.bf16.msra.mxu0 0
      %493 = vmatprep.subr.bf16.mxu0 0
      %494 = vmatpush2.bf16.msra.mxu0 0
      %495 = vmatprep.subr.bf16.mxu0 0
      %496 = vmatpush2.bf16.msra.mxu0 0
      %497 = vmatprep.subr.bf16.mxu0 0
      %498 = vmatpush2.bf16.msra.mxu0 0
      %499 = vmatprep.mubr.bf16.mxu0 0
      %500 = vmatmul.mubr.bf16.gmra.mxu0 %v456
      %v501 = vpop.f32.mrf.mxu0
      %v502 = vadd.f32 0.0, %v501
      %v503 = vpop.f32.mrf.mxu0
      %v504 = vadd.f32 0.0, %v503
      %v505 = vpop.f32.mrf.mxu0
      %v506 = vadd.f32 0.0, %v505
      %v507 = vpop.f32.mrf.mxu0
      %v508 = vadd.f32 0.0, %v507
      %509 = vmatprep.mubr.bf16.mxu0 0
      %510 = vmatmul.mubr.bf16.gmra.mxu0 %v459
      %v511 = vpop.f32.mrf.mxu0
      %v512 = vadd.f32 0.0, %v511
      %v513 = vpop.f32.mrf.mxu0
      %v514 = vadd.f32 0.0, %v513
      %v515 = vpop.f32.mrf.mxu0
      %v516 = vadd.f32 0.0, %v515
      %v517 = vpop.f32.mrf.mxu0
      %v518 = vadd.f32 0.0, %v517
      %519 = vmatprep.mubr.bf16.mxu0 0
      %520 = vmatmul.mubr.bf16.gmra.mxu0 %v462
      %v521 = vpop.f32.mrf.mxu0
      %v522 = vadd.f32 0.0, %v521
      %v523 = vpop.f32.mrf.mxu0
      %v524 = vadd.f32 0.0, %v523
      %v525 = vpop.f32.mrf.mxu0
      %v526 = vadd.f32 0.0, %v525
      %v527 = vpop.f32.mrf.mxu0
      %v528 = vadd.f32 0.0, %v527
      %529 = vmatprep.mubr.bf16.mxu0 0
      %530 = vmatmul.mubr.bf16.gmra.mxu0 %v465
      %v531 = vpop.f32.mrf.mxu0
      %v532 = vadd.f32 0.0, %v531
      %v533 = vpop.f32.mrf.mxu0
      %v534 = vadd.f32 0.0, %v533
      %v535 = vpop.f32.mrf.mxu0
      %v536 = vadd.f32 0.0, %v535
      %v537 = vpop.f32.mrf.mxu0
      %v538 = vadd.f32 0.0, %v537
      %539 = vdwg.mxu0
      %v540 = vld [vmem:[%s4] sm:$0x1]
      %v542 = vlaneseq
      %v543 = vshrl.u32 %v542, 7
      %v544 = vsub.s32 0, %v543
      %v545 = vrot.slane %v540, %v544
      %546 = vrot.lane.b32.xlu0 %v545, 64
      %v547 = vpop.permute.xlu0 %546
      %v549 = vadd.f32 %v504, %v547
      %v550 = vadd.f32 %v508, %v547
      %v551 = vadd.f32 %v514, %v547
      %v552 = vadd.f32 %v518, %v547
      %v553 = vadd.f32 %v524, %v547
      %v554 = vadd.f32 %v528, %v547
      %v555 = vadd.f32 %v534, %v547
      %v556 = vadd.f32 %v538, %v547
      %v557 = vxor.u32 %v549, 2147483648
      %v558 = vxor.u32 %v550, 2147483648
      %v559 = vxor.u32 %v551, 2147483648
      %v560 = vxor.u32 %v552, 2147483648
      %v561 = vxor.u32 %v553, 2147483648
      %v562 = vxor.u32 %v554, 2147483648
      %v563 = vxor.u32 %v555, 2147483648
      %v564 = vxor.u32 %v556, 2147483648
      %v565 = vmul.f32 %v557, 1.442695
      %v566 = vpow.pop %v565
      %v567 = vmul.f32 %v558, 1.442695
      %v568 = vpow.pop %v567
      %v569 = vmul.f32 %v559, 1.442695
      %v570 = vpow.pop %v569
      %v571 = vmul.f32 %v560, 1.442695
      %v572 = vpow.pop %v571
      %v573 = vmul.f32 %v561, 1.442695
      %v574 = vpow.pop %v573
      %v575 = vmul.f32 %v562, 1.442695
      %v576 = vpow.pop %v575
      %v577 = vmul.f32 %v563, 1.442695
      %v578 = vpow.pop %v577
      %v579 = vmul.f32 %v564, 1.442695
      %v580 = vpow.pop %v579
      %v581 = vadd.f32 %v566, 1.0
      %v582 = vadd.f32 %v568, 1.0
      %v583 = vadd.f32 %v570, 1.0
      %v584 = vadd.f32 %v572, 1.0
      %v585 = vadd.f32 %v574, 1.0
      %v586 = vadd.f32 %v576, 1.0
      %v587 = vadd.f32 %v578, 1.0
      %v588 = vadd.f32 %v580, 1.0
      %v589 = vrcp.pop %v581
      %v590 = vmul.f32 1.0, %v589
      %v591 = vrcp.pop %v582
      %v592 = vmul.f32 1.0, %v591
      %v593 = vrcp.pop %v583
      %v594 = vmul.f32 1.0, %v593
      %v595 = vrcp.pop %v584
      %v596 = vmul.f32 1.0, %v595
      %v597 = vrcp.pop %v585
      %v598 = vmul.f32 1.0, %v597
      %v599 = vrcp.pop %v586
      %v600 = vmul.f32 1.0, %v599
      %v601 = vrcp.pop %v587
      %v602 = vmul.f32 1.0, %v601
      %v603 = vrcp.pop %v588
      %v604 = vmul.f32 1.0, %v603
      %v605 = vpack.c.bf16 %v506, %v502
      %v606 = vpack.c.bf16 %v516, %v512
      %v607 = vpack.c.bf16 %v526, %v522
      %v608 = vpack.c.bf16 %v536, %v532
      %610 = vrot.lane.b32.xlu0 %v605, 64
      %v611 = vpop.permute.xlu0 %610
      %vm612 = vcmask 64512
      %v614 = vsel %vm612, %v605, 0
      %v617 = vsel %vm612, %v611, 0
      %619 = vmatprep.subr.bf16.mxu0 0
      %620 = vmatpush1.bf16.xpose.msra.mxu0 0
      %621 = vmatprep.subr.bf16.mxu0 0
      %622 = vmatpush1.bf16.xpose.msra.mxu0 0
      %623 = vmatprep.subr.bf16.mxu0 0
      %624 = vmatpush1.bf16.xpose.msra.mxu0 0
      %625 = vmatprep.subr.bf16.mxu0 0
      %626 = vmatpush1.bf16.xpose.msra.mxu0 0
      %627 = vmatprep.subr.bf16.mxu0 0
      %628 = vmatpush1.bf16.xpose.msra.mxu0 0
      %629 = vmatprep.subr.bf16.mxu0 0
      %630 = vmatpush1.bf16.xpose.msra.mxu0 0
      %631 = vmatprep.subr.bf16.mxu0 0
      %632 = vmatpush1.bf16.xpose.msra.mxu0 0
      %633 = vmatprep.subr.bf16.mxu0 0
      %634 = vmatpush1.bf16.xpose.msra.mxu0 %v617
      %635 = vmatprep.subr.bf16.mxu0 0
      %636 = vmatpush2.bf16.xpose.msra.mxu0 0
      %637 = vmatprep.subr.bf16.mxu0 0
      %638 = vmatpush2.bf16.xpose.msra.mxu0 0
      %639 = vmatprep.subr.bf16.mxu0 0
      %640 = vmatpush2.bf16.xpose.msra.mxu0 0
      %641 = vmatprep.subr.bf16.mxu0 0
      %642 = vmatpush2.bf16.xpose.msra.mxu0 0
      %643 = vmatprep.subr.bf16.mxu0 0
      %644 = vmatpush2.bf16.xpose.msra.mxu0 0
      %645 = vmatprep.subr.bf16.mxu0 0
      %646 = vmatpush2.bf16.xpose.msra.mxu0 0
      %647 = vmatprep.subr.bf16.mxu0 0
      %648 = vmatpush2.bf16.xpose.msra.mxu0 0
      %649 = vmatprep.subr.bf16.mxu0 0
      %650 = vmatpush2.bf16.xpose.msra.mxu0 0
      %651 = vmatprep.mubr.bf16.mxu0 0
      %652 = vmatmul.mubr.bf16.gmra.mxu0 %v614
      %v653 = vpop.f32.mrf.mxu0
      %v654 = vadd.f32 0.0, %v653
      %v655 = vpop.f32.mrf.mxu0
      %v656 = vpop.f32.mrf.mxu0
      %v657 = vadd.f32 0.0, %v656
      %v658 = vpop.f32.mrf.mxu0
      %659 = vdwg.mxu0
      %661 = vrot.lane.b32.xlu0 %v606, 64
      %v662 = vpop.permute.xlu0 %661
      %v664 = vsel %vm612, %v606, 0
      %v667 = vsel %vm612, %v662, 0
      %669 = vmatprep.subr.bf16.mxu0 0
      %670 = vmatpush1.bf16.xpose.msra.mxu0 0
      %671 = vmatprep.subr.bf16.mxu0 0
      %672 = vmatpush1.bf16.xpose.msra.mxu0 0
      %673 = vmatprep.subr.bf16.mxu0 0
      %674 = vmatpush1.bf16.xpose.msra.mxu0 0
      %675 = vmatprep.subr.bf16.mxu0 0
      %676 = vmatpush1.bf16.xpose.msra.mxu0 0
      %677 = vmatprep.subr.bf16.mxu0 0
      %678 = vmatpush1.bf16.xpose.msra.mxu0 0
      %679 = vmatprep.subr.bf16.mxu0 0
      %680 = vmatpush1.bf16.xpose.msra.mxu0 0
      %681 = vmatprep.subr.bf16.mxu0 0
      %682 = vmatpush1.bf16.xpose.msra.mxu0 0
      %683 = vmatprep.subr.bf16.mxu0 0
      %684 = vmatpush1.bf16.xpose.msra.mxu0 %v667
      %685 = vmatprep.subr.bf16.mxu0 0
      %686 = vmatpush2.bf16.xpose.msra.mxu0 0
      %687 = vmatprep.subr.bf16.mxu0 0
      %688 = vmatpush2.bf16.xpose.msra.mxu0 0
      %689 = vmatprep.subr.bf16.mxu0 0
      %690 = vmatpush2.bf16.xpose.msra.mxu0 0
      %691 = vmatprep.subr.bf16.mxu0 0
      %692 = vmatpush2.bf16.xpose.msra.mxu0 0
      %693 = vmatprep.subr.bf16.mxu0 0
      %694 = vmatpush2.bf16.xpose.msra.mxu0 0
      %695 = vmatprep.subr.bf16.mxu0 0
      %696 = vmatpush2.bf16.xpose.msra.mxu0 0
      %697 = vmatprep.subr.bf16.mxu0 0
      %698 = vmatpush2.bf16.xpose.msra.mxu0 0
      %699 = vmatprep.subr.bf16.mxu0 0
      %700 = vmatpush2.bf16.xpose.msra.mxu0 0
      %701 = vmatprep.mubr.bf16.mxu0 0
      %702 = vmatmul.mubr.bf16.gmra.mxu0 %v664
      %v703 = vpop.f32.mrf.mxu0
      %v704 = vadd.f32 0.0, %v703
      %v705 = vpop.f32.mrf.mxu0
      %v706 = vpop.f32.mrf.mxu0
      %v707 = vadd.f32 0.0, %v706
      %v708 = vpop.f32.mrf.mxu0
      %709 = vdwg.mxu0
      %711 = vrot.lane.b32.xlu0 %v607, 64
      %v712 = vpop.permute.xlu0 %711
      %v714 = vsel %vm612, %v607, 0
      %v717 = vsel %vm612, %v712, 0
      %719 = vmatprep.subr.bf16.mxu0 0
      %720 = vmatpush1.bf16.xpose.msra.mxu0 0
      %721 = vmatprep.subr.bf16.mxu0 0
      %722 = vmatpush1.bf16.xpose.msra.mxu0 0
      %723 = vmatprep.subr.bf16.mxu0 0
      %724 = vmatpush1.bf16.xpose.msra.mxu0 0
      %725 = vmatprep.subr.bf16.mxu0 0
      %726 = vmatpush1.bf16.xpose.msra.mxu0 0
      %727 = vmatprep.subr.bf16.mxu0 0
      %728 = vmatpush1.bf16.xpose.msra.mxu0 0
      %729 = vmatprep.subr.bf16.mxu0 0
      %730 = vmatpush1.bf16.xpose.msra.mxu0 0
      %731 = vmatprep.subr.bf16.mxu0 0
      %732 = vmatpush1.bf16.xpose.msra.mxu0 0
      %733 = vmatprep.subr.bf16.mxu0 0
      %734 = vmatpush1.bf16.xpose.msra.mxu0 %v717
      %735 = vmatprep.subr.bf16.mxu0 0
      %736 = vmatpush2.bf16.xpose.msra.mxu0 0
      %737 = vmatprep.subr.bf16.mxu0 0
      %738 = vmatpush2.bf16.xpose.msra.mxu0 0
      %739 = vmatprep.subr.bf16.mxu0 0
      %740 = vmatpush2.bf16.xpose.msra.mxu0 0
      %741 = vmatprep.subr.bf16.mxu0 0
      %742 = vmatpush2.bf16.xpose.msra.mxu0 0
      %743 = vmatprep.subr.bf16.mxu0 0
      %744 = vmatpush2.bf16.xpose.msra.mxu0 0
      %745 = vmatprep.subr.bf16.mxu0 0
      %746 = vmatpush2.bf16.xpose.msra.mxu0 0
      %747 = vmatprep.subr.bf16.mxu0 0
      %748 = vmatpush2.bf16.xpose.msra.mxu0 0
      %749 = vmatprep.subr.bf16.mxu0 0
      %750 = vmatpush2.bf16.xpose.msra.mxu0 0
      %751 = vmatprep.mubr.bf16.mxu0 0
      %752 = vmatmul.mubr.bf16.gmra.mxu0 %v714
      %v753 = vpop.f32.mrf.mxu0
      %v754 = vadd.f32 0.0, %v753
      %v755 = vpop.f32.mrf.mxu0
      %v756 = vpop.f32.mrf.mxu0
      %v757 = vadd.f32 0.0, %v756
      %v758 = vpop.f32.mrf.mxu0
      %759 = vdwg.mxu0
      %761 = vrot.lane.b32.xlu0 %v608, 64
      %v762 = vpop.permute.xlu0 %761
      %v764 = vsel %vm612, %v608, 0
      %v767 = vsel %vm612, %v762, 0
      %769 = vmatprep.subr.bf16.mxu0 0
      %770 = vmatpush1.bf16.xpose.msra.mxu0 0
      %771 = vmatprep.subr.bf16.mxu0 0
      %772 = vmatpush1.bf16.xpose.msra.mxu0 0
      %773 = vmatprep.subr.bf16.mxu0 0
      %774 = vmatpush1.bf16.xpose.msra.mxu0 0
      %775 = vmatprep.subr.bf16.mxu0 0
      %776 = vmatpush1.bf16.xpose.msra.mxu0 0
      %777 = vmatprep.subr.bf16.mxu0 0
      %778 = vmatpush1.bf16.xpose.msra.mxu0 0
      %779 = vmatprep.subr.bf16.mxu0 0
      %780 = vmatpush1.bf16.xpose.msra.mxu0 0
      %781 = vmatprep.subr.bf16.mxu0 0
      %782 = vmatpush1.bf16.xpose.msra.mxu0 0
      %783 = vmatprep.subr.bf16.mxu0 0
      %784 = vmatpush1.bf16.xpose.msra.mxu0 %v767
      %785 = vmatprep.subr.bf16.mxu0 0
      %786 = vmatpush2.bf16.xpose.msra.mxu0 0
      %787 = vmatprep.subr.bf16.mxu0 0
      %788 = vmatpush2.bf16.xpose.msra.mxu0 0
      %789 = vmatprep.subr.bf16.mxu0 0
      %790 = vmatpush2.bf16.xpose.msra.mxu0 0
      %791 = vmatprep.subr.bf16.mxu0 0
      %792 = vmatpush2.bf16.xpose.msra.mxu0 0
      %793 = vmatprep.subr.bf16.mxu0 0
      %794 = vmatpush2.bf16.xpose.msra.mxu0 0
      %795 = vmatprep.subr.bf16.mxu0 0
      %796 = vmatpush2.bf16.xpose.msra.mxu0 0
      %797 = vmatprep.subr.bf16.mxu0 0
      %798 = vmatpush2.bf16.xpose.msra.mxu0 0
      %799 = vmatprep.subr.bf16.mxu0 0
      %800 = vmatpush2.bf16.xpose.msra.mxu0 0
      %801 = vmatprep.mubr.bf16.mxu0 0
      %802 = vmatmul.mubr.bf16.gmra.mxu0 %v764
      %v803 = vpop.f32.mrf.mxu0
      %v804 = vadd.f32 0.0, %v803
      %v805 = vpop.f32.mrf.mxu0
      %v806 = vpop.f32.mrf.mxu0
      %v807 = vadd.f32 0.0, %v806
      %v808 = vpop.f32.mrf.mxu0
      %809 = vdwg.mxu0
      %v810 = vmul.f32 %v654, 0.35355338
      %v811 = vmul.f32 %v657, 0.35355338
      %v812 = vmul.f32 %v704, 0.35355338
      %v813 = vmul.f32 %v707, 0.35355338
      %v814 = vmul.f32 %v754, 0.35355338
      %v815 = vmul.f32 %v757, 0.35355338
      %v816 = vmul.f32 %v804, 0.35355338
      %v817 = vmul.f32 %v807, 0.35355338
      %v818 = vand.u32 2147483647, %v810
      %v819 = vand.u32 2147483647, %v811
      %v820 = vand.u32 2147483647, %v812
      %v821 = vand.u32 2147483647, %v813
      %v822 = vand.u32 2147483647, %v814
      %v823 = vand.u32 2147483647, %v815
      %v824 = vand.u32 2147483647, %v816
      %v825 = vand.u32 2147483647, %v817
      %v826 = vrsqrt.pop %v818
      %v827 = vmul.f32 %v818, %v826
      %vm828 = vcmp.eq.f32.partialorder %v818, inf
      %v829 = vsel %vm828, %v818, %v827
      %vm830 = vcmp.eq.f32.partialorder %v818, 0.0
      %v831 = vand.u32 %v818, 2147483648
      %v832 = vsel %vm830, %v831, %v829
      %v833 = vrsqrt.pop %v819
      %v834 = vmul.f32 %v819, %v833
      %vm835 = vcmp.eq.f32.partialorder %v819, inf
      %v836 = vsel %vm835, %v819, %v834
      %vm837 = vcmp.eq.f32.partialorder %v819, 0.0
      %v838 = vand.u32 %v819, 2147483648
      %v839 = vsel %vm837, %v838, %v836
      %v840 = vrsqrt.pop %v820
      %v841 = vmul.f32 %v820, %v840
      %vm842 = vcmp.eq.f32.partialorder %v820, inf
      %v843 = vsel %vm842, %v820, %v841
      %vm844 = vcmp.eq.f32.partialorder %v820, 0.0
      %v845 = vand.u32 %v820, 2147483648
      %v846 = vsel %vm844, %v845, %v843
      %v847 = vrsqrt.pop %v821
      %v848 = vmul.f32 %v821, %v847
      %vm849 = vcmp.eq.f32.partialorder %v821, inf
      %v850 = vsel %vm849, %v821, %v848
      %vm851 = vcmp.eq.f32.partialorder %v821, 0.0
      %v852 = vand.u32 %v821, 2147483648
      %v853 = vsel %vm851, %v852, %v850
      %v854 = vrsqrt.pop %v822
      %v855 = vmul.f32 %v822, %v854
      %vm856 = vcmp.eq.f32.partialorder %v822, inf
      %v857 = vsel %vm856, %v822, %v855
      %vm858 = vcmp.eq.f32.partialorder %v822, 0.0
      %v859 = vand.u32 %v822, 2147483648
      %v860 = vsel %vm858, %v859, %v857
      %v861 = vrsqrt.pop %v823
      %v862 = vmul.f32 %v823, %v861
      %vm863 = vcmp.eq.f32.partialorder %v823, inf
      %v864 = vsel %vm863, %v823, %v862
      %vm865 = vcmp.eq.f32.partialorder %v823, 0.0
      %v866 = vand.u32 %v823, 2147483648
      %v867 = vsel %vm865, %v866, %v864
      %v868 = vrsqrt.pop %v824
      %v869 = vmul.f32 %v824, %v868
      %vm870 = vcmp.eq.f32.partialorder %v824, inf
      %v871 = vsel %vm870, %v824, %v869
      %vm872 = vcmp.eq.f32.partialorder %v824, 0.0
      %v873 = vand.u32 %v824, 2147483648
      %v874 = vsel %vm872, %v873, %v871
      %v875 = vrsqrt.pop %v825
      %v876 = vmul.f32 %v825, %v875
      %vm877 = vcmp.eq.f32.partialorder %v825, inf
      %v878 = vsel %vm877, %v825, %v876
      %vm879 = vcmp.eq.f32.partialorder %v825, 0.0
      %v880 = vand.u32 %v825, 2147483648
      %v881 = vsel %vm879, %v880, %v878
      %vm882 = vcmp.ge.f32.partialorder %v810, 0.0
      %vm883 = vcmp.ge.f32.partialorder %v811, 0.0
      %vm884 = vcmp.ge.f32.partialorder %v812, 0.0
      %vm885 = vcmp.ge.f32.partialorder %v813, 0.0
      %vm886 = vcmp.ge.f32.partialorder %v814, 0.0
      %vm887 = vcmp.ge.f32.partialorder %v815, 0.0
      %vm888 = vcmp.ge.f32.partialorder %v816, 0.0
      %vm889 = vcmp.ge.f32.partialorder %v817, 0.0
      %v890 = vsub.f32 0.0, %v832
      %v891 = vsub.f32 0.0, %v839
      %v892 = vsub.f32 0.0, %v846
      %v893 = vsub.f32 0.0, %v853
      %v894 = vsub.f32 0.0, %v860
      %v895 = vsub.f32 0.0, %v867
      %v896 = vsub.f32 0.0, %v874
      %v897 = vsub.f32 0.0, %v881
      %v898 = vsel %vm882, %v832, %v890
      %v899 = vsel %vm883, %v839, %v891
      %v900 = vsel %vm884, %v846, %v892
      %v901 = vsel %vm885, %v853, %v893
      %v902 = vsel %vm886, %v860, %v894
      %v903 = vsel %vm887, %v867, %v895
      %v904 = vsel %vm888, %v874, %v896
      %v905 = vsel %vm889, %v881, %v897
      %vm906 = vcmask 130048
      %v907 = vsel %vm906, %v898, -inf
      %908 = vmax.xlane.f32.xlu0 %v907
      %v909 = vpop.xlane.xlu0 %908
      %v910 = vsel %vm906, %v899, -inf
      %911 = vmax.xlane.f32.xlu0 %v910
      %v912 = vpop.xlane.xlu0 %911
      %v913 = vsel %vm906, %v900, -inf
      %914 = vmax.xlane.f32.xlu0 %v913
      %v915 = vpop.xlane.xlu0 %914
      %v916 = vsel %vm906, %v901, -inf
      %917 = vmax.xlane.f32.xlu0 %v916
      %v918 = vpop.xlane.xlu0 %917
      %v919 = vsel %vm906, %v902, -inf
      %920 = vmax.xlane.f32.xlu0 %v919
      %v921 = vpop.xlane.xlu0 %920
      %v922 = vsel %vm906, %v903, -inf
      %923 = vmax.xlane.f32.xlu0 %v922
      %v924 = vpop.xlane.xlu0 %923
      %v925 = vsel %vm906, %v904, -inf
      %926 = vmax.xlane.f32.xlu0 %v925
      %v927 = vpop.xlane.xlu0 %926
      %v928 = vsel %vm906, %v905, -inf
      %929 = vmax.xlane.f32.xlu0 %v928
      %v930 = vpop.xlane.xlu0 %929
      %v931 = vsub.f32 %v898, %v909
      %v932 = vsub.f32 %v899, %v912
      %v933 = vsub.f32 %v900, %v915
      %v934 = vsub.f32 %v901, %v918
      %v935 = vsub.f32 %v902, %v921
      %v936 = vsub.f32 %v903, %v924
      %v937 = vsub.f32 %v904, %v927
      %v938 = vsub.f32 %v905, %v930
      %v939 = vmul.f32 %v931, 1.442695
      %v940 = vpow.pop %v939
      %v941 = vmul.f32 %v932, 1.442695
      %v942 = vpow.pop %v941
      %v943 = vmul.f32 %v933, 1.442695
      %v944 = vpow.pop %v943
      %v945 = vmul.f32 %v934, 1.442695
      %v946 = vpow.pop %v945
      %v947 = vmul.f32 %v935, 1.442695
      %v948 = vpow.pop %v947
      %v949 = vmul.f32 %v936, 1.442695
      %v950 = vpow.pop %v949
      %v951 = vmul.f32 %v937, 1.442695
      %v952 = vpow.pop %v951
      %v953 = vmul.f32 %v938, 1.442695
      %v954 = vpow.pop %v953
      %v955 = vsel %vm906, %v940, 0.0
      %956 = vadd.xlane.f32.xlu0 %v955
      %v957 = vpop.xlane.xlu0 %956
      %v958 = vsel %vm906, %v942, 0.0
      %959 = vadd.xlane.f32.xlu0 %v958
      %v960 = vpop.xlane.xlu0 %959
      %v961 = vsel %vm906, %v944, 0.0
      %962 = vadd.xlane.f32.xlu0 %v961
      %v963 = vpop.xlane.xlu0 %962
      %v964 = vsel %vm906, %v946, 0.0
      %965 = vadd.xlane.f32.xlu0 %v964
      %v966 = vpop.xlane.xlu0 %965
      %v967 = vsel %vm906, %v948, 0.0
      %968 = vadd.xlane.f32.xlu0 %v967
      %v969 = vpop.xlane.xlu0 %968
      %v970 = vsel %vm906, %v950, 0.0
      %971 = vadd.xlane.f32.xlu0 %v970
      %v972 = vpop.xlane.xlu0 %971
      %v973 = vsel %vm906, %v952, 0.0
      %974 = vadd.xlane.f32.xlu0 %v973
      %v975 = vpop.xlane.xlu0 %974
      %v976 = vsel %vm906, %v954, 0.0
      %977 = vadd.xlane.f32.xlu0 %v976
      %v978 = vpop.xlane.xlu0 %977
      %v979 = vrcp.pop %v957
      %v980 = vrcp.pop %v960
      %v981 = vrcp.pop %v963
      %v982 = vrcp.pop %v966
      %v983 = vrcp.pop %v969
      %v984 = vrcp.pop %v972
      %v985 = vrcp.pop %v975
      %v986 = vrcp.pop %v978
      %v987 = vmul.f32 %v940, %v979
      %v988 = vmul.f32 %v942, %v980
      %v989 = vmul.f32 %v944, %v981
      %v990 = vmul.f32 %v946, %v982
      %v991 = vmul.f32 %v948, %v983
      %v992 = vmul.f32 %v950, %v984
      %v993 = vmul.f32 %v952, %v985
      %v994 = vmul.f32 %v954, %v986
      %v996 = vsel %vm906, %v987, 0
      %v999 = vsel %vm906, %v988, 0
      %1001 = vmatprep.subr.mxu0 0.0
      %1002 = vmatpush1.msra.mxu0 0.0
      %1003 = vmatprep.subr.mxu0 0.0
      %1004 = vmatpush1.msra.mxu0 0.0
      %1005 = vmatprep.subr.mxu0 0.0
      %1006 = vmatpush1.msra.mxu0 0.0
      %1007 = vmatprep.subr.mxu0 0.0
      %1008 = vmatpush1.msra.mxu0 0.0
      %1009 = vmatprep.subr.mxu0 0.0
      %1010 = vmatpush1.msra.mxu0 0.0
      %1011 = vmatprep.subr.mxu0 0.0
      %1012 = vmatpush1.msra.mxu0 0.0
      %1013 = vmatprep.subr.mxu0 0.0
      %1014 = vmatpush1.msra.mxu0 0.0
      %1015 = vmatprep.subr.mxu0 0.0
      %1016 = vmatpush1.msra.mxu0 0.0
      %1017 = vmatprep.subr.mxu0 0.0
      %1018 = vmatpush1.msra.mxu0 0.0
      %1019 = vmatprep.subr.mxu0 0.0
      %1020 = vmatpush1.msra.mxu0 0.0
      %1021 = vmatprep.subr.mxu0 0.0
      %1022 = vmatpush1.msra.mxu0 0.0
      %1023 = vmatprep.subr.mxu0 0.0
      %1024 = vmatpush1.msra.mxu0 0.0
      %1025 = vmatprep.subr.mxu0 0.0
      %1026 = vmatpush1.msra.mxu0 0.0
      %1027 = vmatprep.subr.mxu0 0.0
      %1028 = vmatpush1.msra.mxu0 0.0
      %1029 = vmatprep.subr.mxu0 0.0
      %1030 = vmatpush1.msra.mxu0 %v508
      %1031 = vmatprep.subr.mxu0 0.0
      %1032 = vmatpush1.msra.mxu0 %v504
      %1033 = vmatprep.subr.mxu0 0.0
      %1034 = vmatpush2.msra.mxu0 0.0
      %1035 = vmatprep.subr.mxu0 0.0
      %1036 = vmatpush2.msra.mxu0 0.0
      %1037 = vmatprep.subr.mxu0 0.0
      %1038 = vmatpush2.msra.mxu0 0.0
      %1039 = vmatprep.subr.mxu0 0.0
      %1040 = vmatpush2.msra.mxu0 0.0
      %1041 = vmatprep.subr.mxu0 0.0
      %1042 = vmatpush2.msra.mxu0 0.0
      %1043 = vmatprep.subr.mxu0 0.0
      %1044 = vmatpush2.msra.mxu0 0.0
      %1045 = vmatprep.subr.mxu0 0.0
      %1046 = vmatpush2.msra.mxu0 0.0
      %1047 = vmatprep.subr.mxu0 0.0
      %1048 = vmatpush2.msra.mxu0 0.0
      %1049 = vmatprep.subr.mxu0 0.0
      %1050 = vmatpush2.msra.mxu0 0.0
      %1051 = vmatprep.subr.mxu0 0.0
      %1052 = vmatpush2.msra.mxu0 0.0
      %1053 = vmatprep.subr.mxu0 0.0
      %1054 = vmatpush2.msra.mxu0 0.0
      %1055 = vmatprep.subr.mxu0 0.0
      %1056 = vmatpush2.msra.mxu0 0.0
      %1057 = vmatprep.subr.mxu0 0.0
      %1058 = vmatpush2.msra.mxu0 0.0
      %1059 = vmatprep.subr.mxu0 0.0
      %1060 = vmatpush2.msra.mxu0 0.0
      %1061 = vmatprep.subr.mxu0 0.0
      %1062 = vmatpush2.msra.mxu0 0.0
      %1063 = vmatprep.subr.mxu0 0.0
      %1064 = vmatpush2.msra.mxu0 0.0
      %1065 = vmatprep.mubr.f32.mxu0 0.0
      %1066 = vmatmul.mubr.f32.gmra.mxu0 %v996
      %v1067 = vpop.f32.mrf.mxu0
      %v1068 = vadd.f32 0.0, %v1067
      %v1069 = vpop.f32.mrf.mxu0
      %1070 = vmatprep.mubr.f32.mxu0 0.0
      %1071 = vmatmul.mubr.f32.gmra.mxu0 %v999
      %v1072 = vpop.f32.mrf.mxu0
      %v1073 = vadd.f32 0.0, %v1072
      %v1074 = vpop.f32.mrf.mxu0
      %1075 = vdwg.mxu0
      %v1077 = vsel %vm906, %v989, 0
      %v1080 = vsel %vm906, %v990, 0
      %1082 = vmatprep.subr.mxu0 0.0
      %1083 = vmatpush1.msra.mxu0 0.0
      %1084 = vmatprep.subr.mxu0 0.0
      %1085 = vmatpush1.msra.mxu0 0.0
      %1086 = vmatprep.subr.mxu0 0.0
      %1087 = vmatpush1.msra.mxu0 0.0
      %1088 = vmatprep.subr.mxu0 0.0
      %1089 = vmatpush1.msra.mxu0 0.0
      %1090 = vmatprep.subr.mxu0 0.0
      %1091 = vmatpush1.msra.mxu0 0.0
      %1092 = vmatprep.subr.mxu0 0.0
      %1093 = vmatpush1.msra.mxu0 0.0
      %1094 = vmatprep.subr.mxu0 0.0
      %1095 = vmatpush1.msra.mxu0 0.0
      %1096 = vmatprep.subr.mxu0 0.0
      %1097 = vmatpush1.msra.mxu0 0.0
      %1098 = vmatprep.subr.mxu0 0.0
      %1099 = vmatpush1.msra.mxu0 0.0
      %1100 = vmatprep.subr.mxu0 0.0
      %1101 = vmatpush1.msra.mxu0 0.0
      %1102 = vmatprep.subr.mxu0 0.0
      %1103 = vmatpush1.msra.mxu0 0.0
      %1104 = vmatprep.subr.mxu0 0.0
      %1105 = vmatpush1.msra.mxu0 0.0
      %1106 = vmatprep.subr.mxu0 0.0
      %1107 = vmatpush1.msra.mxu0 0.0
      %1108 = vmatprep.subr.mxu0 0.0
      %1109 = vmatpush1.msra.mxu0 0.0
      %1110 = vmatprep.subr.mxu0 0.0
      %1111 = vmatpush1.msra.mxu0 %v518
      %1112 = vmatprep.subr.mxu0 0.0
      %1113 = vmatpush1.msra.mxu0 %v514
      %1114 = vmatprep.subr.mxu0 0.0
      %1115 = vmatpush2.msra.mxu0 0.0
      %1116 = vmatprep.subr.mxu0 0.0
      %1117 = vmatpush2.msra.mxu0 0.0
      %1118 = vmatprep.subr.mxu0 0.0
      %1119 = vmatpush2.msra.mxu0 0.0
      %1120 = vmatprep.subr.mxu0 0.0
      %1121 = vmatpush2.msra.mxu0 0.0
      %1122 = vmatprep.subr.mxu0 0.0
      %1123 = vmatpush2.msra.mxu0 0.0
      %1124 = vmatprep.subr.mxu0 0.0
      %1125 = vmatpush2.msra.mxu0 0.0
      %1126 = vmatprep.subr.mxu0 0.0
      %1127 = vmatpush2.msra.mxu0 0.0
      %1128 = vmatprep.subr.mxu0 0.0
      %1129 = vmatpush2.msra.mxu0 0.0
      %1130 = vmatprep.subr.mxu0 0.0
      %1131 = vmatpush2.msra.mxu0 0.0
      %1132 = vmatprep.subr.mxu0 0.0
      %1133 = vmatpush2.msra.mxu0 0.0
      %1134 = vmatprep.subr.mxu0 0.0
      %1135 = vmatpush2.msra.mxu0 0.0
      %1136 = vmatprep.subr.mxu0 0.0
      %1137 = vmatpush2.msra.mxu0 0.0
      %1138 = vmatprep.subr.mxu0 0.0
      %1139 = vmatpush2.msra.mxu0 0.0
      %1140 = vmatprep.subr.mxu0 0.0
      %1141 = vmatpush2.msra.mxu0 0.0
      %1142 = vmatprep.subr.mxu0 0.0
      %1143 = vmatpush2.msra.mxu0 0.0
      %1144 = vmatprep.subr.mxu0 0.0
      %1145 = vmatpush2.msra.mxu0 0.0
      %1146 = vmatprep.mubr.f32.mxu0 0.0
      %1147 = vmatmul.mubr.f32.gmra.mxu0 %v1077
      %v1148 = vpop.f32.mrf.mxu0
      %v1149 = vadd.f32 0.0, %v1148
      %v1150 = vpop.f32.mrf.mxu0
      %1151 = vmatprep.mubr.f32.mxu0 0.0
      %1152 = vmatmul.mubr.f32.gmra.mxu0 %v1080
      %v1153 = vpop.f32.mrf.mxu0
      %v1154 = vadd.f32 0.0, %v1153
      %v1155 = vpop.f32.mrf.mxu0
      %1156 = vdwg.mxu0
      %v1158 = vsel %vm906, %v991, 0
      %v1161 = vsel %vm906, %v992, 0
      %1163 = vmatprep.subr.mxu0 0.0
      %1164 = vmatpush1.msra.mxu0 0.0
      %1165 = vmatprep.subr.mxu0 0.0
      %1166 = vmatpush1.msra.mxu0 0.0
      %1167 = vmatprep.subr.mxu0 0.0
      %1168 = vmatpush1.msra.mxu0 0.0
      %1169 = vmatprep.subr.mxu0 0.0
      %1170 = vmatpush1.msra.mxu0 0.0
      %1171 = vmatprep.subr.mxu0 0.0
      %1172 = vmatpush1.msra.mxu0 0.0
      %1173 = vmatprep.subr.mxu0 0.0
      %1174 = vmatpush1.msra.mxu0 0.0
      %1175 = vmatprep.subr.mxu0 0.0
      %1176 = vmatpush1.msra.mxu0 0.0
      %1177 = vmatprep.subr.mxu0 0.0
      %1178 = vmatpush1.msra.mxu0 0.0
      %1179 = vmatprep.subr.mxu0 0.0
      %1180 = vmatpush1.msra.mxu0 0.0
      %1181 = vmatprep.subr.mxu0 0.0
      %1182 = vmatpush1.msra.mxu0 0.0
      %1183 = vmatprep.subr.mxu0 0.0
      %1184 = vmatpush1.msra.mxu0 0.0
      %1185 = vmatprep.subr.mxu0 0.0
      %1186 = vmatpush1.msra.mxu0 0.0
      %1187 = vmatprep.subr.mxu0 0.0
      %1188 = vmatpush1.msra.mxu0 0.0
      %1189 = vmatprep.subr.mxu0 0.0
      %1190 = vmatpush1.msra.mxu0 0.0
      %1191 = vmatprep.subr.mxu0 0.0
      %1192 = vmatpush1.msra.mxu0 %v528
      %1193 = vmatprep.subr.mxu0 0.0
      %1194 = vmatpush1.msra.mxu0 %v524
      %1195 = vmatprep.subr.mxu0 0.0
      %1196 = vmatpush2.msra.mxu0 0.0
      %1197 = vmatprep.subr.mxu0 0.0
      %1198 = vmatpush2.msra.mxu0 0.0
      %1199 = vmatprep.subr.mxu0 0.0
      %1200 = vmatpush2.msra.mxu0 0.0
      %1201 = vmatprep.subr.mxu0 0.0
      %1202 = vmatpush2.msra.mxu0 0.0
      %1203 = vmatprep.subr.mxu0 0.0
      %1204 = vmatpush2.msra.mxu0 0.0
      %1205 = vmatprep.subr.mxu0 0.0
      %1206 = vmatpush2.msra.mxu0 0.0
      %1207 = vmatprep.subr.mxu0 0.0
      %1208 = vmatpush2.msra.mxu0 0.0
      %1209 = vmatprep.subr.mxu0 0.0
      %1210 = vmatpush2.msra.mxu0 0.0
      %1211 = vmatprep.subr.mxu0 0.0
      %1212 = vmatpush2.msra.mxu0 0.0
      %1213 = vmatprep.subr.mxu0 0.0
      %1214 = vmatpush2.msra.mxu0 0.0
      %1215 = vmatprep.subr.mxu0 0.0
      %1216 = vmatpush2.msra.mxu0 0.0
      %1217 = vmatprep.subr.mxu0 0.0
      %1218 = vmatpush2.msra.mxu0 0.0
      %1219 = vmatprep.subr.mxu0 0.0
      %1220 = vmatpush2.msra.mxu0 0.0
      %1221 = vmatprep.subr.mxu0 0.0
      %1222 = vmatpush2.msra.mxu0 0.0
      %1223 = vmatprep.subr.mxu0 0.0
      %1224 = vmatpush2.msra.mxu0 0.0
      %1225 = vmatprep.subr.mxu0 0.0
      %1226 = vmatpush2.msra.mxu0 0.0
      %1227 = vmatprep.mubr.f32.mxu0 0.0
      %1228 = vmatmul.mubr.f32.gmra.mxu0 %v1158
      %v1229 = vpop.f32.mrf.mxu0
      %v1230 = vadd.f32 0.0, %v1229
      %v1231 = vpop.f32.mrf.mxu0
      %1232 = vmatprep.mubr.f32.mxu0 0.0
      %1233 = vmatmul.mubr.f32.gmra.mxu0 %v1161
      %v1234 = vpop.f32.mrf.mxu0
      %v1235 = vadd.f32 0.0, %v1234
      %v1236 = vpop.f32.mrf.mxu0
      %1237 = vdwg.mxu0
      %v1239 = vsel %vm906, %v993, 0
      %v1242 = vsel %vm906, %v994, 0
      %1244 = vmatprep.subr.mxu0 0.0
      %1245 = vmatpush1.msra.mxu0 0.0
      %1246 = vmatprep.subr.mxu0 0.0
      %1247 = vmatpush1.msra.mxu0 0.0
      %1248 = vmatprep.subr.mxu0 0.0
      %1249 = vmatpush1.msra.mxu0 0.0
      %1250 = vmatprep.subr.mxu0 0.0
      %1251 = vmatpush1.msra.mxu0 0.0
      %1252 = vmatprep.subr.mxu0 0.0
      %1253 = vmatpush1.msra.mxu0 0.0
      %1254 = vmatprep.subr.mxu0 0.0
      %1255 = vmatpush1.msra.mxu0 0.0
      %1256 = vmatprep.subr.mxu0 0.0
      %1257 = vmatpush1.msra.mxu0 0.0
      %1258 = vmatprep.subr.mxu0 0.0
      %1259 = vmatpush1.msra.mxu0 0.0
      %1260 = vmatprep.subr.mxu0 0.0
      %1261 = vmatpush1.msra.mxu0 0.0
      %1262 = vmatprep.subr.mxu0 0.0
      %1263 = vmatpush1.msra.mxu0 0.0
      %1264 = vmatprep.subr.mxu0 0.0
      %1265 = vmatpush1.msra.mxu0 0.0
      %1266 = vmatprep.subr.mxu0 0.0
      %1267 = vmatpush1.msra.mxu0 0.0
      %1268 = vmatprep.subr.mxu0 0.0
      %1269 = vmatpush1.msra.mxu0 0.0
      %1270 = vmatprep.subr.mxu0 0.0
      %1271 = vmatpush1.msra.mxu0 0.0
      %1272 = vmatprep.subr.mxu0 0.0
      %1273 = vmatpush1.msra.mxu0 %v538
      %1274 = vmatprep.subr.mxu0 0.0
      %1275 = vmatpush1.msra.mxu0 %v534
      %1276 = vmatprep.subr.mxu0 0.0
      %1277 = vmatpush2.msra.mxu0 0.0
      %1278 = vmatprep.subr.mxu0 0.0
      %1279 = vmatpush2.msra.mxu0 0.0
      %1280 = vmatprep.subr.mxu0 0.0
      %1281 = vmatpush2.msra.mxu0 0.0
      %1282 = vmatprep.subr.mxu0 0.0
      %1283 = vmatpush2.msra.mxu0 0.0
      %1284 = vmatprep.subr.mxu0 0.0
      %1285 = vmatpush2.msra.mxu0 0.0
      %1286 = vmatprep.subr.mxu0 0.0
      %1287 = vmatpush2.msra.mxu0 0.0
      %1288 = vmatprep.subr.mxu0 0.0
      %1289 = vmatpush2.msra.mxu0 0.0
      %1290 = vmatprep.subr.mxu0 0.0
      %1291 = vmatpush2.msra.mxu0 0.0
      %1292 = vmatprep.subr.mxu0 0.0
      %1293 = vmatpush2.msra.mxu0 0.0
      %1294 = vmatprep.subr.mxu0 0.0
      %1295 = vmatpush2.msra.mxu0 0.0
      %1296 = vmatprep.subr.mxu0 0.0
      %1297 = vmatpush2.msra.mxu0 0.0
      %1298 = vmatprep.subr.mxu0 0.0
      %1299 = vmatpush2.msra.mxu0 0.0
      %1300 = vmatprep.subr.mxu0 0.0
      %1301 = vmatpush2.msra.mxu0 0.0
      %1302 = vmatprep.subr.mxu0 0.0
      %1303 = vmatpush2.msra.mxu0 0.0
      %1304 = vmatprep.subr.mxu0 0.0
      %1305 = vmatpush2.msra.mxu0 0.0
      %1306 = vmatprep.subr.mxu0 0.0
      %1307 = vmatpush2.msra.mxu0 0.0
      %1308 = vmatprep.mubr.f32.mxu0 0.0
      %1309 = vmatmul.mubr.f32.gmra.mxu0 %v1239
      %v1310 = vpop.f32.mrf.mxu0
      %v1311 = vadd.f32 0.0, %v1310
      %v1312 = vpop.f32.mrf.mxu0
      %1313 = vmatprep.mubr.f32.mxu0 0.0
      %1314 = vmatmul.mubr.f32.gmra.mxu0 %v1242
      %v1315 = vpop.f32.mrf.mxu0
      %v1316 = vadd.f32 0.0, %v1315
      %v1317 = vpop.f32.mrf.mxu0
      %1318 = vdwg.mxu0
      %1319 = vst.msk [vmem:[#allocation2] sm:$0xff] %vm612, %v1068
      %1320 = vst.msk [vmem:[#allocation2 + $0x8] sm:$0xff] %vm612, %v1073
      %1321 = vst.msk [vmem:[#allocation2 + $0x10] sm:$0xff] %vm612, %v1149
      %1322 = vst.msk [vmem:[#allocation2 + $0x18] sm:$0xff] %vm612, %v1154
      %1323 = vst.msk [vmem:[#allocation2 + $0x20] sm:$0xff] %vm612, %v1230
      %1324 = vst.msk [vmem:[#allocation2 + $0x28] sm:$0xff] %vm612, %v1235
      %1325 = vst.msk [vmem:[#allocation2 + $0x30] sm:$0xff] %vm612, %v1311
      %1326 = vst.msk [vmem:[#allocation2 + $0x38] sm:$0xff] %vm612, %v1316
      %1327 = vrot.lane.b32.xlu0 %v605, 120
      %v1328 = vpop.permute.xlu0 %1327
      %1329 = vrot.lane.b32.xlu0 %v605, 56
      %v1330 = vpop.permute.xlu0 %1329
      %v1332 = vsel %vm612, %v1328, 0
      %v1335 = vsel %vm612, %v1330, 0
      %1337 = vmatprep.subr.bf16.mxu0 0
      %1338 = vmatpush1.bf16.xpose.msra.mxu0 0
      %1339 = vmatprep.subr.bf16.mxu0 0
      %1340 = vmatpush1.bf16.xpose.msra.mxu0 0
      %1341 = vmatprep.subr.bf16.mxu0 0
      %1342 = vmatpush1.bf16.xpose.msra.mxu0 0
      %1343 = vmatprep.subr.bf16.mxu0 0
      %1344 = vmatpush1.bf16.xpose.msra.mxu0 0
      %1345 = vmatprep.subr.bf16.mxu0 0
      %1346 = vmatpush1.bf16.xpose.msra.mxu0 0
      %1347 = vmatprep.subr.bf16.mxu0 0
      %1348 = vmatpush1.bf16.xpose.msra.mxu0 0
      %1349 = vmatprep.subr.bf16.mxu0 0
      %1350 = vmatpush1.bf16.xpose.msra.mxu0 0
      %1351 = vmatprep.subr.bf16.mxu0 0
      %1352 = vmatpush1.bf16.xpose.msra.mxu0 %v1335
      %1353 = vmatprep.subr.bf16.mxu0 0
      %1354 = vmatpush2.bf16.xpose.msra.mxu0 0
      %1355 = vmatprep.subr.bf16.mxu0 0
      %1356 = vmatpush2.bf16.xpose.msra.mxu0 0
      %1357 = vmatprep.subr.bf16.mxu0 0
      %1358 = vmatpush2.bf16.xpose.msra.mxu0 0
      %1359 = vmatprep.subr.bf16.mxu0 0
      %1360 = vmatpush2.bf16.xpose.msra.mxu0 0
      %1361 = vmatprep.subr.bf16.mxu0 0
      %1362 = vmatpush2.bf16.xpose.msra.mxu0 0
      %1363 = vmatprep.subr.bf16.mxu0 0
      %1364 = vmatpush2.bf16.xpose.msra.mxu0 0
      %1365 = vmatprep.subr.bf16.mxu0 0
      %1366 = vmatpush2.bf16.xpose.msra.mxu0 0
      %1367 = vmatprep.subr.bf16.mxu0 0
      %1368 = vmatpush2.bf16.xpose.msra.mxu0 0
      %1369 = vmatprep.mubr.bf16.mxu0 0
      %1370 = vmatmul.mubr.bf16.gmra.mxu0 %v1332
      %v1371 = vpop.f32.mrf.mxu0
      %v1372 = vadd.f32 0.0, %v1371
      %v1373 = vpop.f32.mrf.mxu0
      %v1374 = vpop.f32.mrf.mxu0
      %v1375 = vadd.f32 0.0, %v1374
      %v1376 = vpop.f32.mrf.mxu0
      %1377 = vdwg.mxu0
      %1378 = vrot.lane.b32.xlu0 %v606, 120
      %v1379 = vpop.permute.xlu0 %1378
      %1380 = vrot.lane.b32.xlu0 %v606, 56
      %v1381 = vpop.permute.xlu0 %1380
      %v1383 = vsel %vm612, %v1379, 0
      %v1386 = vsel %vm612, %v1381, 0
      %1388 = vmatprep.subr.bf16.mxu0 0
      %1389 = vmatpush1.bf16.xpose.msra.mxu0 0
      %1390 = vmatprep.subr.bf16.mxu0 0
      %1391 = vmatpush1.bf16.xpose.msra.mxu0 0
      %1392 = vmatprep.subr.bf16.mxu0 0
      %1393 = vmatpush1.bf16.xpose.msra.mxu0 0
      %1394 = vmatprep.subr.bf16.mxu0 0
      %1395 = vmatpush1.bf16.xpose.msra.mxu0 0
      %1396 = vmatprep.subr.bf16.mxu0 0
      %1397 = vmatpush1.bf16.xpose.msra.mxu0 0
      %1398 = vmatprep.subr.bf16.mxu0 0
      %1399 = vmatpush1.bf16.xpose.msra.mxu0 0
      %1400 = vmatprep.subr.bf16.mxu0 0
      %1401 = vmatpush1.bf16.xpose.msra.mxu0 0
      %1402 = vmatprep.subr.bf16.mxu0 0
      %1403 = vmatpush1.bf16.xpose.msra.mxu0 %v1386
      %1404 = vmatprep.subr.bf16.mxu0 0
      %1405 = vmatpush2.bf16.xpose.msra.mxu0 0
      %1406 = vmatprep.subr.bf16.mxu0 0
      %1407 = vmatpush2.bf16.xpose.msra.mxu0 0
      %1408 = vmatprep.subr.bf16.mxu0 0
      %1409 = vmatpush2.bf16.xpose.msra.mxu0 0
      %1410 = vmatprep.subr.bf16.mxu0 0
      %1411 = vmatpush2.bf16.xpose.msra.mxu0 0
      %1412 = vmatprep.subr.bf16.mxu0 0
      %1413 = vmatpush2.bf16.xpose.msra.mxu0 0
      %1414 = vmatprep.subr.bf16.mxu0 0
      %1415 = vmatpush2.bf16.xpose.msra.mxu0 0
      %1416 = vmatprep.subr.bf16.mxu0 0
      %1417 = vmatpush2.bf16.xpose.msra.mxu0 0
      %1418 = vmatprep.subr.bf16.mxu0 0
      %1419 = vmatpush2.bf16.xpose.msra.mxu0 0
      %1420 = vmatprep.mubr.bf16.mxu0 0
      %1421 = vmatmul.mubr.bf16.gmra.mxu0 %v1383
      %v1422 = vpop.f32.mrf.mxu0
      %v1423 = vadd.f32 0.0, %v1422
      %v1424 = vpop.f32.mrf.mxu0
      %v1425 = vpop.f32.mrf.mxu0
      %v1426 = vadd.f32 0.0, %v1425
      %v1427 = vpop.f32.mrf.mxu0
      %1428 = vdwg.mxu0
      %1429 = vrot.lane.b32.xlu0 %v607, 120
      %v1430 = vpop.permute.xlu0 %1429
      %1431 = vrot.lane.b32.xlu0 %v607, 56
      %v1432 = vpop.permute.xlu0 %1431
      %v1434 = vsel %vm612, %v1430, 0
      %v1437 = vsel %vm612, %v1432, 0
      %1439 = vmatprep.subr.bf16.mxu0 0
      %1440 = vmatpush1.bf16.xpose.msra.mxu0 0
      %1441 = vmatprep.subr.bf16.mxu0 0
      %1442 = vmatpush1.bf16.xpose.msra.mxu0 0
      %1443 = vmatprep.subr.bf16.mxu0 0
      %1444 = vmatpush1.bf16.xpose.msra.mxu0 0
      %1445 = vmatprep.subr.bf16.mxu0 0
      %1446 = vmatpush1.bf16.xpose.msra.mxu0 0
      %1447 = vmatprep.subr.bf16.mxu0 0
      %1448 = vmatpush1.bf16.xpose.msra.mxu0 0
      %1449 = vmatprep.subr.bf16.mxu0 0
      %1450 = vmatpush1.bf16.xpose.msra.mxu0 0
      %1451 = vmatprep.subr.bf16.mxu0 0
      %1452 = vmatpush1.bf16.xpose.msra.mxu0 0
      %1453 = vmatprep.subr.bf16.mxu0 0
      %1454 = vmatpush1.bf16.xpose.msra.mxu0 %v1437
      %1455 = vmatprep.subr.bf16.mxu0 0
      %1456 = vmatpush2.bf16.xpose.msra.mxu0 0
      %1457 = vmatprep.subr.bf16.mxu0 0
      %1458 = vmatpush2.bf16.xpose.msra.mxu0 0
      %1459 = vmatprep.subr.bf16.mxu0 0
      %1460 = vmatpush2.bf16.xpose.msra.mxu0 0
      %1461 = vmatprep.subr.bf16.mxu0 0
      %1462 = vmatpush2.bf16.xpose.msra.mxu0 0
      %1463 = vmatprep.subr.bf16.mxu0 0
      %1464 = vmatpush2.bf16.xpose.msra.mxu0 0
      %1465 = vmatprep.subr.bf16.mxu0 0
      %1466 = vmatpush2.bf16.xpose.msra.mxu0 0
      %1467 = vmatprep.subr.bf16.mxu0 0
      %1468 = vmatpush2.bf16.xpose.msra.mxu0 0
      %1469 = vmatprep.subr.bf16.mxu0 0
      %1470 = vmatpush2.bf16.xpose.msra.mxu0 0
      %1471 = vmatprep.mubr.bf16.mxu0 0
      %1472 = vmatmul.mubr.bf16.gmra.mxu0 %v1434
      %v1473 = vpop.f32.mrf.mxu0
      %v1474 = vadd.f32 0.0, %v1473
      %v1475 = vpop.f32.mrf.mxu0
      %v1476 = vpop.f32.mrf.mxu0
      %v1477 = vadd.f32 0.0, %v1476
      %v1478 = vpop.f32.mrf.mxu0
      %1479 = vdwg.mxu0
      %1480 = vrot.lane.b32.xlu0 %v608, 120
      %v1481 = vpop.permute.xlu0 %1480
      %1482 = vrot.lane.b32.xlu0 %v608, 56
      %v1483 = vpop.permute.xlu0 %1482
      %v1485 = vsel %vm612, %v1481, 0
      %v1488 = vsel %vm612, %v1483, 0
      %1490 = vmatprep.subr.bf16.mxu0 0
      %1491 = vmatpush1.bf16.xpose.msra.mxu0 0
      %1492 = vmatprep.subr.bf16.mxu0 0
      %1493 = vmatpush1.bf16.xpose.msra.mxu0 0
      %1494 = vmatprep.subr.bf16.mxu0 0
      %1495 = vmatpush1.bf16.xpose.msra.mxu0 0
      %1496 = vmatprep.subr.bf16.mxu0 0
      %1497 = vmatpush1.bf16.xpose.msra.mxu0 0
      %1498 = vmatprep.subr.bf16.mxu0 0
      %1499 = vmatpush1.bf16.xpose.msra.mxu0 0
      %1500 = vmatprep.subr.bf16.mxu0 0
      %1501 = vmatpush1.bf16.xpose.msra.mxu0 0
      %1502 = vmatprep.subr.bf16.mxu0 0
      %1503 = vmatpush1.bf16.xpose.msra.mxu0 0
      %1504 = vmatprep.subr.bf16.mxu0 0
      %1505 = vmatpush1.bf16.xpose.msra.mxu0 %v1488
      %1506 = vmatprep.subr.bf16.mxu0 0
      %1507 = vmatpush2.bf16.xpose.msra.mxu0 0
      %1508 = vmatprep.subr.bf16.mxu0 0
      %1509 = vmatpush2.bf16.xpose.msra.mxu0 0
      %1510 = vmatprep.subr.bf16.mxu0 0
      %1511 = vmatpush2.bf16.xpose.msra.mxu0 0
      %1512 = vmatprep.subr.bf16.mxu0 0
      %1513 = vmatpush2.bf16.xpose.msra.mxu0 0
      %1514 = vmatprep.subr.bf16.mxu0 0
      %1515 = vmatpush2.bf16.xpose.msra.mxu0 0
      %1516 = vmatprep.subr.bf16.mxu0 0
      %1517 = vmatpush2.bf16.xpose.msra.mxu0 0
      %1518 = vmatprep.subr.bf16.mxu0 0
      %1519 = vmatpush2.bf16.xpose.msra.mxu0 0
      %1520 = vmatprep.subr.bf16.mxu0 0
      %1521 = vmatpush2.bf16.xpose.msra.mxu0 0
      %1522 = vmatprep.mubr.bf16.mxu0 0
      %1523 = vmatmul.mubr.bf16.gmra.mxu0 %v1485
      %v1524 = vpop.f32.mrf.mxu0
      %v1525 = vadd.f32 0.0, %v1524
      %v1526 = vpop.f32.mrf.mxu0
      %v1527 = vpop.f32.mrf.mxu0
      %v1528 = vadd.f32 0.0, %v1527
      %v1529 = vpop.f32.mrf.mxu0
      %1530 = vdwg.mxu0
      %v1531 = vmul.f32 %v1372, 0.35355338
      %v1532 = vmul.f32 %v1375, 0.35355338
      %v1533 = vmul.f32 %v1423, 0.35355338
      %v1534 = vmul.f32 %v1426, 0.35355338
      %v1535 = vmul.f32 %v1474, 0.35355338
      %v1536 = vmul.f32 %v1477, 0.35355338
      %v1537 = vmul.f32 %v1525, 0.35355338
      %v1538 = vmul.f32 %v1528, 0.35355338
      %v1539 = vand.u32 2147483647, %v1531
      %v1540 = vand.u32 2147483647, %v1532
      %v1541 = vand.u32 2147483647, %v1533
      %v1542 = vand.u32 2147483647, %v1534
      %v1543 = vand.u32 2147483647, %v1535
      %v1544 = vand.u32 2147483647, %v1536
      %v1545 = vand.u32 2147483647, %v1537
      %v1546 = vand.u32 2147483647, %v1538
      %v1547 = vrsqrt.pop %v1539
      %v1548 = vmul.f32 %v1539, %v1547
      %vm1549 = vcmp.eq.f32.partialorder %v1539, inf
      %v1550 = vsel %vm1549, %v1539, %v1548
      %vm1551 = vcmp.eq.f32.partialorder %v1539, 0.0
      %v1552 = vand.u32 %v1539, 2147483648
      %v1553 = vsel %vm1551, %v1552, %v1550
      %v1554 = vrsqrt.pop %v1540
      %v1555 = vmul.f32 %v1540, %v1554
      %vm1556 = vcmp.eq.f32.partialorder %v1540, inf
      %v1557 = vsel %vm1556, %v1540, %v1555
      %vm1558 = vcmp.eq.f32.partialorder %v1540, 0.0
      %v1559 = vand.u32 %v1540, 2147483648
      %v1560 = vsel %vm1558, %v1559, %v1557
      %v1561 = vrsqrt.pop %v1541
      %v1562 = vmul.f32 %v1541, %v1561
      %vm1563 = vcmp.eq.f32.partialorder %v1541, inf
      %v1564 = vsel %vm1563, %v1541, %v1562
      %vm1565 = vcmp.eq.f32.partialorder %v1541, 0.0
      %v1566 = vand.u32 %v1541, 2147483648
      %v1567 = vsel %vm1565, %v1566, %v1564
      %v1568 = vrsqrt.pop %v1542
      %v1569 = vmul.f32 %v1542, %v1568
      %vm1570 = vcmp.eq.f32.partialorder %v1542, inf
      %v1571 = vsel %vm1570, %v1542, %v1569
      %vm1572 = vcmp.eq.f32.partialorder %v1542, 0.0
      %v1573 = vand.u32 %v1542, 2147483648
      %v1574 = vsel %vm1572, %v1573, %v1571
      %v1575 = vrsqrt.pop %v1543
      %v1576 = vmul.f32 %v1543, %v1575
      %vm1577 = vcmp.eq.f32.partialorder %v1543, inf
      %v1578 = vsel %vm1577, %v1543, %v1576
      %vm1579 = vcmp.eq.f32.partialorder %v1543, 0.0
      %v1580 = vand.u32 %v1543, 2147483648
      %v1581 = vsel %vm1579, %v1580, %v1578
      %v1582 = vrsqrt.pop %v1544
      %v1583 = vmul.f32 %v1544, %v1582
      %vm1584 = vcmp.eq.f32.partialorder %v1544, inf
      %v1585 = vsel %vm1584, %v1544, %v1583
      %vm1586 = vcmp.eq.f32.partialorder %v1544, 0.0
      %v1587 = vand.u32 %v1544, 2147483648
      %v1588 = vsel %vm1586, %v1587, %v1585
      %v1589 = vrsqrt.pop %v1545
      %v1590 = vmul.f32 %v1545, %v1589
      %vm1591 = vcmp.eq.f32.partialorder %v1545, inf
      %v1592 = vsel %vm1591, %v1545, %v1590
      %vm1593 = vcmp.eq.f32.partialorder %v1545, 0.0
      %v1594 = vand.u32 %v1545, 2147483648
      %v1595 = vsel %vm1593, %v1594, %v1592
      %v1596 = vrsqrt.pop %v1546
      %v1597 = vmul.f32 %v1546, %v1596
      %vm1598 = vcmp.eq.f32.partialorder %v1546, inf
      %v1599 = vsel %vm1598, %v1546, %v1597
      %vm1600 = vcmp.eq.f32.partialorder %v1546, 0.0
      %v1601 = vand.u32 %v1546, 2147483648
      %v1602 = vsel %vm1600, %v1601, %v1599
      %vm1603 = vcmp.ge.f32.partialorder %v1531, 0.0
      %vm1604 = vcmp.ge.f32.partialorder %v1532, 0.0
      %vm1605 = vcmp.ge.f32.partialorder %v1533, 0.0
      %vm1606 = vcmp.ge.f32.partialorder %v1534, 0.0
      %vm1607 = vcmp.ge.f32.partialorder %v1535, 0.0
      %vm1608 = vcmp.ge.f32.partialorder %v1536, 0.0
      %vm1609 = vcmp.ge.f32.partialorder %v1537, 0.0
      %vm1610 = vcmp.ge.f32.partialorder %v1538, 0.0
      %v1611 = vsub.f32 0.0, %v1553
      %v1612 = vsub.f32 0.0, %v1560
      %v1613 = vsub.f32 0.0, %v1567
      %v1614 = vsub.f32 0.0, %v1574
      %v1615 = vsub.f32 0.0, %v1581
      %v1616 = vsub.f32 0.0, %v1588
      %v1617 = vsub.f32 0.0, %v1595
      %v1618 = vsub.f32 0.0, %v1602
      %v1619 = vsel %vm1603, %v1553, %v1611
      %v1620 = vsel %vm1604, %v1560, %v1612
      %v1621 = vsel %vm1605, %v1567, %v1613
      %v1622 = vsel %vm1606, %v1574, %v1614
      %v1623 = vsel %vm1607, %v1581, %v1615
      %v1624 = vsel %vm1608, %v1588, %v1616
      %v1625 = vsel %vm1609, %v1595, %v1617
      %v1626 = vsel %vm1610, %v1602, %v1618
      %v1627 = vsel %vm906, %v1619, -inf
      %1628 = vmax.xlane.f32.xlu0 %v1627
      %v1629 = vpop.xlane.xlu0 %1628
      %v1630 = vsel %vm906, %v1620, -inf
      %1631 = vmax.xlane.f32.xlu0 %v1630
      %v1632 = vpop.xlane.xlu0 %1631
      %v1633 = vsel %vm906, %v1621, -inf
      %1634 = vmax.xlane.f32.xlu0 %v1633
      %v1635 = vpop.xlane.xlu0 %1634
      %v1636 = vsel %vm906, %v1622, -inf
      %1637 = vmax.xlane.f32.xlu0 %v1636
      %v1638 = vpop.xlane.xlu0 %1637
      %v1639 = vsel %vm906, %v1623, -inf
      %1640 = vmax.xlane.f32.xlu0 %v1639
      %v1641 = vpop.xlane.xlu0 %1640
      %v1642 = vsel %vm906, %v1624, -inf
      %1643 = vmax.xlane.f32.xlu0 %v1642
      %v1644 = vpop.xlane.xlu0 %1643
      %v1645 = vsel %vm906, %v1625, -inf
      %1646 = vmax.xlane.f32.xlu0 %v1645
      %v1647 = vpop.xlane.xlu0 %1646
      %v1648 = vsel %vm906, %v1626, -inf
      %1649 = vmax.xlane.f32.xlu0 %v1648
      %v1650 = vpop.xlane.xlu0 %1649
      %v1651 = vsub.f32 %v1619, %v1629
      %v1652 = vsub.f32 %v1620, %v1632
      %v1653 = vsub.f32 %v1621, %v1635
      %v1654 = vsub.f32 %v1622, %v1638
      %v1655 = vsub.f32 %v1623, %v1641
      %v1656 = vsub.f32 %v1624, %v1644
      %v1657 = vsub.f32 %v1625, %v1647
      %v1658 = vsub.f32 %v1626, %v1650
      %v1659 = vmul.f32 %v1651, 1.442695
      %v1660 = vpow.pop %v1659
      %v1661 = vmul.f32 %v1652, 1.442695
      %v1662 = vpow.pop %v1661
      %v1663 = vmul.f32 %v1653, 1.442695
      %v1664 = vpow.pop %v1663
      %v1665 = vmul.f32 %v1654, 1.442695
      %v1666 = vpow.pop %v1665
      %v1667 = vmul.f32 %v1655, 1.442695
      %v1668 = vpow.pop %v1667
      %v1669 = vmul.f32 %v1656, 1.442695
      %v1670 = vpow.pop %v1669
      %v1671 = vmul.f32 %v1657, 1.442695
      %v1672 = vpow.pop %v1671
      %v1673 = vmul.f32 %v1658, 1.442695
      %v1674 = vpow.pop %v1673
      %v1675 = vsel %vm906, %v1660, 0.0
      %1676 = vadd.xlane.f32.xlu0 %v1675
      %v1677 = vpop.xlane.xlu0 %1676
      %v1678 = vsel %vm906, %v1662, 0.0
      %1679 = vadd.xlane.f32.xlu0 %v1678
      %v1680 = vpop.xlane.xlu0 %1679
      %v1681 = vsel %vm906, %v1664, 0.0
      %1682 = vadd.xlane.f32.xlu0 %v1681
      %v1683 = vpop.xlane.xlu0 %1682
      %v1684 = vsel %vm906, %v1666, 0.0
      %1685 = vadd.xlane.f32.xlu0 %v1684
      %v1686 = vpop.xlane.xlu0 %1685
      %v1687 = vsel %vm906, %v1668, 0.0
      %1688 = vadd.xlane.f32.xlu0 %v1687
      %v1689 = vpop.xlane.xlu0 %1688
      %v1690 = vsel %vm906, %v1670, 0.0
      %1691 = vadd.xlane.f32.xlu0 %v1690
      %v1692 = vpop.xlane.xlu0 %1691
      %v1693 = vsel %vm906, %v1672, 0.0
      %1694 = vadd.xlane.f32.xlu0 %v1693
      %v1695 = vpop.xlane.xlu0 %1694
      %v1696 = vsel %vm906, %v1674, 0.0
      %1697 = vadd.xlane.f32.xlu0 %v1696
      %v1698 = vpop.xlane.xlu0 %1697
      %v1699 = vrcp.pop %v1677
      %v1700 = vrcp.pop %v1680
      %v1701 = vrcp.pop %v1683
      %v1702 = vrcp.pop %v1686
      %v1703 = vrcp.pop %v1689
      %v1704 = vrcp.pop %v1692
      %v1705 = vrcp.pop %v1695
      %v1706 = vrcp.pop %v1698
      %v1707 = vmul.f32 %v1660, %v1699
      %v1708 = vmul.f32 %v1662, %v1700
      %v1709 = vmul.f32 %v1664, %v1701
      %v1710 = vmul.f32 %v1666, %v1702
      %v1711 = vmul.f32 %v1668, %v1703
      %v1712 = vmul.f32 %v1670, %v1704
      %v1713 = vmul.f32 %v1672, %v1705
      %v1714 = vmul.f32 %v1674, %v1706
      %1717 = vrot.lane.b32.xlu0 %v504, 120
      %v1718 = vpop.permute.xlu0 %1717
      %1719 = vrot.lane.b32.xlu0 %v508, 120
      %v1720 = vpop.permute.xlu0 %1719
      %v1724 = vsel %vm906, %v1707, 0
      %v1727 = vsel %vm906, %v1708, 0
      %1729 = vmatprep.subr.mxu0 0.0
      %1730 = vmatpush1.msra.mxu0 0.0
      %1731 = vmatprep.subr.mxu0 0.0
      %1732 = vmatpush1.msra.mxu0 0.0
      %1733 = vmatprep.subr.mxu0 0.0
      %1734 = vmatpush1.msra.mxu0 0.0
      %1735 = vmatprep.subr.mxu0 0.0
      %1736 = vmatpush1.msra.mxu0 0.0
      %1737 = vmatprep.subr.mxu0 0.0
      %1738 = vmatpush1.msra.mxu0 0.0
      %1739 = vmatprep.subr.mxu0 0.0
      %1740 = vmatpush1.msra.mxu0 0.0
      %1741 = vmatprep.subr.mxu0 0.0
      %1742 = vmatpush1.msra.mxu0 0.0
      %1743 = vmatprep.subr.mxu0 0.0
      %1744 = vmatpush1.msra.mxu0 0.0
      %1745 = vmatprep.subr.mxu0 0.0
      %1746 = vmatpush1.msra.mxu0 0.0
      %1747 = vmatprep.subr.mxu0 0.0
      %1748 = vmatpush1.msra.mxu0 0.0
      %1749 = vmatprep.subr.mxu0 0.0
      %1750 = vmatpush1.msra.mxu0 0.0
      %1751 = vmatprep.subr.mxu0 0.0
      %1752 = vmatpush1.msra.mxu0 0.0
      %1753 = vmatprep.subr.mxu0 0.0
      %1754 = vmatpush1.msra.mxu0 0.0
      %1755 = vmatprep.subr.mxu0 0.0
      %1756 = vmatpush1.msra.mxu0 0.0
      %1757 = vmatprep.subr.mxu0 0.0
      %1758 = vmatpush1.msra.mxu0 %v1720
      %1759 = vmatprep.subr.mxu0 0.0
      %1760 = vmatpush1.msra.mxu0 %v1718
      %1761 = vmatprep.subr.mxu0 0.0
      %1762 = vmatpush2.msra.mxu0 0.0
      %1763 = vmatprep.subr.mxu0 0.0
      %1764 = vmatpush2.msra.mxu0 0.0
      %1765 = vmatprep.subr.mxu0 0.0
      %1766 = vmatpush2.msra.mxu0 0.0
      %1767 = vmatprep.subr.mxu0 0.0
      %1768 = vmatpush2.msra.mxu0 0.0
      %1769 = vmatprep.subr.mxu0 0.0
      %1770 = vmatpush2.msra.mxu0 0.0
      %1771 = vmatprep.subr.mxu0 0.0
      %1772 = vmatpush2.msra.mxu0 0.0
      %1773 = vmatprep.subr.mxu0 0.0
      %1774 = vmatpush2.msra.mxu0 0.0
      %1775 = vmatprep.subr.mxu0 0.0
      %1776 = vmatpush2.msra.mxu0 0.0
      %1777 = vmatprep.subr.mxu0 0.0
      %1778 = vmatpush2.msra.mxu0 0.0
      %1779 = vmatprep.subr.mxu0 0.0
      %1780 = vmatpush2.msra.mxu0 0.0
      %1781 = vmatprep.subr.mxu0 0.0
      %1782 = vmatpush2.msra.mxu0 0.0
      %1783 = vmatprep.subr.mxu0 0.0
      %1784 = vmatpush2.msra.mxu0 0.0
      %1785 = vmatprep.subr.mxu0 0.0
      %1786 = vmatpush2.msra.mxu0 0.0
      %1787 = vmatprep.subr.mxu0 0.0
      %1788 = vmatpush2.msra.mxu0 0.0
      %1789 = vmatprep.subr.mxu0 0.0
      %1790 = vmatpush2.msra.mxu0 0.0
      %1791 = vmatprep.subr.mxu0 0.0
      %1792 = vmatpush2.msra.mxu0 0.0
      %1793 = vmatprep.mubr.f32.mxu0 0.0
      %1794 = vmatmul.mubr.f32.gmra.mxu0 %v1724
      %v1795 = vpop.f32.mrf.mxu0
      %v1796 = vadd.f32 0.0, %v1795
      %v1797 = vpop.f32.mrf.mxu0
      %1798 = vmatprep.mubr.f32.mxu0 0.0
      %1799 = vmatmul.mubr.f32.gmra.mxu0 %v1727
      %v1800 = vpop.f32.mrf.mxu0
      %v1801 = vadd.f32 0.0, %v1800
      %v1802 = vpop.f32.mrf.mxu0
      %1803 = vdwg.mxu0
      %1806 = vrot.lane.b32.xlu0 %v514, 120
      %v1807 = vpop.permute.xlu0 %1806
      %1808 = vrot.lane.b32.xlu0 %v518, 120
      %v1809 = vpop.permute.xlu0 %1808
      %v1813 = vsel %vm906, %v1709, 0
      %v1816 = vsel %vm906, %v1710, 0
      %1818 = vmatprep.subr.mxu0 0.0
      %1819 = vmatpush1.msra.mxu0 0.0
      %1820 = vmatprep.subr.mxu0 0.0
      %1821 = vmatpush1.msra.mxu0 0.0
      %1822 = vmatprep.subr.mxu0 0.0
      %1823 = vmatpush1.msra.mxu0 0.0
      %1824 = vmatprep.subr.mxu0 0.0
      %1825 = vmatpush1.msra.mxu0 0.0
      %1826 = vmatprep.subr.mxu0 0.0
      %1827 = vmatpush1.msra.mxu0 0.0
      %1828 = vmatprep.subr.mxu0 0.0
      %1829 = vmatpush1.msra.mxu0 0.0
      %1830 = vmatprep.subr.mxu0 0.0
      %1831 = vmatpush1.msra.mxu0 0.0
      %1832 = vmatprep.subr.mxu0 0.0
      %1833 = vmatpush1.msra.mxu0 0.0
      %1834 = vmatprep.subr.mxu0 0.0
      %1835 = vmatpush1.msra.mxu0 0.0
      %1836 = vmatprep.subr.mxu0 0.0
      %1837 = vmatpush1.msra.mxu0 0.0
      %1838 = vmatprep.subr.mxu0 0.0
      %1839 = vmatpush1.msra.mxu0 0.0
      %1840 = vmatprep.subr.mxu0 0.0
      %1841 = vmatpush1.msra.mxu0 0.0
      %1842 = vmatprep.subr.mxu0 0.0
      %1843 = vmatpush1.msra.mxu0 0.0
      %1844 = vmatprep.subr.mxu0 0.0
      %1845 = vmatpush1.msra.mxu0 0.0
      %1846 = vmatprep.subr.mxu0 0.0
      %1847 = vmatpush1.msra.mxu0 %v1809
      %1848 = vmatprep.subr.mxu0 0.0
      %1849 = vmatpush1.msra.mxu0 %v1807
      %1850 = vmatprep.subr.mxu0 0.0
      %1851 = vmatpush2.msra.mxu0 0.0
      %1852 = vmatprep.subr.mxu0 0.0
      %1853 = vmatpush2.msra.mxu0 0.0
      %1854 = vmatprep.subr.mxu0 0.0
      %1855 = vmatpush2.msra.mxu0 0.0
      %1856 = vmatprep.subr.mxu0 0.0
      %1857 = vmatpush2.msra.mxu0 0.0
      %1858 = vmatprep.subr.mxu0 0.0
      %1859 = vmatpush2.msra.mxu0 0.0
      %1860 = vmatprep.subr.mxu0 0.0
      %1861 = vmatpush2.msra.mxu0 0.0
      %1862 = vmatprep.subr.mxu0 0.0
      %1863 = vmatpush2.msra.mxu0 0.0
      %1864 = vmatprep.subr.mxu0 0.0
      %1865 = vmatpush2.msra.mxu0 0.0
      %1866 = vmatprep.subr.mxu0 0.0
      %1867 = vmatpush2.msra.mxu0 0.0
      %1868 = vmatprep.subr.mxu0 0.0
      %1869 = vmatpush2.msra.mxu0 0.0
      %1870 = vmatprep.subr.mxu0 0.0
      %1871 = vmatpush2.msra.mxu0 0.0
      %1872 = vmatprep.subr.mxu0 0.0
      %1873 = vmatpush2.msra.mxu0 0.0
      %1874 = vmatprep.subr.mxu0 0.0
      %1875 = vmatpush2.msra.mxu0 0.0
      %1876 = vmatprep.subr.mxu0 0.0
      %1877 = vmatpush2.msra.mxu0 0.0
      %1878 = vmatprep.subr.mxu0 0.0
      %1879 = vmatpush2.msra.mxu0 0.0
      %1880 = vmatprep.subr.mxu0 0.0
      %1881 = vmatpush2.msra.mxu0 0.0
      %1882 = vmatprep.mubr.f32.mxu0 0.0
      %1883 = vmatmul.mubr.f32.gmra.mxu0 %v1813
      %v1884 = vpop.f32.mrf.mxu0
      %v1885 = vadd.f32 0.0, %v1884
      %v1886 = vpop.f32.mrf.mxu0
      %1887 = vmatprep.mubr.f32.mxu0 0.0
      %1888 = vmatmul.mubr.f32.gmra.mxu0 %v1816
      %v1889 = vpop.f32.mrf.mxu0
      %v1890 = vadd.f32 0.0, %v1889
      %v1891 = vpop.f32.mrf.mxu0
      %1892 = vdwg.mxu0
      %1895 = vrot.lane.b32.xlu0 %v524, 120
      %v1896 = vpop.permute.xlu0 %1895
      %1897 = vrot.lane.b32.xlu0 %v528, 120
      %v1898 = vpop.permute.xlu0 %1897
      %v1902 = vsel %vm906, %v1711, 0
      %v1905 = vsel %vm906, %v1712, 0
      %1907 = vmatprep.subr.mxu0 0.0
      %1908 = vmatpush1.msra.mxu0 0.0
      %1909 = vmatprep.subr.mxu0 0.0
      %1910 = vmatpush1.msra.mxu0 0.0
      %1911 = vmatprep.subr.mxu0 0.0
      %1912 = vmatpush1.msra.mxu0 0.0
      %1913 = vmatprep.subr.mxu0 0.0
      %1914 = vmatpush1.msra.mxu0 0.0
      %1915 = vmatprep.subr.mxu0 0.0
      %1916 = vmatpush1.msra.mxu0 0.0
      %1917 = vmatprep.subr.mxu0 0.0
      %1918 = vmatpush1.msra.mxu0 0.0
      %1919 = vmatprep.subr.mxu0 0.0
      %1920 = vmatpush1.msra.mxu0 0.0
      %1921 = vmatprep.subr.mxu0 0.0
      %1922 = vmatpush1.msra.mxu0 0.0
      %1923 = vmatprep.subr.mxu0 0.0
      %1924 = vmatpush1.msra.mxu0 0.0
      %1925 = vmatprep.subr.mxu0 0.0
      %1926 = vmatpush1.msra.mxu0 0.0
      %1927 = vmatprep.subr.mxu0 0.0
      %1928 = vmatpush1.msra.mxu0 0.0
      %1929 = vmatprep.subr.mxu0 0.0
      %1930 = vmatpush1.msra.mxu0 0.0
      %1931 = vmatprep.subr.mxu0 0.0
      %1932 = vmatpush1.msra.mxu0 0.0
      %1933 = vmatprep.subr.mxu0 0.0
      %1934 = vmatpush1.msra.mxu0 0.0
      %1935 = vmatprep.subr.mxu0 0.0
      %1936 = vmatpush1.msra.mxu0 %v1898
      %1937 = vmatprep.subr.mxu0 0.0
      %1938 = vmatpush1.msra.mxu0 %v1896
      %1939 = vmatprep.subr.mxu0 0.0
      %1940 = vmatpush2.msra.mxu0 0.0
      %1941 = vmatprep.subr.mxu0 0.0
      %1942 = vmatpush2.msra.mxu0 0.0
      %1943 = vmatprep.subr.mxu0 0.0
      %1944 = vmatpush2.msra.mxu0 0.0
      %1945 = vmatprep.subr.mxu0 0.0
      %1946 = vmatpush2.msra.mxu0 0.0
      %1947 = vmatprep.subr.mxu0 0.0
      %1948 = vmatpush2.msra.mxu0 0.0
      %1949 = vmatprep.subr.mxu0 0.0
      %1950 = vmatpush2.msra.mxu0 0.0
      %1951 = vmatprep.subr.mxu0 0.0
      %1952 = vmatpush2.msra.mxu0 0.0
      %1953 = vmatprep.subr.mxu0 0.0
      %1954 = vmatpush2.msra.mxu0 0.0
      %1955 = vmatprep.subr.mxu0 0.0
      %1956 = vmatpush2.msra.mxu0 0.0
      %1957 = vmatprep.subr.mxu0 0.0
      %1958 = vmatpush2.msra.mxu0 0.0
      %1959 = vmatprep.subr.mxu0 0.0
      %1960 = vmatpush2.msra.mxu0 0.0
      %1961 = vmatprep.subr.mxu0 0.0
      %1962 = vmatpush2.msra.mxu0 0.0
      %1963 = vmatprep.subr.mxu0 0.0
      %1964 = vmatpush2.msra.mxu0 0.0
      %1965 = vmatprep.subr.mxu0 0.0
      %1966 = vmatpush2.msra.mxu0 0.0
      %1967 = vmatprep.subr.mxu0 0.0
      %1968 = vmatpush2.msra.mxu0 0.0
      %1969 = vmatprep.subr.mxu0 0.0
      %1970 = vmatpush2.msra.mxu0 0.0
      %1971 = vmatprep.mubr.f32.mxu0 0.0
      %1972 = vmatmul.mubr.f32.gmra.mxu0 %v1902
      %v1973 = vpop.f32.mrf.mxu0
      %v1974 = vadd.f32 0.0, %v1973
      %v1975 = vpop.f32.mrf.mxu0
      %1976 = vmatprep.mubr.f32.mxu0 0.0
      %1977 = vmatmul.mubr.f32.gmra.mxu0 %v1905
      %v1978 = vpop.f32.mrf.mxu0
      %v1979 = vadd.f32 0.0, %v1978
      %v1980 = vpop.f32.mrf.mxu0
      %1981 = vdwg.mxu0
      %1984 = vrot.lane.b32.xlu0 %v534, 120
      %v1985 = vpop.permute.xlu0 %1984
      %1986 = vrot.lane.b32.xlu0 %v538, 120
      %v1987 = vpop.permute.xlu0 %1986
      %v1991 = vsel %vm906, %v1713, 0
      %v1994 = vsel %vm906, %v1714, 0
      %1996 = vmatprep.subr.mxu0 0.0
      %1997 = vmatpush1.msra.mxu0 0.0
      %1998 = vmatprep.subr.mxu0 0.0
      %1999 = vmatpush1.msra.mxu0 0.0
      %2000 = vmatprep.subr.mxu0 0.0
      %2001 = vmatpush1.msra.mxu0 0.0
      %2002 = vmatprep.subr.mxu0 0.0
      %2003 = vmatpush1.msra.mxu0 0.0
      %2004 = vmatprep.subr.mxu0 0.0
      %2005 = vmatpush1.msra.mxu0 0.0
      %2006 = vmatprep.subr.mxu0 0.0
      %2007 = vmatpush1.msra.mxu0 0.0
      %2008 = vmatprep.subr.mxu0 0.0
      %2009 = vmatpush1.msra.mxu0 0.0
      %2010 = vmatprep.subr.mxu0 0.0
      %2011 = vmatpush1.msra.mxu0 0.0
      %2012 = vmatprep.subr.mxu0 0.0
      %2013 = vmatpush1.msra.mxu0 0.0
      %2014 = vmatprep.subr.mxu0 0.0
      %2015 = vmatpush1.msra.mxu0 0.0
      %2016 = vmatprep.subr.mxu0 0.0
      %2017 = vmatpush1.msra.mxu0 0.0
      %2018 = vmatprep.subr.mxu0 0.0
      %2019 = vmatpush1.msra.mxu0 0.0
      %2020 = vmatprep.subr.mxu0 0.0
      %2021 = vmatpush1.msra.mxu0 0.0
      %2022 = vmatprep.subr.mxu0 0.0
      %2023 = vmatpush1.msra.mxu0 0.0
      %2024 = vmatprep.subr.mxu0 0.0
      %2025 = vmatpush1.msra.mxu0 %v1987
      %2026 = vmatprep.subr.mxu0 0.0
      %2027 = vmatpush1.msra.mxu0 %v1985
      %2028 = vmatprep.subr.mxu0 0.0
      %2029 = vmatpush2.msra.mxu0 0.0
      %2030 = vmatprep.subr.mxu0 0.0
      %2031 = vmatpush2.msra.mxu0 0.0
      %2032 = vmatprep.subr.mxu0 0.0
      %2033 = vmatpush2.msra.mxu0 0.0
      %2034 = vmatprep.subr.mxu0 0.0
      %2035 = vmatpush2.msra.mxu0 0.0
      %2036 = vmatprep.subr.mxu0 0.0
      %2037 = vmatpush2.msra.mxu0 0.0
      %2038 = vmatprep.subr.mxu0 0.0
      %2039 = vmatpush2.msra.mxu0 0.0
      %2040 = vmatprep.subr.mxu0 0.0
      %2041 = vmatpush2.msra.mxu0 0.0
      %2042 = vmatprep.subr.mxu0 0.0
      %2043 = vmatpush2.msra.mxu0 0.0
      %2044 = vmatprep.subr.mxu0 0.0
      %2045 = vmatpush2.msra.mxu0 0.0
      %2046 = vmatprep.subr.mxu0 0.0
      %2047 = vmatpush2.msra.mxu0 0.0
      %2048 = vmatprep.subr.mxu0 0.0
      %2049 = vmatpush2.msra.mxu0 0.0
      %2050 = vmatprep.subr.mxu0 0.0
      %2051 = vmatpush2.msra.mxu0 0.0
      %2052 = vmatprep.subr.mxu0 0.0
      %2053 = vmatpush2.msra.mxu0 0.0
      %2054 = vmatprep.subr.mxu0 0.0
      %2055 = vmatpush2.msra.mxu0 0.0
      %2056 = vmatprep.subr.mxu0 0.0
      %2057 = vmatpush2.msra.mxu0 0.0
      %2058 = vmatprep.subr.mxu0 0.0
      %2059 = vmatpush2.msra.mxu0 0.0
      %2060 = vmatprep.mubr.f32.mxu0 0.0
      %2061 = vmatmul.mubr.f32.gmra.mxu0 %v1991
      %v2062 = vpop.f32.mrf.mxu0
      %v2063 = vadd.f32 0.0, %v2062
      %v2064 = vpop.f32.mrf.mxu0
      %2065 = vmatprep.mubr.f32.mxu0 0.0
      %2066 = vmatmul.mubr.f32.gmra.mxu0 %v1994
      %v2067 = vpop.f32.mrf.mxu0
      %v2068 = vadd.f32 0.0, %v2067
      %v2069 = vpop.f32.mrf.mxu0
      %2070 = vdwg.mxu0
      %2079 = vrot.lane.b32.xlu0 %v1796, 8
      %v2080 = vpop.permute.xlu0 %2079
      %2081 = vrot.lane.b32.xlu0 %v1801, 8
      %v2082 = vpop.permute.xlu0 %2081
      %2083 = vrot.lane.b32.xlu0 %v1885, 8
      %v2084 = vpop.permute.xlu0 %2083
      %2085 = vrot.lane.b32.xlu0 %v1890, 8
      %v2086 = vpop.permute.xlu0 %2085
      %2087 = vrot.lane.b32.xlu0 %v1974, 8
      %v2088 = vpop.permute.xlu0 %2087
      %2089 = vrot.lane.b32.xlu0 %v1979, 8
      %v2090 = vpop.permute.xlu0 %2089
      %2091 = vrot.lane.b32.xlu0 %v2063, 8
      %v2092 = vpop.permute.xlu0 %2091
      %2093 = vrot.lane.b32.xlu0 %v2068, 8
      %v2094 = vpop.permute.xlu0 %2093
      %vm2103 = vcmask 130112
      %2104 = vst.msk [vmem:[#allocation2] sm:$0xff] %vm2103, %v2080
      %2105 = vst.msk [vmem:[#allocation2 + $0x8] sm:$0xff] %vm2103, %v2082
      %2106 = vst.msk [vmem:[#allocation2 + $0x10] sm:$0xff] %vm2103, %v2084
      %2107 = vst.msk [vmem:[#allocation2 + $0x18] sm:$0xff] %vm2103, %v2086
      %2108 = vst.msk [vmem:[#allocation2 + $0x20] sm:$0xff] %vm2103, %v2088
      %2109 = vst.msk [vmem:[#allocation2 + $0x28] sm:$0xff] %vm2103, %v2090
      %2110 = vst.msk [vmem:[#allocation2 + $0x30] sm:$0xff] %vm2103, %v2092
      %2111 = vst.msk [vmem:[#allocation2 + $0x38] sm:$0xff] %vm2103, %v2094
      %2112 = vrot.lane.b32.xlu0 %v605, 112
      %v2113 = vpop.permute.xlu0 %2112
      %2114 = vrot.lane.b32.xlu0 %v605, 48
      %v2115 = vpop.permute.xlu0 %2114
      %v2117 = vsel %vm612, %v2113, 0
      %v2120 = vsel %vm612, %v2115, 0
      %2122 = vmatprep.subr.bf16.mxu0 0
      %2123 = vmatpush1.bf16.xpose.msra.mxu0 0
      %2124 = vmatprep.subr.bf16.mxu0 0
      %2125 = vmatpush1.bf16.xpose.msra.mxu0 0
      %2126 = vmatprep.subr.bf16.mxu0 0
      %2127 = vmatpush1.bf16.xpose.msra.mxu0 0
      %2128 = vmatprep.subr.bf16.mxu0 0
      %2129 = vmatpush1.bf16.xpose.msra.mxu0 0
      %2130 = vmatprep.subr.bf16.mxu0 0
      %2131 = vmatpush1.bf16.xpose.msra.mxu0 0
      %2132 = vmatprep.subr.bf16.mxu0 0
      %2133 = vmatpush1.bf16.xpose.msra.mxu0 0
      %2134 = vmatprep.subr.bf16.mxu0 0
      %2135 = vmatpush1.bf16.xpose.msra.mxu0 0
      %2136 = vmatprep.subr.bf16.mxu0 0
      %2137 = vmatpush1.bf16.xpose.msra.mxu0 %v2120
      %2138 = vmatprep.subr.bf16.mxu0 0
      %2139 = vmatpush2.bf16.xpose.msra.mxu0 0
      %2140 = vmatprep.subr.bf16.mxu0 0
      %2141 = vmatpush2.bf16.xpose.msra.mxu0 0
      %2142 = vmatprep.subr.bf16.mxu0 0
      %2143 = vmatpush2.bf16.xpose.msra.mxu0 0
      %2144 = vmatprep.subr.bf16.mxu0 0
      %2145 = vmatpush2.bf16.xpose.msra.mxu0 0
      %2146 = vmatprep.subr.bf16.mxu0 0
      %2147 = vmatpush2.bf16.xpose.msra.mxu0 0
      %2148 = vmatprep.subr.bf16.mxu0 0
      %2149 = vmatpush2.bf16.xpose.msra.mxu0 0
      %2150 = vmatprep.subr.bf16.mxu0 0
      %2151 = vmatpush2.bf16.xpose.msra.mxu0 0
      %2152 = vmatprep.subr.bf16.mxu0 0
      %2153 = vmatpush2.bf16.xpose.msra.mxu0 0
      %2154 = vmatprep.mubr.bf16.mxu0 0
      %2155 = vmatmul.mubr.bf16.gmra.mxu0 %v2117
      %v2156 = vpop.f32.mrf.mxu0
      %v2157 = vadd.f32 0.0, %v2156
      %v2158 = vpop.f32.mrf.mxu0
      %v2159 = vpop.f32.mrf.mxu0
      %v2160 = vadd.f32 0.0, %v2159
      %v2161 = vpop.f32.mrf.mxu0
      %2162 = vdwg.mxu0
      %2163 = vrot.lane.b32.xlu0 %v606, 112
      %v2164 = vpop.permute.xlu0 %2163
      %2165 = vrot.lane.b32.xlu0 %v606, 48
      %v2166 = vpop.permute.xlu0 %2165
      %v2168 = vsel %vm612, %v2164, 0
      %v2171 = vsel %vm612, %v2166, 0
      %2173 = vmatprep.subr.bf16.mxu0 0
      %2174 = vmatpush1.bf16.xpose.msra.mxu0 0
      %2175 = vmatprep.subr.bf16.mxu0 0
      %2176 = vmatpush1.bf16.xpose.msra.mxu0 0
      %2177 = vmatprep.subr.bf16.mxu0 0
      %2178 = vmatpush1.bf16.xpose.msra.mxu0 0
      %2179 = vmatprep.subr.bf16.mxu0 0
      %2180 = vmatpush1.bf16.xpose.msra.mxu0 0
      %2181 = vmatprep.subr.bf16.mxu0 0
      %2182 = vmatpush1.bf16.xpose.msra.mxu0 0
      %2183 = vmatprep.subr.bf16.mxu0 0
      %2184 = vmatpush1.bf16.xpose.msra.mxu0 0
      %2185 = vmatprep.subr.bf16.mxu0 0
      %2186 = vmatpush1.bf16.xpose.msra.mxu0 0
      %2187 = vmatprep.subr.bf16.mxu0 0
      %2188 = vmatpush1.bf16.xpose.msra.mxu0 %v2171
      %2189 = vmatprep.subr.bf16.mxu0 0
      %2190 = vmatpush2.bf16.xpose.msra.mxu0 0
      %2191 = vmatprep.subr.bf16.mxu0 0
      %2192 = vmatpush2.bf16.xpose.msra.mxu0 0
      %2193 = vmatprep.subr.bf16.mxu0 0
      %2194 = vmatpush2.bf16.xpose.msra.mxu0 0
      %2195 = vmatprep.subr.bf16.mxu0 0
      %2196 = vmatpush2.bf16.xpose.msra.mxu0 0
      %2197 = vmatprep.subr.bf16.mxu0 0
      %2198 = vmatpush2.bf16.xpose.msra.mxu0 0
      %2199 = vmatprep.subr.bf16.mxu0 0
      %2200 = vmatpush2.bf16.xpose.msra.mxu0 0
      %2201 = vmatprep.subr.bf16.mxu0 0
      %2202 = vmatpush2.bf16.xpose.msra.mxu0 0
      %2203 = vmatprep.subr.bf16.mxu0 0
      %2204 = vmatpush2.bf16.xpose.msra.mxu0 0
      %2205 = vmatprep.mubr.bf16.mxu0 0
      %2206 = vmatmul.mubr.bf16.gmra.mxu0 %v2168
      %v2207 = vpop.f32.mrf.mxu0
      %v2208 = vadd.f32 0.0, %v2207
      %v2209 = vpop.f32.mrf.mxu0
      %v2210 = vpop.f32.mrf.mxu0
      %v2211 = vadd.f32 0.0, %v2210
      %v2212 = vpop.f32.mrf.mxu0
      %2213 = vdwg.mxu0
      %2214 = vrot.lane.b32.xlu0 %v607, 112
      %v2215 = vpop.permute.xlu0 %2214
      %2216 = vrot.lane.b32.xlu0 %v607, 48
      %v2217 = vpop.permute.xlu0 %2216
      %v2219 = vsel %vm612, %v2215, 0
      %v2222 = vsel %vm612, %v2217, 0
      %2224 = vmatprep.subr.bf16.mxu0 0
      %2225 = vmatpush1.bf16.xpose.msra.mxu0 0
      %2226 = vmatprep.subr.bf16.mxu0 0
      %2227 = vmatpush1.bf16.xpose.msra.mxu0 0
      %2228 = vmatprep.subr.bf16.mxu0 0
      %2229 = vmatpush1.bf16.xpose.msra.mxu0 0
      %2230 = vmatprep.subr.bf16.mxu0 0
      %2231 = vmatpush1.bf16.xpose.msra.mxu0 0
      %2232 = vmatprep.subr.bf16.mxu0 0
      %2233 = vmatpush1.bf16.xpose.msra.mxu0 0
      %2234 = vmatprep.subr.bf16.mxu0 0
      %2235 = vmatpush1.bf16.xpose.msra.mxu0 0
      %2236 = vmatprep.subr.bf16.mxu0 0
      %2237 = vmatpush1.bf16.xpose.msra.mxu0 0
      %2238 = vmatprep.subr.bf16.mxu0 0
      %2239 = vmatpush1.bf16.xpose.msra.mxu0 %v2222
      %2240 = vmatprep.subr.bf16.mxu0 0
      %2241 = vmatpush2.bf16.xpose.msra.mxu0 0
      %2242 = vmatprep.subr.bf16.mxu0 0
      %2243 = vmatpush2.bf16.xpose.msra.mxu0 0
      %2244 = vmatprep.subr.bf16.mxu0 0
      %2245 = vmatpush2.bf16.xpose.msra.mxu0 0
      %2246 = vmatprep.subr.bf16.mxu0 0
      %2247 = vmatpush2.bf16.xpose.msra.mxu0 0
      %2248 = vmatprep.subr.bf16.mxu0 0
      %2249 = vmatpush2.bf16.xpose.msra.mxu0 0
      %2250 = vmatprep.subr.bf16.mxu0 0
      %2251 = vmatpush2.bf16.xpose.msra.mxu0 0
      %2252 = vmatprep.subr.bf16.mxu0 0
      %2253 = vmatpush2.bf16.xpose.msra.mxu0 0
      %2254 = vmatprep.subr.bf16.mxu0 0
      %2255 = vmatpush2.bf16.xpose.msra.mxu0 0
      %2256 = vmatprep.mubr.bf16.mxu0 0
      %2257 = vmatmul.mubr.bf16.gmra.mxu0 %v2219
      %v2258 = vpop.f32.mrf.mxu0
      %v2259 = vadd.f32 0.0, %v2258
      %v2260 = vpop.f32.mrf.mxu0
      %v2261 = vpop.f32.mrf.mxu0
      %v2262 = vadd.f32 0.0, %v2261
      %v2263 = vpop.f32.mrf.mxu0
      %2264 = vdwg.mxu0
      %2265 = vrot.lane.b32.xlu0 %v608, 112
      %v2266 = vpop.permute.xlu0 %2265
      %2267 = vrot.lane.b32.xlu0 %v608, 48
      %v2268 = vpop.permute.xlu0 %2267
      %v2270 = vsel %vm612, %v2266, 0
      %v2273 = vsel %vm612, %v2268, 0
      %2275 = vmatprep.subr.bf16.mxu0 0
      %2276 = vmatpush1.bf16.xpose.msra.mxu0 0
      %2277 = vmatprep.subr.bf16.mxu0 0
      %2278 = vmatpush1.bf16.xpose.msra.mxu0 0
      %2279 = vmatprep.subr.bf16.mxu0 0
      %2280 = vmatpush1.bf16.xpose.msra.mxu0 0
      %2281 = vmatprep.subr.bf16.mxu0 0
      %2282 = vmatpush1.bf16.xpose.msra.mxu0 0
      %2283 = vmatprep.subr.bf16.mxu0 0
      %2284 = vmatpush1.bf16.xpose.msra.mxu0 0
      %2285 = vmatprep.subr.bf16.mxu0 0
      %2286 = vmatpush1.bf16.xpose.msra.mxu0 0
      %2287 = vmatprep.subr.bf16.mxu0 0
      %2288 = vmatpush1.bf16.xpose.msra.mxu0 0
      %2289 = vmatprep.subr.bf16.mxu0 0
      %2290 = vmatpush1.bf16.xpose.msra.mxu0 %v2273
      %2291 = vmatprep.subr.bf16.mxu0 0
      %2292 = vmatpush2.bf16.xpose.msra.mxu0 0
      %2293 = vmatprep.subr.bf16.mxu0 0
      %2294 = vmatpush2.bf16.xpose.msra.mxu0 0
      %2295 = vmatprep.subr.bf16.mxu0 0
      %2296 = vmatpush2.bf16.xpose.msra.mxu0 0
      %2297 = vmatprep.subr.bf16.mxu0 0
      %2298 = vmatpush2.bf16.xpose.msra.mxu0 0
      %2299 = vmatprep.subr.bf16.mxu0 0
      %2300 = vmatpush2.bf16.xpose.msra.mxu0 0
      %2301 = vmatprep.subr.bf16.mxu0 0
      %2302 = vmatpush2.bf16.xpose.msra.mxu0 0
      %2303 = vmatprep.subr.bf16.mxu0 0
      %2304 = vmatpush2.bf16.xpose.msra.mxu0 0
      %2305 = vmatprep.subr.bf16.mxu0 0
      %2306 = vmatpush2.bf16.xpose.msra.mxu0 0
      %2307 = vmatprep.mubr.bf16.mxu0 0
      %2308 = vmatmul.mubr.bf16.gmra.mxu0 %v2270
      %v2309 = vpop.f32.mrf.mxu0
      %v2310 = vadd.f32 0.0, %v2309
      %v2311 = vpop.f32.mrf.mxu0
      %v2312 = vpop.f32.mrf.mxu0
      %v2313 = vadd.f32 0.0, %v2312
      %v2314 = vpop.f32.mrf.mxu0
      %2315 = vdwg.mxu0
      %v2316 = vmul.f32 %v2157, 0.35355338
      %v2317 = vmul.f32 %v2160, 0.35355338
      %v2318 = vmul.f32 %v2208, 0.35355338
      %v2319 = vmul.f32 %v2211, 0.35355338
      %v2320 = vmul.f32 %v2259, 0.35355338
      %v2321 = vmul.f32 %v2262, 0.35355338
      %v2322 = vmul.f32 %v2310, 0.35355338
      %v2323 = vmul.f32 %v2313, 0.35355338
      %v2324 = vand.u32 2147483647, %v2316
      %v2325 = vand.u32 2147483647, %v2317
      %v2326 = vand.u32 2147483647, %v2318
      %v2327 = vand.u32 2147483647, %v2319
      %v2328 = vand.u32 2147483647, %v2320
      %v2329 = vand.u32 2147483647, %v2321
      %v2330 = vand.u32 2147483647, %v2322
      %v2331 = vand.u32 2147483647, %v2323
      %v2332 = vrsqrt.pop %v2324
      %v2333 = vmul.f32 %v2324, %v2332
      %vm2334 = vcmp.eq.f32.partialorder %v2324, inf
      %v2335 = vsel %vm2334, %v2324, %v2333
      %vm2336 = vcmp.eq.f32.partialorder %v2324, 0.0
      %v2337 = vand.u32 %v2324, 2147483648
      %v2338 = vsel %vm2336, %v2337, %v2335
      %v2339 = vrsqrt.pop %v2325
      %v2340 = vmul.f32 %v2325, %v2339
      %vm2341 = vcmp.eq.f32.partialorder %v2325, inf
      %v2342 = vsel %vm2341, %v2325, %v2340
      %vm2343 = vcmp.eq.f32.partialorder %v2325, 0.0
      %v2344 = vand.u32 %v2325, 2147483648
      %v2345 = vsel %vm2343, %v2344, %v2342
      %v2346 = vrsqrt.pop %v2326
      %v2347 = vmul.f32 %v2326, %v2346
      %vm2348 = vcmp.eq.f32.partialorder %v2326, inf
      %v2349 = vsel %vm2348, %v2326, %v2347
      %vm2350 = vcmp.eq.f32.partialorder %v2326, 0.0
      %v2351 = vand.u32 %v2326, 2147483648
      %v2352 = vsel %vm2350, %v2351, %v2349
      %v2353 = vrsqrt.pop %v2327
      %v2354 = vmul.f32 %v2327, %v2353
      %vm2355 = vcmp.eq.f32.partialorder %v2327, inf
      %v2356 = vsel %vm2355, %v2327, %v2354
      %vm2357 = vcmp.eq.f32.partialorder %v2327, 0.0
      %v2358 = vand.u32 %v2327, 2147483648
      %v2359 = vsel %vm2357, %v2358, %v2356
      %v2360 = vrsqrt.pop %v2328
      %v2361 = vmul.f32 %v2328, %v2360
      %vm2362 = vcmp.eq.f32.partialorder %v2328, inf
      %v2363 = vsel %vm2362, %v2328, %v2361
      %vm2364 = vcmp.eq.f32.partialorder %v2328, 0.0
      %v2365 = vand.u32 %v2328, 2147483648
      %v2366 = vsel %vm2364, %v2365, %v2363
      %v2367 = vrsqrt.pop %v2329
      %v2368 = vmul.f32 %v2329, %v2367
      %vm2369 = vcmp.eq.f32.partialorder %v2329, inf
      %v2370 = vsel %vm2369, %v2329, %v2368
      %vm2371 = vcmp.eq.f32.partialorder %v2329, 0.0
      %v2372 = vand.u32 %v2329, 2147483648
      %v2373 = vsel %vm2371, %v2372, %v2370
      %v2374 = vrsqrt.pop %v2330
      %v2375 = vmul.f32 %v2330, %v2374
      %vm2376 = vcmp.eq.f32.partialorder %v2330, inf
      %v2377 = vsel %vm2376, %v2330, %v2375
      %vm2378 = vcmp.eq.f32.partialorder %v2330, 0.0
      %v2379 = vand.u32 %v2330, 2147483648
      %v2380 = vsel %vm2378, %v2379, %v2377
      %v2381 = vrsqrt.pop %v2331
      %v2382 = vmul.f32 %v2331, %v2381
      %vm2383 = vcmp.eq.f32.partialorder %v2331, inf
      %v2384 = vsel %vm2383, %v2331, %v2382
      %vm2385 = vcmp.eq.f32.partialorder %v2331, 0.0
      %v2386 = vand.u32 %v2331, 2147483648
      %v2387 = vsel %vm2385, %v2386, %v2384
      %vm2388 = vcmp.ge.f32.partialorder %v2316, 0.0
      %vm2389 = vcmp.ge.f32.partialorder %v2317, 0.0
      %vm2390 = vcmp.ge.f32.partialorder %v2318, 0.0
      %vm2391 = vcmp.ge.f32.partialorder %v2319, 0.0
      %vm2392 = vcmp.ge.f32.partialorder %v2320, 0.0
      %vm2393 = vcmp.ge.f32.partialorder %v2321, 0.0
      %vm2394 = vcmp.ge.f32.partialorder %v2322, 0.0
      %vm2395 = vcmp.ge.f32.partialorder %v2323, 0.0
      %v2396 = vsub.f32 0.0, %v2338
      %v2397 = vsub.f32 0.0, %v2345
      %v2398 = vsub.f32 0.0, %v2352
      %v2399 = vsub.f32 0.0, %v2359
      %v2400 = vsub.f32 0.0, %v2366
      %v2401 = vsub.f32 0.0, %v2373
      %v2402 = vsub.f32 0.0, %v2380
      %v2403 = vsub.f32 0.0, %v2387
      %v2404 = vsel %vm2388, %v2338, %v2396
      %v2405 = vsel %vm2389, %v2345, %v2397
      %v2406 = vsel %vm2390, %v2352, %v2398
      %v2407 = vsel %vm2391, %v2359, %v2399
      %v2408 = vsel %vm2392, %v2366, %v2400
      %v2409 = vsel %vm2393, %v2373, %v2401
      %v2410 = vsel %vm2394, %v2380, %v2402
      %v2411 = vsel %vm2395, %v2387, %v2403
      %v2412 = vsel %vm906, %v2404, -inf
      %2413 = vmax.xlane.f32.xlu0 %v2412
      %v2414 = vpop.xlane.xlu0 %2413
      %v2415 = vsel %vm906, %v2405, -inf
      %2416 = vmax.xlane.f32.xlu0 %v2415
      %v2417 = vpop.xlane.xlu0 %2416
      %v2418 = vsel %vm906, %v2406, -inf
      %2419 = vmax.xlane.f32.xlu0 %v2418
      %v2420 = vpop.xlane.xlu0 %2419
      %v2421 = vsel %vm906, %v2407, -inf
      %2422 = vmax.xlane.f32.xlu0 %v2421
      %v2423 = vpop.xlane.xlu0 %2422
      %v2424 = vsel %vm906, %v2408, -inf
      %2425 = vmax.xlane.f32.xlu0 %v2424
      %v2426 = vpop.xlane.xlu0 %2425
      %v2427 = vsel %vm906, %v2409, -inf
      %2428 = vmax.xlane.f32.xlu0 %v2427
      %v2429 = vpop.xlane.xlu0 %2428
      %v2430 = vsel %vm906, %v2410, -inf
      %2431 = vmax.xlane.f32.xlu0 %v2430
      %v2432 = vpop.xlane.xlu0 %2431
      %v2433 = vsel %vm906, %v2411, -inf
      %2434 = vmax.xlane.f32.xlu0 %v2433
      %v2435 = vpop.xlane.xlu0 %2434
      %v2436 = vsub.f32 %v2404, %v2414
      %v2437 = vsub.f32 %v2405, %v2417
      %v2438 = vsub.f32 %v2406, %v2420
      %v2439 = vsub.f32 %v2407, %v2423
      %v2440 = vsub.f32 %v2408, %v2426
      %v2441 = vsub.f32 %v2409, %v2429
      %v2442 = vsub.f32 %v2410, %v2432
      %v2443 = vsub.f32 %v2411, %v2435
      %v2444 = vmul.f32 %v2436, 1.442695
      %v2445 = vpow.pop %v2444
      %v2446 = vmul.f32 %v2437, 1.442695
      %v2447 = vpow.pop %v2446
      %v2448 = vmul.f32 %v2438, 1.442695
      %v2449 = vpow.pop %v2448
      %v2450 = vmul.f32 %v2439, 1.442695
      %v2451 = vpow.pop %v2450
      %v2452 = vmul.f32 %v2440, 1.442695
      %v2453 = vpow.pop %v2452
      %v2454 = vmul.f32 %v2441, 1.442695
      %v2455 = vpow.pop %v2454
      %v2456 = vmul.f32 %v2442, 1.442695
      %v2457 = vpow.pop %v2456
      %v2458 = vmul.f32 %v2443, 1.442695
      %v2459 = vpow.pop %v2458
      %v2460 = vsel %vm906, %v2445, 0.0
      %2461 = vadd.xlane.f32.xlu0 %v2460
      %v2462 = vpop.xlane.xlu0 %2461
      %v2463 = vsel %vm906, %v2447, 0.0
      %2464 = vadd.xlane.f32.xlu0 %v2463
      %v2465 = vpop.xlane.xlu0 %2464
      %v2466 = vsel %vm906, %v2449, 0.0
      %2467 = vadd.xlane.f32.xlu0 %v2466
      %v2468 = vpop.xlane.xlu0 %2467
      %v2469 = vsel %vm906, %v2451, 0.0
      %2470 = vadd.xlane.f32.xlu0 %v2469
      %v2471 = vpop.xlane.xlu0 %2470
      %v2472 = vsel %vm906, %v2453, 0.0
      %2473 = vadd.xlane.f32.xlu0 %v2472
      %v2474 = vpop.xlane.xlu0 %2473
      %v2475 = vsel %vm906, %v2455, 0.0
      %2476 = vadd.xlane.f32.xlu0 %v2475
      %v2477 = vpop.xlane.xlu0 %2476
      %v2478 = vsel %vm906, %v2457, 0.0
      %2479 = vadd.xlane.f32.xlu0 %v2478
      %v2480 = vpop.xlane.xlu0 %2479
      %v2481 = vsel %vm906, %v2459, 0.0
      %2482 = vadd.xlane.f32.xlu0 %v2481
      %v2483 = vpop.xlane.xlu0 %2482
      %v2484 = vrcp.pop %v2462
      %v2485 = vrcp.pop %v2465
      %v2486 = vrcp.pop %v2468
      %v2487 = vrcp.pop %v2471
      %v2488 = vrcp.pop %v2474
      %v2489 = vrcp.pop %v2477
      %v2490 = vrcp.pop %v2480
      %v2491 = vrcp.pop %v2483
      %v2492 = vmul.f32 %v2445, %v2484
      %v2493 = vmul.f32 %v2447, %v2485
      %v2494 = vmul.f32 %v2449, %v2486
      %v2495 = vmul.f32 %v2451, %v2487
      %v2496 = vmul.f32 %v2453, %v2488
      %v2497 = vmul.f32 %v2455, %v2489
      %v2498 = vmul.f32 %v2457, %v2490
      %v2499 = vmul.f32 %v2459, %v2491
      %2500 = vrot.lane.b32.xlu0 %v504, 112
      %v2501 = vpop.permute.xlu0 %2500
      %2502 = vrot.lane.b32.xlu0 %v508, 112
      %v2503 = vpop.permute.xlu0 %2502
      %v2507 = vsel %vm906, %v2492, 0
      %v2510 = vsel %vm906, %v2493, 0
      %2512 = vmatprep.subr.mxu0 0.0
      %2513 = vmatpush1.msra.mxu0 0.0
      %2514 = vmatprep.subr.mxu0 0.0
      %2515 = vmatpush1.msra.mxu0 0.0
      %2516 = vmatprep.subr.mxu0 0.0
      %2517 = vmatpush1.msra.mxu0 0.0
      %2518 = vmatprep.subr.mxu0 0.0
      %2519 = vmatpush1.msra.mxu0 0.0
      %2520 = vmatprep.subr.mxu0 0.0
      %2521 = vmatpush1.msra.mxu0 0.0
      %2522 = vmatprep.subr.mxu0 0.0
      %2523 = vmatpush1.msra.mxu0 0.0
      %2524 = vmatprep.subr.mxu0 0.0
      %2525 = vmatpush1.msra.mxu0 0.0
      %2526 = vmatprep.subr.mxu0 0.0
      %2527 = vmatpush1.msra.mxu0 0.0
      %2528 = vmatprep.subr.mxu0 0.0
      %2529 = vmatpush1.msra.mxu0 0.0
      %2530 = vmatprep.subr.mxu0 0.0
      %2531 = vmatpush1.msra.mxu0 0.0
      %2532 = vmatprep.subr.mxu0 0.0
      %2533 = vmatpush1.msra.mxu0 0.0
      %2534 = vmatprep.subr.mxu0 0.0
      %2535 = vmatpush1.msra.mxu0 0.0
      %2536 = vmatprep.subr.mxu0 0.0
      %2537 = vmatpush1.msra.mxu0 0.0
      %2538 = vmatprep.subr.mxu0 0.0
      %2539 = vmatpush1.msra.mxu0 0.0
      %2540 = vmatprep.subr.mxu0 0.0
      %2541 = vmatpush1.msra.mxu0 %v2503
      %2542 = vmatprep.subr.mxu0 0.0
      %2543 = vmatpush1.msra.mxu0 %v2501
      %2544 = vmatprep.subr.mxu0 0.0
      %2545 = vmatpush2.msra.mxu0 0.0
      %2546 = vmatprep.subr.mxu0 0.0
      %2547 = vmatpush2.msra.mxu0 0.0
      %2548 = vmatprep.subr.mxu0 0.0
      %2549 = vmatpush2.msra.mxu0 0.0
      %2550 = vmatprep.subr.mxu0 0.0
      %2551 = vmatpush2.msra.mxu0 0.0
      %2552 = vmatprep.subr.mxu0 0.0
      %2553 = vmatpush2.msra.mxu0 0.0
      %2554 = vmatprep.subr.mxu0 0.0
      %2555 = vmatpush2.msra.mxu0 0.0
      %2556 = vmatprep.subr.mxu0 0.0
      %2557 = vmatpush2.msra.mxu0 0.0
      %2558 = vmatprep.subr.mxu0 0.0
      %2559 = vmatpush2.msra.mxu0 0.0
      %2560 = vmatprep.subr.mxu0 0.0
      %2561 = vmatpush2.msra.mxu0 0.0
      %2562 = vmatprep.subr.mxu0 0.0
      %2563 = vmatpush2.msra.mxu0 0.0
      %2564 = vmatprep.subr.mxu0 0.0
      %2565 = vmatpush2.msra.mxu0 0.0
      %2566 = vmatprep.subr.mxu0 0.0
      %2567 = vmatpush2.msra.mxu0 0.0
      %2568 = vmatprep.subr.mxu0 0.0
      %2569 = vmatpush2.msra.mxu0 0.0
      %2570 = vmatprep.subr.mxu0 0.0
      %2571 = vmatpush2.msra.mxu0 0.0
      %2572 = vmatprep.subr.mxu0 0.0
      %2573 = vmatpush2.msra.mxu0 0.0
      %2574 = vmatprep.subr.mxu0 0.0
      %2575 = vmatpush2.msra.mxu0 0.0
      %2576 = vmatprep.mubr.f32.mxu0 0.0
      %2577 = vmatmul.mubr.f32.gmra.mxu0 %v2507
      %v2578 = vpop.f32.mrf.mxu0
      %v2579 = vadd.f32 0.0, %v2578
      %v2580 = vpop.f32.mrf.mxu0
      %2581 = vmatprep.mubr.f32.mxu0 0.0
      %2582 = vmatmul.mubr.f32.gmra.mxu0 %v2510
      %v2583 = vpop.f32.mrf.mxu0
      %v2584 = vadd.f32 0.0, %v2583
      %v2585 = vpop.f32.mrf.mxu0
      %2586 = vdwg.mxu0
      %2587 = vrot.lane.b32.xlu0 %v514, 112
      %v2588 = vpop.permute.xlu0 %2587
      %2589 = vrot.lane.b32.xlu0 %v518, 112
      %v2590 = vpop.permute.xlu0 %2589
      %v2594 = vsel %vm906, %v2494, 0
      %v2597 = vsel %vm906, %v2495, 0
      %2599 = vmatprep.subr.mxu0 0.0
      %2600 = vmatpush1.msra.mxu0 0.0
      %2601 = vmatprep.subr.mxu0 0.0
      %2602 = vmatpush1.msra.mxu0 0.0
      %2603 = vmatprep.subr.mxu0 0.0
      %2604 = vmatpush1.msra.mxu0 0.0
      %2605 = vmatprep.subr.mxu0 0.0
      %2606 = vmatpush1.msra.mxu0 0.0
      %2607 = vmatprep.subr.mxu0 0.0
      %2608 = vmatpush1.msra.mxu0 0.0
      %2609 = vmatprep.subr.mxu0 0.0
      %2610 = vmatpush1.msra.mxu0 0.0
      %2611 = vmatprep.subr.mxu0 0.0
      %2612 = vmatpush1.msra.mxu0 0.0
      %2613 = vmatprep.subr.mxu0 0.0
      %2614 = vmatpush1.msra.mxu0 0.0
      %2615 = vmatprep.subr.mxu0 0.0
      %2616 = vmatpush1.msra.mxu0 0.0
      %2617 = vmatprep.subr.mxu0 0.0
      %2618 = vmatpush1.msra.mxu0 0.0
      %2619 = vmatprep.subr.mxu0 0.0
      %2620 = vmatpush1.msra.mxu0 0.0
      %2621 = vmatprep.subr.mxu0 0.0
      %2622 = vmatpush1.msra.mxu0 0.0
      %2623 = vmatprep.subr.mxu0 0.0
      %2624 = vmatpush1.msra.mxu0 0.0
      %2625 = vmatprep.subr.mxu0 0.0
      %2626 = vmatpush1.msra.mxu0 0.0
      %2627 = vmatprep.subr.mxu0 0.0
      %2628 = vmatpush1.msra.mxu0 %v2590
      %2629 = vmatprep.subr.mxu0 0.0
      %2630 = vmatpush1.msra.mxu0 %v2588
      %2631 = vmatprep.subr.mxu0 0.0
      %2632 = vmatpush2.msra.mxu0 0.0
      %2633 = vmatprep.subr.mxu0 0.0
      %2634 = vmatpush2.msra.mxu0 0.0
      %2635 = vmatprep.subr.mxu0 0.0
      %2636 = vmatpush2.msra.mxu0 0.0
      %2637 = vmatprep.subr.mxu0 0.0
      %2638 = vmatpush2.msra.mxu0 0.0
      %2639 = vmatprep.subr.mxu0 0.0
      %2640 = vmatpush2.msra.mxu0 0.0
      %2641 = vmatprep.subr.mxu0 0.0
      %2642 = vmatpush2.msra.mxu0 0.0
      %2643 = vmatprep.subr.mxu0 0.0
      %2644 = vmatpush2.msra.mxu0 0.0
      %2645 = vmatprep.subr.mxu0 0.0
      %2646 = vmatpush2.msra.mxu0 0.0
      %2647 = vmatprep.subr.mxu0 0.0
      %2648 = vmatpush2.msra.mxu0 0.0
      %2649 = vmatprep.subr.mxu0 0.0
      %2650 = vmatpush2.msra.mxu0 0.0
      %2651 = vmatprep.subr.mxu0 0.0
      %2652 = vmatpush2.msra.mxu0 0.0
      %2653 = vmatprep.subr.mxu0 0.0
      %2654 = vmatpush2.msra.mxu0 0.0
      %2655 = vmatprep.subr.mxu0 0.0
      %2656 = vmatpush2.msra.mxu0 0.0
      %2657 = vmatprep.subr.mxu0 0.0
      %2658 = vmatpush2.msra.mxu0 0.0
      %2659 = vmatprep.subr.mxu0 0.0
      %2660 = vmatpush2.msra.mxu0 0.0
      %2661 = vmatprep.subr.mxu0 0.0
      %2662 = vmatpush2.msra.mxu0 0.0
      %2663 = vmatprep.mubr.f32.mxu0 0.0
      %2664 = vmatmul.mubr.f32.gmra.mxu0 %v2594
      %v2665 = vpop.f32.mrf.mxu0
      %v2666 = vadd.f32 0.0, %v2665
      %v2667 = vpop.f32.mrf.mxu0
      %2668 = vmatprep.mubr.f32.mxu0 0.0
      %2669 = vmatmul.mubr.f32.gmra.mxu0 %v2597
      %v2670 = vpop.f32.mrf.mxu0
      %v2671 = vadd.f32 0.0, %v2670
      %v2672 = vpop.f32.mrf.mxu0
      %2673 = vdwg.mxu0
      %2674 = vrot.lane.b32.xlu0 %v524, 112
      %v2675 = vpop.permute.xlu0 %2674
      %2676 = vrot.lane.b32.xlu0 %v528, 112
      %v2677 = vpop.permute.xlu0 %2676
      %v2681 = vsel %vm906, %v2496, 0
      %v2684 = vsel %vm906, %v2497, 0
      %2686 = vmatprep.subr.mxu0 0.0
      %2687 = vmatpush1.msra.mxu0 0.0
      %2688 = vmatprep.subr.mxu0 0.0
      %2689 = vmatpush1.msra.mxu0 0.0
      %2690 = vmatprep.subr.mxu0 0.0
      %2691 = vmatpush1.msra.mxu0 0.0
      %2692 = vmatprep.subr.mxu0 0.0
      %2693 = vmatpush1.msra.mxu0 0.0
      %2694 = vmatprep.subr.mxu0 0.0
      %2695 = vmatpush1.msra.mxu0 0.0
      %2696 = vmatprep.subr.mxu0 0.0
      %2697 = vmatpush1.msra.mxu0 0.0
      %2698 = vmatprep.subr.mxu0 0.0
      %2699 = vmatpush1.msra.mxu0 0.0
      %2700 = vmatprep.subr.mxu0 0.0
      %2701 = vmatpush1.msra.mxu0 0.0
      %2702 = vmatprep.subr.mxu0 0.0
      %2703 = vmatpush1.msra.mxu0 0.0
      %2704 = vmatprep.subr.mxu0 0.0
      %2705 = vmatpush1.msra.mxu0 0.0
      %2706 = vmatprep.subr.mxu0 0.0
      %2707 = vmatpush1.msra.mxu0 0.0
      %2708 = vmatprep.subr.mxu0 0.0
      %2709 = vmatpush1.msra.mxu0 0.0
      %2710 = vmatprep.subr.mxu0 0.0
      %2711 = vmatpush1.msra.mxu0 0.0
      %2712 = vmatprep.subr.mxu0 0.0
      %2713 = vmatpush1.msra.mxu0 0.0
      %2714 = vmatprep.subr.mxu0 0.0
      %2715 = vmatpush1.msra.mxu0 %v2677
      %2716 = vmatprep.subr.mxu0 0.0
      %2717 = vmatpush1.msra.mxu0 %v2675
      %2718 = vmatprep.subr.mxu0 0.0
      %2719 = vmatpush2.msra.mxu0 0.0
      %2720 = vmatprep.subr.mxu0 0.0
      %2721 = vmatpush2.msra.mxu0 0.0
      %2722 = vmatprep.subr.mxu0 0.0
      %2723 = vmatpush2.msra.mxu0 0.0
      %2724 = vmatprep.subr.mxu0 0.0
      %2725 = vmatpush2.msra.mxu0 0.0
      %2726 = vmatprep.subr.mxu0 0.0
      %2727 = vmatpush2.msra.mxu0 0.0
      %2728 = vmatprep.subr.mxu0 0.0
      %2729 = vmatpush2.msra.mxu0 0.0
      %2730 = vmatprep.subr.mxu0 0.0
      %2731 = vmatpush2.msra.mxu0 0.0
      %2732 = vmatprep.subr.mxu0 0.0
      %2733 = vmatpush2.msra.mxu0 0.0
      %2734 = vmatprep.subr.mxu0 0.0
      %2735 = vmatpush2.msra.mxu0 0.0
      %2736 = vmatprep.subr.mxu0 0.0
      %2737 = vmatpush2.msra.mxu0 0.0
      %2738 = vmatprep.subr.mxu0 0.0
      %2739 = vmatpush2.msra.mxu0 0.0
      %2740 = vmatprep.subr.mxu0 0.0
      %2741 = vmatpush2.msra.mxu0 0.0
      %2742 = vmatprep.subr.mxu0 0.0
      %2743 = vmatpush2.msra.mxu0 0.0
      %2744 = vmatprep.subr.mxu0 0.0
      %2745 = vmatpush2.msra.mxu0 0.0
      %2746 = vmatprep.subr.mxu0 0.0
      %2747 = vmatpush2.msra.mxu0 0.0
      %2748 = vmatprep.subr.mxu0 0.0
      %2749 = vmatpush2.msra.mxu0 0.0
      %2750 = vmatprep.mubr.f32.mxu0 0.0
      %2751 = vmatmul.mubr.f32.gmra.mxu0 %v2681
      %v2752 = vpop.f32.mrf.mxu0
      %v2753 = vadd.f32 0.0, %v2752
      %v2754 = vpop.f32.mrf.mxu0
      %2755 = vmatprep.mubr.f32.mxu0 0.0
      %2756 = vmatmul.mubr.f32.gmra.mxu0 %v2684
      %v2757 = vpop.f32.mrf.mxu0
      %v2758 = vadd.f32 0.0, %v2757
      %v2759 = vpop.f32.mrf.mxu0
      %2760 = vdwg.mxu0
      %2761 = vrot.lane.b32.xlu0 %v534, 112
      %v2762 = vpop.permute.xlu0 %2761
      %2763 = vrot.lane.b32.xlu0 %v538, 112
      %v2764 = vpop.permute.xlu0 %2763
      %v2768 = vsel %vm906, %v2498, 0
      %v2771 = vsel %vm906, %v2499, 0
      %2773 = vmatprep.subr.mxu0 0.0
      %2774 = vmatpush1.msra.mxu0 0.0
      %2775 = vmatprep.subr.mxu0 0.0
      %2776 = vmatpush1.msra.mxu0 0.0
      %2777 = vmatprep.subr.mxu0 0.0
      %2778 = vmatpush1.msra.mxu0 0.0
      %2779 = vmatprep.subr.mxu0 0.0
      %2780 = vmatpush1.msra.mxu0 0.0
      %2781 = vmatprep.subr.mxu0 0.0
      %2782 = vmatpush1.msra.mxu0 0.0
      %2783 = vmatprep.subr.mxu0 0.0
      %2784 = vmatpush1.msra.mxu0 0.0
      %2785 = vmatprep.subr.mxu0 0.0
      %2786 = vmatpush1.msra.mxu0 0.0
      %2787 = vmatprep.subr.mxu0 0.0
      %2788 = vmatpush1.msra.mxu0 0.0
      %2789 = vmatprep.subr.mxu0 0.0
      %2790 = vmatpush1.msra.mxu0 0.0
      %2791 = vmatprep.subr.mxu0 0.0
      %2792 = vmatpush1.msra.mxu0 0.0
      %2793 = vmatprep.subr.mxu0 0.0
      %2794 = vmatpush1.msra.mxu0 0.0
      %2795 = vmatprep.subr.mxu0 0.0
      %2796 = vmatpush1.msra.mxu0 0.0
      %2797 = vmatprep.subr.mxu0 0.0
      %2798 = vmatpush1.msra.mxu0 0.0
      %2799 = vmatprep.subr.mxu0 0.0
      %2800 = vmatpush1.msra.mxu0 0.0
      %2801 = vmatprep.subr.mxu0 0.0
      %2802 = vmatpush1.msra.mxu0 %v2764
      %2803 = vmatprep.subr.mxu0 0.0
      %2804 = vmatpush1.msra.mxu0 %v2762
      %2805 = vmatprep.subr.mxu0 0.0
      %2806 = vmatpush2.msra.mxu0 0.0
      %2807 = vmatprep.subr.mxu0 0.0
      %2808 = vmatpush2.msra.mxu0 0.0
      %2809 = vmatprep.subr.mxu0 0.0
      %2810 = vmatpush2.msra.mxu0 0.0
      %2811 = vmatprep.subr.mxu0 0.0
      %2812 = vmatpush2.msra.mxu0 0.0
      %2813 = vmatprep.subr.mxu0 0.0
      %2814 = vmatpush2.msra.mxu0 0.0
      %2815 = vmatprep.subr.mxu0 0.0
      %2816 = vmatpush2.msra.mxu0 0.0
      %2817 = vmatprep.subr.mxu0 0.0
      %2818 = vmatpush2.msra.mxu0 0.0
      %2819 = vmatprep.subr.mxu0 0.0
      %2820 = vmatpush2.msra.mxu0 0.0
      %2821 = vmatprep.subr.mxu0 0.0
      %2822 = vmatpush2.msra.mxu0 0.0
      %2823 = vmatprep.subr.mxu0 0.0
      %2824 = vmatpush2.msra.mxu0 0.0
      %2825 = vmatprep.subr.mxu0 0.0
      %2826 = vmatpush2.msra.mxu0 0.0
      %2827 = vmatprep.subr.mxu0 0.0
      %2828 = vmatpush2.msra.mxu0 0.0
      %2829 = vmatprep.subr.mxu0 0.0
      %2830 = vmatpush2.msra.mxu0 0.0
      %2831 = vmatprep.subr.mxu0 0.0
      %2832 = vmatpush2.msra.mxu0 0.0
      %2833 = vmatprep.subr.mxu0 0.0
      %2834 = vmatpush2.msra.mxu0 0.0
      %2835 = vmatprep.subr.mxu0 0.0
      %2836 = vmatpush2.msra.mxu0 0.0
      %2837 = vmatprep.mubr.f32.mxu0 0.0
      %2838 = vmatmul.mubr.f32.gmra.mxu0 %v2768
      %v2839 = vpop.f32.mrf.mxu0
      %v2840 = vadd.f32 0.0, %v2839
      %v2841 = vpop.f32.mrf.mxu0
      %2842 = vmatprep.mubr.f32.mxu0 0.0
      %2843 = vmatmul.mubr.f32.gmra.mxu0 %v2771
      %v2844 = vpop.f32.mrf.mxu0
      %v2845 = vadd.f32 0.0, %v2844
      %v2846 = vpop.f32.mrf.mxu0
      %2847 = vdwg.mxu0
      %2856 = vrot.lane.b32.xlu0 %v2579, 16
      %v2857 = vpop.permute.xlu0 %2856
      %2858 = vrot.lane.b32.xlu0 %v2584, 16
      %v2859 = vpop.permute.xlu0 %2858
      %2860 = vrot.lane.b32.xlu0 %v2666, 16
      %v2861 = vpop.permute.xlu0 %2860
      %2862 = vrot.lane.b32.xlu0 %v2671, 16
      %v2863 = vpop.permute.xlu0 %2862
      %2864 = vrot.lane.b32.xlu0 %v2753, 16
      %v2865 = vpop.permute.xlu0 %2864
      %2866 = vrot.lane.b32.xlu0 %v2758, 16
      %v2867 = vpop.permute.xlu0 %2866
      %2868 = vrot.lane.b32.xlu0 %v2840, 16
      %v2869 = vpop.permute.xlu0 %2868
      %2870 = vrot.lane.b32.xlu0 %v2845, 16
      %v2871 = vpop.permute.xlu0 %2870
      %vm2880 = vcmask 195712
      %2881 = vst.msk [vmem:[#allocation2] sm:$0xff] %vm2880, %v2857
      %2882 = vst.msk [vmem:[#allocation2 + $0x8] sm:$0xff] %vm2880, %v2859
      %2883 = vst.msk [vmem:[#allocation2 + $0x10] sm:$0xff] %vm2880, %v2861
      %2884 = vst.msk [vmem:[#allocation2 + $0x18] sm:$0xff] %vm2880, %v2863
      %2885 = vst.msk [vmem:[#allocation2 + $0x20] sm:$0xff] %vm2880, %v2865
      %2886 = vst.msk [vmem:[#allocation2 + $0x28] sm:$0xff] %vm2880, %v2867
      %2887 = vst.msk [vmem:[#allocation2 + $0x30] sm:$0xff] %vm2880, %v2869
      %2888 = vst.msk [vmem:[#allocation2 + $0x38] sm:$0xff] %vm2880, %v2871
      %2889 = vrot.lane.b32.xlu0 %v605, 104
      %v2890 = vpop.permute.xlu0 %2889
      %2891 = vrot.lane.b32.xlu0 %v605, 40
      %v2892 = vpop.permute.xlu0 %2891
      %v2894 = vsel %vm612, %v2890, 0
      %v2897 = vsel %vm612, %v2892, 0
      %2899 = vmatprep.subr.bf16.mxu0 0
      %2900 = vmatpush1.bf16.xpose.msra.mxu0 0
      %2901 = vmatprep.subr.bf16.mxu0 0
      %2902 = vmatpush1.bf16.xpose.msra.mxu0 0
      %2903 = vmatprep.subr.bf16.mxu0 0
      %2904 = vmatpush1.bf16.xpose.msra.mxu0 0
      %2905 = vmatprep.subr.bf16.mxu0 0
      %2906 = vmatpush1.bf16.xpose.msra.mxu0 0
      %2907 = vmatprep.subr.bf16.mxu0 0
      %2908 = vmatpush1.bf16.xpose.msra.mxu0 0
      %2909 = vmatprep.subr.bf16.mxu0 0
      %2910 = vmatpush1.bf16.xpose.msra.mxu0 0
      %2911 = vmatprep.subr.bf16.mxu0 0
      %2912 = vmatpush1.bf16.xpose.msra.mxu0 0
      %2913 = vmatprep.subr.bf16.mxu0 0
      %2914 = vmatpush1.bf16.xpose.msra.mxu0 %v2897
      %2915 = vmatprep.subr.bf16.mxu0 0
      %2916 = vmatpush2.bf16.xpose.msra.mxu0 0
      %2917 = vmatprep.subr.bf16.mxu0 0
      %2918 = vmatpush2.bf16.xpose.msra.mxu0 0
      %2919 = vmatprep.subr.bf16.mxu0 0
      %2920 = vmatpush2.bf16.xpose.msra.mxu0 0
      %2921 = vmatprep.subr.bf16.mxu0 0
      %2922 = vmatpush2.bf16.xpose.msra.mxu0 0
      %2923 = vmatprep.subr.bf16.mxu0 0
      %2924 = vmatpush2.bf16.xpose.msra.mxu0 0
      %2925 = vmatprep.subr.bf16.mxu0 0
      %2926 = vmatpush2.bf16.xpose.msra.mxu0 0
      %2927 = vmatprep.subr.bf16.mxu0 0
      %2928 = vmatpush2.bf16.xpose.msra.mxu0 0
      %2929 = vmatprep.subr.bf16.mxu0 0
      %2930 = vmatpush2.bf16.xpose.msra.mxu0 0
      %2931 = vmatprep.mubr.bf16.mxu0 0
      %2932 = vmatmul.mubr.bf16.gmra.mxu0 %v2894
      %v2933 = vpop.f32.mrf.mxu0
      %v2934 = vadd.f32 0.0, %v2933
      %v2935 = vpop.f32.mrf.mxu0
      %v2936 = vpop.f32.mrf.mxu0
      %v2937 = vadd.f32 0.0, %v2936
      %v2938 = vpop.f32.mrf.mxu0
      %2939 = vdwg.mxu0
      %2940 = vrot.lane.b32.xlu0 %v606, 104
      %v2941 = vpop.permute.xlu0 %2940
      %2942 = vrot.lane.b32.xlu0 %v606, 40
      %v2943 = vpop.permute.xlu0 %2942
      %v2945 = vsel %vm612, %v2941, 0
      %v2948 = vsel %vm612, %v2943, 0
      %2950 = vmatprep.subr.bf16.mxu0 0
      %2951 = vmatpush1.bf16.xpose.msra.mxu0 0
      %2952 = vmatprep.subr.bf16.mxu0 0
      %2953 = vmatpush1.bf16.xpose.msra.mxu0 0
      %2954 = vmatprep.subr.bf16.mxu0 0
      %2955 = vmatpush1.bf16.xpose.msra.mxu0 0
      %2956 = vmatprep.subr.bf16.mxu0 0
      %2957 = vmatpush1.bf16.xpose.msra.mxu0 0
      %2958 = vmatprep.subr.bf16.mxu0 0
      %2959 = vmatpush1.bf16.xpose.msra.mxu0 0
      %2960 = vmatprep.subr.bf16.mxu0 0
      %2961 = vmatpush1.bf16.xpose.msra.mxu0 0
      %2962 = vmatprep.subr.bf16.mxu0 0
      %2963 = vmatpush1.bf16.xpose.msra.mxu0 0
      %2964 = vmatprep.subr.bf16.mxu0 0
      %2965 = vmatpush1.bf16.xpose.msra.mxu0 %v2948
      %2966 = vmatprep.subr.bf16.mxu0 0
      %2967 = vmatpush2.bf16.xpose.msra.mxu0 0
      %2968 = vmatprep.subr.bf16.mxu0 0
      %2969 = vmatpush2.bf16.xpose.msra.mxu0 0
      %2970 = vmatprep.subr.bf16.mxu0 0
      %2971 = vmatpush2.bf16.xpose.msra.mxu0 0
      %2972 = vmatprep.subr.bf16.mxu0 0
      %2973 = vmatpush2.bf16.xpose.msra.mxu0 0
      %2974 = vmatprep.subr.bf16.mxu0 0
      %2975 = vmatpush2.bf16.xpose.msra.mxu0 0
      %2976 = vmatprep.subr.bf16.mxu0 0
      %2977 = vmatpush2.bf16.xpose.msra.mxu0 0
      %2978 = vmatprep.subr.bf16.mxu0 0
      %2979 = vmatpush2.bf16.xpose.msra.mxu0 0
      %2980 = vmatprep.subr.bf16.mxu0 0
      %2981 = vmatpush2.bf16.xpose.msra.mxu0 0
      %2982 = vmatprep.mubr.bf16.mxu0 0
      %2983 = vmatmul.mubr.bf16.gmra.mxu0 %v2945
      %v2984 = vpop.f32.mrf.mxu0
      %v2985 = vadd.f32 0.0, %v2984
      %v2986 = vpop.f32.mrf.mxu0
      %v2987 = vpop.f32.mrf.mxu0
      %v2988 = vadd.f32 0.0, %v2987
      %v2989 = vpop.f32.mrf.mxu0
      %2990 = vdwg.mxu0
      %2991 = vrot.lane.b32.xlu0 %v607, 104
      %v2992 = vpop.permute.xlu0 %2991
      %2993 = vrot.lane.b32.xlu0 %v607, 40
      %v2994 = vpop.permute.xlu0 %2993
      %v2996 = vsel %vm612, %v2992, 0
      %v2999 = vsel %vm612, %v2994, 0
      %3001 = vmatprep.subr.bf16.mxu0 0
      %3002 = vmatpush1.bf16.xpose.msra.mxu0 0
      %3003 = vmatprep.subr.bf16.mxu0 0
      %3004 = vmatpush1.bf16.xpose.msra.mxu0 0
      %3005 = vmatprep.subr.bf16.mxu0 0
      %3006 = vmatpush1.bf16.xpose.msra.mxu0 0
      %3007 = vmatprep.subr.bf16.mxu0 0
      %3008 = vmatpush1.bf16.xpose.msra.mxu0 0
      %3009 = vmatprep.subr.bf16.mxu0 0
      %3010 = vmatpush1.bf16.xpose.msra.mxu0 0
      %3011 = vmatprep.subr.bf16.mxu0 0
      %3012 = vmatpush1.bf16.xpose.msra.mxu0 0
      %3013 = vmatprep.subr.bf16.mxu0 0
      %3014 = vmatpush1.bf16.xpose.msra.mxu0 0
      %3015 = vmatprep.subr.bf16.mxu0 0
      %3016 = vmatpush1.bf16.xpose.msra.mxu0 %v2999
      %3017 = vmatprep.subr.bf16.mxu0 0
      %3018 = vmatpush2.bf16.xpose.msra.mxu0 0
      %3019 = vmatprep.subr.bf16.mxu0 0
      %3020 = vmatpush2.bf16.xpose.msra.mxu0 0
      %3021 = vmatprep.subr.bf16.mxu0 0
      %3022 = vmatpush2.bf16.xpose.msra.mxu0 0
      %3023 = vmatprep.subr.bf16.mxu0 0
      %3024 = vmatpush2.bf16.xpose.msra.mxu0 0
      %3025 = vmatprep.subr.bf16.mxu0 0
      %3026 = vmatpush2.bf16.xpose.msra.mxu0 0
      %3027 = vmatprep.subr.bf16.mxu0 0
      %3028 = vmatpush2.bf16.xpose.msra.mxu0 0
      %3029 = vmatprep.subr.bf16.mxu0 0
      %3030 = vmatpush2.bf16.xpose.msra.mxu0 0
      %3031 = vmatprep.subr.bf16.mxu0 0
      %3032 = vmatpush2.bf16.xpose.msra.mxu0 0
      %3033 = vmatprep.mubr.bf16.mxu0 0
      %3034 = vmatmul.mubr.bf16.gmra.mxu0 %v2996
      %v3035 = vpop.f32.mrf.mxu0
      %v3036 = vadd.f32 0.0, %v3035
      %v3037 = vpop.f32.mrf.mxu0
      %v3038 = vpop.f32.mrf.mxu0
      %v3039 = vadd.f32 0.0, %v3038
      %v3040 = vpop.f32.mrf.mxu0
      %3041 = vdwg.mxu0
      %3042 = vrot.lane.b32.xlu0 %v608, 104
      %v3043 = vpop.permute.xlu0 %3042
      %3044 = vrot.lane.b32.xlu0 %v608, 40
      %v3045 = vpop.permute.xlu0 %3044
      %v3047 = vsel %vm612, %v3043, 0
      %v3050 = vsel %vm612, %v3045, 0
      %3052 = vmatprep.subr.bf16.mxu0 0
      %3053 = vmatpush1.bf16.xpose.msra.mxu0 0
      %3054 = vmatprep.subr.bf16.mxu0 0
      %3055 = vmatpush1.bf16.xpose.msra.mxu0 0
      %3056 = vmatprep.subr.bf16.mxu0 0
      %3057 = vmatpush1.bf16.xpose.msra.mxu0 0
      %3058 = vmatprep.subr.bf16.mxu0 0
      %3059 = vmatpush1.bf16.xpose.msra.mxu0 0
      %3060 = vmatprep.subr.bf16.mxu0 0
      %3061 = vmatpush1.bf16.xpose.msra.mxu0 0
      %3062 = vmatprep.subr.bf16.mxu0 0
      %3063 = vmatpush1.bf16.xpose.msra.mxu0 0
      %3064 = vmatprep.subr.bf16.mxu0 0
      %3065 = vmatpush1.bf16.xpose.msra.mxu0 0
      %3066 = vmatprep.subr.bf16.mxu0 0
      %3067 = vmatpush1.bf16.xpose.msra.mxu0 %v3050
      %3068 = vmatprep.subr.bf16.mxu0 0
      %3069 = vmatpush2.bf16.xpose.msra.mxu0 0
      %3070 = vmatprep.subr.bf16.mxu0 0
      %3071 = vmatpush2.bf16.xpose.msra.mxu0 0
      %3072 = vmatprep.subr.bf16.mxu0 0
      %3073 = vmatpush2.bf16.xpose.msra.mxu0 0
      %3074 = vmatprep.subr.bf16.mxu0 0
      %3075 = vmatpush2.bf16.xpose.msra.mxu0 0
      %3076 = vmatprep.subr.bf16.mxu0 0
      %3077 = vmatpush2.bf16.xpose.msra.mxu0 0
      %3078 = vmatprep.subr.bf16.mxu0 0
      %3079 = vmatpush2.bf16.xpose.msra.mxu0 0
      %3080 = vmatprep.subr.bf16.mxu0 0
      %3081 = vmatpush2.bf16.xpose.msra.mxu0 0
      %3082 = vmatprep.subr.bf16.mxu0 0
      %3083 = vmatpush2.bf16.xpose.msra.mxu0 0
      %3084 = vmatprep.mubr.bf16.mxu0 0
      %3085 = vmatmul.mubr.bf16.gmra.mxu0 %v3047
      %v3086 = vpop.f32.mrf.mxu0
      %v3087 = vadd.f32 0.0, %v3086
      %v3088 = vpop.f32.mrf.mxu0
      %v3089 = vpop.f32.mrf.mxu0
      %v3090 = vadd.f32 0.0, %v3089
      %v3091 = vpop.f32.mrf.mxu0
      %3092 = vdwg.mxu0
      %v3093 = vmul.f32 %v2934, 0.35355338
      %v3094 = vmul.f32 %v2937, 0.35355338
      %v3095 = vmul.f32 %v2985, 0.35355338
      %v3096 = vmul.f32 %v2988, 0.35355338
      %v3097 = vmul.f32 %v3036, 0.35355338
      %v3098 = vmul.f32 %v3039, 0.35355338
      %v3099 = vmul.f32 %v3087, 0.35355338
      %v3100 = vmul.f32 %v3090, 0.35355338
      %v3101 = vand.u32 2147483647, %v3093
      %v3102 = vand.u32 2147483647, %v3094
      %v3103 = vand.u32 2147483647, %v3095
      %v3104 = vand.u32 2147483647, %v3096
      %v3105 = vand.u32 2147483647, %v3097
      %v3106 = vand.u32 2147483647, %v3098
      %v3107 = vand.u32 2147483647, %v3099
      %v3108 = vand.u32 2147483647, %v3100
      %v3109 = vrsqrt.pop %v3101
      %v3110 = vmul.f32 %v3101, %v3109
      %vm3111 = vcmp.eq.f32.partialorder %v3101, inf
      %v3112 = vsel %vm3111, %v3101, %v3110
      %vm3113 = vcmp.eq.f32.partialorder %v3101, 0.0
      %v3114 = vand.u32 %v3101, 2147483648
      %v3115 = vsel %vm3113, %v3114, %v3112
      %v3116 = vrsqrt.pop %v3102
      %v3117 = vmul.f32 %v3102, %v3116
      %vm3118 = vcmp.eq.f32.partialorder %v3102, inf
      %v3119 = vsel %vm3118, %v3102, %v3117
      %vm3120 = vcmp.eq.f32.partialorder %v3102, 0.0
      %v3121 = vand.u32 %v3102, 2147483648
      %v3122 = vsel %vm3120, %v3121, %v3119
      %v3123 = vrsqrt.pop %v3103
      %v3124 = vmul.f32 %v3103, %v3123
      %vm3125 = vcmp.eq.f32.partialorder %v3103, inf
      %v3126 = vsel %vm3125, %v3103, %v3124
      %vm3127 = vcmp.eq.f32.partialorder %v3103, 0.0
      %v3128 = vand.u32 %v3103, 2147483648
      %v3129 = vsel %vm3127, %v3128, %v3126
      %v3130 = vrsqrt.pop %v3104
      %v3131 = vmul.f32 %v3104, %v3130
      %vm3132 = vcmp.eq.f32.partialorder %v3104, inf
      %v3133 = vsel %vm3132, %v3104, %v3131
      %vm3134 = vcmp.eq.f32.partialorder %v3104, 0.0
      %v3135 = vand.u32 %v3104, 2147483648
      %v3136 = vsel %vm3134, %v3135, %v3133
      %v3137 = vrsqrt.pop %v3105
      %v3138 = vmul.f32 %v3105, %v3137
      %vm3139 = vcmp.eq.f32.partialorder %v3105, inf
      %v3140 = vsel %vm3139, %v3105, %v3138
      %vm3141 = vcmp.eq.f32.partialorder %v3105, 0.0
      %v3142 = vand.u32 %v3105, 2147483648
      %v3143 = vsel %vm3141, %v3142, %v3140
      %v3144 = vrsqrt.pop %v3106
      %v3145 = vmul.f32 %v3106, %v3144
      %vm3146 = vcmp.eq.f32.partialorder %v3106, inf
      %v3147 = vsel %vm3146, %v3106, %v3145
      %vm3148 = vcmp.eq.f32.partialorder %v3106, 0.0
      %v3149 = vand.u32 %v3106, 2147483648
      %v3150 = vsel %vm3148, %v3149, %v3147
      %v3151 = vrsqrt.pop %v3107
      %v3152 = vmul.f32 %v3107, %v3151
      %vm3153 = vcmp.eq.f32.partialorder %v3107, inf
      %v3154 = vsel %vm3153, %v3107, %v3152
      %vm3155 = vcmp.eq.f32.partialorder %v3107, 0.0
      %v3156 = vand.u32 %v3107, 2147483648
      %v3157 = vsel %vm3155, %v3156, %v3154
      %v3158 = vrsqrt.pop %v3108
      %v3159 = vmul.f32 %v3108, %v3158
      %vm3160 = vcmp.eq.f32.partialorder %v3108, inf
      %v3161 = vsel %vm3160, %v3108, %v3159
      %vm3162 = vcmp.eq.f32.partialorder %v3108, 0.0
      %v3163 = vand.u32 %v3108, 2147483648
      %v3164 = vsel %vm3162, %v3163, %v3161
      %vm3165 = vcmp.ge.f32.partialorder %v3093, 0.0
      %vm3166 = vcmp.ge.f32.partialorder %v3094, 0.0
      %vm3167 = vcmp.ge.f32.partialorder %v3095, 0.0
      %vm3168 = vcmp.ge.f32.partialorder %v3096, 0.0
      %vm3169 = vcmp.ge.f32.partialorder %v3097, 0.0
      %vm3170 = vcmp.ge.f32.partialorder %v3098, 0.0
      %vm3171 = vcmp.ge.f32.partialorder %v3099, 0.0
      %vm3172 = vcmp.ge.f32.partialorder %v3100, 0.0
      %v3173 = vsub.f32 0.0, %v3115
      %v3174 = vsub.f32 0.0, %v3122
      %v3175 = vsub.f32 0.0, %v3129
      %v3176 = vsub.f32 0.0, %v3136
      %v3177 = vsub.f32 0.0, %v3143
      %v3178 = vsub.f32 0.0, %v3150
      %v3179 = vsub.f32 0.0, %v3157
      %v3180 = vsub.f32 0.0, %v3164
      %v3181 = vsel %vm3165, %v3115, %v3173
      %v3182 = vsel %vm3166, %v3122, %v3174
      %v3183 = vsel %vm3167, %v3129, %v3175
      %v3184 = vsel %vm3168, %v3136, %v3176
      %v3185 = vsel %vm3169, %v3143, %v3177
      %v3186 = vsel %vm3170, %v3150, %v3178
      %v3187 = vsel %vm3171, %v3157, %v3179
      %v3188 = vsel %vm3172, %v3164, %v3180
      %v3189 = vsel %vm906, %v3181, -inf
      %3190 = vmax.xlane.f32.xlu0 %v3189
      %v3191 = vpop.xlane.xlu0 %3190
      %v3192 = vsel %vm906, %v3182, -inf
      %3193 = vmax.xlane.f32.xlu0 %v3192
      %v3194 = vpop.xlane.xlu0 %3193
      %v3195 = vsel %vm906, %v3183, -inf
      %3196 = vmax.xlane.f32.xlu0 %v3195
      %v3197 = vpop.xlane.xlu0 %3196
      %v3198 = vsel %vm906, %v3184, -inf
      %3199 = vmax.xlane.f32.xlu0 %v3198
      %v3200 = vpop.xlane.xlu0 %3199
      %v3201 = vsel %vm906, %v3185, -inf
      %3202 = vmax.xlane.f32.xlu0 %v3201
      %v3203 = vpop.xlane.xlu0 %3202
      %v3204 = vsel %vm906, %v3186, -inf
      %3205 = vmax.xlane.f32.xlu0 %v3204
      %v3206 = vpop.xlane.xlu0 %3205
      %v3207 = vsel %vm906, %v3187, -inf
      %3208 = vmax.xlane.f32.xlu0 %v3207
      %v3209 = vpop.xlane.xlu0 %3208
      %v3210 = vsel %vm906, %v3188, -inf
      %3211 = vmax.xlane.f32.xlu0 %v3210
      %v3212 = vpop.xlane.xlu0 %3211
      %v3213 = vsub.f32 %v3181, %v3191
      %v3214 = vsub.f32 %v3182, %v3194
      %v3215 = vsub.f32 %v3183, %v3197
      %v3216 = vsub.f32 %v3184, %v3200
      %v3217 = vsub.f32 %v3185, %v3203
      %v3218 = vsub.f32 %v3186, %v3206
      %v3219 = vsub.f32 %v3187, %v3209
      %v3220 = vsub.f32 %v3188, %v3212
      %v3221 = vmul.f32 %v3213, 1.442695
      %v3222 = vpow.pop %v3221
      %v3223 = vmul.f32 %v3214, 1.442695
      %v3224 = vpow.pop %v3223
      %v3225 = vmul.f32 %v3215, 1.442695
      %v3226 = vpow.pop %v3225
      %v3227 = vmul.f32 %v3216, 1.442695
      %v3228 = vpow.pop %v3227
      %v3229 = vmul.f32 %v3217, 1.442695
      %v3230 = vpow.pop %v3229
      %v3231 = vmul.f32 %v3218, 1.442695
      %v3232 = vpow.pop %v3231
      %v3233 = vmul.f32 %v3219, 1.442695
      %v3234 = vpow.pop %v3233
      %v3235 = vmul.f32 %v3220, 1.442695
      %v3236 = vpow.pop %v3235
      %v3237 = vsel %vm906, %v3222, 0.0
      %3238 = vadd.xlane.f32.xlu0 %v3237
      %v3239 = vpop.xlane.xlu0 %3238
      %v3240 = vsel %vm906, %v3224, 0.0
      %3241 = vadd.xlane.f32.xlu0 %v3240
      %v3242 = vpop.xlane.xlu0 %3241
      %v3243 = vsel %vm906, %v3226, 0.0
      %3244 = vadd.xlane.f32.xlu0 %v3243
      %v3245 = vpop.xlane.xlu0 %3244
      %v3246 = vsel %vm906, %v3228, 0.0
      %3247 = vadd.xlane.f32.xlu0 %v3246
      %v3248 = vpop.xlane.xlu0 %3247
      %v3249 = vsel %vm906, %v3230, 0.0
      %3250 = vadd.xlane.f32.xlu0 %v3249
      %v3251 = vpop.xlane.xlu0 %3250
      %v3252 = vsel %vm906, %v3232, 0.0
      %3253 = vadd.xlane.f32.xlu0 %v3252
      %v3254 = vpop.xlane.xlu0 %3253
      %v3255 = vsel %vm906, %v3234, 0.0
      %3256 = vadd.xlane.f32.xlu0 %v3255
      %v3257 = vpop.xlane.xlu0 %3256
      %v3258 = vsel %vm906, %v3236, 0.0
      %3259 = vadd.xlane.f32.xlu0 %v3258
      %v3260 = vpop.xlane.xlu0 %3259
      %v3261 = vrcp.pop %v3239
      %v3262 = vrcp.pop %v3242
      %v3263 = vrcp.pop %v3245
      %v3264 = vrcp.pop %v3248
      %v3265 = vrcp.pop %v3251
      %v3266 = vrcp.pop %v3254
      %v3267 = vrcp.pop %v3257
      %v3268 = vrcp.pop %v3260
      %v3269 = vmul.f32 %v3222, %v3261
      %v3270 = vmul.f32 %v3224, %v3262
      %v3271 = vmul.f32 %v3226, %v3263
      %v3272 = vmul.f32 %v3228, %v3264
      %v3273 = vmul.f32 %v3230, %v3265
      %v3274 = vmul.f32 %v3232, %v3266
      %v3275 = vmul.f32 %v3234, %v3267
      %v3276 = vmul.f32 %v3236, %v3268
      %3277 = vrot.lane.b32.xlu0 %v504, 104
      %v3278 = vpop.permute.xlu0 %3277
      %3279 = vrot.lane.b32.xlu0 %v508, 104
      %v3280 = vpop.permute.xlu0 %3279
      %v3284 = vsel %vm906, %v3269, 0
      %v3287 = vsel %vm906, %v3270, 0
      %3289 = vmatprep.subr.mxu0 0.0
      %3290 = vmatpush1.msra.mxu0 0.0
      %3291 = vmatprep.subr.mxu0 0.0
      %3292 = vmatpush1.msra.mxu0 0.0
      %3293 = vmatprep.subr.mxu0 0.0
      %3294 = vmatpush1.msra.mxu0 0.0
      %3295 = vmatprep.subr.mxu0 0.0
      %3296 = vmatpush1.msra.mxu0 0.0
      %3297 = vmatprep.subr.mxu0 0.0
      %3298 = vmatpush1.msra.mxu0 0.0
      %3299 = vmatprep.subr.mxu0 0.0
      %3300 = vmatpush1.msra.mxu0 0.0
      %3301 = vmatprep.subr.mxu0 0.0
      %3302 = vmatpush1.msra.mxu0 0.0
      %3303 = vmatprep.subr.mxu0 0.0
      %3304 = vmatpush1.msra.mxu0 0.0
      %3305 = vmatprep.subr.mxu0 0.0
      %3306 = vmatpush1.msra.mxu0 0.0
      %3307 = vmatprep.subr.mxu0 0.0
      %3308 = vmatpush1.msra.mxu0 0.0
      %3309 = vmatprep.subr.mxu0 0.0
      %3310 = vmatpush1.msra.mxu0 0.0
      %3311 = vmatprep.subr.mxu0 0.0
      %3312 = vmatpush1.msra.mxu0 0.0
      %3313 = vmatprep.subr.mxu0 0.0
      %3314 = vmatpush1.msra.mxu0 0.0
      %3315 = vmatprep.subr.mxu0 0.0
      %3316 = vmatpush1.msra.mxu0 0.0
      %3317 = vmatprep.subr.mxu0 0.0
      %3318 = vmatpush1.msra.mxu0 %v3280
      %3319 = vmatprep.subr.mxu0 0.0
      %3320 = vmatpush1.msra.mxu0 %v3278
      %3321 = vmatprep.subr.mxu0 0.0
      %3322 = vmatpush2.msra.mxu0 0.0
      %3323 = vmatprep.subr.mxu0 0.0
      %3324 = vmatpush2.msra.mxu0 0.0
      %3325 = vmatprep.subr.mxu0 0.0
      %3326 = vmatpush2.msra.mxu0 0.0
      %3327 = vmatprep.subr.mxu0 0.0
      %3328 = vmatpush2.msra.mxu0 0.0
      %3329 = vmatprep.subr.mxu0 0.0
      %3330 = vmatpush2.msra.mxu0 0.0
      %3331 = vmatprep.subr.mxu0 0.0
      %3332 = vmatpush2.msra.mxu0 0.0
      %3333 = vmatprep.subr.mxu0 0.0
      %3334 = vmatpush2.msra.mxu0 0.0
      %3335 = vmatprep.subr.mxu0 0.0
      %3336 = vmatpush2.msra.mxu0 0.0
      %3337 = vmatprep.subr.mxu0 0.0
      %3338 = vmatpush2.msra.mxu0 0.0
      %3339 = vmatprep.subr.mxu0 0.0
      %3340 = vmatpush2.msra.mxu0 0.0
      %3341 = vmatprep.subr.mxu0 0.0
      %3342 = vmatpush2.msra.mxu0 0.0
      %3343 = vmatprep.subr.mxu0 0.0
      %3344 = vmatpush2.msra.mxu0 0.0
      %3345 = vmatprep.subr.mxu0 0.0
      %3346 = vmatpush2.msra.mxu0 0.0
      %3347 = vmatprep.subr.mxu0 0.0
      %3348 = vmatpush2.msra.mxu0 0.0
      %3349 = vmatprep.subr.mxu0 0.0
      %3350 = vmatpush2.msra.mxu0 0.0
      %3351 = vmatprep.subr.mxu0 0.0
      %3352 = vmatpush2.msra.mxu0 0.0
      %3353 = vmatprep.mubr.f32.mxu0 0.0
      %3354 = vmatmul.mubr.f32.gmra.mxu0 %v3284
      %v3355 = vpop.f32.mrf.mxu0
      %v3356 = vadd.f32 0.0, %v3355
      %v3357 = vpop.f32.mrf.mxu0
      %3358 = vmatprep.mubr.f32.mxu0 0.0
      %3359 = vmatmul.mubr.f32.gmra.mxu0 %v3287
      %v3360 = vpop.f32.mrf.mxu0
      %v3361 = vadd.f32 0.0, %v3360
      %v3362 = vpop.f32.mrf.mxu0
      %3363 = vdwg.mxu0
      %3364 = vrot.lane.b32.xlu0 %v514, 104
      %v3365 = vpop.permute.xlu0 %3364
      %3366 = vrot.lane.b32.xlu0 %v518, 104
      %v3367 = vpop.permute.xlu0 %3366
      %v3371 = vsel %vm906, %v3271, 0
      %v3374 = vsel %vm906, %v3272, 0
      %3376 = vmatprep.subr.mxu0 0.0
      %3377 = vmatpush1.msra.mxu0 0.0
      %3378 = vmatprep.subr.mxu0 0.0
      %3379 = vmatpush1.msra.mxu0 0.0
      %3380 = vmatprep.subr.mxu0 0.0
      %3381 = vmatpush1.msra.mxu0 0.0
      %3382 = vmatprep.subr.mxu0 0.0
      %3383 = vmatpush1.msra.mxu0 0.0
      %3384 = vmatprep.subr.mxu0 0.0
      %3385 = vmatpush1.msra.mxu0 0.0
      %3386 = vmatprep.subr.mxu0 0.0
      %3387 = vmatpush1.msra.mxu0 0.0
      %3388 = vmatprep.subr.mxu0 0.0
      %3389 = vmatpush1.msra.mxu0 0.0
      %3390 = vmatprep.subr.mxu0 0.0
      %3391 = vmatpush1.msra.mxu0 0.0
      %3392 = vmatprep.subr.mxu0 0.0
      %3393 = vmatpush1.msra.mxu0 0.0
      %3394 = vmatprep.subr.mxu0 0.0
      %3395 = vmatpush1.msra.mxu0 0.0
      %3396 = vmatprep.subr.mxu0 0.0
      %3397 = vmatpush1.msra.mxu0 0.0
      %3398 = vmatprep.subr.mxu0 0.0
      %3399 = vmatpush1.msra.mxu0 0.0
      %3400 = vmatprep.subr.mxu0 0.0
      %3401 = vmatpush1.msra.mxu0 0.0
      %3402 = vmatprep.subr.mxu0 0.0
      %3403 = vmatpush1.msra.mxu0 0.0
      %3404 = vmatprep.subr.mxu0 0.0
      %3405 = vmatpush1.msra.mxu0 %v3367
      %3406 = vmatprep.subr.mxu0 0.0
      %3407 = vmatpush1.msra.mxu0 %v3365
      %3408 = vmatprep.subr.mxu0 0.0
      %3409 = vmatpush2.msra.mxu0 0.0
      %3410 = vmatprep.subr.mxu0 0.0
      %3411 = vmatpush2.msra.mxu0 0.0
      %3412 = vmatprep.subr.mxu0 0.0
      %3413 = vmatpush2.msra.mxu0 0.0
      %3414 = vmatprep.subr.mxu0 0.0
      %3415 = vmatpush2.msra.mxu0 0.0
      %3416 = vmatprep.subr.mxu0 0.0
      %3417 = vmatpush2.msra.mxu0 0.0
      %3418 = vmatprep.subr.mxu0 0.0
      %3419 = vmatpush2.msra.mxu0 0.0
      %3420 = vmatprep.subr.mxu0 0.0
      %3421 = vmatpush2.msra.mxu0 0.0
      %3422 = vmatprep.subr.mxu0 0.0
      %3423 = vmatpush2.msra.mxu0 0.0
      %3424 = vmatprep.subr.mxu0 0.0
      %3425 = vmatpush2.msra.mxu0 0.0
      %3426 = vmatprep.subr.mxu0 0.0
      %3427 = vmatpush2.msra.mxu0 0.0
      %3428 = vmatprep.subr.mxu0 0.0
      %3429 = vmatpush2.msra.mxu0 0.0
      %3430 = vmatprep.subr.mxu0 0.0
      %3431 = vmatpush2.msra.mxu0 0.0
      %3432 = vmatprep.subr.mxu0 0.0
      %3433 = vmatpush2.msra.mxu0 0.0
      %3434 = vmatprep.subr.mxu0 0.0
      %3435 = vmatpush2.msra.mxu0 0.0
      %3436 = vmatprep.subr.mxu0 0.0
      %3437 = vmatpush2.msra.mxu0 0.0
      %3438 = vmatprep.subr.mxu0 0.0
      %3439 = vmatpush2.msra.mxu0 0.0
      %3440 = vmatprep.mubr.f32.mxu0 0.0
      %3441 = vmatmul.mubr.f32.gmra.mxu0 %v3371
      %v3442 = vpop.f32.mrf.mxu0
      %v3443 = vadd.f32 0.0, %v3442
      %v3444 = vpop.f32.mrf.mxu0
      %3445 = vmatprep.mubr.f32.mxu0 0.0
      %3446 = vmatmul.mubr.f32.gmra.mxu0 %v3374
      %v3447 = vpop.f32.mrf.mxu0
      %v3448 = vadd.f32 0.0, %v3447
      %v3449 = vpop.f32.mrf.mxu0
      %3450 = vdwg.mxu0
      %3451 = vrot.lane.b32.xlu0 %v524, 104
      %v3452 = vpop.permute.xlu0 %3451
      %3453 = vrot.lane.b32.xlu0 %v528, 104
      %v3454 = vpop.permute.xlu0 %3453
      %v3458 = vsel %vm906, %v3273, 0
      %v3461 = vsel %vm906, %v3274, 0
      %3463 = vmatprep.subr.mxu0 0.0
      %3464 = vmatpush1.msra.mxu0 0.0
      %3465 = vmatprep.subr.mxu0 0.0
      %3466 = vmatpush1.msra.mxu0 0.0
      %3467 = vmatprep.subr.mxu0 0.0
      %3468 = vmatpush1.msra.mxu0 0.0
      %3469 = vmatprep.subr.mxu0 0.0
      %3470 = vmatpush1.msra.mxu0 0.0
      %3471 = vmatprep.subr.mxu0 0.0
      %3472 = vmatpush1.msra.mxu0 0.0
      %3473 = vmatprep.subr.mxu0 0.0
      %3474 = vmatpush1.msra.mxu0 0.0
      %3475 = vmatprep.subr.mxu0 0.0
      %3476 = vmatpush1.msra.mxu0 0.0
      %3477 = vmatprep.subr.mxu0 0.0
      %3478 = vmatpush1.msra.mxu0 0.0
      %3479 = vmatprep.subr.mxu0 0.0
      %3480 = vmatpush1.msra.mxu0 0.0
      %3481 = vmatprep.subr.mxu0 0.0
      %3482 = vmatpush1.msra.mxu0 0.0
      %3483 = vmatprep.subr.mxu0 0.0
      %3484 = vmatpush1.msra.mxu0 0.0
      %3485 = vmatprep.subr.mxu0 0.0
      %3486 = vmatpush1.msra.mxu0 0.0
      %3487 = vmatprep.subr.mxu0 0.0
      %3488 = vmatpush1.msra.mxu0 0.0
      %3489 = vmatprep.subr.mxu0 0.0
      %3490 = vmatpush1.msra.mxu0 0.0
      %3491 = vmatprep.subr.mxu0 0.0
      %3492 = vmatpush1.msra.mxu0 %v3454
      %3493 = vmatprep.subr.mxu0 0.0
      %3494 = vmatpush1.msra.mxu0 %v3452
      %3495 = vmatprep.subr.mxu0 0.0
      %3496 = vmatpush2.msra.mxu0 0.0
      %3497 = vmatprep.subr.mxu0 0.0
      %3498 = vmatpush2.msra.mxu0 0.0
      %3499 = vmatprep.subr.mxu0 0.0
      %3500 = vmatpush2.msra.mxu0 0.0
      %3501 = vmatprep.subr.mxu0 0.0
      %3502 = vmatpush2.msra.mxu0 0.0
      %3503 = vmatprep.subr.mxu0 0.0
      %3504 = vmatpush2.msra.mxu0 0.0
      %3505 = vmatprep.subr.mxu0 0.0
      %3506 = vmatpush2.msra.mxu0 0.0
      %3507 = vmatprep.subr.mxu0 0.0
      %3508 = vmatpush2.msra.mxu0 0.0
      %3509 = vmatprep.subr.mxu0 0.0
      %3510 = vmatpush2.msra.mxu0 0.0
      %3511 = vmatprep.subr.mxu0 0.0
      %3512 = vmatpush2.msra.mxu0 0.0
      %3513 = vmatprep.subr.mxu0 0.0
      %3514 = vmatpush2.msra.mxu0 0.0
      %3515 = vmatprep.subr.mxu0 0.0
      %3516 = vmatpush2.msra.mxu0 0.0
      %3517 = vmatprep.subr.mxu0 0.0
      %3518 = vmatpush2.msra.mxu0 0.0
      %3519 = vmatprep.subr.mxu0 0.0
      %3520 = vmatpush2.msra.mxu0 0.0
      %3521 = vmatprep.subr.mxu0 0.0
      %3522 = vmatpush2.msra.mxu0 0.0
      %3523 = vmatprep.subr.mxu0 0.0
      %3524 = vmatpush2.msra.mxu0 0.0
      %3525 = vmatprep.subr.mxu0 0.0
      %3526 = vmatpush2.msra.mxu0 0.0
      %3527 = vmatprep.mubr.f32.mxu0 0.0
      %3528 = vmatmul.mubr.f32.gmra.mxu0 %v3458
      %v3529 = vpop.f32.mrf.mxu0
      %v3530 = vadd.f32 0.0, %v3529
      %v3531 = vpop.f32.mrf.mxu0
      %3532 = vmatprep.mubr.f32.mxu0 0.0
      %3533 = vmatmul.mubr.f32.gmra.mxu0 %v3461
      %v3534 = vpop.f32.mrf.mxu0
      %v3535 = vadd.f32 0.0, %v3534
      %v3536 = vpop.f32.mrf.mxu0
      %3537 = vdwg.mxu0
      %3538 = vrot.lane.b32.xlu0 %v534, 104
      %v3539 = vpop.permute.xlu0 %3538
      %3540 = vrot.lane.b32.xlu0 %v538, 104
      %v3541 = vpop.permute.xlu0 %3540
      %v3545 = vsel %vm906, %v3275, 0
      %v3548 = vsel %vm906, %v3276, 0
      %3550 = vmatprep.subr.mxu0 0.0
      %3551 = vmatpush1.msra.mxu0 0.0
      %3552 = vmatprep.subr.mxu0 0.0
      %3553 = vmatpush1.msra.mxu0 0.0
      %3554 = vmatprep.subr.mxu0 0.0
      %3555 = vmatpush1.msra.mxu0 0.0
      %3556 = vmatprep.subr.mxu0 0.0
      %3557 = vmatpush1.msra.mxu0 0.0
      %3558 = vmatprep.subr.mxu0 0.0
      %3559 = vmatpush1.msra.mxu0 0.0
      %3560 = vmatprep.subr.mxu0 0.0
      %3561 = vmatpush1.msra.mxu0 0.0
      %3562 = vmatprep.subr.mxu0 0.0
      %3563 = vmatpush1.msra.mxu0 0.0
      %3564 = vmatprep.subr.mxu0 0.0
      %3565 = vmatpush1.msra.mxu0 0.0
      %3566 = vmatprep.subr.mxu0 0.0
      %3567 = vmatpush1.msra.mxu0 0.0
      %3568 = vmatprep.subr.mxu0 0.0
      %3569 = vmatpush1.msra.mxu0 0.0
      %3570 = vmatprep.subr.mxu0 0.0
      %3571 = vmatpush1.msra.mxu0 0.0
      %3572 = vmatprep.subr.mxu0 0.0
      %3573 = vmatpush1.msra.mxu0 0.0
      %3574 = vmatprep.subr.mxu0 0.0
      %3575 = vmatpush1.msra.mxu0 0.0
      %3576 = vmatprep.subr.mxu0 0.0
      %3577 = vmatpush1.msra.mxu0 0.0
      %3578 = vmatprep.subr.mxu0 0.0
      %3579 = vmatpush1.msra.mxu0 %v3541
      %3580 = vmatprep.subr.mxu0 0.0
      %3581 = vmatpush1.msra.mxu0 %v3539
      %3582 = vmatprep.subr.mxu0 0.0
      %3583 = vmatpush2.msra.mxu0 0.0
      %3584 = vmatprep.subr.mxu0 0.0
      %3585 = vmatpush2.msra.mxu0 0.0
      %3586 = vmatprep.subr.mxu0 0.0
      %3587 = vmatpush2.msra.mxu0 0.0
      %3588 = vmatprep.subr.mxu0 0.0
      %3589 = vmatpush2.msra.mxu0 0.0
      %3590 = vmatprep.subr.mxu0 0.0
      %3591 = vmatpush2.msra.mxu0 0.0
      %3592 = vmatprep.subr.mxu0 0.0
      %3593 = vmatpush2.msra.mxu0 0.0
      %3594 = vmatprep.subr.mxu0 0.0
      %3595 = vmatpush2.msra.mxu0 0.0
      %3596 = vmatprep.subr.mxu0 0.0
      %3597 = vmatpush2.msra.mxu0 0.0
      %3598 = vmatprep.subr.mxu0 0.0
      %3599 = vmatpush2.msra.mxu0 0.0
      %3600 = vmatprep.subr.mxu0 0.0
      %3601 = vmatpush2.msra.mxu0 0.0
      %3602 = vmatprep.subr.mxu0 0.0
      %3603 = vmatpush2.msra.mxu0 0.0
      %3604 = vmatprep.subr.mxu0 0.0
      %3605 = vmatpush2.msra.mxu0 0.0
      %3606 = vmatprep.subr.mxu0 0.0
      %3607 = vmatpush2.msra.mxu0 0.0
      %3608 = vmatprep.subr.mxu0 0.0
      %3609 = vmatpush2.msra.mxu0 0.0
      %3610 = vmatprep.subr.mxu0 0.0
      %3611 = vmatpush2.msra.mxu0 0.0
      %3612 = vmatprep.subr.mxu0 0.0
      %3613 = vmatpush2.msra.mxu0 0.0
      %3614 = vmatprep.mubr.f32.mxu0 0.0
      %3615 = vmatmul.mubr.f32.gmra.mxu0 %v3545
      %v3616 = vpop.f32.mrf.mxu0
      %v3617 = vadd.f32 0.0, %v3616
      %v3618 = vpop.f32.mrf.mxu0
      %3619 = vmatprep.mubr.f32.mxu0 0.0
      %3620 = vmatmul.mubr.f32.gmra.mxu0 %v3548
      %v3621 = vpop.f32.mrf.mxu0
      %v3622 = vadd.f32 0.0, %v3621
      %v3623 = vpop.f32.mrf.mxu0
      %3624 = vdwg.mxu0
      %3633 = vrot.lane.b32.xlu0 %v3356, 24
      %v3634 = vpop.permute.xlu0 %3633
      %3635 = vrot.lane.b32.xlu0 %v3361, 24
      %v3636 = vpop.permute.xlu0 %3635
      %3637 = vrot.lane.b32.xlu0 %v3443, 24
      %v3638 = vpop.permute.xlu0 %3637
      %3639 = vrot.lane.b32.xlu0 %v3448, 24
      %v3640 = vpop.permute.xlu0 %3639
      %3641 = vrot.lane.b32.xlu0 %v3530, 24
      %v3642 = vpop.permute.xlu0 %3641
      %3643 = vrot.lane.b32.xlu0 %v3535, 24
      %v3644 = vpop.permute.xlu0 %3643
      %3645 = vrot.lane.b32.xlu0 %v3617, 24
      %v3646 = vpop.permute.xlu0 %3645
      %3647 = vrot.lane.b32.xlu0 %v3622, 24
      %v3648 = vpop.permute.xlu0 %3647
      %vm3657 = vcmask 261312
      %3658 = vst.msk [vmem:[#allocation2] sm:$0xff] %vm3657, %v3634
      %3659 = vst.msk [vmem:[#allocation2 + $0x8] sm:$0xff] %vm3657, %v3636
      %3660 = vst.msk [vmem:[#allocation2 + $0x10] sm:$0xff] %vm3657, %v3638
      %3661 = vst.msk [vmem:[#allocation2 + $0x18] sm:$0xff] %vm3657, %v3640
      %3662 = vst.msk [vmem:[#allocation2 + $0x20] sm:$0xff] %vm3657, %v3642
      %3663 = vst.msk [vmem:[#allocation2 + $0x28] sm:$0xff] %vm3657, %v3644
      %3664 = vst.msk [vmem:[#allocation2 + $0x30] sm:$0xff] %vm3657, %v3646
      %3665 = vst.msk [vmem:[#allocation2 + $0x38] sm:$0xff] %vm3657, %v3648
      %3666 = vrot.lane.b32.xlu0 %v605, 96
      %v3667 = vpop.permute.xlu0 %3666
      %3668 = vrot.lane.b32.xlu0 %v605, 32
      %v3669 = vpop.permute.xlu0 %3668
      %v3671 = vsel %vm612, %v3667, 0
      %v3674 = vsel %vm612, %v3669, 0
      %3676 = vmatprep.subr.bf16.mxu0 0
      %3677 = vmatpush1.bf16.xpose.msra.mxu0 0
      %3678 = vmatprep.subr.bf16.mxu0 0
      %3679 = vmatpush1.bf16.xpose.msra.mxu0 0
      %3680 = vmatprep.subr.bf16.mxu0 0
      %3681 = vmatpush1.bf16.xpose.msra.mxu0 0
      %3682 = vmatprep.subr.bf16.mxu0 0
      %3683 = vmatpush1.bf16.xpose.msra.mxu0 0
      %3684 = vmatprep.subr.bf16.mxu0 0
      %3685 = vmatpush1.bf16.xpose.msra.mxu0 0
      %3686 = vmatprep.subr.bf16.mxu0 0
      %3687 = vmatpush1.bf16.xpose.msra.mxu0 0
      %3688 = vmatprep.subr.bf16.mxu0 0
      %3689 = vmatpush1.bf16.xpose.msra.mxu0 0
      %3690 = vmatprep.subr.bf16.mxu0 0
      %3691 = vmatpush1.bf16.xpose.msra.mxu0 %v3674
      %3692 = vmatprep.subr.bf16.mxu0 0
      %3693 = vmatpush2.bf16.xpose.msra.mxu0 0
      %3694 = vmatprep.subr.bf16.mxu0 0
      %3695 = vmatpush2.bf16.xpose.msra.mxu0 0
      %3696 = vmatprep.subr.bf16.mxu0 0
      %3697 = vmatpush2.bf16.xpose.msra.mxu0 0
      %3698 = vmatprep.subr.bf16.mxu0 0
      %3699 = vmatpush2.bf16.xpose.msra.mxu0 0
      %3700 = vmatprep.subr.bf16.mxu0 0
      %3701 = vmatpush2.bf16.xpose.msra.mxu0 0
      %3702 = vmatprep.subr.bf16.mxu0 0
      %3703 = vmatpush2.bf16.xpose.msra.mxu0 0
      %3704 = vmatprep.subr.bf16.mxu0 0
      %3705 = vmatpush2.bf16.xpose.msra.mxu0 0
      %3706 = vmatprep.subr.bf16.mxu0 0
      %3707 = vmatpush2.bf16.xpose.msra.mxu0 0
      %3708 = vmatprep.mubr.bf16.mxu0 0
      %3709 = vmatmul.mubr.bf16.gmra.mxu0 %v3671
      %v3710 = vpop.f32.mrf.mxu0
      %v3711 = vadd.f32 0.0, %v3710
      %v3712 = vpop.f32.mrf.mxu0
      %v3713 = vpop.f32.mrf.mxu0
      %v3714 = vadd.f32 0.0, %v3713
      %v3715 = vpop.f32.mrf.mxu0
      %3716 = vdwg.mxu0
      %3717 = vrot.lane.b32.xlu0 %v606, 96
      %v3718 = vpop.permute.xlu0 %3717
      %3719 = vrot.lane.b32.xlu0 %v606, 32
      %v3720 = vpop.permute.xlu0 %3719
      %v3722 = vsel %vm612, %v3718, 0
      %v3725 = vsel %vm612, %v3720, 0
      %3727 = vmatprep.subr.bf16.mxu0 0
      %3728 = vmatpush1.bf16.xpose.msra.mxu0 0
      %3729 = vmatprep.subr.bf16.mxu0 0
      %3730 = vmatpush1.bf16.xpose.msra.mxu0 0
      %3731 = vmatprep.subr.bf16.mxu0 0
      %3732 = vmatpush1.bf16.xpose.msra.mxu0 0
      %3733 = vmatprep.subr.bf16.mxu0 0
      %3734 = vmatpush1.bf16.xpose.msra.mxu0 0
      %3735 = vmatprep.subr.bf16.mxu0 0
      %3736 = vmatpush1.bf16.xpose.msra.mxu0 0
      %3737 = vmatprep.subr.bf16.mxu0 0
      %3738 = vmatpush1.bf16.xpose.msra.mxu0 0
      %3739 = vmatprep.subr.bf16.mxu0 0
      %3740 = vmatpush1.bf16.xpose.msra.mxu0 0
      %3741 = vmatprep.subr.bf16.mxu0 0
      %3742 = vmatpush1.bf16.xpose.msra.mxu0 %v3725
      %3743 = vmatprep.subr.bf16.mxu0 0
      %3744 = vmatpush2.bf16.xpose.msra.mxu0 0
      %3745 = vmatprep.subr.bf16.mxu0 0
      %3746 = vmatpush2.bf16.xpose.msra.mxu0 0
      %3747 = vmatprep.subr.bf16.mxu0 0
      %3748 = vmatpush2.bf16.xpose.msra.mxu0 0
      %3749 = vmatprep.subr.bf16.mxu0 0
      %3750 = vmatpush2.bf16.xpose.msra.mxu0 0
      %3751 = vmatprep.subr.bf16.mxu0 0
      %3752 = vmatpush2.bf16.xpose.msra.mxu0 0
      %3753 = vmatprep.subr.bf16.mxu0 0
      %3754 = vmatpush2.bf16.xpose.msra.mxu0 0
      %3755 = vmatprep.subr.bf16.mxu0 0
      %3756 = vmatpush2.bf16.xpose.msra.mxu0 0
      %3757 = vmatprep.subr.bf16.mxu0 0
      %3758 = vmatpush2.bf16.xpose.msra.mxu0 0
      %3759 = vmatprep.mubr.bf16.mxu0 0
      %3760 = vmatmul.mubr.bf16.gmra.mxu0 %v3722
      %v3761 = vpop.f32.mrf.mxu0
      %v3762 = vadd.f32 0.0, %v3761
      %v3763 = vpop.f32.mrf.mxu0
      %v3764 = vpop.f32.mrf.mxu0
      %v3765 = vadd.f32 0.0, %v3764
      %v3766 = vpop.f32.mrf.mxu0
      %3767 = vdwg.mxu0
      %3768 = vrot.lane.b32.xlu0 %v607, 96
      %v3769 = vpop.permute.xlu0 %3768
      %3770 = vrot.lane.b32.xlu0 %v607, 32
      %v3771 = vpop.permute.xlu0 %3770
      %v3773 = vsel %vm612, %v3769, 0
      %v3776 = vsel %vm612, %v3771, 0
      %3778 = vmatprep.subr.bf16.mxu0 0
      %3779 = vmatpush1.bf16.xpose.msra.mxu0 0
      %3780 = vmatprep.subr.bf16.mxu0 0
      %3781 = vmatpush1.bf16.xpose.msra.mxu0 0
      %3782 = vmatprep.subr.bf16.mxu0 0
      %3783 = vmatpush1.bf16.xpose.msra.mxu0 0
      %3784 = vmatprep.subr.bf16.mxu0 0
      %3785 = vmatpush1.bf16.xpose.msra.mxu0 0
      %3786 = vmatprep.subr.bf16.mxu0 0
      %3787 = vmatpush1.bf16.xpose.msra.mxu0 0
      %3788 = vmatprep.subr.bf16.mxu0 0
      %3789 = vmatpush1.bf16.xpose.msra.mxu0 0
      %3790 = vmatprep.subr.bf16.mxu0 0
      %3791 = vmatpush1.bf16.xpose.msra.mxu0 0
      %3792 = vmatprep.subr.bf16.mxu0 0
      %3793 = vmatpush1.bf16.xpose.msra.mxu0 %v3776
      %3794 = vmatprep.subr.bf16.mxu0 0
      %3795 = vmatpush2.bf16.xpose.msra.mxu0 0
      %3796 = vmatprep.subr.bf16.mxu0 0
      %3797 = vmatpush2.bf16.xpose.msra.mxu0 0
      %3798 = vmatprep.subr.bf16.mxu0 0
      %3799 = vmatpush2.bf16.xpose.msra.mxu0 0
      %3800 = vmatprep.subr.bf16.mxu0 0
      %3801 = vmatpush2.bf16.xpose.msra.mxu0 0
      %3802 = vmatprep.subr.bf16.mxu0 0
      %3803 = vmatpush2.bf16.xpose.msra.mxu0 0
      %3804 = vmatprep.subr.bf16.mxu0 0
      %3805 = vmatpush2.bf16.xpose.msra.mxu0 0
      %3806 = vmatprep.subr.bf16.mxu0 0
      %3807 = vmatpush2.bf16.xpose.msra.mxu0 0
      %3808 = vmatprep.subr.bf16.mxu0 0
      %3809 = vmatpush2.bf16.xpose.msra.mxu0 0
      %3810 = vmatprep.mubr.bf16.mxu0 0
      %3811 = vmatmul.mubr.bf16.gmra.mxu0 %v3773
      %v3812 = vpop.f32.mrf.mxu0
      %v3813 = vadd.f32 0.0, %v3812
      %v3814 = vpop.f32.mrf.mxu0
      %v3815 = vpop.f32.mrf.mxu0
      %v3816 = vadd.f32 0.0, %v3815
      %v3817 = vpop.f32.mrf.mxu0
      %3818 = vdwg.mxu0
      %3819 = vrot.lane.b32.xlu0 %v608, 96
      %v3820 = vpop.permute.xlu0 %3819
      %3821 = vrot.lane.b32.xlu0 %v608, 32
      %v3822 = vpop.permute.xlu0 %3821
      %v3824 = vsel %vm612, %v3820, 0
      %v3827 = vsel %vm612, %v3822, 0
      %3829 = vmatprep.subr.bf16.mxu0 0
      %3830 = vmatpush1.bf16.xpose.msra.mxu0 0
      %3831 = vmatprep.subr.bf16.mxu0 0
      %3832 = vmatpush1.bf16.xpose.msra.mxu0 0
      %3833 = vmatprep.subr.bf16.mxu0 0
      %3834 = vmatpush1.bf16.xpose.msra.mxu0 0
      %3835 = vmatprep.subr.bf16.mxu0 0
      %3836 = vmatpush1.bf16.xpose.msra.mxu0 0
      %3837 = vmatprep.subr.bf16.mxu0 0
      %3838 = vmatpush1.bf16.xpose.msra.mxu0 0
      %3839 = vmatprep.subr.bf16.mxu0 0
      %3840 = vmatpush1.bf16.xpose.msra.mxu0 0
      %3841 = vmatprep.subr.bf16.mxu0 0
      %3842 = vmatpush1.bf16.xpose.msra.mxu0 0
      %3843 = vmatprep.subr.bf16.mxu0 0
      %3844 = vmatpush1.bf16.xpose.msra.mxu0 %v3827
      %3845 = vmatprep.subr.bf16.mxu0 0
      %3846 = vmatpush2.bf16.xpose.msra.mxu0 0
      %3847 = vmatprep.subr.bf16.mxu0 0
      %3848 = vmatpush2.bf16.xpose.msra.mxu0 0
      %3849 = vmatprep.subr.bf16.mxu0 0
      %3850 = vmatpush2.bf16.xpose.msra.mxu0 0
      %3851 = vmatprep.subr.bf16.mxu0 0
      %3852 = vmatpush2.bf16.xpose.msra.mxu0 0
      %3853 = vmatprep.subr.bf16.mxu0 0
      %3854 = vmatpush2.bf16.xpose.msra.mxu0 0
      %3855 = vmatprep.subr.bf16.mxu0 0
      %3856 = vmatpush2.bf16.xpose.msra.mxu0 0
      %3857 = vmatprep.subr.bf16.mxu0 0
      %3858 = vmatpush2.bf16.xpose.msra.mxu0 0
      %3859 = vmatprep.subr.bf16.mxu0 0
      %3860 = vmatpush2.bf16.xpose.msra.mxu0 0
      %3861 = vmatprep.mubr.bf16.mxu0 0
      %3862 = vmatmul.mubr.bf16.gmra.mxu0 %v3824
      %v3863 = vpop.f32.mrf.mxu0
      %v3864 = vadd.f32 0.0, %v3863
      %v3865 = vpop.f32.mrf.mxu0
      %v3866 = vpop.f32.mrf.mxu0
      %v3867 = vadd.f32 0.0, %v3866
      %v3868 = vpop.f32.mrf.mxu0
      %3869 = vdwg.mxu0
      %v3870 = vmul.f32 %v3711, 0.35355338
      %v3871 = vmul.f32 %v3714, 0.35355338
      %v3872 = vmul.f32 %v3762, 0.35355338
      %v3873 = vmul.f32 %v3765, 0.35355338
      %v3874 = vmul.f32 %v3813, 0.35355338
      %v3875 = vmul.f32 %v3816, 0.35355338
      %v3876 = vmul.f32 %v3864, 0.35355338
      %v3877 = vmul.f32 %v3867, 0.35355338
      %v3878 = vand.u32 2147483647, %v3870
      %v3879 = vand.u32 2147483647, %v3871
      %v3880 = vand.u32 2147483647, %v3872
      %v3881 = vand.u32 2147483647, %v3873
      %v3882 = vand.u32 2147483647, %v3874
      %v3883 = vand.u32 2147483647, %v3875
      %v3884 = vand.u32 2147483647, %v3876
      %v3885 = vand.u32 2147483647, %v3877
      %v3886 = vrsqrt.pop %v3878
      %v3887 = vmul.f32 %v3878, %v3886
      %vm3888 = vcmp.eq.f32.partialorder %v3878, inf
      %v3889 = vsel %vm3888, %v3878, %v3887
      %vm3890 = vcmp.eq.f32.partialorder %v3878, 0.0
      %v3891 = vand.u32 %v3878, 2147483648
      %v3892 = vsel %vm3890, %v3891, %v3889
      %v3893 = vrsqrt.pop %v3879
      %v3894 = vmul.f32 %v3879, %v3893
      %vm3895 = vcmp.eq.f32.partialorder %v3879, inf
      %v3896 = vsel %vm3895, %v3879, %v3894
      %vm3897 = vcmp.eq.f32.partialorder %v3879, 0.0
      %v3898 = vand.u32 %v3879, 2147483648
      %v3899 = vsel %vm3897, %v3898, %v3896
      %v3900 = vrsqrt.pop %v3880
      %v3901 = vmul.f32 %v3880, %v3900
      %vm3902 = vcmp.eq.f32.partialorder %v3880, inf
      %v3903 = vsel %vm3902, %v3880, %v3901
      %vm3904 = vcmp.eq.f32.partialorder %v3880, 0.0
      %v3905 = vand.u32 %v3880, 2147483648
      %v3906 = vsel %vm3904, %v3905, %v3903
      %v3907 = vrsqrt.pop %v3881
      %v3908 = vmul.f32 %v3881, %v3907
      %vm3909 = vcmp.eq.f32.partialorder %v3881, inf
      %v3910 = vsel %vm3909, %v3881, %v3908
      %vm3911 = vcmp.eq.f32.partialorder %v3881, 0.0
      %v3912 = vand.u32 %v3881, 2147483648
      %v3913 = vsel %vm3911, %v3912, %v3910
      %v3914 = vrsqrt.pop %v3882
      %v3915 = vmul.f32 %v3882, %v3914
      %vm3916 = vcmp.eq.f32.partialorder %v3882, inf
      %v3917 = vsel %vm3916, %v3882, %v3915
      %vm3918 = vcmp.eq.f32.partialorder %v3882, 0.0
      %v3919 = vand.u32 %v3882, 2147483648
      %v3920 = vsel %vm3918, %v3919, %v3917
      %v3921 = vrsqrt.pop %v3883
      %v3922 = vmul.f32 %v3883, %v3921
      %vm3923 = vcmp.eq.f32.partialorder %v3883, inf
      %v3924 = vsel %vm3923, %v3883, %v3922
      %vm3925 = vcmp.eq.f32.partialorder %v3883, 0.0
      %v3926 = vand.u32 %v3883, 2147483648
      %v3927 = vsel %vm3925, %v3926, %v3924
      %v3928 = vrsqrt.pop %v3884
      %v3929 = vmul.f32 %v3884, %v3928
      %vm3930 = vcmp.eq.f32.partialorder %v3884, inf
      %v3931 = vsel %vm3930, %v3884, %v3929
      %vm3932 = vcmp.eq.f32.partialorder %v3884, 0.0
      %v3933 = vand.u32 %v3884, 2147483648
      %v3934 = vsel %vm3932, %v3933, %v3931
      %v3935 = vrsqrt.pop %v3885
      %v3936 = vmul.f32 %v3885, %v3935
      %vm3937 = vcmp.eq.f32.partialorder %v3885, inf
      %v3938 = vsel %vm3937, %v3885, %v3936
      %vm3939 = vcmp.eq.f32.partialorder %v3885, 0.0
      %v3940 = vand.u32 %v3885, 2147483648
      %v3941 = vsel %vm3939, %v3940, %v3938
      %vm3942 = vcmp.ge.f32.partialorder %v3870, 0.0
      %vm3943 = vcmp.ge.f32.partialorder %v3871, 0.0
      %vm3944 = vcmp.ge.f32.partialorder %v3872, 0.0
      %vm3945 = vcmp.ge.f32.partialorder %v3873, 0.0
      %vm3946 = vcmp.ge.f32.partialorder %v3874, 0.0
      %vm3947 = vcmp.ge.f32.partialorder %v3875, 0.0
      %vm3948 = vcmp.ge.f32.partialorder %v3876, 0.0
      %vm3949 = vcmp.ge.f32.partialorder %v3877, 0.0
      %v3950 = vsub.f32 0.0, %v3892
      %v3951 = vsub.f32 0.0, %v3899
      %v3952 = vsub.f32 0.0, %v3906
      %v3953 = vsub.f32 0.0, %v3913
      %v3954 = vsub.f32 0.0, %v3920
      %v3955 = vsub.f32 0.0, %v3927
      %v3956 = vsub.f32 0.0, %v3934
      %v3957 = vsub.f32 0.0, %v3941
      %v3958 = vsel %vm3942, %v3892, %v3950
      %v3959 = vsel %vm3943, %v3899, %v3951
      %v3960 = vsel %vm3944, %v3906, %v3952
      %v3961 = vsel %vm3945, %v3913, %v3953
      %v3962 = vsel %vm3946, %v3920, %v3954
      %v3963 = vsel %vm3947, %v3927, %v3955
      %v3964 = vsel %vm3948, %v3934, %v3956
      %v3965 = vsel %vm3949, %v3941, %v3957
      %v3966 = vsel %vm906, %v3958, -inf
      %3967 = vmax.xlane.f32.xlu0 %v3966
      %v3968 = vpop.xlane.xlu0 %3967
      %v3969 = vsel %vm906, %v3959, -inf
      %3970 = vmax.xlane.f32.xlu0 %v3969
      %v3971 = vpop.xlane.xlu0 %3970
      %v3972 = vsel %vm906, %v3960, -inf
      %3973 = vmax.xlane.f32.xlu0 %v3972
      %v3974 = vpop.xlane.xlu0 %3973
      %v3975 = vsel %vm906, %v3961, -inf
      %3976 = vmax.xlane.f32.xlu0 %v3975
      %v3977 = vpop.xlane.xlu0 %3976
      %v3978 = vsel %vm906, %v3962, -inf
      %3979 = vmax.xlane.f32.xlu0 %v3978
      %v3980 = vpop.xlane.xlu0 %3979
      %v3981 = vsel %vm906, %v3963, -inf
      %3982 = vmax.xlane.f32.xlu0 %v3981
      %v3983 = vpop.xlane.xlu0 %3982
      %v3984 = vsel %vm906, %v3964, -inf
      %3985 = vmax.xlane.f32.xlu0 %v3984
      %v3986 = vpop.xlane.xlu0 %3985
      %v3987 = vsel %vm906, %v3965, -inf
      %3988 = vmax.xlane.f32.xlu0 %v3987
      %v3989 = vpop.xlane.xlu0 %3988
      %v3990 = vsub.f32 %v3958, %v3968
      %v3991 = vsub.f32 %v3959, %v3971
      %v3992 = vsub.f32 %v3960, %v3974
      %v3993 = vsub.f32 %v3961, %v3977
      %v3994 = vsub.f32 %v3962, %v3980
      %v3995 = vsub.f32 %v3963, %v3983
      %v3996 = vsub.f32 %v3964, %v3986
      %v3997 = vsub.f32 %v3965, %v3989
      %v3998 = vmul.f32 %v3990, 1.442695
      %v3999 = vpow.pop %v3998
      %v4000 = vmul.f32 %v3991, 1.442695
      %v4001 = vpow.pop %v4000
      %v4002 = vmul.f32 %v3992, 1.442695
      %v4003 = vpow.pop %v4002
      %v4004 = vmul.f32 %v3993, 1.442695
      %v4005 = vpow.pop %v4004
      %v4006 = vmul.f32 %v3994, 1.442695
      %v4007 = vpow.pop %v4006
      %v4008 = vmul.f32 %v3995, 1.442695
      %v4009 = vpow.pop %v4008
      %v4010 = vmul.f32 %v3996, 1.442695
      %v4011 = vpow.pop %v4010
      %v4012 = vmul.f32 %v3997, 1.442695
      %v4013 = vpow.pop %v4012
      %v4014 = vsel %vm906, %v3999, 0.0
      %4015 = vadd.xlane.f32.xlu0 %v4014
      %v4016 = vpop.xlane.xlu0 %4015
      %v4017 = vsel %vm906, %v4001, 0.0
      %4018 = vadd.xlane.f32.xlu0 %v4017
      %v4019 = vpop.xlane.xlu0 %4018
      %v4020 = vsel %vm906, %v4003, 0.0
      %4021 = vadd.xlane.f32.xlu0 %v4020
      %v4022 = vpop.xlane.xlu0 %4021
      %v4023 = vsel %vm906, %v4005, 0.0
      %4024 = vadd.xlane.f32.xlu0 %v4023
      %v4025 = vpop.xlane.xlu0 %4024
      %v4026 = vsel %vm906, %v4007, 0.0
      %4027 = vadd.xlane.f32.xlu0 %v4026
      %v4028 = vpop.xlane.xlu0 %4027
      %v4029 = vsel %vm906, %v4009, 0.0
      %4030 = vadd.xlane.f32.xlu0 %v4029
      %v4031 = vpop.xlane.xlu0 %4030
      %v4032 = vsel %vm906, %v4011, 0.0
      %4033 = vadd.xlane.f32.xlu0 %v4032
      %v4034 = vpop.xlane.xlu0 %4033
      %v4035 = vsel %vm906, %v4013, 0.0
      %4036 = vadd.xlane.f32.xlu0 %v4035
      %v4037 = vpop.xlane.xlu0 %4036
      %v4038 = vrcp.pop %v4016
      %v4039 = vrcp.pop %v4019
      %v4040 = vrcp.pop %v4022
      %v4041 = vrcp.pop %v4025
      %v4042 = vrcp.pop %v4028
      %v4043 = vrcp.pop %v4031
      %v4044 = vrcp.pop %v4034
      %v4045 = vrcp.pop %v4037
      %v4046 = vmul.f32 %v3999, %v4038
      %v4047 = vmul.f32 %v4001, %v4039
      %v4048 = vmul.f32 %v4003, %v4040
      %v4049 = vmul.f32 %v4005, %v4041
      %v4050 = vmul.f32 %v4007, %v4042
      %v4051 = vmul.f32 %v4009, %v4043
      %v4052 = vmul.f32 %v4011, %v4044
      %v4053 = vmul.f32 %v4013, %v4045
      %4054 = vrot.lane.b32.xlu0 %v504, 96
      %v4055 = vpop.permute.xlu0 %4054
      %4056 = vrot.lane.b32.xlu0 %v508, 96
      %v4057 = vpop.permute.xlu0 %4056
      %v4061 = vsel %vm906, %v4046, 0
      %v4064 = vsel %vm906, %v4047, 0
      %4066 = vmatprep.subr.mxu0 0.0
      %4067 = vmatpush1.msra.mxu0 0.0
      %4068 = vmatprep.subr.mxu0 0.0
      %4069 = vmatpush1.msra.mxu0 0.0
      %4070 = vmatprep.subr.mxu0 0.0
      %4071 = vmatpush1.msra.mxu0 0.0
      %4072 = vmatprep.subr.mxu0 0.0
      %4073 = vmatpush1.msra.mxu0 0.0
      %4074 = vmatprep.subr.mxu0 0.0
      %4075 = vmatpush1.msra.mxu0 0.0
      %4076 = vmatprep.subr.mxu0 0.0
      %4077 = vmatpush1.msra.mxu0 0.0
      %4078 = vmatprep.subr.mxu0 0.0
      %4079 = vmatpush1.msra.mxu0 0.0
      %4080 = vmatprep.subr.mxu0 0.0
      %4081 = vmatpush1.msra.mxu0 0.0
      %4082 = vmatprep.subr.mxu0 0.0
      %4083 = vmatpush1.msra.mxu0 0.0
      %4084 = vmatprep.subr.mxu0 0.0
      %4085 = vmatpush1.msra.mxu0 0.0
      %4086 = vmatprep.subr.mxu0 0.0
      %4087 = vmatpush1.msra.mxu0 0.0
      %4088 = vmatprep.subr.mxu0 0.0
      %4089 = vmatpush1.msra.mxu0 0.0
      %4090 = vmatprep.subr.mxu0 0.0
      %4091 = vmatpush1.msra.mxu0 0.0
      %4092 = vmatprep.subr.mxu0 0.0
      %4093 = vmatpush1.msra.mxu0 0.0
      %4094 = vmatprep.subr.mxu0 0.0
      %4095 = vmatpush1.msra.mxu0 %v4057
      %4096 = vmatprep.subr.mxu0 0.0
      %4097 = vmatpush1.msra.mxu0 %v4055
      %4098 = vmatprep.subr.mxu0 0.0
      %4099 = vmatpush2.msra.mxu0 0.0
      %4100 = vmatprep.subr.mxu0 0.0
      %4101 = vmatpush2.msra.mxu0 0.0
      %4102 = vmatprep.subr.mxu0 0.0
      %4103 = vmatpush2.msra.mxu0 0.0
      %4104 = vmatprep.subr.mxu0 0.0
      %4105 = vmatpush2.msra.mxu0 0.0
      %4106 = vmatprep.subr.mxu0 0.0
      %4107 = vmatpush2.msra.mxu0 0.0
      %4108 = vmatprep.subr.mxu0 0.0
      %4109 = vmatpush2.msra.mxu0 0.0
      %4110 = vmatprep.subr.mxu0 0.0
      %4111 = vmatpush2.msra.mxu0 0.0
      %4112 = vmatprep.subr.mxu0 0.0
      %4113 = vmatpush2.msra.mxu0 0.0
      %4114 = vmatprep.subr.mxu0 0.0
      %4115 = vmatpush2.msra.mxu0 0.0
      %4116 = vmatprep.subr.mxu0 0.0
      %4117 = vmatpush2.msra.mxu0 0.0
      %4118 = vmatprep.subr.mxu0 0.0
      %4119 = vmatpush2.msra.mxu0 0.0
      %4120 = vmatprep.subr.mxu0 0.0
      %4121 = vmatpush2.msra.mxu0 0.0
      %4122 = vmatprep.subr.mxu0 0.0
      %4123 = vmatpush2.msra.mxu0 0.0
      %4124 = vmatprep.subr.mxu0 0.0
      %4125 = vmatpush2.msra.mxu0 0.0
      %4126 = vmatprep.subr.mxu0 0.0
      %4127 = vmatpush2.msra.mxu0 0.0
      %4128 = vmatprep.subr.mxu0 0.0
      %4129 = vmatpush2.msra.mxu0 0.0
      %4130 = vmatprep.mubr.f32.mxu0 0.0
      %4131 = vmatmul.mubr.f32.gmra.mxu0 %v4061
      %v4132 = vpop.f32.mrf.mxu0
      %v4133 = vadd.f32 0.0, %v4132
      %v4134 = vpop.f32.mrf.mxu0
      %4135 = vmatprep.mubr.f32.mxu0 0.0
      %4136 = vmatmul.mubr.f32.gmra.mxu0 %v4064
      %v4137 = vpop.f32.mrf.mxu0
      %v4138 = vadd.f32 0.0, %v4137
      %v4139 = vpop.f32.mrf.mxu0
      %4140 = vdwg.mxu0
      %4141 = vrot.lane.b32.xlu0 %v514, 96
      %v4142 = vpop.permute.xlu0 %4141
      %4143 = vrot.lane.b32.xlu0 %v518, 96
      %v4144 = vpop.permute.xlu0 %4143
      %v4148 = vsel %vm906, %v4048, 0
      %v4151 = vsel %vm906, %v4049, 0
      %4153 = vmatprep.subr.mxu0 0.0
      %4154 = vmatpush1.msra.mxu0 0.0
      %4155 = vmatprep.subr.mxu0 0.0
      %4156 = vmatpush1.msra.mxu0 0.0
      %4157 = vmatprep.subr.mxu0 0.0
      %4158 = vmatpush1.msra.mxu0 0.0
      %4159 = vmatprep.subr.mxu0 0.0
      %4160 = vmatpush1.msra.mxu0 0.0
      %4161 = vmatprep.subr.mxu0 0.0
      %4162 = vmatpush1.msra.mxu0 0.0
      %4163 = vmatprep.subr.mxu0 0.0
      %4164 = vmatpush1.msra.mxu0 0.0
      %4165 = vmatprep.subr.mxu0 0.0
      %4166 = vmatpush1.msra.mxu0 0.0
      %4167 = vmatprep.subr.mxu0 0.0
      %4168 = vmatpush1.msra.mxu0 0.0
      %4169 = vmatprep.subr.mxu0 0.0
      %4170 = vmatpush1.msra.mxu0 0.0
      %4171 = vmatprep.subr.mxu0 0.0
      %4172 = vmatpush1.msra.mxu0 0.0
      %4173 = vmatprep.subr.mxu0 0.0
      %4174 = vmatpush1.msra.mxu0 0.0
      %4175 = vmatprep.subr.mxu0 0.0
      %4176 = vmatpush1.msra.mxu0 0.0
      %4177 = vmatprep.subr.mxu0 0.0
      %4178 = vmatpush1.msra.mxu0 0.0
      %4179 = vmatprep.subr.mxu0 0.0
      %4180 = vmatpush1.msra.mxu0 0.0
      %4181 = vmatprep.subr.mxu0 0.0
      %4182 = vmatpush1.msra.mxu0 %v4144
      %4183 = vmatprep.subr.mxu0 0.0
      %4184 = vmatpush1.msra.mxu0 %v4142
      %4185 = vmatprep.subr.mxu0 0.0
      %4186 = vmatpush2.msra.mxu0 0.0
      %4187 = vmatprep.subr.mxu0 0.0
      %4188 = vmatpush2.msra.mxu0 0.0
      %4189 = vmatprep.subr.mxu0 0.0
      %4190 = vmatpush2.msra.mxu0 0.0
      %4191 = vmatprep.subr.mxu0 0.0
      %4192 = vmatpush2.msra.mxu0 0.0
      %4193 = vmatprep.subr.mxu0 0.0
      %4194 = vmatpush2.msra.mxu0 0.0
      %4195 = vmatprep.subr.mxu0 0.0
      %4196 = vmatpush2.msra.mxu0 0.0
      %4197 = vmatprep.subr.mxu0 0.0
      %4198 = vmatpush2.msra.mxu0 0.0
      %4199 = vmatprep.subr.mxu0 0.0
      %4200 = vmatpush2.msra.mxu0 0.0
      %4201 = vmatprep.subr.mxu0 0.0
      %4202 = vmatpush2.msra.mxu0 0.0
      %4203 = vmatprep.subr.mxu0 0.0
      %4204 = vmatpush2.msra.mxu0 0.0
      %4205 = vmatprep.subr.mxu0 0.0
      %4206 = vmatpush2.msra.mxu0 0.0
      %4207 = vmatprep.subr.mxu0 0.0
      %4208 = vmatpush2.msra.mxu0 0.0
      %4209 = vmatprep.subr.mxu0 0.0
      %4210 = vmatpush2.msra.mxu0 0.0
      %4211 = vmatprep.subr.mxu0 0.0
      %4212 = vmatpush2.msra.mxu0 0.0
      %4213 = vmatprep.subr.mxu0 0.0
      %4214 = vmatpush2.msra.mxu0 0.0
      %4215 = vmatprep.subr.mxu0 0.0
      %4216 = vmatpush2.msra.mxu0 0.0
      %4217 = vmatprep.mubr.f32.mxu0 0.0
      %4218 = vmatmul.mubr.f32.gmra.mxu0 %v4148
      %v4219 = vpop.f32.mrf.mxu0
      %v4220 = vadd.f32 0.0, %v4219
      %v4221 = vpop.f32.mrf.mxu0
      %4222 = vmatprep.mubr.f32.mxu0 0.0
      %4223 = vmatmul.mubr.f32.gmra.mxu0 %v4151
      %v4224 = vpop.f32.mrf.mxu0
      %v4225 = vadd.f32 0.0, %v4224
      %v4226 = vpop.f32.mrf.mxu0
      %4227 = vdwg.mxu0
      %4228 = vrot.lane.b32.xlu0 %v524, 96
      %v4229 = vpop.permute.xlu0 %4228
      %4230 = vrot.lane.b32.xlu0 %v528, 96
      %v4231 = vpop.permute.xlu0 %4230
      %v4235 = vsel %vm906, %v4050, 0
      %v4238 = vsel %vm906, %v4051, 0
      %4240 = vmatprep.subr.mxu0 0.0
      %4241 = vmatpush1.msra.mxu0 0.0
      %4242 = vmatprep.subr.mxu0 0.0
      %4243 = vmatpush1.msra.mxu0 0.0
      %4244 = vmatprep.subr.mxu0 0.0
      %4245 = vmatpush1.msra.mxu0 0.0
      %4246 = vmatprep.subr.mxu0 0.0
      %4247 = vmatpush1.msra.mxu0 0.0
      %4248 = vmatprep.subr.mxu0 0.0
      %4249 = vmatpush1.msra.mxu0 0.0
      %4250 = vmatprep.subr.mxu0 0.0
      %4251 = vmatpush1.msra.mxu0 0.0
      %4252 = vmatprep.subr.mxu0 0.0
      %4253 = vmatpush1.msra.mxu0 0.0
      %4254 = vmatprep.subr.mxu0 0.0
      %4255 = vmatpush1.msra.mxu0 0.0
      %4256 = vmatprep.subr.mxu0 0.0
      %4257 = vmatpush1.msra.mxu0 0.0
      %4258 = vmatprep.subr.mxu0 0.0
      %4259 = vmatpush1.msra.mxu0 0.0
      %4260 = vmatprep.subr.mxu0 0.0
      %4261 = vmatpush1.msra.mxu0 0.0
      %4262 = vmatprep.subr.mxu0 0.0
      %4263 = vmatpush1.msra.mxu0 0.0
      %4264 = vmatprep.subr.mxu0 0.0
      %4265 = vmatpush1.msra.mxu0 0.0
      %4266 = vmatprep.subr.mxu0 0.0
      %4267 = vmatpush1.msra.mxu0 0.0
      %4268 = vmatprep.subr.mxu0 0.0
      %4269 = vmatpush1.msra.mxu0 %v4231
      %4270 = vmatprep.subr.mxu0 0.0
      %4271 = vmatpush1.msra.mxu0 %v4229
      %4272 = vmatprep.subr.mxu0 0.0
      %4273 = vmatpush2.msra.mxu0 0.0
      %4274 = vmatprep.subr.mxu0 0.0
      %4275 = vmatpush2.msra.mxu0 0.0
      %4276 = vmatprep.subr.mxu0 0.0
      %4277 = vmatpush2.msra.mxu0 0.0
      %4278 = vmatprep.subr.mxu0 0.0
      %4279 = vmatpush2.msra.mxu0 0.0
      %4280 = vmatprep.subr.mxu0 0.0
      %4281 = vmatpush2.msra.mxu0 0.0
      %4282 = vmatprep.subr.mxu0 0.0
      %4283 = vmatpush2.msra.mxu0 0.0
      %4284 = vmatprep.subr.mxu0 0.0
      %4285 = vmatpush2.msra.mxu0 0.0
      %4286 = vmatprep.subr.mxu0 0.0
      %4287 = vmatpush2.msra.mxu0 0.0
      %4288 = vmatprep.subr.mxu0 0.0
      %4289 = vmatpush2.msra.mxu0 0.0
      %4290 = vmatprep.subr.mxu0 0.0
      %4291 = vmatpush2.msra.mxu0 0.0
      %4292 = vmatprep.subr.mxu0 0.0
      %4293 = vmatpush2.msra.mxu0 0.0
      %4294 = vmatprep.subr.mxu0 0.0
      %4295 = vmatpush2.msra.mxu0 0.0
      %4296 = vmatprep.subr.mxu0 0.0
      %4297 = vmatpush2.msra.mxu0 0.0
      %4298 = vmatprep.subr.mxu0 0.0
      %4299 = vmatpush2.msra.mxu0 0.0
      %4300 = vmatprep.subr.mxu0 0.0
      %4301 = vmatpush2.msra.mxu0 0.0
      %4302 = vmatprep.subr.mxu0 0.0
      %4303 = vmatpush2.msra.mxu0 0.0
      %4304 = vmatprep.mubr.f32.mxu0 0.0
      %4305 = vmatmul.mubr.f32.gmra.mxu0 %v4235
      %v4306 = vpop.f32.mrf.mxu0
      %v4307 = vadd.f32 0.0, %v4306
      %v4308 = vpop.f32.mrf.mxu0
      %4309 = vmatprep.mubr.f32.mxu0 0.0
      %4310 = vmatmul.mubr.f32.gmra.mxu0 %v4238
      %v4311 = vpop.f32.mrf.mxu0
      %v4312 = vadd.f32 0.0, %v4311
      %v4313 = vpop.f32.mrf.mxu0
      %4314 = vdwg.mxu0
      %4315 = vrot.lane.b32.xlu0 %v534, 96
      %v4316 = vpop.permute.xlu0 %4315
      %4317 = vrot.lane.b32.xlu0 %v538, 96
      %v4318 = vpop.permute.xlu0 %4317
      %v4322 = vsel %vm906, %v4052, 0
      %v4325 = vsel %vm906, %v4053, 0
      %4327 = vmatprep.subr.mxu0 0.0
      %4328 = vmatpush1.msra.mxu0 0.0
      %4329 = vmatprep.subr.mxu0 0.0
      %4330 = vmatpush1.msra.mxu0 0.0
      %4331 = vmatprep.subr.mxu0 0.0
      %4332 = vmatpush1.msra.mxu0 0.0
      %4333 = vmatprep.subr.mxu0 0.0
      %4334 = vmatpush1.msra.mxu0 0.0
      %4335 = vmatprep.subr.mxu0 0.0
      %4336 = vmatpush1.msra.mxu0 0.0
      %4337 = vmatprep.subr.mxu0 0.0
      %4338 = vmatpush1.msra.mxu0 0.0
      %4339 = vmatprep.subr.mxu0 0.0
      %4340 = vmatpush1.msra.mxu0 0.0
      %4341 = vmatprep.subr.mxu0 0.0
      %4342 = vmatpush1.msra.mxu0 0.0
      %4343 = vmatprep.subr.mxu0 0.0
      %4344 = vmatpush1.msra.mxu0 0.0
      %4345 = vmatprep.subr.mxu0 0.0
      %4346 = vmatpush1.msra.mxu0 0.0
      %4347 = vmatprep.subr.mxu0 0.0
      %4348 = vmatpush1.msra.mxu0 0.0
      %4349 = vmatprep.subr.mxu0 0.0
      %4350 = vmatpush1.msra.mxu0 0.0
      %4351 = vmatprep.subr.mxu0 0.0
      %4352 = vmatpush1.msra.mxu0 0.0
      %4353 = vmatprep.subr.mxu0 0.0
      %4354 = vmatpush1.msra.mxu0 0.0
      %4355 = vmatprep.subr.mxu0 0.0
      %4356 = vmatpush1.msra.mxu0 %v4318
      %4357 = vmatprep.subr.mxu0 0.0
      %4358 = vmatpush1.msra.mxu0 %v4316
      %4359 = vmatprep.subr.mxu0 0.0
      %4360 = vmatpush2.msra.mxu0 0.0
      %4361 = vmatprep.subr.mxu0 0.0
      %4362 = vmatpush2.msra.mxu0 0.0
      %4363 = vmatprep.subr.mxu0 0.0
      %4364 = vmatpush2.msra.mxu0 0.0
      %4365 = vmatprep.subr.mxu0 0.0
      %4366 = vmatpush2.msra.mxu0 0.0
      %4367 = vmatprep.subr.mxu0 0.0
      %4368 = vmatpush2.msra.mxu0 0.0
      %4369 = vmatprep.subr.mxu0 0.0
      %4370 = vmatpush2.msra.mxu0 0.0
      %4371 = vmatprep.subr.mxu0 0.0
      %4372 = vmatpush2.msra.mxu0 0.0
      %4373 = vmatprep.subr.mxu0 0.0
      %4374 = vmatpush2.msra.mxu0 0.0
      %4375 = vmatprep.subr.mxu0 0.0
      %4376 = vmatpush2.msra.mxu0 0.0
      %4377 = vmatprep.subr.mxu0 0.0
      %4378 = vmatpush2.msra.mxu0 0.0
      %4379 = vmatprep.subr.mxu0 0.0
      %4380 = vmatpush2.msra.mxu0 0.0
      %4381 = vmatprep.subr.mxu0 0.0
      %4382 = vmatpush2.msra.mxu0 0.0
      %4383 = vmatprep.subr.mxu0 0.0
      %4384 = vmatpush2.msra.mxu0 0.0
      %4385 = vmatprep.subr.mxu0 0.0
      %4386 = vmatpush2.msra.mxu0 0.0
      %4387 = vmatprep.subr.mxu0 0.0
      %4388 = vmatpush2.msra.mxu0 0.0
      %4389 = vmatprep.subr.mxu0 0.0
      %4390 = vmatpush2.msra.mxu0 0.0
      %4391 = vmatprep.mubr.f32.mxu0 0.0
      %4392 = vmatmul.mubr.f32.gmra.mxu0 %v4322
      %v4393 = vpop.f32.mrf.mxu0
      %v4394 = vadd.f32 0.0, %v4393
      %v4395 = vpop.f32.mrf.mxu0
      %4396 = vmatprep.mubr.f32.mxu0 0.0
      %4397 = vmatmul.mubr.f32.gmra.mxu0 %v4325
      %v4398 = vpop.f32.mrf.mxu0
      %v4399 = vadd.f32 0.0, %v4398
      %v4400 = vpop.f32.mrf.mxu0
      %4401 = vdwg.mxu0
      %4410 = vrot.lane.b32.xlu0 %v4133, 32
      %v4411 = vpop.permute.xlu0 %4410
      %4412 = vrot.lane.b32.xlu0 %v4138, 32
      %v4413 = vpop.permute.xlu0 %4412
      %4414 = vrot.lane.b32.xlu0 %v4220, 32
      %v4415 = vpop.permute.xlu0 %4414
      %4416 = vrot.lane.b32.xlu0 %v4225, 32
      %v4417 = vpop.permute.xlu0 %4416
      %4418 = vrot.lane.b32.xlu0 %v4307, 32
      %v4419 = vpop.permute.xlu0 %4418
      %4420 = vrot.lane.b32.xlu0 %v4312, 32
      %v4421 = vpop.permute.xlu0 %4420
      %4422 = vrot.lane.b32.xlu0 %v4394, 32
      %v4423 = vpop.permute.xlu0 %4422
      %4424 = vrot.lane.b32.xlu0 %v4399, 32
      %v4425 = vpop.permute.xlu0 %4424
      %vm4434 = vcmask 326912
      %4435 = vst.msk [vmem:[#allocation2] sm:$0xff] %vm4434, %v4411
      %4436 = vst.msk [vmem:[#allocation2 + $0x8] sm:$0xff] %vm4434, %v4413
      %4437 = vst.msk [vmem:[#allocation2 + $0x10] sm:$0xff] %vm4434, %v4415
      %4438 = vst.msk [vmem:[#allocation2 + $0x18] sm:$0xff] %vm4434, %v4417
      %4439 = vst.msk [vmem:[#allocation2 + $0x20] sm:$0xff] %vm4434, %v4419
      %4440 = vst.msk [vmem:[#allocation2 + $0x28] sm:$0xff] %vm4434, %v4421
      %4441 = vst.msk [vmem:[#allocation2 + $0x30] sm:$0xff] %vm4434, %v4423
      %4442 = vst.msk [vmem:[#allocation2 + $0x38] sm:$0xff] %vm4434, %v4425
      %4443 = vrot.lane.b32.xlu0 %v605, 88
      %v4444 = vpop.permute.xlu0 %4443
      %4445 = vrot.lane.b32.xlu0 %v605, 24
      %v4446 = vpop.permute.xlu0 %4445
      %v4448 = vsel %vm612, %v4444, 0
      %v4451 = vsel %vm612, %v4446, 0
      %4453 = vmatprep.subr.bf16.mxu0 0
      %4454 = vmatpush1.bf16.xpose.msra.mxu0 0
      %4455 = vmatprep.subr.bf16.mxu0 0
      %4456 = vmatpush1.bf16.xpose.msra.mxu0 0
      %4457 = vmatprep.subr.bf16.mxu0 0
      %4458 = vmatpush1.bf16.xpose.msra.mxu0 0
      %4459 = vmatprep.subr.bf16.mxu0 0
      %4460 = vmatpush1.bf16.xpose.msra.mxu0 0
      %4461 = vmatprep.subr.bf16.mxu0 0
      %4462 = vmatpush1.bf16.xpose.msra.mxu0 0
      %4463 = vmatprep.subr.bf16.mxu0 0
      %4464 = vmatpush1.bf16.xpose.msra.mxu0 0
      %4465 = vmatprep.subr.bf16.mxu0 0
      %4466 = vmatpush1.bf16.xpose.msra.mxu0 0
      %4467 = vmatprep.subr.bf16.mxu0 0
      %4468 = vmatpush1.bf16.xpose.msra.mxu0 %v4451
      %4469 = vmatprep.subr.bf16.mxu0 0
      %4470 = vmatpush2.bf16.xpose.msra.mxu0 0
      %4471 = vmatprep.subr.bf16.mxu0 0
      %4472 = vmatpush2.bf16.xpose.msra.mxu0 0
      %4473 = vmatprep.subr.bf16.mxu0 0
      %4474 = vmatpush2.bf16.xpose.msra.mxu0 0
      %4475 = vmatprep.subr.bf16.mxu0 0
      %4476 = vmatpush2.bf16.xpose.msra.mxu0 0
      %4477 = vmatprep.subr.bf16.mxu0 0
      %4478 = vmatpush2.bf16.xpose.msra.mxu0 0
      %4479 = vmatprep.subr.bf16.mxu0 0
      %4480 = vmatpush2.bf16.xpose.msra.mxu0 0
      %4481 = vmatprep.subr.bf16.mxu0 0
      %4482 = vmatpush2.bf16.xpose.msra.mxu0 0
      %4483 = vmatprep.subr.bf16.mxu0 0
      %4484 = vmatpush2.bf16.xpose.msra.mxu0 0
      %4485 = vmatprep.mubr.bf16.mxu0 0
      %4486 = vmatmul.mubr.bf16.gmra.mxu0 %v4448
      %v4487 = vpop.f32.mrf.mxu0
      %v4488 = vadd.f32 0.0, %v4487
      %v4489 = vpop.f32.mrf.mxu0
      %v4490 = vpop.f32.mrf.mxu0
      %v4491 = vadd.f32 0.0, %v4490
      %v4492 = vpop.f32.mrf.mxu0
      %4493 = vdwg.mxu0
      %4494 = vrot.lane.b32.xlu0 %v606, 88
      %v4495 = vpop.permute.xlu0 %4494
      %4496 = vrot.lane.b32.xlu0 %v606, 24
      %v4497 = vpop.permute.xlu0 %4496
      %v4499 = vsel %vm612, %v4495, 0
      %v4502 = vsel %vm612, %v4497, 0
      %4504 = vmatprep.subr.bf16.mxu0 0
      %4505 = vmatpush1.bf16.xpose.msra.mxu0 0
      %4506 = vmatprep.subr.bf16.mxu0 0
      %4507 = vmatpush1.bf16.xpose.msra.mxu0 0
      %4508 = vmatprep.subr.bf16.mxu0 0
      %4509 = vmatpush1.bf16.xpose.msra.mxu0 0
      %4510 = vmatprep.subr.bf16.mxu0 0
      %4511 = vmatpush1.bf16.xpose.msra.mxu0 0
      %4512 = vmatprep.subr.bf16.mxu0 0
      %4513 = vmatpush1.bf16.xpose.msra.mxu0 0
      %4514 = vmatprep.subr.bf16.mxu0 0
      %4515 = vmatpush1.bf16.xpose.msra.mxu0 0
      %4516 = vmatprep.subr.bf16.mxu0 0
      %4517 = vmatpush1.bf16.xpose.msra.mxu0 0
      %4518 = vmatprep.subr.bf16.mxu0 0
      %4519 = vmatpush1.bf16.xpose.msra.mxu0 %v4502
      %4520 = vmatprep.subr.bf16.mxu0 0
      %4521 = vmatpush2.bf16.xpose.msra.mxu0 0
      %4522 = vmatprep.subr.bf16.mxu0 0
      %4523 = vmatpush2.bf16.xpose.msra.mxu0 0
      %4524 = vmatprep.subr.bf16.mxu0 0
      %4525 = vmatpush2.bf16.xpose.msra.mxu0 0
      %4526 = vmatprep.subr.bf16.mxu0 0
      %4527 = vmatpush2.bf16.xpose.msra.mxu0 0
      %4528 = vmatprep.subr.bf16.mxu0 0
      %4529 = vmatpush2.bf16.xpose.msra.mxu0 0
      %4530 = vmatprep.subr.bf16.mxu0 0
      %4531 = vmatpush2.bf16.xpose.msra.mxu0 0
      %4532 = vmatprep.subr.bf16.mxu0 0
      %4533 = vmatpush2.bf16.xpose.msra.mxu0 0
      %4534 = vmatprep.subr.bf16.mxu0 0
      %4535 = vmatpush2.bf16.xpose.msra.mxu0 0
      %4536 = vmatprep.mubr.bf16.mxu0 0
      %4537 = vmatmul.mubr.bf16.gmra.mxu0 %v4499
      %v4538 = vpop.f32.mrf.mxu0
      %v4539 = vadd.f32 0.0, %v4538
      %v4540 = vpop.f32.mrf.mxu0
      %v4541 = vpop.f32.mrf.mxu0
      %v4542 = vadd.f32 0.0, %v4541
      %v4543 = vpop.f32.mrf.mxu0
      %4544 = vdwg.mxu0
      %4545 = vrot.lane.b32.xlu0 %v607, 88
      %v4546 = vpop.permute.xlu0 %4545
      %4547 = vrot.lane.b32.xlu0 %v607, 24
      %v4548 = vpop.permute.xlu0 %4547
      %v4550 = vsel %vm612, %v4546, 0
      %v4553 = vsel %vm612, %v4548, 0
      %4555 = vmatprep.subr.bf16.mxu0 0
      %4556 = vmatpush1.bf16.xpose.msra.mxu0 0
      %4557 = vmatprep.subr.bf16.mxu0 0
      %4558 = vmatpush1.bf16.xpose.msra.mxu0 0
      %4559 = vmatprep.subr.bf16.mxu0 0
      %4560 = vmatpush1.bf16.xpose.msra.mxu0 0
      %4561 = vmatprep.subr.bf16.mxu0 0
      %4562 = vmatpush1.bf16.xpose.msra.mxu0 0
      %4563 = vmatprep.subr.bf16.mxu0 0
      %4564 = vmatpush1.bf16.xpose.msra.mxu0 0
      %4565 = vmatprep.subr.bf16.mxu0 0
      %4566 = vmatpush1.bf16.xpose.msra.mxu0 0
      %4567 = vmatprep.subr.bf16.mxu0 0
      %4568 = vmatpush1.bf16.xpose.msra.mxu0 0
      %4569 = vmatprep.subr.bf16.mxu0 0
      %4570 = vmatpush1.bf16.xpose.msra.mxu0 %v4553
      %4571 = vmatprep.subr.bf16.mxu0 0
      %4572 = vmatpush2.bf16.xpose.msra.mxu0 0
      %4573 = vmatprep.subr.bf16.mxu0 0
      %4574 = vmatpush2.bf16.xpose.msra.mxu0 0
      %4575 = vmatprep.subr.bf16.mxu0 0
      %4576 = vmatpush2.bf16.xpose.msra.mxu0 0
      %4577 = vmatprep.subr.bf16.mxu0 0
      %4578 = vmatpush2.bf16.xpose.msra.mxu0 0
      %4579 = vmatprep.subr.bf16.mxu0 0
      %4580 = vmatpush2.bf16.xpose.msra.mxu0 0
      %4581 = vmatprep.subr.bf16.mxu0 0
      %4582 = vmatpush2.bf16.xpose.msra.mxu0 0
      %4583 = vmatprep.subr.bf16.mxu0 0
      %4584 = vmatpush2.bf16.xpose.msra.mxu0 0
      %4585 = vmatprep.subr.bf16.mxu0 0
      %4586 = vmatpush2.bf16.xpose.msra.mxu0 0
      %4587 = vmatprep.mubr.bf16.mxu0 0
      %4588 = vmatmul.mubr.bf16.gmra.mxu0 %v4550
      %v4589 = vpop.f32.mrf.mxu0
      %v4590 = vadd.f32 0.0, %v4589
      %v4591 = vpop.f32.mrf.mxu0
      %v4592 = vpop.f32.mrf.mxu0
      %v4593 = vadd.f32 0.0, %v4592
      %v4594 = vpop.f32.mrf.mxu0
      %4595 = vdwg.mxu0
      %4596 = vrot.lane.b32.xlu0 %v608, 88
      %v4597 = vpop.permute.xlu0 %4596
      %4598 = vrot.lane.b32.xlu0 %v608, 24
      %v4599 = vpop.permute.xlu0 %4598
      %v4601 = vsel %vm612, %v4597, 0
      %v4604 = vsel %vm612, %v4599, 0
      %4606 = vmatprep.subr.bf16.mxu0 0
      %4607 = vmatpush1.bf16.xpose.msra.mxu0 0
      %4608 = vmatprep.subr.bf16.mxu0 0
      %4609 = vmatpush1.bf16.xpose.msra.mxu0 0
      %4610 = vmatprep.subr.bf16.mxu0 0
      %4611 = vmatpush1.bf16.xpose.msra.mxu0 0
      %4612 = vmatprep.subr.bf16.mxu0 0
      %4613 = vmatpush1.bf16.xpose.msra.mxu0 0
      %4614 = vmatprep.subr.bf16.mxu0 0
      %4615 = vmatpush1.bf16.xpose.msra.mxu0 0
      %4616 = vmatprep.subr.bf16.mxu0 0
      %4617 = vmatpush1.bf16.xpose.msra.mxu0 0
      %4618 = vmatprep.subr.bf16.mxu0 0
      %4619 = vmatpush1.bf16.xpose.msra.mxu0 0
      %4620 = vmatprep.subr.bf16.mxu0 0
      %4621 = vmatpush1.bf16.xpose.msra.mxu0 %v4604
      %4622 = vmatprep.subr.bf16.mxu0 0
      %4623 = vmatpush2.bf16.xpose.msra.mxu0 0
      %4624 = vmatprep.subr.bf16.mxu0 0
      %4625 = vmatpush2.bf16.xpose.msra.mxu0 0
      %4626 = vmatprep.subr.bf16.mxu0 0
      %4627 = vmatpush2.bf16.xpose.msra.mxu0 0
      %4628 = vmatprep.subr.bf16.mxu0 0
      %4629 = vmatpush2.bf16.xpose.msra.mxu0 0
      %4630 = vmatprep.subr.bf16.mxu0 0
      %4631 = vmatpush2.bf16.xpose.msra.mxu0 0
      %4632 = vmatprep.subr.bf16.mxu0 0
      %4633 = vmatpush2.bf16.xpose.msra.mxu0 0
      %4634 = vmatprep.subr.bf16.mxu0 0
      %4635 = vmatpush2.bf16.xpose.msra.mxu0 0
      %4636 = vmatprep.subr.bf16.mxu0 0
      %4637 = vmatpush2.bf16.xpose.msra.mxu0 0
      %4638 = vmatprep.mubr.bf16.mxu0 0
      %4639 = vmatmul.mubr.bf16.gmra.mxu0 %v4601
      %v4640 = vpop.f32.mrf.mxu0
      %v4641 = vadd.f32 0.0, %v4640
      %v4642 = vpop.f32.mrf.mxu0
      %v4643 = vpop.f32.mrf.mxu0
      %v4644 = vadd.f32 0.0, %v4643
      %v4645 = vpop.f32.mrf.mxu0
      %4646 = vdwg.mxu0
      %v4647 = vmul.f32 %v4488, 0.35355338
      %v4648 = vmul.f32 %v4491, 0.35355338
      %v4649 = vmul.f32 %v4539, 0.35355338
      %v4650 = vmul.f32 %v4542, 0.35355338
      %v4651 = vmul.f32 %v4590, 0.35355338
      %v4652 = vmul.f32 %v4593, 0.35355338
      %v4653 = vmul.f32 %v4641, 0.35355338
      %v4654 = vmul.f32 %v4644, 0.35355338
      %v4655 = vand.u32 2147483647, %v4647
      %v4656 = vand.u32 2147483647, %v4648
      %v4657 = vand.u32 2147483647, %v4649
      %v4658 = vand.u32 2147483647, %v4650
      %v4659 = vand.u32 2147483647, %v4651
      %v4660 = vand.u32 2147483647, %v4652
      %v4661 = vand.u32 2147483647, %v4653
      %v4662 = vand.u32 2147483647, %v4654
      %v4663 = vrsqrt.pop %v4655
      %v4664 = vmul.f32 %v4655, %v4663
      %vm4665 = vcmp.eq.f32.partialorder %v4655, inf
      %v4666 = vsel %vm4665, %v4655, %v4664
      %vm4667 = vcmp.eq.f32.partialorder %v4655, 0.0
      %v4668 = vand.u32 %v4655, 2147483648
      %v4669 = vsel %vm4667, %v4668, %v4666
      %v4670 = vrsqrt.pop %v4656
      %v4671 = vmul.f32 %v4656, %v4670
      %vm4672 = vcmp.eq.f32.partialorder %v4656, inf
      %v4673 = vsel %vm4672, %v4656, %v4671
      %vm4674 = vcmp.eq.f32.partialorder %v4656, 0.0
      %v4675 = vand.u32 %v4656, 2147483648
      %v4676 = vsel %vm4674, %v4675, %v4673
      %v4677 = vrsqrt.pop %v4657
      %v4678 = vmul.f32 %v4657, %v4677
      %vm4679 = vcmp.eq.f32.partialorder %v4657, inf
      %v4680 = vsel %vm4679, %v4657, %v4678
      %vm4681 = vcmp.eq.f32.partialorder %v4657, 0.0
      %v4682 = vand.u32 %v4657, 2147483648
      %v4683 = vsel %vm4681, %v4682, %v4680
      %v4684 = vrsqrt.pop %v4658
      %v4685 = vmul.f32 %v4658, %v4684
      %vm4686 = vcmp.eq.f32.partialorder %v4658, inf
      %v4687 = vsel %vm4686, %v4658, %v4685
      %vm4688 = vcmp.eq.f32.partialorder %v4658, 0.0
      %v4689 = vand.u32 %v4658, 2147483648
      %v4690 = vsel %vm4688, %v4689, %v4687
      %v4691 = vrsqrt.pop %v4659
      %v4692 = vmul.f32 %v4659, %v4691
      %vm4693 = vcmp.eq.f32.partialorder %v4659, inf
      %v4694 = vsel %vm4693, %v4659, %v4692
      %vm4695 = vcmp.eq.f32.partialorder %v4659, 0.0
      %v4696 = vand.u32 %v4659, 2147483648
      %v4697 = vsel %vm4695, %v4696, %v4694
      %v4698 = vrsqrt.pop %v4660
      %v4699 = vmul.f32 %v4660, %v4698
      %vm4700 = vcmp.eq.f32.partialorder %v4660, inf
      %v4701 = vsel %vm4700, %v4660, %v4699
      %vm4702 = vcmp.eq.f32.partialorder %v4660, 0.0
      %v4703 = vand.u32 %v4660, 2147483648
      %v4704 = vsel %vm4702, %v4703, %v4701
      %v4705 = vrsqrt.pop %v4661
      %v4706 = vmul.f32 %v4661, %v4705
      %vm4707 = vcmp.eq.f32.partialorder %v4661, inf
      %v4708 = vsel %vm4707, %v4661, %v4706
      %vm4709 = vcmp.eq.f32.partialorder %v4661, 0.0
      %v4710 = vand.u32 %v4661, 2147483648
      %v4711 = vsel %vm4709, %v4710, %v4708
      %v4712 = vrsqrt.pop %v4662
      %v4713 = vmul.f32 %v4662, %v4712
      %vm4714 = vcmp.eq.f32.partialorder %v4662, inf
      %v4715 = vsel %vm4714, %v4662, %v4713
      %vm4716 = vcmp.eq.f32.partialorder %v4662, 0.0
      %v4717 = vand.u32 %v4662, 2147483648
      %v4718 = vsel %vm4716, %v4717, %v4715
      %vm4719 = vcmp.ge.f32.partialorder %v4647, 0.0
      %vm4720 = vcmp.ge.f32.partialorder %v4648, 0.0
      %vm4721 = vcmp.ge.f32.partialorder %v4649, 0.0
      %vm4722 = vcmp.ge.f32.partialorder %v4650, 0.0
      %vm4723 = vcmp.ge.f32.partialorder %v4651, 0.0
      %vm4724 = vcmp.ge.f32.partialorder %v4652, 0.0
      %vm4725 = vcmp.ge.f32.partialorder %v4653, 0.0
      %vm4726 = vcmp.ge.f32.partialorder %v4654, 0.0
      %v4727 = vsub.f32 0.0, %v4669
      %v4728 = vsub.f32 0.0, %v4676
      %v4729 = vsub.f32 0.0, %v4683
      %v4730 = vsub.f32 0.0, %v4690
      %v4731 = vsub.f32 0.0, %v4697
      %v4732 = vsub.f32 0.0, %v4704
      %v4733 = vsub.f32 0.0, %v4711
      %v4734 = vsub.f32 0.0, %v4718
      %v4735 = vsel %vm4719, %v4669, %v4727
      %v4736 = vsel %vm4720, %v4676, %v4728
      %v4737 = vsel %vm4721, %v4683, %v4729
      %v4738 = vsel %vm4722, %v4690, %v4730
      %v4739 = vsel %vm4723, %v4697, %v4731
      %v4740 = vsel %vm4724, %v4704, %v4732
      %v4741 = vsel %vm4725, %v4711, %v4733
      %v4742 = vsel %vm4726, %v4718, %v4734
      %v4743 = vsel %vm906, %v4735, -inf
      %4744 = vmax.xlane.f32.xlu0 %v4743
      %v4745 = vpop.xlane.xlu0 %4744
      %v4746 = vsel %vm906, %v4736, -inf
      %4747 = vmax.xlane.f32.xlu0 %v4746
      %v4748 = vpop.xlane.xlu0 %4747
      %v4749 = vsel %vm906, %v4737, -inf
      %4750 = vmax.xlane.f32.xlu0 %v4749
      %v4751 = vpop.xlane.xlu0 %4750
      %v4752 = vsel %vm906, %v4738, -inf
      %4753 = vmax.xlane.f32.xlu0 %v4752
      %v4754 = vpop.xlane.xlu0 %4753
      %v4755 = vsel %vm906, %v4739, -inf
      %4756 = vmax.xlane.f32.xlu0 %v4755
      %v4757 = vpop.xlane.xlu0 %4756
      %v4758 = vsel %vm906, %v4740, -inf
      %4759 = vmax.xlane.f32.xlu0 %v4758
      %v4760 = vpop.xlane.xlu0 %4759
      %v4761 = vsel %vm906, %v4741, -inf
      %4762 = vmax.xlane.f32.xlu0 %v4761
      %v4763 = vpop.xlane.xlu0 %4762
      %v4764 = vsel %vm906, %v4742, -inf
      %4765 = vmax.xlane.f32.xlu0 %v4764
      %v4766 = vpop.xlane.xlu0 %4765
      %v4767 = vsub.f32 %v4735, %v4745
      %v4768 = vsub.f32 %v4736, %v4748
      %v4769 = vsub.f32 %v4737, %v4751
      %v4770 = vsub.f32 %v4738, %v4754
      %v4771 = vsub.f32 %v4739, %v4757
      %v4772 = vsub.f32 %v4740, %v4760
      %v4773 = vsub.f32 %v4741, %v4763
      %v4774 = vsub.f32 %v4742, %v4766
      %v4775 = vmul.f32 %v4767, 1.442695
      %v4776 = vpow.pop %v4775
      %v4777 = vmul.f32 %v4768, 1.442695
      %v4778 = vpow.pop %v4777
      %v4779 = vmul.f32 %v4769, 1.442695
      %v4780 = vpow.pop %v4779
      %v4781 = vmul.f32 %v4770, 1.442695
      %v4782 = vpow.pop %v4781
      %v4783 = vmul.f32 %v4771, 1.442695
      %v4784 = vpow.pop %v4783
      %v4785 = vmul.f32 %v4772, 1.442695
      %v4786 = vpow.pop %v4785
      %v4787 = vmul.f32 %v4773, 1.442695
      %v4788 = vpow.pop %v4787
      %v4789 = vmul.f32 %v4774, 1.442695
      %v4790 = vpow.pop %v4789
      %v4791 = vsel %vm906, %v4776, 0.0
      %4792 = vadd.xlane.f32.xlu0 %v4791
      %v4793 = vpop.xlane.xlu0 %4792
      %v4794 = vsel %vm906, %v4778, 0.0
      %4795 = vadd.xlane.f32.xlu0 %v4794
      %v4796 = vpop.xlane.xlu0 %4795
      %v4797 = vsel %vm906, %v4780, 0.0
      %4798 = vadd.xlane.f32.xlu0 %v4797
      %v4799 = vpop.xlane.xlu0 %4798
      %v4800 = vsel %vm906, %v4782, 0.0
      %4801 = vadd.xlane.f32.xlu0 %v4800
      %v4802 = vpop.xlane.xlu0 %4801
      %v4803 = vsel %vm906, %v4784, 0.0
      %4804 = vadd.xlane.f32.xlu0 %v4803
      %v4805 = vpop.xlane.xlu0 %4804
      %v4806 = vsel %vm906, %v4786, 0.0
      %4807 = vadd.xlane.f32.xlu0 %v4806
      %v4808 = vpop.xlane.xlu0 %4807
      %v4809 = vsel %vm906, %v4788, 0.0
      %4810 = vadd.xlane.f32.xlu0 %v4809
      %v4811 = vpop.xlane.xlu0 %4810
      %v4812 = vsel %vm906, %v4790, 0.0
      %4813 = vadd.xlane.f32.xlu0 %v4812
      %v4814 = vpop.xlane.xlu0 %4813
      %v4815 = vrcp.pop %v4793
      %v4816 = vrcp.pop %v4796
      %v4817 = vrcp.pop %v4799
      %v4818 = vrcp.pop %v4802
      %v4819 = vrcp.pop %v4805
      %v4820 = vrcp.pop %v4808
      %v4821 = vrcp.pop %v4811
      %v4822 = vrcp.pop %v4814
      %v4823 = vmul.f32 %v4776, %v4815
      %v4824 = vmul.f32 %v4778, %v4816
      %v4825 = vmul.f32 %v4780, %v4817
      %v4826 = vmul.f32 %v4782, %v4818
      %v4827 = vmul.f32 %v4784, %v4819
      %v4828 = vmul.f32 %v4786, %v4820
      %v4829 = vmul.f32 %v4788, %v4821
      %v4830 = vmul.f32 %v4790, %v4822
      %4831 = vrot.lane.b32.xlu0 %v504, 88
      %v4832 = vpop.permute.xlu0 %4831
      %4833 = vrot.lane.b32.xlu0 %v508, 88
      %v4834 = vpop.permute.xlu0 %4833
      %v4838 = vsel %vm906, %v4823, 0
      %v4841 = vsel %vm906, %v4824, 0
      %4843 = vmatprep.subr.mxu0 0.0
      %4844 = vmatpush1.msra.mxu0 0.0
      %4845 = vmatprep.subr.mxu0 0.0
      %4846 = vmatpush1.msra.mxu0 0.0
      %4847 = vmatprep.subr.mxu0 0.0
      %4848 = vmatpush1.msra.mxu0 0.0
      %4849 = vmatprep.subr.mxu0 0.0
      %4850 = vmatpush1.msra.mxu0 0.0
      %4851 = vmatprep.subr.mxu0 0.0
      %4852 = vmatpush1.msra.mxu0 0.0
      %4853 = vmatprep.subr.mxu0 0.0
      %4854 = vmatpush1.msra.mxu0 0.0
      %4855 = vmatprep.subr.mxu0 0.0
      %4856 = vmatpush1.msra.mxu0 0.0
      %4857 = vmatprep.subr.mxu0 0.0
      %4858 = vmatpush1.msra.mxu0 0.0
      %4859 = vmatprep.subr.mxu0 0.0
      %4860 = vmatpush1.msra.mxu0 0.0
      %4861 = vmatprep.subr.mxu0 0.0
      %4862 = vmatpush1.msra.mxu0 0.0
      %4863 = vmatprep.subr.mxu0 0.0
      %4864 = vmatpush1.msra.mxu0 0.0
      %4865 = vmatprep.subr.mxu0 0.0
      %4866 = vmatpush1.msra.mxu0 0.0
      %4867 = vmatprep.subr.mxu0 0.0
      %4868 = vmatpush1.msra.mxu0 0.0
      %4869 = vmatprep.subr.mxu0 0.0
      %4870 = vmatpush1.msra.mxu0 0.0
      %4871 = vmatprep.subr.mxu0 0.0
      %4872 = vmatpush1.msra.mxu0 %v4834
      %4873 = vmatprep.subr.mxu0 0.0
      %4874 = vmatpush1.msra.mxu0 %v4832
      %4875 = vmatprep.subr.mxu0 0.0
      %4876 = vmatpush2.msra.mxu0 0.0
      %4877 = vmatprep.subr.mxu0 0.0
      %4878 = vmatpush2.msra.mxu0 0.0
      %4879 = vmatprep.subr.mxu0 0.0
      %4880 = vmatpush2.msra.mxu0 0.0
      %4881 = vmatprep.subr.mxu0 0.0
      %4882 = vmatpush2.msra.mxu0 0.0
      %4883 = vmatprep.subr.mxu0 0.0
      %4884 = vmatpush2.msra.mxu0 0.0
      %4885 = vmatprep.subr.mxu0 0.0
      %4886 = vmatpush2.msra.mxu0 0.0
      %4887 = vmatprep.subr.mxu0 0.0
      %4888 = vmatpush2.msra.mxu0 0.0
      %4889 = vmatprep.subr.mxu0 0.0
      %4890 = vmatpush2.msra.mxu0 0.0
      %4891 = vmatprep.subr.mxu0 0.0
      %4892 = vmatpush2.msra.mxu0 0.0
      %4893 = vmatprep.subr.mxu0 0.0
      %4894 = vmatpush2.msra.mxu0 0.0
      %4895 = vmatprep.subr.mxu0 0.0
      %4896 = vmatpush2.msra.mxu0 0.0
      %4897 = vmatprep.subr.mxu0 0.0
      %4898 = vmatpush2.msra.mxu0 0.0
      %4899 = vmatprep.subr.mxu0 0.0
      %4900 = vmatpush2.msra.mxu0 0.0
      %4901 = vmatprep.subr.mxu0 0.0
      %4902 = vmatpush2.msra.mxu0 0.0
      %4903 = vmatprep.subr.mxu0 0.0
      %4904 = vmatpush2.msra.mxu0 0.0
      %4905 = vmatprep.subr.mxu0 0.0
      %4906 = vmatpush2.msra.mxu0 0.0
      %4907 = vmatprep.mubr.f32.mxu0 0.0
      %4908 = vmatmul.mubr.f32.gmra.mxu0 %v4838
      %v4909 = vpop.f32.mrf.mxu0
      %v4910 = vadd.f32 0.0, %v4909
      %v4911 = vpop.f32.mrf.mxu0
      %4912 = vmatprep.mubr.f32.mxu0 0.0
      %4913 = vmatmul.mubr.f32.gmra.mxu0 %v4841
      %v4914 = vpop.f32.mrf.mxu0
      %v4915 = vadd.f32 0.0, %v4914
      %v4916 = vpop.f32.mrf.mxu0
      %4917 = vdwg.mxu0
      %4918 = vrot.lane.b32.xlu0 %v514, 88
      %v4919 = vpop.permute.xlu0 %4918
      %4920 = vrot.lane.b32.xlu0 %v518, 88
      %v4921 = vpop.permute.xlu0 %4920
      %v4925 = vsel %vm906, %v4825, 0
      %v4928 = vsel %vm906, %v4826, 0
      %4930 = vmatprep.subr.mxu0 0.0
      %4931 = vmatpush1.msra.mxu0 0.0
      %4932 = vmatprep.subr.mxu0 0.0
      %4933 = vmatpush1.msra.mxu0 0.0
      %4934 = vmatprep.subr.mxu0 0.0
      %4935 = vmatpush1.msra.mxu0 0.0
      %4936 = vmatprep.subr.mxu0 0.0
      %4937 = vmatpush1.msra.mxu0 0.0
      %4938 = vmatprep.subr.mxu0 0.0
      %4939 = vmatpush1.msra.mxu0 0.0
      %4940 = vmatprep.subr.mxu0 0.0
      %4941 = vmatpush1.msra.mxu0 0.0
      %4942 = vmatprep.subr.mxu0 0.0
      %4943 = vmatpush1.msra.mxu0 0.0
      %4944 = vmatprep.subr.mxu0 0.0
      %4945 = vmatpush1.msra.mxu0 0.0
      %4946 = vmatprep.subr.mxu0 0.0
      %4947 = vmatpush1.msra.mxu0 0.0
      %4948 = vmatprep.subr.mxu0 0.0
      %4949 = vmatpush1.msra.mxu0 0.0
      %4950 = vmatprep.subr.mxu0 0.0
      %4951 = vmatpush1.msra.mxu0 0.0
      %4952 = vmatprep.subr.mxu0 0.0
      %4953 = vmatpush1.msra.mxu0 0.0
      %4954 = vmatprep.subr.mxu0 0.0
      %4955 = vmatpush1.msra.mxu0 0.0
      %4956 = vmatprep.subr.mxu0 0.0
      %4957 = vmatpush1.msra.mxu0 0.0
      %4958 = vmatprep.subr.mxu0 0.0
      %4959 = vmatpush1.msra.mxu0 %v4921
      %4960 = vmatprep.subr.mxu0 0.0
      %4961 = vmatpush1.msra.mxu0 %v4919
      %4962 = vmatprep.subr.mxu0 0.0
      %4963 = vmatpush2.msra.mxu0 0.0
      %4964 = vmatprep.subr.mxu0 0.0
      %4965 = vmatpush2.msra.mxu0 0.0
      %4966 = vmatprep.subr.mxu0 0.0
      %4967 = vmatpush2.msra.mxu0 0.0
      %4968 = vmatprep.subr.mxu0 0.0
      %4969 = vmatpush2.msra.mxu0 0.0
      %4970 = vmatprep.subr.mxu0 0.0
      %4971 = vmatpush2.msra.mxu0 0.0
      %4972 = vmatprep.subr.mxu0 0.0
      %4973 = vmatpush2.msra.mxu0 0.0
      %4974 = vmatprep.subr.mxu0 0.0
      %4975 = vmatpush2.msra.mxu0 0.0
      %4976 = vmatprep.subr.mxu0 0.0
      %4977 = vmatpush2.msra.mxu0 0.0
      %4978 = vmatprep.subr.mxu0 0.0
      %4979 = vmatpush2.msra.mxu0 0.0
      %4980 = vmatprep.subr.mxu0 0.0
      %4981 = vmatpush2.msra.mxu0 0.0
      %4982 = vmatprep.subr.mxu0 0.0
      %4983 = vmatpush2.msra.mxu0 0.0
      %4984 = vmatprep.subr.mxu0 0.0
      %4985 = vmatpush2.msra.mxu0 0.0
      %4986 = vmatprep.subr.mxu0 0.0
      %4987 = vmatpush2.msra.mxu0 0.0
      %4988 = vmatprep.subr.mxu0 0.0
      %4989 = vmatpush2.msra.mxu0 0.0
      %4990 = vmatprep.subr.mxu0 0.0
      %4991 = vmatpush2.msra.mxu0 0.0
      %4992 = vmatprep.subr.mxu0 0.0
      %4993 = vmatpush2.msra.mxu0 0.0
      %4994 = vmatprep.mubr.f32.mxu0 0.0
      %4995 = vmatmul.mubr.f32.gmra.mxu0 %v4925
      %v4996 = vpop.f32.mrf.mxu0
      %v4997 = vadd.f32 0.0, %v4996
      %v4998 = vpop.f32.mrf.mxu0
      %4999 = vmatprep.mubr.f32.mxu0 0.0
      %5000 = vmatmul.mubr.f32.gmra.mxu0 %v4928
      %v5001 = vpop.f32.mrf.mxu0
      %v5002 = vadd.f32 0.0, %v5001
      %v5003 = vpop.f32.mrf.mxu0
      %5004 = vdwg.mxu0
      %5005 = vrot.lane.b32.xlu0 %v524, 88
      %v5006 = vpop.permute.xlu0 %5005
      %5007 = vrot.lane.b32.xlu0 %v528, 88
      %v5008 = vpop.permute.xlu0 %5007
      %v5012 = vsel %vm906, %v4827, 0
      %v5015 = vsel %vm906, %v4828, 0
      %5017 = vmatprep.subr.mxu0 0.0
      %5018 = vmatpush1.msra.mxu0 0.0
      %5019 = vmatprep.subr.mxu0 0.0
      %5020 = vmatpush1.msra.mxu0 0.0
      %5021 = vmatprep.subr.mxu0 0.0
      %5022 = vmatpush1.msra.mxu0 0.0
      %5023 = vmatprep.subr.mxu0 0.0
      %5024 = vmatpush1.msra.mxu0 0.0
      %5025 = vmatprep.subr.mxu0 0.0
      %5026 = vmatpush1.msra.mxu0 0.0
      %5027 = vmatprep.subr.mxu0 0.0
      %5028 = vmatpush1.msra.mxu0 0.0
      %5029 = vmatprep.subr.mxu0 0.0
      %5030 = vmatpush1.msra.mxu0 0.0
      %5031 = vmatprep.subr.mxu0 0.0
      %5032 = vmatpush1.msra.mxu0 0.0
      %5033 = vmatprep.subr.mxu0 0.0
      %5034 = vmatpush1.msra.mxu0 0.0
      %5035 = vmatprep.subr.mxu0 0.0
      %5036 = vmatpush1.msra.mxu0 0.0
      %5037 = vmatprep.subr.mxu0 0.0
      %5038 = vmatpush1.msra.mxu0 0.0
      %5039 = vmatprep.subr.mxu0 0.0
      %5040 = vmatpush1.msra.mxu0 0.0
      %5041 = vmatprep.subr.mxu0 0.0
      %5042 = vmatpush1.msra.mxu0 0.0
      %5043 = vmatprep.subr.mxu0 0.0
      %5044 = vmatpush1.msra.mxu0 0.0
      %5045 = vmatprep.subr.mxu0 0.0
      %5046 = vmatpush1.msra.mxu0 %v5008
      %5047 = vmatprep.subr.mxu0 0.0
      %5048 = vmatpush1.msra.mxu0 %v5006
      %5049 = vmatprep.subr.mxu0 0.0
      %5050 = vmatpush2.msra.mxu0 0.0
      %5051 = vmatprep.subr.mxu0 0.0
      %5052 = vmatpush2.msra.mxu0 0.0
      %5053 = vmatprep.subr.mxu0 0.0
      %5054 = vmatpush2.msra.mxu0 0.0
      %5055 = vmatprep.subr.mxu0 0.0
      %5056 = vmatpush2.msra.mxu0 0.0
      %5057 = vmatprep.subr.mxu0 0.0
      %5058 = vmatpush2.msra.mxu0 0.0
      %5059 = vmatprep.subr.mxu0 0.0
      %5060 = vmatpush2.msra.mxu0 0.0
      %5061 = vmatprep.subr.mxu0 0.0
      %5062 = vmatpush2.msra.mxu0 0.0
      %5063 = vmatprep.subr.mxu0 0.0
      %5064 = vmatpush2.msra.mxu0 0.0
      %5065 = vmatprep.subr.mxu0 0.0
      %5066 = vmatpush2.msra.mxu0 0.0
      %5067 = vmatprep.subr.mxu0 0.0
      %5068 = vmatpush2.msra.mxu0 0.0
      %5069 = vmatprep.subr.mxu0 0.0
      %5070 = vmatpush2.msra.mxu0 0.0
      %5071 = vmatprep.subr.mxu0 0.0
      %5072 = vmatpush2.msra.mxu0 0.0
      %5073 = vmatprep.subr.mxu0 0.0
      %5074 = vmatpush2.msra.mxu0 0.0
      %5075 = vmatprep.subr.mxu0 0.0
      %5076 = vmatpush2.msra.mxu0 0.0
      %5077 = vmatprep.subr.mxu0 0.0
      %5078 = vmatpush2.msra.mxu0 0.0
      %5079 = vmatprep.subr.mxu0 0.0
      %5080 = vmatpush2.msra.mxu0 0.0
      %5081 = vmatprep.mubr.f32.mxu0 0.0
      %5082 = vmatmul.mubr.f32.gmra.mxu0 %v5012
      %v5083 = vpop.f32.mrf.mxu0
      %v5084 = vadd.f32 0.0, %v5083
      %v5085 = vpop.f32.mrf.mxu0
      %5086 = vmatprep.mubr.f32.mxu0 0.0
      %5087 = vmatmul.mubr.f32.gmra.mxu0 %v5015
      %v5088 = vpop.f32.mrf.mxu0
      %v5089 = vadd.f32 0.0, %v5088
      %v5090 = vpop.f32.mrf.mxu0
      %5091 = vdwg.mxu0
      %5092 = vrot.lane.b32.xlu0 %v534, 88
      %v5093 = vpop.permute.xlu0 %5092
      %5094 = vrot.lane.b32.xlu0 %v538, 88
      %v5095 = vpop.permute.xlu0 %5094
      %v5099 = vsel %vm906, %v4829, 0
      %v5102 = vsel %vm906, %v4830, 0
      %5104 = vmatprep.subr.mxu0 0.0
      %5105 = vmatpush1.msra.mxu0 0.0
      %5106 = vmatprep.subr.mxu0 0.0
      %5107 = vmatpush1.msra.mxu0 0.0
      %5108 = vmatprep.subr.mxu0 0.0
      %5109 = vmatpush1.msra.mxu0 0.0
      %5110 = vmatprep.subr.mxu0 0.0
      %5111 = vmatpush1.msra.mxu0 0.0
      %5112 = vmatprep.subr.mxu0 0.0
      %5113 = vmatpush1.msra.mxu0 0.0
      %5114 = vmatprep.subr.mxu0 0.0
      %5115 = vmatpush1.msra.mxu0 0.0
      %5116 = vmatprep.subr.mxu0 0.0
      %5117 = vmatpush1.msra.mxu0 0.0
      %5118 = vmatprep.subr.mxu0 0.0
      %5119 = vmatpush1.msra.mxu0 0.0
      %5120 = vmatprep.subr.mxu0 0.0
      %5121 = vmatpush1.msra.mxu0 0.0
      %5122 = vmatprep.subr.mxu0 0.0
      %5123 = vmatpush1.msra.mxu0 0.0
      %5124 = vmatprep.subr.mxu0 0.0
      %5125 = vmatpush1.msra.mxu0 0.0
      %5126 = vmatprep.subr.mxu0 0.0
      %5127 = vmatpush1.msra.mxu0 0.0
      %5128 = vmatprep.subr.mxu0 0.0
      %5129 = vmatpush1.msra.mxu0 0.0
      %5130 = vmatprep.subr.mxu0 0.0
      %5131 = vmatpush1.msra.mxu0 0.0
      %5132 = vmatprep.subr.mxu0 0.0
      %5133 = vmatpush1.msra.mxu0 %v5095
      %5134 = vmatprep.subr.mxu0 0.0
      %5135 = vmatpush1.msra.mxu0 %v5093
      %5136 = vmatprep.subr.mxu0 0.0
      %5137 = vmatpush2.msra.mxu0 0.0
      %5138 = vmatprep.subr.mxu0 0.0
      %5139 = vmatpush2.msra.mxu0 0.0
      %5140 = vmatprep.subr.mxu0 0.0
      %5141 = vmatpush2.msra.mxu0 0.0
      %5142 = vmatprep.subr.mxu0 0.0
      %5143 = vmatpush2.msra.mxu0 0.0
      %5144 = vmatprep.subr.mxu0 0.0
      %5145 = vmatpush2.msra.mxu0 0.0
      %5146 = vmatprep.subr.mxu0 0.0
      %5147 = vmatpush2.msra.mxu0 0.0
      %5148 = vmatprep.subr.mxu0 0.0
      %5149 = vmatpush2.msra.mxu0 0.0
      %5150 = vmatprep.subr.mxu0 0.0
      %5151 = vmatpush2.msra.mxu0 0.0
      %5152 = vmatprep.subr.mxu0 0.0
      %5153 = vmatpush2.msra.mxu0 0.0
      %5154 = vmatprep.subr.mxu0 0.0
      %5155 = vmatpush2.msra.mxu0 0.0
      %5156 = vmatprep.subr.mxu0 0.0
      %5157 = vmatpush2.msra.mxu0 0.0
      %5158 = vmatprep.subr.mxu0 0.0
      %5159 = vmatpush2.msra.mxu0 0.0
      %5160 = vmatprep.subr.mxu0 0.0
      %5161 = vmatpush2.msra.mxu0 0.0
      %5162 = vmatprep.subr.mxu0 0.0
      %5163 = vmatpush2.msra.mxu0 0.0
      %5164 = vmatprep.subr.mxu0 0.0
      %5165 = vmatpush2.msra.mxu0 0.0
      %5166 = vmatprep.subr.mxu0 0.0
      %5167 = vmatpush2.msra.mxu0 0.0
      %5168 = vmatprep.mubr.f32.mxu0 0.0
      %5169 = vmatmul.mubr.f32.gmra.mxu0 %v5099
      %v5170 = vpop.f32.mrf.mxu0
      %v5171 = vadd.f32 0.0, %v5170
      %v5172 = vpop.f32.mrf.mxu0
      %5173 = vmatprep.mubr.f32.mxu0 0.0
      %5174 = vmatmul.mubr.f32.gmra.mxu0 %v5102
      %v5175 = vpop.f32.mrf.mxu0
      %v5176 = vadd.f32 0.0, %v5175
      %v5177 = vpop.f32.mrf.mxu0
      %5178 = vdwg.mxu0
      %5187 = vrot.lane.b32.xlu0 %v4910, 40
      %v5188 = vpop.permute.xlu0 %5187
      %5189 = vrot.lane.b32.xlu0 %v4915, 40
      %v5190 = vpop.permute.xlu0 %5189
      %5191 = vrot.lane.b32.xlu0 %v4997, 40
      %v5192 = vpop.permute.xlu0 %5191
      %5193 = vrot.lane.b32.xlu0 %v5002, 40
      %v5194 = vpop.permute.xlu0 %5193
      %5195 = vrot.lane.b32.xlu0 %v5084, 40
      %v5196 = vpop.permute.xlu0 %5195
      %5197 = vrot.lane.b32.xlu0 %v5089, 40
      %v5198 = vpop.permute.xlu0 %5197
      %5199 = vrot.lane.b32.xlu0 %v5171, 40
      %v5200 = vpop.permute.xlu0 %5199
      %5201 = vrot.lane.b32.xlu0 %v5176, 40
      %v5202 = vpop.permute.xlu0 %5201
      %vm5211 = vcmask 392512
      %5212 = vst.msk [vmem:[#allocation2] sm:$0xff] %vm5211, %v5188
      %5213 = vst.msk [vmem:[#allocation2 + $0x8] sm:$0xff] %vm5211, %v5190
      %5214 = vst.msk [vmem:[#allocation2 + $0x10] sm:$0xff] %vm5211, %v5192
      %5215 = vst.msk [vmem:[#allocation2 + $0x18] sm:$0xff] %vm5211, %v5194
      %5216 = vst.msk [vmem:[#allocation2 + $0x20] sm:$0xff] %vm5211, %v5196
      %5217 = vst.msk [vmem:[#allocation2 + $0x28] sm:$0xff] %vm5211, %v5198
      %5218 = vst.msk [vmem:[#allocation2 + $0x30] sm:$0xff] %vm5211, %v5200
      %5219 = vst.msk [vmem:[#allocation2 + $0x38] sm:$0xff] %vm5211, %v5202
      %5220 = vrot.lane.b32.xlu0 %v605, 80
      %v5221 = vpop.permute.xlu0 %5220
      %5222 = vrot.lane.b32.xlu0 %v605, 16
      %v5223 = vpop.permute.xlu0 %5222
      %v5225 = vsel %vm612, %v5221, 0
      %v5228 = vsel %vm612, %v5223, 0
      %5230 = vmatprep.subr.bf16.mxu0 0
      %5231 = vmatpush1.bf16.xpose.msra.mxu0 0
      %5232 = vmatprep.subr.bf16.mxu0 0
      %5233 = vmatpush1.bf16.xpose.msra.mxu0 0
      %5234 = vmatprep.subr.bf16.mxu0 0
      %5235 = vmatpush1.bf16.xpose.msra.mxu0 0
      %5236 = vmatprep.subr.bf16.mxu0 0
      %5237 = vmatpush1.bf16.xpose.msra.mxu0 0
      %5238 = vmatprep.subr.bf16.mxu0 0
      %5239 = vmatpush1.bf16.xpose.msra.mxu0 0
      %5240 = vmatprep.subr.bf16.mxu0 0
      %5241 = vmatpush1.bf16.xpose.msra.mxu0 0
      %5242 = vmatprep.subr.bf16.mxu0 0
      %5243 = vmatpush1.bf16.xpose.msra.mxu0 0
      %5244 = vmatprep.subr.bf16.mxu0 0
      %5245 = vmatpush1.bf16.xpose.msra.mxu0 %v5228
      %5246 = vmatprep.subr.bf16.mxu0 0
      %5247 = vmatpush2.bf16.xpose.msra.mxu0 0
      %5248 = vmatprep.subr.bf16.mxu0 0
      %5249 = vmatpush2.bf16.xpose.msra.mxu0 0
      %5250 = vmatprep.subr.bf16.mxu0 0
      %5251 = vmatpush2.bf16.xpose.msra.mxu0 0
      %5252 = vmatprep.subr.bf16.mxu0 0
      %5253 = vmatpush2.bf16.xpose.msra.mxu0 0
      %5254 = vmatprep.subr.bf16.mxu0 0
      %5255 = vmatpush2.bf16.xpose.msra.mxu0 0
      %5256 = vmatprep.subr.bf16.mxu0 0
      %5257 = vmatpush2.bf16.xpose.msra.mxu0 0
      %5258 = vmatprep.subr.bf16.mxu0 0
      %5259 = vmatpush2.bf16.xpose.msra.mxu0 0
      %5260 = vmatprep.subr.bf16.mxu0 0
      %5261 = vmatpush2.bf16.xpose.msra.mxu0 0
      %5262 = vmatprep.mubr.bf16.mxu0 0
      %5263 = vmatmul.mubr.bf16.gmra.mxu0 %v5225
      %v5264 = vpop.f32.mrf.mxu0
      %v5265 = vadd.f32 0.0, %v5264
      %v5266 = vpop.f32.mrf.mxu0
      %v5267 = vpop.f32.mrf.mxu0
      %v5268 = vadd.f32 0.0, %v5267
      %v5269 = vpop.f32.mrf.mxu0
      %5270 = vdwg.mxu0
      %5271 = vrot.lane.b32.xlu0 %v606, 80
      %v5272 = vpop.permute.xlu0 %5271
      %5273 = vrot.lane.b32.xlu0 %v606, 16
      %v5274 = vpop.permute.xlu0 %5273
      %v5276 = vsel %vm612, %v5272, 0
      %v5279 = vsel %vm612, %v5274, 0
      %5281 = vmatprep.subr.bf16.mxu0 0
      %5282 = vmatpush1.bf16.xpose.msra.mxu0 0
      %5283 = vmatprep.subr.bf16.mxu0 0
      %5284 = vmatpush1.bf16.xpose.msra.mxu0 0
      %5285 = vmatprep.subr.bf16.mxu0 0
      %5286 = vmatpush1.bf16.xpose.msra.mxu0 0
      %5287 = vmatprep.subr.bf16.mxu0 0
      %5288 = vmatpush1.bf16.xpose.msra.mxu0 0
      %5289 = vmatprep.subr.bf16.mxu0 0
      %5290 = vmatpush1.bf16.xpose.msra.mxu0 0
      %5291 = vmatprep.subr.bf16.mxu0 0
      %5292 = vmatpush1.bf16.xpose.msra.mxu0 0
      %5293 = vmatprep.subr.bf16.mxu0 0
      %5294 = vmatpush1.bf16.xpose.msra.mxu0 0
      %5295 = vmatprep.subr.bf16.mxu0 0
      %5296 = vmatpush1.bf16.xpose.msra.mxu0 %v5279
      %5297 = vmatprep.subr.bf16.mxu0 0
      %5298 = vmatpush2.bf16.xpose.msra.mxu0 0
      %5299 = vmatprep.subr.bf16.mxu0 0
      %5300 = vmatpush2.bf16.xpose.msra.mxu0 0
      %5301 = vmatprep.subr.bf16.mxu0 0
      %5302 = vmatpush2.bf16.xpose.msra.mxu0 0
      %5303 = vmatprep.subr.bf16.mxu0 0
      %5304 = vmatpush2.bf16.xpose.msra.mxu0 0
      %5305 = vmatprep.subr.bf16.mxu0 0
      %5306 = vmatpush2.bf16.xpose.msra.mxu0 0
      %5307 = vmatprep.subr.bf16.mxu0 0
      %5308 = vmatpush2.bf16.xpose.msra.mxu0 0
      %5309 = vmatprep.subr.bf16.mxu0 0
      %5310 = vmatpush2.bf16.xpose.msra.mxu0 0
      %5311 = vmatprep.subr.bf16.mxu0 0
      %5312 = vmatpush2.bf16.xpose.msra.mxu0 0
      %5313 = vmatprep.mubr.bf16.mxu0 0
      %5314 = vmatmul.mubr.bf16.gmra.mxu0 %v5276
      %v5315 = vpop.f32.mrf.mxu0
      %v5316 = vadd.f32 0.0, %v5315
      %v5317 = vpop.f32.mrf.mxu0
      %v5318 = vpop.f32.mrf.mxu0
      %v5319 = vadd.f32 0.0, %v5318
      %v5320 = vpop.f32.mrf.mxu0
      %5321 = vdwg.mxu0
      %5322 = vrot.lane.b32.xlu0 %v607, 80
      %v5323 = vpop.permute.xlu0 %5322
      %5324 = vrot.lane.b32.xlu0 %v607, 16
      %v5325 = vpop.permute.xlu0 %5324
      %v5327 = vsel %vm612, %v5323, 0
      %v5330 = vsel %vm612, %v5325, 0
      %5332 = vmatprep.subr.bf16.mxu0 0
      %5333 = vmatpush1.bf16.xpose.msra.mxu0 0
      %5334 = vmatprep.subr.bf16.mxu0 0
      %5335 = vmatpush1.bf16.xpose.msra.mxu0 0
      %5336 = vmatprep.subr.bf16.mxu0 0
      %5337 = vmatpush1.bf16.xpose.msra.mxu0 0
      %5338 = vmatprep.subr.bf16.mxu0 0
      %5339 = vmatpush1.bf16.xpose.msra.mxu0 0
      %5340 = vmatprep.subr.bf16.mxu0 0
      %5341 = vmatpush1.bf16.xpose.msra.mxu0 0
      %5342 = vmatprep.subr.bf16.mxu0 0
      %5343 = vmatpush1.bf16.xpose.msra.mxu0 0
      %5344 = vmatprep.subr.bf16.mxu0 0
      %5345 = vmatpush1.bf16.xpose.msra.mxu0 0
      %5346 = vmatprep.subr.bf16.mxu0 0
      %5347 = vmatpush1.bf16.xpose.msra.mxu0 %v5330
      %5348 = vmatprep.subr.bf16.mxu0 0
      %5349 = vmatpush2.bf16.xpose.msra.mxu0 0
      %5350 = vmatprep.subr.bf16.mxu0 0
      %5351 = vmatpush2.bf16.xpose.msra.mxu0 0
      %5352 = vmatprep.subr.bf16.mxu0 0
      %5353 = vmatpush2.bf16.xpose.msra.mxu0 0
      %5354 = vmatprep.subr.bf16.mxu0 0
      %5355 = vmatpush2.bf16.xpose.msra.mxu0 0
      %5356 = vmatprep.subr.bf16.mxu0 0
      %5357 = vmatpush2.bf16.xpose.msra.mxu0 0
      %5358 = vmatprep.subr.bf16.mxu0 0
      %5359 = vmatpush2.bf16.xpose.msra.mxu0 0
      %5360 = vmatprep.subr.bf16.mxu0 0
      %5361 = vmatpush2.bf16.xpose.msra.mxu0 0
      %5362 = vmatprep.subr.bf16.mxu0 0
      %5363 = vmatpush2.bf16.xpose.msra.mxu0 0
      %5364 = vmatprep.mubr.bf16.mxu0 0
      %5365 = vmatmul.mubr.bf16.gmra.mxu0 %v5327
      %v5366 = vpop.f32.mrf.mxu0
      %v5367 = vadd.f32 0.0, %v5366
      %v5368 = vpop.f32.mrf.mxu0
      %v5369 = vpop.f32.mrf.mxu0
      %v5370 = vadd.f32 0.0, %v5369
      %v5371 = vpop.f32.mrf.mxu0
      %5372 = vdwg.mxu0
      %5373 = vrot.lane.b32.xlu0 %v608, 80
      %v5374 = vpop.permute.xlu0 %5373
      %5375 = vrot.lane.b32.xlu0 %v608, 16
      %v5376 = vpop.permute.xlu0 %5375
      %v5378 = vsel %vm612, %v5374, 0
      %v5381 = vsel %vm612, %v5376, 0
      %5383 = vmatprep.subr.bf16.mxu0 0
      %5384 = vmatpush1.bf16.xpose.msra.mxu0 0
      %5385 = vmatprep.subr.bf16.mxu0 0
      %5386 = vmatpush1.bf16.xpose.msra.mxu0 0
      %5387 = vmatprep.subr.bf16.mxu0 0
      %5388 = vmatpush1.bf16.xpose.msra.mxu0 0
      %5389 = vmatprep.subr.bf16.mxu0 0
      %5390 = vmatpush1.bf16.xpose.msra.mxu0 0
      %5391 = vmatprep.subr.bf16.mxu0 0
      %5392 = vmatpush1.bf16.xpose.msra.mxu0 0
      %5393 = vmatprep.subr.bf16.mxu0 0
      %5394 = vmatpush1.bf16.xpose.msra.mxu0 0
      %5395 = vmatprep.subr.bf16.mxu0 0
      %5396 = vmatpush1.bf16.xpose.msra.mxu0 0
      %5397 = vmatprep.subr.bf16.mxu0 0
      %5398 = vmatpush1.bf16.xpose.msra.mxu0 %v5381
      %5399 = vmatprep.subr.bf16.mxu0 0
      %5400 = vmatpush2.bf16.xpose.msra.mxu0 0
      %5401 = vmatprep.subr.bf16.mxu0 0
      %5402 = vmatpush2.bf16.xpose.msra.mxu0 0
      %5403 = vmatprep.subr.bf16.mxu0 0
      %5404 = vmatpush2.bf16.xpose.msra.mxu0 0
      %5405 = vmatprep.subr.bf16.mxu0 0
      %5406 = vmatpush2.bf16.xpose.msra.mxu0 0
      %5407 = vmatprep.subr.bf16.mxu0 0
      %5408 = vmatpush2.bf16.xpose.msra.mxu0 0
      %5409 = vmatprep.subr.bf16.mxu0 0
      %5410 = vmatpush2.bf16.xpose.msra.mxu0 0
      %5411 = vmatprep.subr.bf16.mxu0 0
      %5412 = vmatpush2.bf16.xpose.msra.mxu0 0
      %5413 = vmatprep.subr.bf16.mxu0 0
      %5414 = vmatpush2.bf16.xpose.msra.mxu0 0
      %5415 = vmatprep.mubr.bf16.mxu0 0
      %5416 = vmatmul.mubr.bf16.gmra.mxu0 %v5378
      %v5417 = vpop.f32.mrf.mxu0
      %v5418 = vadd.f32 0.0, %v5417
      %v5419 = vpop.f32.mrf.mxu0
      %v5420 = vpop.f32.mrf.mxu0
      %v5421 = vadd.f32 0.0, %v5420
      %v5422 = vpop.f32.mrf.mxu0
      %5423 = vdwg.mxu0
      %v5424 = vmul.f32 %v5265, 0.35355338
      %v5425 = vmul.f32 %v5268, 0.35355338
      %v5426 = vmul.f32 %v5316, 0.35355338
      %v5427 = vmul.f32 %v5319, 0.35355338
      %v5428 = vmul.f32 %v5367, 0.35355338
      %v5429 = vmul.f32 %v5370, 0.35355338
      %v5430 = vmul.f32 %v5418, 0.35355338
      %v5431 = vmul.f32 %v5421, 0.35355338
      %v5432 = vand.u32 2147483647, %v5424
      %v5433 = vand.u32 2147483647, %v5425
      %v5434 = vand.u32 2147483647, %v5426
      %v5435 = vand.u32 2147483647, %v5427
      %v5436 = vand.u32 2147483647, %v5428
      %v5437 = vand.u32 2147483647, %v5429
      %v5438 = vand.u32 2147483647, %v5430
      %v5439 = vand.u32 2147483647, %v5431
      %v5440 = vrsqrt.pop %v5432
      %v5441 = vmul.f32 %v5432, %v5440
      %vm5442 = vcmp.eq.f32.partialorder %v5432, inf
      %v5443 = vsel %vm5442, %v5432, %v5441
      %vm5444 = vcmp.eq.f32.partialorder %v5432, 0.0
      %v5445 = vand.u32 %v5432, 2147483648
      %v5446 = vsel %vm5444, %v5445, %v5443
      %v5447 = vrsqrt.pop %v5433
      %v5448 = vmul.f32 %v5433, %v5447
      %vm5449 = vcmp.eq.f32.partialorder %v5433, inf
      %v5450 = vsel %vm5449, %v5433, %v5448
      %vm5451 = vcmp.eq.f32.partialorder %v5433, 0.0
      %v5452 = vand.u32 %v5433, 2147483648
      %v5453 = vsel %vm5451, %v5452, %v5450
      %v5454 = vrsqrt.pop %v5434
      %v5455 = vmul.f32 %v5434, %v5454
      %vm5456 = vcmp.eq.f32.partialorder %v5434, inf
      %v5457 = vsel %vm5456, %v5434, %v5455
      %vm5458 = vcmp.eq.f32.partialorder %v5434, 0.0
      %v5459 = vand.u32 %v5434, 2147483648
      %v5460 = vsel %vm5458, %v5459, %v5457
      %v5461 = vrsqrt.pop %v5435
      %v5462 = vmul.f32 %v5435, %v5461
      %vm5463 = vcmp.eq.f32.partialorder %v5435, inf
      %v5464 = vsel %vm5463, %v5435, %v5462
      %vm5465 = vcmp.eq.f32.partialorder %v5435, 0.0
      %v5466 = vand.u32 %v5435, 2147483648
      %v5467 = vsel %vm5465, %v5466, %v5464
      %v5468 = vrsqrt.pop %v5436
      %v5469 = vmul.f32 %v5436, %v5468
      %vm5470 = vcmp.eq.f32.partialorder %v5436, inf
      %v5471 = vsel %vm5470, %v5436, %v5469
      %vm5472 = vcmp.eq.f32.partialorder %v5436, 0.0
      %v5473 = vand.u32 %v5436, 2147483648
      %v5474 = vsel %vm5472, %v5473, %v5471
      %v5475 = vrsqrt.pop %v5437
      %v5476 = vmul.f32 %v5437, %v5475
      %vm5477 = vcmp.eq.f32.partialorder %v5437, inf
      %v5478 = vsel %vm5477, %v5437, %v5476
      %vm5479 = vcmp.eq.f32.partialorder %v5437, 0.0
      %v5480 = vand.u32 %v5437, 2147483648
      %v5481 = vsel %vm5479, %v5480, %v5478
      %v5482 = vrsqrt.pop %v5438
      %v5483 = vmul.f32 %v5438, %v5482
      %vm5484 = vcmp.eq.f32.partialorder %v5438, inf
      %v5485 = vsel %vm5484, %v5438, %v5483
      %vm5486 = vcmp.eq.f32.partialorder %v5438, 0.0
      %v5487 = vand.u32 %v5438, 2147483648
      %v5488 = vsel %vm5486, %v5487, %v5485
      %v5489 = vrsqrt.pop %v5439
      %v5490 = vmul.f32 %v5439, %v5489
      %vm5491 = vcmp.eq.f32.partialorder %v5439, inf
      %v5492 = vsel %vm5491, %v5439, %v5490
      %vm5493 = vcmp.eq.f32.partialorder %v5439, 0.0
      %v5494 = vand.u32 %v5439, 2147483648
      %v5495 = vsel %vm5493, %v5494, %v5492
      %vm5496 = vcmp.ge.f32.partialorder %v5424, 0.0
      %vm5497 = vcmp.ge.f32.partialorder %v5425, 0.0
      %vm5498 = vcmp.ge.f32.partialorder %v5426, 0.0
      %vm5499 = vcmp.ge.f32.partialorder %v5427, 0.0
      %vm5500 = vcmp.ge.f32.partialorder %v5428, 0.0
      %vm5501 = vcmp.ge.f32.partialorder %v5429, 0.0
      %vm5502 = vcmp.ge.f32.partialorder %v5430, 0.0
      %vm5503 = vcmp.ge.f32.partialorder %v5431, 0.0
      %v5504 = vsub.f32 0.0, %v5446
      %v5505 = vsub.f32 0.0, %v5453
      %v5506 = vsub.f32 0.0, %v5460
      %v5507 = vsub.f32 0.0, %v5467
      %v5508 = vsub.f32 0.0, %v5474
      %v5509 = vsub.f32 0.0, %v5481
      %v5510 = vsub.f32 0.0, %v5488
      %v5511 = vsub.f32 0.0, %v5495
      %v5512 = vsel %vm5496, %v5446, %v5504
      %v5513 = vsel %vm5497, %v5453, %v5505
      %v5514 = vsel %vm5498, %v5460, %v5506
      %v5515 = vsel %vm5499, %v5467, %v5507
      %v5516 = vsel %vm5500, %v5474, %v5508
      %v5517 = vsel %vm5501, %v5481, %v5509
      %v5518 = vsel %vm5502, %v5488, %v5510
      %v5519 = vsel %vm5503, %v5495, %v5511
      %v5520 = vsel %vm906, %v5512, -inf
      %5521 = vmax.xlane.f32.xlu0 %v5520
      %v5522 = vpop.xlane.xlu0 %5521
      %v5523 = vsel %vm906, %v5513, -inf
      %5524 = vmax.xlane.f32.xlu0 %v5523
      %v5525 = vpop.xlane.xlu0 %5524
      %v5526 = vsel %vm906, %v5514, -inf
      %5527 = vmax.xlane.f32.xlu0 %v5526
      %v5528 = vpop.xlane.xlu0 %5527
      %v5529 = vsel %vm906, %v5515, -inf
      %5530 = vmax.xlane.f32.xlu0 %v5529
      %v5531 = vpop.xlane.xlu0 %5530
      %v5532 = vsel %vm906, %v5516, -inf
      %5533 = vmax.xlane.f32.xlu0 %v5532
      %v5534 = vpop.xlane.xlu0 %5533
      %v5535 = vsel %vm906, %v5517, -inf
      %5536 = vmax.xlane.f32.xlu0 %v5535
      %v5537 = vpop.xlane.xlu0 %5536
      %v5538 = vsel %vm906, %v5518, -inf
      %5539 = vmax.xlane.f32.xlu0 %v5538
      %v5540 = vpop.xlane.xlu0 %5539
      %v5541 = vsel %vm906, %v5519, -inf
      %5542 = vmax.xlane.f32.xlu0 %v5541
      %v5543 = vpop.xlane.xlu0 %5542
      %v5544 = vsub.f32 %v5512, %v5522
      %v5545 = vsub.f32 %v5513, %v5525
      %v5546 = vsub.f32 %v5514, %v5528
      %v5547 = vsub.f32 %v5515, %v5531
      %v5548 = vsub.f32 %v5516, %v5534
      %v5549 = vsub.f32 %v5517, %v5537
      %v5550 = vsub.f32 %v5518, %v5540
      %v5551 = vsub.f32 %v5519, %v5543
      %v5552 = vmul.f32 %v5544, 1.442695
      %v5553 = vpow.pop %v5552
      %v5554 = vmul.f32 %v5545, 1.442695
      %v5555 = vpow.pop %v5554
      %v5556 = vmul.f32 %v5546, 1.442695
      %v5557 = vpow.pop %v5556
      %v5558 = vmul.f32 %v5547, 1.442695
      %v5559 = vpow.pop %v5558
      %v5560 = vmul.f32 %v5548, 1.442695
      %v5561 = vpow.pop %v5560
      %v5562 = vmul.f32 %v5549, 1.442695
      %v5563 = vpow.pop %v5562
      %v5564 = vmul.f32 %v5550, 1.442695
      %v5565 = vpow.pop %v5564
      %v5566 = vmul.f32 %v5551, 1.442695
      %v5567 = vpow.pop %v5566
      %v5568 = vsel %vm906, %v5553, 0.0
      %5569 = vadd.xlane.f32.xlu0 %v5568
      %v5570 = vpop.xlane.xlu0 %5569
      %v5571 = vsel %vm906, %v5555, 0.0
      %5572 = vadd.xlane.f32.xlu0 %v5571
      %v5573 = vpop.xlane.xlu0 %5572
      %v5574 = vsel %vm906, %v5557, 0.0
      %5575 = vadd.xlane.f32.xlu0 %v5574
      %v5576 = vpop.xlane.xlu0 %5575
      %v5577 = vsel %vm906, %v5559, 0.0
      %5578 = vadd.xlane.f32.xlu0 %v5577
      %v5579 = vpop.xlane.xlu0 %5578
      %v5580 = vsel %vm906, %v5561, 0.0
      %5581 = vadd.xlane.f32.xlu0 %v5580
      %v5582 = vpop.xlane.xlu0 %5581
      %v5583 = vsel %vm906, %v5563, 0.0
      %5584 = vadd.xlane.f32.xlu0 %v5583
      %v5585 = vpop.xlane.xlu0 %5584
      %v5586 = vsel %vm906, %v5565, 0.0
      %5587 = vadd.xlane.f32.xlu0 %v5586
      %v5588 = vpop.xlane.xlu0 %5587
      %v5589 = vsel %vm906, %v5567, 0.0
      %5590 = vadd.xlane.f32.xlu0 %v5589
      %v5591 = vpop.xlane.xlu0 %5590
      %v5592 = vrcp.pop %v5570
      %v5593 = vrcp.pop %v5573
      %v5594 = vrcp.pop %v5576
      %v5595 = vrcp.pop %v5579
      %v5596 = vrcp.pop %v5582
      %v5597 = vrcp.pop %v5585
      %v5598 = vrcp.pop %v5588
      %v5599 = vrcp.pop %v5591
      %v5600 = vmul.f32 %v5553, %v5592
      %v5601 = vmul.f32 %v5555, %v5593
      %v5602 = vmul.f32 %v5557, %v5594
      %v5603 = vmul.f32 %v5559, %v5595
      %v5604 = vmul.f32 %v5561, %v5596
      %v5605 = vmul.f32 %v5563, %v5597
      %v5606 = vmul.f32 %v5565, %v5598
      %v5607 = vmul.f32 %v5567, %v5599
      %5608 = vrot.lane.b32.xlu0 %v504, 80
      %v5609 = vpop.permute.xlu0 %5608
      %5610 = vrot.lane.b32.xlu0 %v508, 80
      %v5611 = vpop.permute.xlu0 %5610
      %v5615 = vsel %vm906, %v5600, 0
      %v5618 = vsel %vm906, %v5601, 0
      %5620 = vmatprep.subr.mxu0 0.0
      %5621 = vmatpush1.msra.mxu0 0.0
      %5622 = vmatprep.subr.mxu0 0.0
      %5623 = vmatpush1.msra.mxu0 0.0
      %5624 = vmatprep.subr.mxu0 0.0
      %5625 = vmatpush1.msra.mxu0 0.0
      %5626 = vmatprep.subr.mxu0 0.0
      %5627 = vmatpush1.msra.mxu0 0.0
      %5628 = vmatprep.subr.mxu0 0.0
      %5629 = vmatpush1.msra.mxu0 0.0
      %5630 = vmatprep.subr.mxu0 0.0
      %5631 = vmatpush1.msra.mxu0 0.0
      %5632 = vmatprep.subr.mxu0 0.0
      %5633 = vmatpush1.msra.mxu0 0.0
      %5634 = vmatprep.subr.mxu0 0.0
      %5635 = vmatpush1.msra.mxu0 0.0
      %5636 = vmatprep.subr.mxu0 0.0
      %5637 = vmatpush1.msra.mxu0 0.0
      %5638 = vmatprep.subr.mxu0 0.0
      %5639 = vmatpush1.msra.mxu0 0.0
      %5640 = vmatprep.subr.mxu0 0.0
      %5641 = vmatpush1.msra.mxu0 0.0
      %5642 = vmatprep.subr.mxu0 0.0
      %5643 = vmatpush1.msra.mxu0 0.0
      %5644 = vmatprep.subr.mxu0 0.0
      %5645 = vmatpush1.msra.mxu0 0.0
      %5646 = vmatprep.subr.mxu0 0.0
      %5647 = vmatpush1.msra.mxu0 0.0
      %5648 = vmatprep.subr.mxu0 0.0
      %5649 = vmatpush1.msra.mxu0 %v5611
      %5650 = vmatprep.subr.mxu0 0.0
      %5651 = vmatpush1.msra.mxu0 %v5609
      %5652 = vmatprep.subr.mxu0 0.0
      %5653 = vmatpush2.msra.mxu0 0.0
      %5654 = vmatprep.subr.mxu0 0.0
      %5655 = vmatpush2.msra.mxu0 0.0
      %5656 = vmatprep.subr.mxu0 0.0
      %5657 = vmatpush2.msra.mxu0 0.0
      %5658 = vmatprep.subr.mxu0 0.0
      %5659 = vmatpush2.msra.mxu0 0.0
      %5660 = vmatprep.subr.mxu0 0.0
      %5661 = vmatpush2.msra.mxu0 0.0
      %5662 = vmatprep.subr.mxu0 0.0
      %5663 = vmatpush2.msra.mxu0 0.0
      %5664 = vmatprep.subr.mxu0 0.0
      %5665 = vmatpush2.msra.mxu0 0.0
      %5666 = vmatprep.subr.mxu0 0.0
      %5667 = vmatpush2.msra.mxu0 0.0
      %5668 = vmatprep.subr.mxu0 0.0
      %5669 = vmatpush2.msra.mxu0 0.0
      %5670 = vmatprep.subr.mxu0 0.0
      %5671 = vmatpush2.msra.mxu0 0.0
      %5672 = vmatprep.subr.mxu0 0.0
      %5673 = vmatpush2.msra.mxu0 0.0
      %5674 = vmatprep.subr.mxu0 0.0
      %5675 = vmatpush2.msra.mxu0 0.0
      %5676 = vmatprep.subr.mxu0 0.0
      %5677 = vmatpush2.msra.mxu0 0.0
      %5678 = vmatprep.subr.mxu0 0.0
      %5679 = vmatpush2.msra.mxu0 0.0
      %5680 = vmatprep.subr.mxu0 0.0
      %5681 = vmatpush2.msra.mxu0 0.0
      %5682 = vmatprep.subr.mxu0 0.0
      %5683 = vmatpush2.msra.mxu0 0.0
      %5684 = vmatprep.mubr.f32.mxu0 0.0
      %5685 = vmatmul.mubr.f32.gmra.mxu0 %v5615
      %v5686 = vpop.f32.mrf.mxu0
      %v5687 = vadd.f32 0.0, %v5686
      %v5688 = vpop.f32.mrf.mxu0
      %5689 = vmatprep.mubr.f32.mxu0 0.0
      %5690 = vmatmul.mubr.f32.gmra.mxu0 %v5618
      %v5691 = vpop.f32.mrf.mxu0
      %v5692 = vadd.f32 0.0, %v5691
      %v5693 = vpop.f32.mrf.mxu0
      %5694 = vdwg.mxu0
      %5695 = vrot.lane.b32.xlu0 %v514, 80
      %v5696 = vpop.permute.xlu0 %5695
      %5697 = vrot.lane.b32.xlu0 %v518, 80
      %v5698 = vpop.permute.xlu0 %5697
      %v5702 = vsel %vm906, %v5602, 0
      %v5705 = vsel %vm906, %v5603, 0
      %5707 = vmatprep.subr.mxu0 0.0
      %5708 = vmatpush1.msra.mxu0 0.0
      %5709 = vmatprep.subr.mxu0 0.0
      %5710 = vmatpush1.msra.mxu0 0.0
      %5711 = vmatprep.subr.mxu0 0.0
      %5712 = vmatpush1.msra.mxu0 0.0
      %5713 = vmatprep.subr.mxu0 0.0
      %5714 = vmatpush1.msra.mxu0 0.0
      %5715 = vmatprep.subr.mxu0 0.0
      %5716 = vmatpush1.msra.mxu0 0.0
      %5717 = vmatprep.subr.mxu0 0.0
      %5718 = vmatpush1.msra.mxu0 0.0
      %5719 = vmatprep.subr.mxu0 0.0
      %5720 = vmatpush1.msra.mxu0 0.0
      %5721 = vmatprep.subr.mxu0 0.0
      %5722 = vmatpush1.msra.mxu0 0.0
      %5723 = vmatprep.subr.mxu0 0.0
      %5724 = vmatpush1.msra.mxu0 0.0
      %5725 = vmatprep.subr.mxu0 0.0
      %5726 = vmatpush1.msra.mxu0 0.0
      %5727 = vmatprep.subr.mxu0 0.0
      %5728 = vmatpush1.msra.mxu0 0.0
      %5729 = vmatprep.subr.mxu0 0.0
      %5730 = vmatpush1.msra.mxu0 0.0
      %5731 = vmatprep.subr.mxu0 0.0
      %5732 = vmatpush1.msra.mxu0 0.0
      %5733 = vmatprep.subr.mxu0 0.0
      %5734 = vmatpush1.msra.mxu0 0.0
      %5735 = vmatprep.subr.mxu0 0.0
      %5736 = vmatpush1.msra.mxu0 %v5698
      %5737 = vmatprep.subr.mxu0 0.0
      %5738 = vmatpush1.msra.mxu0 %v5696
      %5739 = vmatprep.subr.mxu0 0.0
      %5740 = vmatpush2.msra.mxu0 0.0
      %5741 = vmatprep.subr.mxu0 0.0
      %5742 = vmatpush2.msra.mxu0 0.0
      %5743 = vmatprep.subr.mxu0 0.0
      %5744 = vmatpush2.msra.mxu0 0.0
      %5745 = vmatprep.subr.mxu0 0.0
      %5746 = vmatpush2.msra.mxu0 0.0
      %5747 = vmatprep.subr.mxu0 0.0
      %5748 = vmatpush2.msra.mxu0 0.0
      %5749 = vmatprep.subr.mxu0 0.0
      %5750 = vmatpush2.msra.mxu0 0.0
      %5751 = vmatprep.subr.mxu0 0.0
      %5752 = vmatpush2.msra.mxu0 0.0
      %5753 = vmatprep.subr.mxu0 0.0
      %5754 = vmatpush2.msra.mxu0 0.0
      %5755 = vmatprep.subr.mxu0 0.0
      %5756 = vmatpush2.msra.mxu0 0.0
      %5757 = vmatprep.subr.mxu0 0.0
      %5758 = vmatpush2.msra.mxu0 0.0
      %5759 = vmatprep.subr.mxu0 0.0
      %5760 = vmatpush2.msra.mxu0 0.0
      %5761 = vmatprep.subr.mxu0 0.0
      %5762 = vmatpush2.msra.mxu0 0.0
      %5763 = vmatprep.subr.mxu0 0.0
      %5764 = vmatpush2.msra.mxu0 0.0
      %5765 = vmatprep.subr.mxu0 0.0
      %5766 = vmatpush2.msra.mxu0 0.0
      %5767 = vmatprep.subr.mxu0 0.0
      %5768 = vmatpush2.msra.mxu0 0.0
      %5769 = vmatprep.subr.mxu0 0.0
      %5770 = vmatpush2.msra.mxu0 0.0
      %5771 = vmatprep.mubr.f32.mxu0 0.0
      %5772 = vmatmul.mubr.f32.gmra.mxu0 %v5702
      %v5773 = vpop.f32.mrf.mxu0
      %v5774 = vadd.f32 0.0, %v5773
      %v5775 = vpop.f32.mrf.mxu0
      %5776 = vmatprep.mubr.f32.mxu0 0.0
      %5777 = vmatmul.mubr.f32.gmra.mxu0 %v5705
      %v5778 = vpop.f32.mrf.mxu0
      %v5779 = vadd.f32 0.0, %v5778
      %v5780 = vpop.f32.mrf.mxu0
      %5781 = vdwg.mxu0
      %5782 = vrot.lane.b32.xlu0 %v524, 80
      %v5783 = vpop.permute.xlu0 %5782
      %5784 = vrot.lane.b32.xlu0 %v528, 80
      %v5785 = vpop.permute.xlu0 %5784
      %v5789 = vsel %vm906, %v5604, 0
      %v5792 = vsel %vm906, %v5605, 0
      %5794 = vmatprep.subr.mxu0 0.0
      %5795 = vmatpush1.msra.mxu0 0.0
      %5796 = vmatprep.subr.mxu0 0.0
      %5797 = vmatpush1.msra.mxu0 0.0
      %5798 = vmatprep.subr.mxu0 0.0
      %5799 = vmatpush1.msra.mxu0 0.0
      %5800 = vmatprep.subr.mxu0 0.0
      %5801 = vmatpush1.msra.mxu0 0.0
      %5802 = vmatprep.subr.mxu0 0.0
      %5803 = vmatpush1.msra.mxu0 0.0
      %5804 = vmatprep.subr.mxu0 0.0
      %5805 = vmatpush1.msra.mxu0 0.0
      %5806 = vmatprep.subr.mxu0 0.0
      %5807 = vmatpush1.msra.mxu0 0.0
      %5808 = vmatprep.subr.mxu0 0.0
      %5809 = vmatpush1.msra.mxu0 0.0
      %5810 = vmatprep.subr.mxu0 0.0
      %5811 = vmatpush1.msra.mxu0 0.0
      %5812 = vmatprep.subr.mxu0 0.0
      %5813 = vmatpush1.msra.mxu0 0.0
      %5814 = vmatprep.subr.mxu0 0.0
      %5815 = vmatpush1.msra.mxu0 0.0
      %5816 = vmatprep.subr.mxu0 0.0
      %5817 = vmatpush1.msra.mxu0 0.0
      %5818 = vmatprep.subr.mxu0 0.0
      %5819 = vmatpush1.msra.mxu0 0.0
      %5820 = vmatprep.subr.mxu0 0.0
      %5821 = vmatpush1.msra.mxu0 0.0
      %5822 = vmatprep.subr.mxu0 0.0
      %5823 = vmatpush1.msra.mxu0 %v5785
      %5824 = vmatprep.subr.mxu0 0.0
      %5825 = vmatpush1.msra.mxu0 %v5783
      %5826 = vmatprep.subr.mxu0 0.0
      %5827 = vmatpush2.msra.mxu0 0.0
      %5828 = vmatprep.subr.mxu0 0.0
      %5829 = vmatpush2.msra.mxu0 0.0
      %5830 = vmatprep.subr.mxu0 0.0
      %5831 = vmatpush2.msra.mxu0 0.0
      %5832 = vmatprep.subr.mxu0 0.0
      %5833 = vmatpush2.msra.mxu0 0.0
      %5834 = vmatprep.subr.mxu0 0.0
      %5835 = vmatpush2.msra.mxu0 0.0
      %5836 = vmatprep.subr.mxu0 0.0
      %5837 = vmatpush2.msra.mxu0 0.0
      %5838 = vmatprep.subr.mxu0 0.0
      %5839 = vmatpush2.msra.mxu0 0.0
      %5840 = vmatprep.subr.mxu0 0.0
      %5841 = vmatpush2.msra.mxu0 0.0
      %5842 = vmatprep.subr.mxu0 0.0
      %5843 = vmatpush2.msra.mxu0 0.0
      %5844 = vmatprep.subr.mxu0 0.0
      %5845 = vmatpush2.msra.mxu0 0.0
      %5846 = vmatprep.subr.mxu0 0.0
      %5847 = vmatpush2.msra.mxu0 0.0
      %5848 = vmatprep.subr.mxu0 0.0
      %5849 = vmatpush2.msra.mxu0 0.0
      %5850 = vmatprep.subr.mxu0 0.0
      %5851 = vmatpush2.msra.mxu0 0.0
      %5852 = vmatprep.subr.mxu0 0.0
      %5853 = vmatpush2.msra.mxu0 0.0
      %5854 = vmatprep.subr.mxu0 0.0
      %5855 = vmatpush2.msra.mxu0 0.0
      %5856 = vmatprep.subr.mxu0 0.0
      %5857 = vmatpush2.msra.mxu0 0.0
      %5858 = vmatprep.mubr.f32.mxu0 0.0
      %5859 = vmatmul.mubr.f32.gmra.mxu0 %v5789
      %v5860 = vpop.f32.mrf.mxu0
      %v5861 = vadd.f32 0.0, %v5860
      %v5862 = vpop.f32.mrf.mxu0
      %5863 = vmatprep.mubr.f32.mxu0 0.0
      %5864 = vmatmul.mubr.f32.gmra.mxu0 %v5792
      %v5865 = vpop.f32.mrf.mxu0
      %v5866 = vadd.f32 0.0, %v5865
      %v5867 = vpop.f32.mrf.mxu0
      %5868 = vdwg.mxu0
      %5869 = vrot.lane.b32.xlu0 %v534, 80
      %v5870 = vpop.permute.xlu0 %5869
      %5871 = vrot.lane.b32.xlu0 %v538, 80
      %v5872 = vpop.permute.xlu0 %5871
      %v5876 = vsel %vm906, %v5606, 0
      %v5879 = vsel %vm906, %v5607, 0
      %5881 = vmatprep.subr.mxu0 0.0
      %5882 = vmatpush1.msra.mxu0 0.0
      %5883 = vmatprep.subr.mxu0 0.0
      %5884 = vmatpush1.msra.mxu0 0.0
      %5885 = vmatprep.subr.mxu0 0.0
      %5886 = vmatpush1.msra.mxu0 0.0
      %5887 = vmatprep.subr.mxu0 0.0
      %5888 = vmatpush1.msra.mxu0 0.0
      %5889 = vmatprep.subr.mxu0 0.0
      %5890 = vmatpush1.msra.mxu0 0.0
      %5891 = vmatprep.subr.mxu0 0.0
      %5892 = vmatpush1.msra.mxu0 0.0
      %5893 = vmatprep.subr.mxu0 0.0
      %5894 = vmatpush1.msra.mxu0 0.0
      %5895 = vmatprep.subr.mxu0 0.0
      %5896 = vmatpush1.msra.mxu0 0.0
      %5897 = vmatprep.subr.mxu0 0.0
      %5898 = vmatpush1.msra.mxu0 0.0
      %5899 = vmatprep.subr.mxu0 0.0
      %5900 = vmatpush1.msra.mxu0 0.0
      %5901 = vmatprep.subr.mxu0 0.0
      %5902 = vmatpush1.msra.mxu0 0.0
      %5903 = vmatprep.subr.mxu0 0.0
      %5904 = vmatpush1.msra.mxu0 0.0
      %5905 = vmatprep.subr.mxu0 0.0
      %5906 = vmatpush1.msra.mxu0 0.0
      %5907 = vmatprep.subr.mxu0 0.0
      %5908 = vmatpush1.msra.mxu0 0.0
      %5909 = vmatprep.subr.mxu0 0.0
      %5910 = vmatpush1.msra.mxu0 %v5872
      %5911 = vmatprep.subr.mxu0 0.0
      %5912 = vmatpush1.msra.mxu0 %v5870
      %5913 = vmatprep.subr.mxu0 0.0
      %5914 = vmatpush2.msra.mxu0 0.0
      %5915 = vmatprep.subr.mxu0 0.0
      %5916 = vmatpush2.msra.mxu0 0.0
      %5917 = vmatprep.subr.mxu0 0.0
      %5918 = vmatpush2.msra.mxu0 0.0
      %5919 = vmatprep.subr.mxu0 0.0
      %5920 = vmatpush2.msra.mxu0 0.0
      %5921 = vmatprep.subr.mxu0 0.0
      %5922 = vmatpush2.msra.mxu0 0.0
      %5923 = vmatprep.subr.mxu0 0.0
      %5924 = vmatpush2.msra.mxu0 0.0
      %5925 = vmatprep.subr.mxu0 0.0
      %5926 = vmatpush2.msra.mxu0 0.0
      %5927 = vmatprep.subr.mxu0 0.0
      %5928 = vmatpush2.msra.mxu0 0.0
      %5929 = vmatprep.subr.mxu0 0.0
      %5930 = vmatpush2.msra.mxu0 0.0
      %5931 = vmatprep.subr.mxu0 0.0
      %5932 = vmatpush2.msra.mxu0 0.0
      %5933 = vmatprep.subr.mxu0 0.0
      %5934 = vmatpush2.msra.mxu0 0.0
      %5935 = vmatprep.subr.mxu0 0.0
      %5936 = vmatpush2.msra.mxu0 0.0
      %5937 = vmatprep.subr.mxu0 0.0
      %5938 = vmatpush2.msra.mxu0 0.0
      %5939 = vmatprep.subr.mxu0 0.0
      %5940 = vmatpush2.msra.mxu0 0.0
      %5941 = vmatprep.subr.mxu0 0.0
      %5942 = vmatpush2.msra.mxu0 0.0
      %5943 = vmatprep.subr.mxu0 0.0
      %5944 = vmatpush2.msra.mxu0 0.0
      %5945 = vmatprep.mubr.f32.mxu0 0.0
      %5946 = vmatmul.mubr.f32.gmra.mxu0 %v5876
      %v5947 = vpop.f32.mrf.mxu0
      %v5948 = vadd.f32 0.0, %v5947
      %v5949 = vpop.f32.mrf.mxu0
      %5950 = vmatprep.mubr.f32.mxu0 0.0
      %5951 = vmatmul.mubr.f32.gmra.mxu0 %v5879
      %v5952 = vpop.f32.mrf.mxu0
      %v5953 = vadd.f32 0.0, %v5952
      %v5954 = vpop.f32.mrf.mxu0
      %5955 = vdwg.mxu0
      %5964 = vrot.lane.b32.xlu0 %v5687, 48
      %v5965 = vpop.permute.xlu0 %5964
      %5966 = vrot.lane.b32.xlu0 %v5692, 48
      %v5967 = vpop.permute.xlu0 %5966
      %5968 = vrot.lane.b32.xlu0 %v5774, 48
      %v5969 = vpop.permute.xlu0 %5968
      %5970 = vrot.lane.b32.xlu0 %v5779, 48
      %v5971 = vpop.permute.xlu0 %5970
      %5972 = vrot.lane.b32.xlu0 %v5861, 48
      %v5973 = vpop.permute.xlu0 %5972
      %5974 = vrot.lane.b32.xlu0 %v5866, 48
      %v5975 = vpop.permute.xlu0 %5974
      %5976 = vrot.lane.b32.xlu0 %v5948, 48
      %v5977 = vpop.permute.xlu0 %5976
      %5978 = vrot.lane.b32.xlu0 %v5953, 48
      %v5979 = vpop.permute.xlu0 %5978
      %vm5988 = vcmask 458112
      %5989 = vst.msk [vmem:[#allocation2] sm:$0xff] %vm5988, %v5965
      %5990 = vst.msk [vmem:[#allocation2 + $0x8] sm:$0xff] %vm5988, %v5967
      %5991 = vst.msk [vmem:[#allocation2 + $0x10] sm:$0xff] %vm5988, %v5969
      %5992 = vst.msk [vmem:[#allocation2 + $0x18] sm:$0xff] %vm5988, %v5971
      %5993 = vst.msk [vmem:[#allocation2 + $0x20] sm:$0xff] %vm5988, %v5973
      %5994 = vst.msk [vmem:[#allocation2 + $0x28] sm:$0xff] %vm5988, %v5975
      %5995 = vst.msk [vmem:[#allocation2 + $0x30] sm:$0xff] %vm5988, %v5977
      %5996 = vst.msk [vmem:[#allocation2 + $0x38] sm:$0xff] %vm5988, %v5979
      %5997 = vrot.lane.b32.xlu0 %v605, 72
      %v5998 = vpop.permute.xlu0 %5997
      %5999 = vrot.lane.b32.xlu0 %v605, 8
      %v6000 = vpop.permute.xlu0 %5999
      %v6002 = vsel %vm612, %v5998, 0
      %v6005 = vsel %vm612, %v6000, 0
      %6007 = vmatprep.subr.bf16.mxu0 0
      %6008 = vmatpush1.bf16.xpose.msra.mxu0 0
      %6009 = vmatprep.subr.bf16.mxu0 0
      %6010 = vmatpush1.bf16.xpose.msra.mxu0 0
      %6011 = vmatprep.subr.bf16.mxu0 0
      %6012 = vmatpush1.bf16.xpose.msra.mxu0 0
      %6013 = vmatprep.subr.bf16.mxu0 0
      %6014 = vmatpush1.bf16.xpose.msra.mxu0 0
      %6015 = vmatprep.subr.bf16.mxu0 0
      %6016 = vmatpush1.bf16.xpose.msra.mxu0 0
      %6017 = vmatprep.subr.bf16.mxu0 0
      %6018 = vmatpush1.bf16.xpose.msra.mxu0 0
      %6019 = vmatprep.subr.bf16.mxu0 0
      %6020 = vmatpush1.bf16.xpose.msra.mxu0 0
      %6021 = vmatprep.subr.bf16.mxu0 0
      %6022 = vmatpush1.bf16.xpose.msra.mxu0 %v6005
      %6023 = vmatprep.subr.bf16.mxu0 0
      %6024 = vmatpush2.bf16.xpose.msra.mxu0 0
      %6025 = vmatprep.subr.bf16.mxu0 0
      %6026 = vmatpush2.bf16.xpose.msra.mxu0 0
      %6027 = vmatprep.subr.bf16.mxu0 0
      %6028 = vmatpush2.bf16.xpose.msra.mxu0 0
      %6029 = vmatprep.subr.bf16.mxu0 0
      %6030 = vmatpush2.bf16.xpose.msra.mxu0 0
      %6031 = vmatprep.subr.bf16.mxu0 0
      %6032 = vmatpush2.bf16.xpose.msra.mxu0 0
      %6033 = vmatprep.subr.bf16.mxu0 0
      %6034 = vmatpush2.bf16.xpose.msra.mxu0 0
      %6035 = vmatprep.subr.bf16.mxu0 0
      %6036 = vmatpush2.bf16.xpose.msra.mxu0 0
      %6037 = vmatprep.subr.bf16.mxu0 0
      %6038 = vmatpush2.bf16.xpose.msra.mxu0 0
      %6039 = vmatprep.mubr.bf16.mxu0 0
      %6040 = vmatmul.mubr.bf16.gmra.mxu0 %v6002
      %v6041 = vpop.f32.mrf.mxu0
      %v6042 = vadd.f32 0.0, %v6041
      %v6043 = vpop.f32.mrf.mxu0
      %v6044 = vpop.f32.mrf.mxu0
      %v6045 = vadd.f32 0.0, %v6044
      %v6046 = vpop.f32.mrf.mxu0
      %6047 = vdwg.mxu0
      %6048 = vrot.lane.b32.xlu0 %v606, 72
      %v6049 = vpop.permute.xlu0 %6048
      %6050 = vrot.lane.b32.xlu0 %v606, 8
      %v6051 = vpop.permute.xlu0 %6050
      %v6053 = vsel %vm612, %v6049, 0
      %v6056 = vsel %vm612, %v6051, 0
      %6058 = vmatprep.subr.bf16.mxu0 0
      %6059 = vmatpush1.bf16.xpose.msra.mxu0 0
      %6060 = vmatprep.subr.bf16.mxu0 0
      %6061 = vmatpush1.bf16.xpose.msra.mxu0 0
      %6062 = vmatprep.subr.bf16.mxu0 0
      %6063 = vmatpush1.bf16.xpose.msra.mxu0 0
      %6064 = vmatprep.subr.bf16.mxu0 0
      %6065 = vmatpush1.bf16.xpose.msra.mxu0 0
      %6066 = vmatprep.subr.bf16.mxu0 0
      %6067 = vmatpush1.bf16.xpose.msra.mxu0 0
      %6068 = vmatprep.subr.bf16.mxu0 0
      %6069 = vmatpush1.bf16.xpose.msra.mxu0 0
      %6070 = vmatprep.subr.bf16.mxu0 0
      %6071 = vmatpush1.bf16.xpose.msra.mxu0 0
      %6072 = vmatprep.subr.bf16.mxu0 0
      %6073 = vmatpush1.bf16.xpose.msra.mxu0 %v6056
      %6074 = vmatprep.subr.bf16.mxu0 0
      %6075 = vmatpush2.bf16.xpose.msra.mxu0 0
      %6076 = vmatprep.subr.bf16.mxu0 0
      %6077 = vmatpush2.bf16.xpose.msra.mxu0 0
      %6078 = vmatprep.subr.bf16.mxu0 0
      %6079 = vmatpush2.bf16.xpose.msra.mxu0 0
      %6080 = vmatprep.subr.bf16.mxu0 0
      %6081 = vmatpush2.bf16.xpose.msra.mxu0 0
      %6082 = vmatprep.subr.bf16.mxu0 0
      %6083 = vmatpush2.bf16.xpose.msra.mxu0 0
      %6084 = vmatprep.subr.bf16.mxu0 0
      %6085 = vmatpush2.bf16.xpose.msra.mxu0 0
      %6086 = vmatprep.subr.bf16.mxu0 0
      %6087 = vmatpush2.bf16.xpose.msra.mxu0 0
      %6088 = vmatprep.subr.bf16.mxu0 0
      %6089 = vmatpush2.bf16.xpose.msra.mxu0 0
      %6090 = vmatprep.mubr.bf16.mxu0 0
      %6091 = vmatmul.mubr.bf16.gmra.mxu0 %v6053
      %v6092 = vpop.f32.mrf.mxu0
      %v6093 = vadd.f32 0.0, %v6092
      %v6094 = vpop.f32.mrf.mxu0
      %v6095 = vpop.f32.mrf.mxu0
      %v6096 = vadd.f32 0.0, %v6095
      %v6097 = vpop.f32.mrf.mxu0
      %6098 = vdwg.mxu0
      %6099 = vrot.lane.b32.xlu0 %v607, 72
      %v6100 = vpop.permute.xlu0 %6099
      %6101 = vrot.lane.b32.xlu0 %v607, 8
      %v6102 = vpop.permute.xlu0 %6101
      %v6104 = vsel %vm612, %v6100, 0
      %v6107 = vsel %vm612, %v6102, 0
      %6109 = vmatprep.subr.bf16.mxu0 0
      %6110 = vmatpush1.bf16.xpose.msra.mxu0 0
      %6111 = vmatprep.subr.bf16.mxu0 0
      %6112 = vmatpush1.bf16.xpose.msra.mxu0 0
      %6113 = vmatprep.subr.bf16.mxu0 0
      %6114 = vmatpush1.bf16.xpose.msra.mxu0 0
      %6115 = vmatprep.subr.bf16.mxu0 0
      %6116 = vmatpush1.bf16.xpose.msra.mxu0 0
      %6117 = vmatprep.subr.bf16.mxu0 0
      %6118 = vmatpush1.bf16.xpose.msra.mxu0 0
      %6119 = vmatprep.subr.bf16.mxu0 0
      %6120 = vmatpush1.bf16.xpose.msra.mxu0 0
      %6121 = vmatprep.subr.bf16.mxu0 0
      %6122 = vmatpush1.bf16.xpose.msra.mxu0 0
      %6123 = vmatprep.subr.bf16.mxu0 0
      %6124 = vmatpush1.bf16.xpose.msra.mxu0 %v6107
      %6125 = vmatprep.subr.bf16.mxu0 0
      %6126 = vmatpush2.bf16.xpose.msra.mxu0 0
      %6127 = vmatprep.subr.bf16.mxu0 0
      %6128 = vmatpush2.bf16.xpose.msra.mxu0 0
      %6129 = vmatprep.subr.bf16.mxu0 0
      %6130 = vmatpush2.bf16.xpose.msra.mxu0 0
      %6131 = vmatprep.subr.bf16.mxu0 0
      %6132 = vmatpush2.bf16.xpose.msra.mxu0 0
      %6133 = vmatprep.subr.bf16.mxu0 0
      %6134 = vmatpush2.bf16.xpose.msra.mxu0 0
      %6135 = vmatprep.subr.bf16.mxu0 0
      %6136 = vmatpush2.bf16.xpose.msra.mxu0 0
      %6137 = vmatprep.subr.bf16.mxu0 0
      %6138 = vmatpush2.bf16.xpose.msra.mxu0 0
      %6139 = vmatprep.subr.bf16.mxu0 0
      %6140 = vmatpush2.bf16.xpose.msra.mxu0 0
      %6141 = vmatprep.mubr.bf16.mxu0 0
      %6142 = vmatmul.mubr.bf16.gmra.mxu0 %v6104
      %v6143 = vpop.f32.mrf.mxu0
      %v6144 = vadd.f32 0.0, %v6143
      %v6145 = vpop.f32.mrf.mxu0
      %v6146 = vpop.f32.mrf.mxu0
      %v6147 = vadd.f32 0.0, %v6146
      %v6148 = vpop.f32.mrf.mxu0
      %6149 = vdwg.mxu0
      %6150 = vrot.lane.b32.xlu0 %v608, 72
      %v6151 = vpop.permute.xlu0 %6150
      %6152 = vrot.lane.b32.xlu0 %v608, 8
      %v6153 = vpop.permute.xlu0 %6152
      %v6155 = vsel %vm612, %v6151, 0
      %v6158 = vsel %vm612, %v6153, 0
      %6160 = vmatprep.subr.bf16.mxu0 0
      %6161 = vmatpush1.bf16.xpose.msra.mxu0 0
      %6162 = vmatprep.subr.bf16.mxu0 0
      %6163 = vmatpush1.bf16.xpose.msra.mxu0 0
      %6164 = vmatprep.subr.bf16.mxu0 0
      %6165 = vmatpush1.bf16.xpose.msra.mxu0 0
      %6166 = vmatprep.subr.bf16.mxu0 0
      %6167 = vmatpush1.bf16.xpose.msra.mxu0 0
      %6168 = vmatprep.subr.bf16.mxu0 0
      %6169 = vmatpush1.bf16.xpose.msra.mxu0 0
      %6170 = vmatprep.subr.bf16.mxu0 0
      %6171 = vmatpush1.bf16.xpose.msra.mxu0 0
      %6172 = vmatprep.subr.bf16.mxu0 0
      %6173 = vmatpush1.bf16.xpose.msra.mxu0 0
      %6174 = vmatprep.subr.bf16.mxu0 0
      %6175 = vmatpush1.bf16.xpose.msra.mxu0 %v6158
      %6176 = vmatprep.subr.bf16.mxu0 0
      %6177 = vmatpush2.bf16.xpose.msra.mxu0 0
      %6178 = vmatprep.subr.bf16.mxu0 0
      %6179 = vmatpush2.bf16.xpose.msra.mxu0 0
      %6180 = vmatprep.subr.bf16.mxu0 0
      %6181 = vmatpush2.bf16.xpose.msra.mxu0 0
      %6182 = vmatprep.subr.bf16.mxu0 0
      %6183 = vmatpush2.bf16.xpose.msra.mxu0 0
      %6184 = vmatprep.subr.bf16.mxu0 0
      %6185 = vmatpush2.bf16.xpose.msra.mxu0 0
      %6186 = vmatprep.subr.bf16.mxu0 0
      %6187 = vmatpush2.bf16.xpose.msra.mxu0 0
      %6188 = vmatprep.subr.bf16.mxu0 0
      %6189 = vmatpush2.bf16.xpose.msra.mxu0 0
      %6190 = vmatprep.subr.bf16.mxu0 0
      %6191 = vmatpush2.bf16.xpose.msra.mxu0 0
      %6192 = vmatprep.mubr.bf16.mxu0 0
      %6193 = vmatmul.mubr.bf16.gmra.mxu0 %v6155
      %v6194 = vpop.f32.mrf.mxu0
      %v6195 = vadd.f32 0.0, %v6194
      %v6196 = vpop.f32.mrf.mxu0
      %v6197 = vpop.f32.mrf.mxu0
      %v6198 = vadd.f32 0.0, %v6197
      %v6199 = vpop.f32.mrf.mxu0
      %6200 = vdwg.mxu0
      %v6201 = vmul.f32 %v6042, 0.35355338
      %v6202 = vmul.f32 %v6045, 0.35355338
      %v6203 = vmul.f32 %v6093, 0.35355338
      %v6204 = vmul.f32 %v6096, 0.35355338
      %v6205 = vmul.f32 %v6144, 0.35355338
      %v6206 = vmul.f32 %v6147, 0.35355338
      %v6207 = vmul.f32 %v6195, 0.35355338
      %v6208 = vmul.f32 %v6198, 0.35355338
      %v6209 = vand.u32 2147483647, %v6201
      %v6210 = vand.u32 2147483647, %v6202
      %v6211 = vand.u32 2147483647, %v6203
      %v6212 = vand.u32 2147483647, %v6204
      %v6213 = vand.u32 2147483647, %v6205
      %v6214 = vand.u32 2147483647, %v6206
      %v6215 = vand.u32 2147483647, %v6207
      %v6216 = vand.u32 2147483647, %v6208
      %v6217 = vrsqrt.pop %v6209
      %v6218 = vmul.f32 %v6209, %v6217
      %vm6219 = vcmp.eq.f32.partialorder %v6209, inf
      %v6220 = vsel %vm6219, %v6209, %v6218
      %vm6221 = vcmp.eq.f32.partialorder %v6209, 0.0
      %v6222 = vand.u32 %v6209, 2147483648
      %v6223 = vsel %vm6221, %v6222, %v6220
      %v6224 = vrsqrt.pop %v6210
      %v6225 = vmul.f32 %v6210, %v6224
      %vm6226 = vcmp.eq.f32.partialorder %v6210, inf
      %v6227 = vsel %vm6226, %v6210, %v6225
      %vm6228 = vcmp.eq.f32.partialorder %v6210, 0.0
      %v6229 = vand.u32 %v6210, 2147483648
      %v6230 = vsel %vm6228, %v6229, %v6227
      %v6231 = vrsqrt.pop %v6211
      %v6232 = vmul.f32 %v6211, %v6231
      %vm6233 = vcmp.eq.f32.partialorder %v6211, inf
      %v6234 = vsel %vm6233, %v6211, %v6232
      %vm6235 = vcmp.eq.f32.partialorder %v6211, 0.0
      %v6236 = vand.u32 %v6211, 2147483648
      %v6237 = vsel %vm6235, %v6236, %v6234
      %v6238 = vrsqrt.pop %v6212
      %v6239 = vmul.f32 %v6212, %v6238
      %vm6240 = vcmp.eq.f32.partialorder %v6212, inf
      %v6241 = vsel %vm6240, %v6212, %v6239
      %vm6242 = vcmp.eq.f32.partialorder %v6212, 0.0
      %v6243 = vand.u32 %v6212, 2147483648
      %v6244 = vsel %vm6242, %v6243, %v6241
      %v6245 = vrsqrt.pop %v6213
      %v6246 = vmul.f32 %v6213, %v6245
      %vm6247 = vcmp.eq.f32.partialorder %v6213, inf
      %v6248 = vsel %vm6247, %v6213, %v6246
      %vm6249 = vcmp.eq.f32.partialorder %v6213, 0.0
      %v6250 = vand.u32 %v6213, 2147483648
      %v6251 = vsel %vm6249, %v6250, %v6248
      %v6252 = vrsqrt.pop %v6214
      %v6253 = vmul.f32 %v6214, %v6252
      %vm6254 = vcmp.eq.f32.partialorder %v6214, inf
      %v6255 = vsel %vm6254, %v6214, %v6253
      %vm6256 = vcmp.eq.f32.partialorder %v6214, 0.0
      %v6257 = vand.u32 %v6214, 2147483648
      %v6258 = vsel %vm6256, %v6257, %v6255
      %v6259 = vrsqrt.pop %v6215
      %v6260 = vmul.f32 %v6215, %v6259
      %vm6261 = vcmp.eq.f32.partialorder %v6215, inf
      %v6262 = vsel %vm6261, %v6215, %v6260
      %vm6263 = vcmp.eq.f32.partialorder %v6215, 0.0
      %v6264 = vand.u32 %v6215, 2147483648
      %v6265 = vsel %vm6263, %v6264, %v6262
      %v6266 = vrsqrt.pop %v6216
      %v6267 = vmul.f32 %v6216, %v6266
      %vm6268 = vcmp.eq.f32.partialorder %v6216, inf
      %v6269 = vsel %vm6268, %v6216, %v6267
      %vm6270 = vcmp.eq.f32.partialorder %v6216, 0.0
      %v6271 = vand.u32 %v6216, 2147483648
      %v6272 = vsel %vm6270, %v6271, %v6269
      %vm6273 = vcmp.ge.f32.partialorder %v6201, 0.0
      %vm6274 = vcmp.ge.f32.partialorder %v6202, 0.0
      %vm6275 = vcmp.ge.f32.partialorder %v6203, 0.0
      %vm6276 = vcmp.ge.f32.partialorder %v6204, 0.0
      %vm6277 = vcmp.ge.f32.partialorder %v6205, 0.0
      %vm6278 = vcmp.ge.f32.partialorder %v6206, 0.0
      %vm6279 = vcmp.ge.f32.partialorder %v6207, 0.0
      %vm6280 = vcmp.ge.f32.partialorder %v6208, 0.0
      %v6281 = vsub.f32 0.0, %v6223
      %v6282 = vsub.f32 0.0, %v6230
      %v6283 = vsub.f32 0.0, %v6237
      %v6284 = vsub.f32 0.0, %v6244
      %v6285 = vsub.f32 0.0, %v6251
      %v6286 = vsub.f32 0.0, %v6258
      %v6287 = vsub.f32 0.0, %v6265
      %v6288 = vsub.f32 0.0, %v6272
      %v6289 = vsel %vm6273, %v6223, %v6281
      %v6290 = vsel %vm6274, %v6230, %v6282
      %v6291 = vsel %vm6275, %v6237, %v6283
      %v6292 = vsel %vm6276, %v6244, %v6284
      %v6293 = vsel %vm6277, %v6251, %v6285
      %v6294 = vsel %vm6278, %v6258, %v6286
      %v6295 = vsel %vm6279, %v6265, %v6287
      %v6296 = vsel %vm6280, %v6272, %v6288
      %v6297 = vsel %vm906, %v6289, -inf
      %6298 = vmax.xlane.f32.xlu0 %v6297
      %v6299 = vpop.xlane.xlu0 %6298
      %v6300 = vsel %vm906, %v6290, -inf
      %6301 = vmax.xlane.f32.xlu0 %v6300
      %v6302 = vpop.xlane.xlu0 %6301
      %v6303 = vsel %vm906, %v6291, -inf
      %6304 = vmax.xlane.f32.xlu0 %v6303
      %v6305 = vpop.xlane.xlu0 %6304
      %v6306 = vsel %vm906, %v6292, -inf
      %6307 = vmax.xlane.f32.xlu0 %v6306
      %v6308 = vpop.xlane.xlu0 %6307
      %v6309 = vsel %vm906, %v6293, -inf
      %6310 = vmax.xlane.f32.xlu0 %v6309
      %v6311 = vpop.xlane.xlu0 %6310
      %v6312 = vsel %vm906, %v6294, -inf
      %6313 = vmax.xlane.f32.xlu0 %v6312
      %v6314 = vpop.xlane.xlu0 %6313
      %v6315 = vsel %vm906, %v6295, -inf
      %6316 = vmax.xlane.f32.xlu0 %v6315
      %v6317 = vpop.xlane.xlu0 %6316
      %v6318 = vsel %vm906, %v6296, -inf
      %6319 = vmax.xlane.f32.xlu0 %v6318
      %v6320 = vpop.xlane.xlu0 %6319
      %v6321 = vsub.f32 %v6289, %v6299
      %v6322 = vsub.f32 %v6290, %v6302
      %v6323 = vsub.f32 %v6291, %v6305
      %v6324 = vsub.f32 %v6292, %v6308
      %v6325 = vsub.f32 %v6293, %v6311
      %v6326 = vsub.f32 %v6294, %v6314
      %v6327 = vsub.f32 %v6295, %v6317
      %v6328 = vsub.f32 %v6296, %v6320
      %v6329 = vmul.f32 %v6321, 1.442695
      %v6330 = vpow.pop %v6329
      %v6331 = vmul.f32 %v6322, 1.442695
      %v6332 = vpow.pop %v6331
      %v6333 = vmul.f32 %v6323, 1.442695
      %v6334 = vpow.pop %v6333
      %v6335 = vmul.f32 %v6324, 1.442695
      %v6336 = vpow.pop %v6335
      %v6337 = vmul.f32 %v6325, 1.442695
      %v6338 = vpow.pop %v6337
      %v6339 = vmul.f32 %v6326, 1.442695
      %v6340 = vpow.pop %v6339
      %v6341 = vmul.f32 %v6327, 1.442695
      %v6342 = vpow.pop %v6341
      %v6343 = vmul.f32 %v6328, 1.442695
      %v6344 = vpow.pop %v6343
      %v6345 = vsel %vm906, %v6330, 0.0
      %6346 = vadd.xlane.f32.xlu0 %v6345
      %v6347 = vpop.xlane.xlu0 %6346
      %v6348 = vsel %vm906, %v6332, 0.0
      %6349 = vadd.xlane.f32.xlu0 %v6348
      %v6350 = vpop.xlane.xlu0 %6349
      %v6351 = vsel %vm906, %v6334, 0.0
      %6352 = vadd.xlane.f32.xlu0 %v6351
      %v6353 = vpop.xlane.xlu0 %6352
      %v6354 = vsel %vm906, %v6336, 0.0
      %6355 = vadd.xlane.f32.xlu0 %v6354
      %v6356 = vpop.xlane.xlu0 %6355
      %v6357 = vsel %vm906, %v6338, 0.0
      %6358 = vadd.xlane.f32.xlu0 %v6357
      %v6359 = vpop.xlane.xlu0 %6358
      %v6360 = vsel %vm906, %v6340, 0.0
      %6361 = vadd.xlane.f32.xlu0 %v6360
      %v6362 = vpop.xlane.xlu0 %6361
      %v6363 = vsel %vm906, %v6342, 0.0
      %6364 = vadd.xlane.f32.xlu0 %v6363
      %v6365 = vpop.xlane.xlu0 %6364
      %v6366 = vsel %vm906, %v6344, 0.0
      %6367 = vadd.xlane.f32.xlu0 %v6366
      %v6368 = vpop.xlane.xlu0 %6367
      %v6369 = vrcp.pop %v6347
      %v6370 = vrcp.pop %v6350
      %v6371 = vrcp.pop %v6353
      %v6372 = vrcp.pop %v6356
      %v6373 = vrcp.pop %v6359
      %v6374 = vrcp.pop %v6362
      %v6375 = vrcp.pop %v6365
      %v6376 = vrcp.pop %v6368
      %v6377 = vmul.f32 %v6330, %v6369
      %v6378 = vmul.f32 %v6332, %v6370
      %v6379 = vmul.f32 %v6334, %v6371
      %v6380 = vmul.f32 %v6336, %v6372
      %v6381 = vmul.f32 %v6338, %v6373
      %v6382 = vmul.f32 %v6340, %v6374
      %v6383 = vmul.f32 %v6342, %v6375
      %v6384 = vmul.f32 %v6344, %v6376
      %6385 = vrot.lane.b32.xlu0 %v504, 72
      %v6386 = vpop.permute.xlu0 %6385
      %6387 = vrot.lane.b32.xlu0 %v508, 72
      %v6388 = vpop.permute.xlu0 %6387
      %v6392 = vsel %vm906, %v6377, 0
      %v6395 = vsel %vm906, %v6378, 0
      %6397 = vmatprep.subr.mxu0 0.0
      %6398 = vmatpush1.msra.mxu0 0.0
      %6399 = vmatprep.subr.mxu0 0.0
      %6400 = vmatpush1.msra.mxu0 0.0
      %6401 = vmatprep.subr.mxu0 0.0
      %6402 = vmatpush1.msra.mxu0 0.0
      %6403 = vmatprep.subr.mxu0 0.0
      %6404 = vmatpush1.msra.mxu0 0.0
      %6405 = vmatprep.subr.mxu0 0.0
      %6406 = vmatpush1.msra.mxu0 0.0
      %6407 = vmatprep.subr.mxu0 0.0
      %6408 = vmatpush1.msra.mxu0 0.0
      %6409 = vmatprep.subr.mxu0 0.0
      %6410 = vmatpush1.msra.mxu0 0.0
      %6411 = vmatprep.subr.mxu0 0.0
      %6412 = vmatpush1.msra.mxu0 0.0
      %6413 = vmatprep.subr.mxu0 0.0
      %6414 = vmatpush1.msra.mxu0 0.0
      %6415 = vmatprep.subr.mxu0 0.0
      %6416 = vmatpush1.msra.mxu0 0.0
      %6417 = vmatprep.subr.mxu0 0.0
      %6418 = vmatpush1.msra.mxu0 0.0
      %6419 = vmatprep.subr.mxu0 0.0
      %6420 = vmatpush1.msra.mxu0 0.0
      %6421 = vmatprep.subr.mxu0 0.0
      %6422 = vmatpush1.msra.mxu0 0.0
      %6423 = vmatprep.subr.mxu0 0.0
      %6424 = vmatpush1.msra.mxu0 0.0
      %6425 = vmatprep.subr.mxu0 0.0
      %6426 = vmatpush1.msra.mxu0 %v6388
      %6427 = vmatprep.subr.mxu0 0.0
      %6428 = vmatpush1.msra.mxu0 %v6386
      %6429 = vmatprep.subr.mxu0 0.0
      %6430 = vmatpush2.msra.mxu0 0.0
      %6431 = vmatprep.subr.mxu0 0.0
      %6432 = vmatpush2.msra.mxu0 0.0
      %6433 = vmatprep.subr.mxu0 0.0
      %6434 = vmatpush2.msra.mxu0 0.0
      %6435 = vmatprep.subr.mxu0 0.0
      %6436 = vmatpush2.msra.mxu0 0.0
      %6437 = vmatprep.subr.mxu0 0.0
      %6438 = vmatpush2.msra.mxu0 0.0
      %6439 = vmatprep.subr.mxu0 0.0
      %6440 = vmatpush2.msra.mxu0 0.0
      %6441 = vmatprep.subr.mxu0 0.0
      %6442 = vmatpush2.msra.mxu0 0.0
      %6443 = vmatprep.subr.mxu0 0.0
      %6444 = vmatpush2.msra.mxu0 0.0
      %6445 = vmatprep.subr.mxu0 0.0
      %6446 = vmatpush2.msra.mxu0 0.0
      %6447 = vmatprep.subr.mxu0 0.0
      %6448 = vmatpush2.msra.mxu0 0.0
      %6449 = vmatprep.subr.mxu0 0.0
      %6450 = vmatpush2.msra.mxu0 0.0
      %6451 = vmatprep.subr.mxu0 0.0
      %6452 = vmatpush2.msra.mxu0 0.0
      %6453 = vmatprep.subr.mxu0 0.0
      %6454 = vmatpush2.msra.mxu0 0.0
      %6455 = vmatprep.subr.mxu0 0.0
      %6456 = vmatpush2.msra.mxu0 0.0
      %6457 = vmatprep.subr.mxu0 0.0
      %6458 = vmatpush2.msra.mxu0 0.0
      %6459 = vmatprep.subr.mxu0 0.0
      %6460 = vmatpush2.msra.mxu0 0.0
      %6461 = vmatprep.mubr.f32.mxu0 0.0
      %6462 = vmatmul.mubr.f32.gmra.mxu0 %v6392
      %v6463 = vpop.f32.mrf.mxu0
      %v6464 = vadd.f32 0.0, %v6463
      %v6465 = vpop.f32.mrf.mxu0
      %6466 = vmatprep.mubr.f32.mxu0 0.0
      %6467 = vmatmul.mubr.f32.gmra.mxu0 %v6395
      %v6468 = vpop.f32.mrf.mxu0
      %v6469 = vadd.f32 0.0, %v6468
      %v6470 = vpop.f32.mrf.mxu0
      %6471 = vdwg.mxu0
      %6472 = vrot.lane.b32.xlu0 %v514, 72
      %v6473 = vpop.permute.xlu0 %6472
      %6474 = vrot.lane.b32.xlu0 %v518, 72
      %v6475 = vpop.permute.xlu0 %6474
      %v6479 = vsel %vm906, %v6379, 0
      %v6482 = vsel %vm906, %v6380, 0
      %6484 = vmatprep.subr.mxu0 0.0
      %6485 = vmatpush1.msra.mxu0 0.0
      %6486 = vmatprep.subr.mxu0 0.0
      %6487 = vmatpush1.msra.mxu0 0.0
      %6488 = vmatprep.subr.mxu0 0.0
      %6489 = vmatpush1.msra.mxu0 0.0
      %6490 = vmatprep.subr.mxu0 0.0
      %6491 = vmatpush1.msra.mxu0 0.0
      %6492 = vmatprep.subr.mxu0 0.0
      %6493 = vmatpush1.msra.mxu0 0.0
      %6494 = vmatprep.subr.mxu0 0.0
      %6495 = vmatpush1.msra.mxu0 0.0
      %6496 = vmatprep.subr.mxu0 0.0
      %6497 = vmatpush1.msra.mxu0 0.0
      %6498 = vmatprep.subr.mxu0 0.0
      %6499 = vmatpush1.msra.mxu0 0.0
      %6500 = vmatprep.subr.mxu0 0.0
      %6501 = vmatpush1.msra.mxu0 0.0
      %6502 = vmatprep.subr.mxu0 0.0
      %6503 = vmatpush1.msra.mxu0 0.0
      %6504 = vmatprep.subr.mxu0 0.0
      %6505 = vmatpush1.msra.mxu0 0.0
      %6506 = vmatprep.subr.mxu0 0.0
      %6507 = vmatpush1.msra.mxu0 0.0
      %6508 = vmatprep.subr.mxu0 0.0
      %6509 = vmatpush1.msra.mxu0 0.0
      %6510 = vmatprep.subr.mxu0 0.0
      %6511 = vmatpush1.msra.mxu0 0.0
      %6512 = vmatprep.subr.mxu0 0.0
      %6513 = vmatpush1.msra.mxu0 %v6475
      %6514 = vmatprep.subr.mxu0 0.0
      %6515 = vmatpush1.msra.mxu0 %v6473
      %6516 = vmatprep.subr.mxu0 0.0
      %6517 = vmatpush2.msra.mxu0 0.0
      %6518 = vmatprep.subr.mxu0 0.0
      %6519 = vmatpush2.msra.mxu0 0.0
      %6520 = vmatprep.subr.mxu0 0.0
      %6521 = vmatpush2.msra.mxu0 0.0
      %6522 = vmatprep.subr.mxu0 0.0
      %6523 = vmatpush2.msra.mxu0 0.0
      %6524 = vmatprep.subr.mxu0 0.0
      %6525 = vmatpush2.msra.mxu0 0.0
      %6526 = vmatprep.subr.mxu0 0.0
      %6527 = vmatpush2.msra.mxu0 0.0
      %6528 = vmatprep.subr.mxu0 0.0
      %6529 = vmatpush2.msra.mxu0 0.0
      %6530 = vmatprep.subr.mxu0 0.0
      %6531 = vmatpush2.msra.mxu0 0.0
      %6532 = vmatprep.subr.mxu0 0.0
      %6533 = vmatpush2.msra.mxu0 0.0
      %6534 = vmatprep.subr.mxu0 0.0
      %6535 = vmatpush2.msra.mxu0 0.0
      %6536 = vmatprep.subr.mxu0 0.0
      %6537 = vmatpush2.msra.mxu0 0.0
      %6538 = vmatprep.subr.mxu0 0.0
      %6539 = vmatpush2.msra.mxu0 0.0
      %6540 = vmatprep.subr.mxu0 0.0
      %6541 = vmatpush2.msra.mxu0 0.0
      %6542 = vmatprep.subr.mxu0 0.0
      %6543 = vmatpush2.msra.mxu0 0.0
      %6544 = vmatprep.subr.mxu0 0.0
      %6545 = vmatpush2.msra.mxu0 0.0
      %6546 = vmatprep.subr.mxu0 0.0
      %6547 = vmatpush2.msra.mxu0 0.0
      %6548 = vmatprep.mubr.f32.mxu0 0.0
      %6549 = vmatmul.mubr.f32.gmra.mxu0 %v6479
      %v6550 = vpop.f32.mrf.mxu0
      %v6551 = vadd.f32 0.0, %v6550
      %v6552 = vpop.f32.mrf.mxu0
      %6553 = vmatprep.mubr.f32.mxu0 0.0
      %6554 = vmatmul.mubr.f32.gmra.mxu0 %v6482
      %v6555 = vpop.f32.mrf.mxu0
      %v6556 = vadd.f32 0.0, %v6555
      %v6557 = vpop.f32.mrf.mxu0
      %6558 = vdwg.mxu0
      %6559 = vrot.lane.b32.xlu0 %v524, 72
      %v6560 = vpop.permute.xlu0 %6559
      %6561 = vrot.lane.b32.xlu0 %v528, 72
      %v6562 = vpop.permute.xlu0 %6561
      %v6566 = vsel %vm906, %v6381, 0
      %v6569 = vsel %vm906, %v6382, 0
      %6571 = vmatprep.subr.mxu0 0.0
      %6572 = vmatpush1.msra.mxu0 0.0
      %6573 = vmatprep.subr.mxu0 0.0
      %6574 = vmatpush1.msra.mxu0 0.0
      %6575 = vmatprep.subr.mxu0 0.0
      %6576 = vmatpush1.msra.mxu0 0.0
      %6577 = vmatprep.subr.mxu0 0.0
      %6578 = vmatpush1.msra.mxu0 0.0
      %6579 = vmatprep.subr.mxu0 0.0
      %6580 = vmatpush1.msra.mxu0 0.0
      %6581 = vmatprep.subr.mxu0 0.0
      %6582 = vmatpush1.msra.mxu0 0.0
      %6583 = vmatprep.subr.mxu0 0.0
      %6584 = vmatpush1.msra.mxu0 0.0
      %6585 = vmatprep.subr.mxu0 0.0
      %6586 = vmatpush1.msra.mxu0 0.0
      %6587 = vmatprep.subr.mxu0 0.0
      %6588 = vmatpush1.msra.mxu0 0.0
      %6589 = vmatprep.subr.mxu0 0.0
      %6590 = vmatpush1.msra.mxu0 0.0
      %6591 = vmatprep.subr.mxu0 0.0
      %6592 = vmatpush1.msra.mxu0 0.0
      %6593 = vmatprep.subr.mxu0 0.0
      %6594 = vmatpush1.msra.mxu0 0.0
      %6595 = vmatprep.subr.mxu0 0.0
      %6596 = vmatpush1.msra.mxu0 0.0
      %6597 = vmatprep.subr.mxu0 0.0
      %6598 = vmatpush1.msra.mxu0 0.0
      %6599 = vmatprep.subr.mxu0 0.0
      %6600 = vmatpush1.msra.mxu0 %v6562
      %6601 = vmatprep.subr.mxu0 0.0
      %6602 = vmatpush1.msra.mxu0 %v6560
      %6603 = vmatprep.subr.mxu0 0.0
      %6604 = vmatpush2.msra.mxu0 0.0
      %6605 = vmatprep.subr.mxu0 0.0
      %6606 = vmatpush2.msra.mxu0 0.0
      %6607 = vmatprep.subr.mxu0 0.0
      %6608 = vmatpush2.msra.mxu0 0.0
      %6609 = vmatprep.subr.mxu0 0.0
      %6610 = vmatpush2.msra.mxu0 0.0
      %6611 = vmatprep.subr.mxu0 0.0
      %6612 = vmatpush2.msra.mxu0 0.0
      %6613 = vmatprep.subr.mxu0 0.0
      %6614 = vmatpush2.msra.mxu0 0.0
      %6615 = vmatprep.subr.mxu0 0.0
      %6616 = vmatpush2.msra.mxu0 0.0
      %6617 = vmatprep.subr.mxu0 0.0
      %6618 = vmatpush2.msra.mxu0 0.0
      %6619 = vmatprep.subr.mxu0 0.0
      %6620 = vmatpush2.msra.mxu0 0.0
      %6621 = vmatprep.subr.mxu0 0.0
      %6622 = vmatpush2.msra.mxu0 0.0
      %6623 = vmatprep.subr.mxu0 0.0
      %6624 = vmatpush2.msra.mxu0 0.0
      %6625 = vmatprep.subr.mxu0 0.0
      %6626 = vmatpush2.msra.mxu0 0.0
      %6627 = vmatprep.subr.mxu0 0.0
      %6628 = vmatpush2.msra.mxu0 0.0
      %6629 = vmatprep.subr.mxu0 0.0
      %6630 = vmatpush2.msra.mxu0 0.0
      %6631 = vmatprep.subr.mxu0 0.0
      %6632 = vmatpush2.msra.mxu0 0.0
      %6633 = vmatprep.subr.mxu0 0.0
      %6634 = vmatpush2.msra.mxu0 0.0
      %6635 = vmatprep.mubr.f32.mxu0 0.0
      %6636 = vmatmul.mubr.f32.gmra.mxu0 %v6566
      %v6637 = vpop.f32.mrf.mxu0
      %v6638 = vadd.f32 0.0, %v6637
      %v6639 = vpop.f32.mrf.mxu0
      %6640 = vmatprep.mubr.f32.mxu0 0.0
      %6641 = vmatmul.mubr.f32.gmra.mxu0 %v6569
      %v6642 = vpop.f32.mrf.mxu0
      %v6643 = vadd.f32 0.0, %v6642
      %v6644 = vpop.f32.mrf.mxu0
      %6645 = vdwg.mxu0
      %6646 = vrot.lane.b32.xlu0 %v534, 72
      %v6647 = vpop.permute.xlu0 %6646
      %6648 = vrot.lane.b32.xlu0 %v538, 72
      %v6649 = vpop.permute.xlu0 %6648
      %v6653 = vsel %vm906, %v6383, 0
      %v6656 = vsel %vm906, %v6384, 0
      %6658 = vmatprep.subr.mxu0 0.0
      %6659 = vmatpush1.msra.mxu0 0.0
      %6660 = vmatprep.subr.mxu0 0.0
      %6661 = vmatpush1.msra.mxu0 0.0
      %6662 = vmatprep.subr.mxu0 0.0
      %6663 = vmatpush1.msra.mxu0 0.0
      %6664 = vmatprep.subr.mxu0 0.0
      %6665 = vmatpush1.msra.mxu0 0.0
      %6666 = vmatprep.subr.mxu0 0.0
      %6667 = vmatpush1.msra.mxu0 0.0
      %6668 = vmatprep.subr.mxu0 0.0
      %6669 = vmatpush1.msra.mxu0 0.0
      %6670 = vmatprep.subr.mxu0 0.0
      %6671 = vmatpush1.msra.mxu0 0.0
      %6672 = vmatprep.subr.mxu0 0.0
      %6673 = vmatpush1.msra.mxu0 0.0
      %6674 = vmatprep.subr.mxu0 0.0
      %6675 = vmatpush1.msra.mxu0 0.0
      %6676 = vmatprep.subr.mxu0 0.0
      %6677 = vmatpush1.msra.mxu0 0.0
      %6678 = vmatprep.subr.mxu0 0.0
      %6679 = vmatpush1.msra.mxu0 0.0
      %6680 = vmatprep.subr.mxu0 0.0
      %6681 = vmatpush1.msra.mxu0 0.0
      %6682 = vmatprep.subr.mxu0 0.0
      %6683 = vmatpush1.msra.mxu0 0.0
      %6684 = vmatprep.subr.mxu0 0.0
      %6685 = vmatpush1.msra.mxu0 0.0
      %6686 = vmatprep.subr.mxu0 0.0
      %6687 = vmatpush1.msra.mxu0 %v6649
      %6688 = vmatprep.subr.mxu0 0.0
      %6689 = vmatpush1.msra.mxu0 %v6647
      %6690 = vmatprep.subr.mxu0 0.0
      %6691 = vmatpush2.msra.mxu0 0.0
      %6692 = vmatprep.subr.mxu0 0.0
      %6693 = vmatpush2.msra.mxu0 0.0
      %6694 = vmatprep.subr.mxu0 0.0
      %6695 = vmatpush2.msra.mxu0 0.0
      %6696 = vmatprep.subr.mxu0 0.0
      %6697 = vmatpush2.msra.mxu0 0.0
      %6698 = vmatprep.subr.mxu0 0.0
      %6699 = vmatpush2.msra.mxu0 0.0
      %6700 = vmatprep.subr.mxu0 0.0
      %6701 = vmatpush2.msra.mxu0 0.0
      %6702 = vmatprep.subr.mxu0 0.0
      %6703 = vmatpush2.msra.mxu0 0.0
      %6704 = vmatprep.subr.mxu0 0.0
      %6705 = vmatpush2.msra.mxu0 0.0
      %6706 = vmatprep.subr.mxu0 0.0
      %6707 = vmatpush2.msra.mxu0 0.0
      %6708 = vmatprep.subr.mxu0 0.0
      %6709 = vmatpush2.msra.mxu0 0.0
      %6710 = vmatprep.subr.mxu0 0.0
      %6711 = vmatpush2.msra.mxu0 0.0
      %6712 = vmatprep.subr.mxu0 0.0
      %6713 = vmatpush2.msra.mxu0 0.0
      %6714 = vmatprep.subr.mxu0 0.0
      %6715 = vmatpush2.msra.mxu0 0.0
      %6716 = vmatprep.subr.mxu0 0.0
      %6717 = vmatpush2.msra.mxu0 0.0
      %6718 = vmatprep.subr.mxu0 0.0
      %6719 = vmatpush2.msra.mxu0 0.0
      %6720 = vmatprep.subr.mxu0 0.0
      %6721 = vmatpush2.msra.mxu0 0.0
      %6722 = vmatprep.mubr.f32.mxu0 0.0
      %6723 = vmatmul.mubr.f32.gmra.mxu0 %v6653
      %v6724 = vpop.f32.mrf.mxu0
      %v6725 = vadd.f32 0.0, %v6724
      %v6726 = vpop.f32.mrf.mxu0
      %6727 = vmatprep.mubr.f32.mxu0 0.0
      %6728 = vmatmul.mubr.f32.gmra.mxu0 %v6656
      %v6729 = vpop.f32.mrf.mxu0
      %v6730 = vadd.f32 0.0, %v6729
      %v6731 = vpop.f32.mrf.mxu0
      %6732 = vdwg.mxu0
      %6741 = vrot.lane.b32.xlu0 %v6464, 56
      %v6742 = vpop.permute.xlu0 %6741
      %6743 = vrot.lane.b32.xlu0 %v6469, 56
      %v6744 = vpop.permute.xlu0 %6743
      %6745 = vrot.lane.b32.xlu0 %v6551, 56
      %v6746 = vpop.permute.xlu0 %6745
      %6747 = vrot.lane.b32.xlu0 %v6556, 56
      %v6748 = vpop.permute.xlu0 %6747
      %6749 = vrot.lane.b32.xlu0 %v6638, 56
      %v6750 = vpop.permute.xlu0 %6749
      %6751 = vrot.lane.b32.xlu0 %v6643, 56
      %v6752 = vpop.permute.xlu0 %6751
      %6753 = vrot.lane.b32.xlu0 %v6725, 56
      %v6754 = vpop.permute.xlu0 %6753
      %6755 = vrot.lane.b32.xlu0 %v6730, 56
      %v6756 = vpop.permute.xlu0 %6755
      %vm6765 = vcmask 523712
      %6766 = vst.msk [vmem:[#allocation2] sm:$0xff] %vm6765, %v6742
      %6767 = vst.msk [vmem:[#allocation2 + $0x8] sm:$0xff] %vm6765, %v6744
      %6768 = vst.msk [vmem:[#allocation2 + $0x10] sm:$0xff] %vm6765, %v6746
      %6769 = vst.msk [vmem:[#allocation2 + $0x18] sm:$0xff] %vm6765, %v6748
      %6770 = vst.msk [vmem:[#allocation2 + $0x20] sm:$0xff] %vm6765, %v6750
      %6771 = vst.msk [vmem:[#allocation2 + $0x28] sm:$0xff] %vm6765, %v6752
      %6772 = vst.msk [vmem:[#allocation2 + $0x30] sm:$0xff] %vm6765, %v6754
      %6773 = vst.msk [vmem:[#allocation2 + $0x38] sm:$0xff] %vm6765, %v6756
      %v6774 = vld [vmem:[#allocation2] sm:$0xff]
      %v6775 = vld [vmem:[#allocation2 + $0x8] sm:$0xff]
      %v6776 = vld [vmem:[#allocation2 + $0x10] sm:$0xff]
      %v6777 = vld [vmem:[#allocation2 + $0x18] sm:$0xff]
      %v6778 = vld [vmem:[#allocation2 + $0x20] sm:$0xff]
      %v6779 = vld [vmem:[#allocation2 + $0x28] sm:$0xff]
      %v6780 = vld [vmem:[#allocation2 + $0x30] sm:$0xff]
      %v6781 = vld [vmem:[#allocation2 + $0x38] sm:$0xff]
      %6790 = vrot.lane.b32.xlu0 %v590, 64
      %v6791 = vpop.permute.xlu0 %6790
      %6792 = vrot.lane.b32.xlu0 %v592, 64
      %v6793 = vpop.permute.xlu0 %6792
      %6794 = vrot.lane.b32.xlu0 %v594, 64
      %v6795 = vpop.permute.xlu0 %6794
      %6796 = vrot.lane.b32.xlu0 %v596, 64
      %v6797 = vpop.permute.xlu0 %6796
      %6798 = vrot.lane.b32.xlu0 %v598, 64
      %v6799 = vpop.permute.xlu0 %6798
      %6800 = vrot.lane.b32.xlu0 %v600, 64
      %v6801 = vpop.permute.xlu0 %6800
      %6802 = vrot.lane.b32.xlu0 %v602, 64
      %v6803 = vpop.permute.xlu0 %6802
      %6804 = vrot.lane.b32.xlu0 %v604, 64
      %v6805 = vpop.permute.xlu0 %6804
      %v6814 = vmul.f32 %v6774, %v6791
      %v6815 = vmul.f32 %v6775, %v6793
      %v6816 = vmul.f32 %v6776, %v6795
      %v6817 = vmul.f32 %v6777, %v6797
      %v6818 = vmul.f32 %v6778, %v6799
      %v6819 = vmul.f32 %v6779, %v6801
      %v6820 = vmul.f32 %v6780, %v6803
      %v6821 = vmul.f32 %v6781, %v6805
      %v6822 = vpack.c.bf16 %v6815, %v6814
      %v6823 = vpack.c.bf16 %v6817, %v6816
      %v6824 = vpack.c.bf16 %v6819, %v6818
      %v6825 = vpack.c.bf16 %v6821, %v6820
      %v6826 = vld [vmem:[%s5] sm:$0xf]
      %v6827 = vld [vmem:[%s5 + $0x4] sm:$0xf]
      %v6828 = vld [vmem:[%s5 + $0x8] sm:$0xf]
      %v6829 = vld [vmem:[%s5 + $0xc] sm:$0xf]
      %v6830 = vld [vmem:[%s5 + $0x10] sm:$0xf]
      %v6831 = vld [vmem:[%s5 + $0x14] sm:$0xf]
      %v6832 = vld [vmem:[%s5 + $0x18] sm:$0xf]
      %v6833 = vld [vmem:[%s5 + $0x1c] sm:$0xf]
      %v6834 = vld [vmem:[%s6] sm:$0x1]
      %v6836 = vlaneseq
      %v6837 = vshrl.u32 %v6836, 7
      %v6838 = vsub.s32 0, %v6837
      %v6839 = vrot.slane %v6834, %v6838
      %v6849 = vunpack.c.l.b16 %v6826
      %v6850 = vunpack.c.l.b16 %v6827
      %v6851 = vunpack.c.l.b16 %v6828
      %v6852 = vunpack.c.l.b16 %v6829
      %v6853 = vunpack.c.l.b16 %v6830
      %v6854 = vunpack.c.l.b16 %v6831
      %v6855 = vunpack.c.l.b16 %v6832
      %v6856 = vunpack.c.l.b16 %v6833
      %v6857 = vpack.c.b16 %v6850, %v6849
      %v6858 = vpack.c.b16 %v6852, %v6851
      %v6859 = vpack.c.b16 %v6854, %v6853
      %v6860 = vpack.c.b16 %v6856, %v6855
      %vm6865 = vcmask 523264
      %v6867 = vsel %vm6865, %v6822, 0
      %v6870 = vsel %vm6865, %v6823, 0
      %v6873 = vsel %vm6865, %v6824, 0
      %v6876 = vsel %vm6865, %v6825, 0
      %6878 = vmatprep.subr.bf16.mxu0 0
      %6879 = vmatpush1.bf16.msra.mxu0 0
      %6880 = vmatprep.subr.bf16.mxu0 0
      %6881 = vmatpush1.bf16.msra.mxu0 0
      %6882 = vmatprep.subr.bf16.mxu0 0
      %6883 = vmatpush1.bf16.msra.mxu0 0
      %6884 = vmatprep.subr.bf16.mxu0 0
      %6885 = vmatpush1.bf16.msra.mxu0 0
      %6886 = vmatprep.subr.bf16.mxu0 0
      %6887 = vmatpush1.bf16.msra.mxu0 %v6860
      %6888 = vmatprep.subr.bf16.mxu0 0
      %6889 = vmatpush1.bf16.msra.mxu0 %v6859
      %6890 = vmatprep.subr.bf16.mxu0 0
      %6891 = vmatpush1.bf16.msra.mxu0 %v6858
      %6892 = vmatprep.subr.bf16.mxu0 0
      %6893 = vmatpush1.bf16.msra.mxu0 %v6857
      %6894 = vmatprep.subr.bf16.mxu0 0
      %6895 = vmatpush2.bf16.msra.mxu0 0
      %6896 = vmatprep.subr.bf16.mxu0 0
      %6897 = vmatpush2.bf16.msra.mxu0 0
      %6898 = vmatprep.subr.bf16.mxu0 0
      %6899 = vmatpush2.bf16.msra.mxu0 0
      %6900 = vmatprep.subr.bf16.mxu0 0
      %6901 = vmatpush2.bf16.msra.mxu0 0
      %6902 = vmatprep.subr.bf16.mxu0 0
      %6903 = vmatpush2.bf16.msra.mxu0 0
      %6904 = vmatprep.subr.bf16.mxu0 0
      %6905 = vmatpush2.bf16.msra.mxu0 0
      %6906 = vmatprep.subr.bf16.mxu0 0
      %6907 = vmatpush2.bf16.msra.mxu0 0
      %6908 = vmatprep.subr.bf16.mxu0 0
      %6909 = vmatpush2.bf16.msra.mxu0 0
      %6910 = vmatprep.mubr.bf16.mxu0 0
      %6911 = vmatmul.mubr.bf16.gmra.mxu0 %v6867
      %v6912 = vpop.f32.mrf.mxu0
      %v6913 = vadd.f32 %v6839, %v6912
      %v6914 = vpop.f32.mrf.mxu0
      %v6915 = vpop.f32.mrf.mxu0
      %v6916 = vadd.f32 %v6839, %v6915
      %v6917 = vpop.f32.mrf.mxu0
      %6918 = vmatprep.mubr.bf16.mxu0 0
      %6919 = vmatmul.mubr.bf16.gmra.mxu0 %v6870
      %v6920 = vpop.f32.mrf.mxu0
      %v6921 = vadd.f32 %v6839, %v6920
      %v6922 = vpop.f32.mrf.mxu0
      %v6923 = vpop.f32.mrf.mxu0
      %v6924 = vadd.f32 %v6839, %v6923
      %v6925 = vpop.f32.mrf.mxu0
      %6926 = vmatprep.mubr.bf16.mxu0 0
      %6927 = vmatmul.mubr.bf16.gmra.mxu0 %v6873
      %v6928 = vpop.f32.mrf.mxu0
      %v6929 = vadd.f32 %v6839, %v6928
      %v6930 = vpop.f32.mrf.mxu0
      %v6931 = vpop.f32.mrf.mxu0
      %v6932 = vadd.f32 %v6839, %v6931
      %v6933 = vpop.f32.mrf.mxu0
      %6934 = vmatprep.mubr.bf16.mxu0 0
      %6935 = vmatmul.mubr.bf16.gmra.mxu0 %v6876
      %v6936 = vpop.f32.mrf.mxu0
      %v6937 = vadd.f32 %v6839, %v6936
      %v6938 = vpop.f32.mrf.mxu0
      %v6939 = vpop.f32.mrf.mxu0
      %v6940 = vadd.f32 %v6839, %v6939
      %v6941 = vpop.f32.mrf.mxu0
      %6942 = vdwg.mxu0
      %6943 = vst.msk [vmem:[%s280] sm:$0xff] %vm291, %v6913
      %6944 = vst.msk [vmem:[%s280 + $0x8] sm:$0xff] %vm291, %v6916
      %6945 = vst.msk [vmem:[%s280 + $0x10] sm:$0xff] %vm291, %v6921
      %6946 = vst.msk [vmem:[%s280 + $0x18] sm:$0xff] %vm291, %v6924
      %6947 = vst.msk [vmem:[%s280 + $0x20] sm:$0xff] %vm291, %v6929
      %6948 = vst.msk [vmem:[%s280 + $0x28] sm:$0xff] %vm291, %v6932
      %6949 = vst.msk [vmem:[%s280 + $0x30] sm:$0xff] %vm291, %v6937
      %6950 = vst.msk [vmem:[%s280 + $0x38] sm:$0xff] %vm291, %v6940
      %s6951 = smul.u32 8, %s18
      %p6952 = scmp.lt.s32.totalorder %s6951, 15
      %s6953 = scalar_select %p6952, %s6951, 15
      %s6954 = smul.addr %s6953, 8
      %s6955 = scalar_lea.vmem %s7, %s6954
      // Predicated region
      $region49: #{tpu_custom_call.1} parent=47 // pred_check
        %p6956 = pneg %p188
      $region50: #{tpu_custom_call.1} parent=47 // pred_check_branch
        %6958 = sbr.rel (%p6956) target = $region52
      $region51: #{tpu_custom_call.1} parent=47 // pred_region
        %s6959 = smul.u32 8, %s18
      $region52: #{tpu_custom_call.1} parent=47 // pred_fallthru
        _
    $region48: #{tpu_custom_call.1} parent=5 // pred_fallthru
      _
    %p6960 = scmp.le.s32.totalorder 2, %s13
    // Predicated region
    $region53: #{tpu_custom_call.1} parent=5 // pred_check
      %p6961 = pneg %p6960
    $region54: #{tpu_custom_call.1} parent=5 // pred_check_branch
      %6963 = sbr.rel (%p6961) target = $region56
    $region55: #{tpu_custom_call.1} parent=5 // pred_region
      %s6964 = ssub.s32 %s13, 2
      // Predicated region
      $region57: #{tpu_custom_call.1} parent=55 // pred_check
        %p6965 = pneg %p194
      $region58: #{tpu_custom_call.1} parent=55 // pred_check_branch
        %6967 = sbr.rel (%p6965) target = $region60
      $region59: #{tpu_custom_call.1} parent=55 // pred_region
        %s6968 = smul.u32 8, %s19
        %p6969 = scmp.lt.s32.totalorder %s6968, 15
        %s6970 = scalar_select %p6969, %s6968, 15
        %s6971 = smul.addr %s6970, 8
        %s6972 = scalar_lea.vmem %s7, %s6971
      $region60: #{tpu_custom_call.1} parent=55 // pred_fallthru
        _
    $region56: #{tpu_custom_call.1} parent=5 // pred_fallthru
      _
  $region6: #{tpu_custom_call.1} parent=0 // loop_footer
    %s17 = sadd.s32 1, %s13
  $region7: #{tpu_custom_call.1} parent=0 // loop_footer_branch
    %12 = sbr.rel target = $region3
  $region8: #{tpu_custom_call.1} parent=0 // loop_exit
    _

</llo_original>
